<compile_context>
chip_gen: v5e
topology: v5e:2x2
jax: 0.10.0
libtpu: 0.0.40
codegen_flags: <defaults>
</compile_context>

<pallas_src>
import functools

import jax
import jax.numpy as jnp
from jax.experimental import pallas as pl
from jax.experimental.pallas import tpu as pltpu

_EPS = 1e-5
_LANE = 128


def _round_up(v, m):
  return ((v + m - 1) // m) * m


# ---------------------------------------------------------------------------
# Kernel bodies.
#
# Per-sample activation layout inside the kernels: a flattened, spatially
# pre-padded slab (P, Cp) with P = (H+2)*(W+2), zero 1-pixel halo ring and
# channels zero-padded to Cp = k*128 (lane-dense loads/stores everywhere).
# A 3x3 SAME conv is one im2col matmul:
#     slab[:, t*Cp:(t+1)*Cp] = pad_flat[t_off : t_off + Ms]   (t = 3*ky + kx,
#                                                              t_off = ky*(W+2)+kx)
#     acc = slab @ W_flat          # (Ms, 9*Cp) @ (9*Cp, Cp), f32 accumulation
# Slab row o corresponds to padded flat position o + (W+3); rows landing on
# halo columns are junk and are zeroed with a precomputed validity mask
# before statistics and writeback.
# ---------------------------------------------------------------------------


def _build_im2col(src_ref, slab_ref, transform, *, W, Ms, Cp, mxu_dtype):
  """Fill the (Ms, 9*Cp) im2col slab from the flat padded source ref.

  Each tap's window is a contiguous, unstrided chunk of the flat buffer.
  `transform(window, flat_start)` maps the raw window to the conv input for
  that tap (identity for conv1; bn+relu+halo-mask for conv2); the result is
  cast to the MXU operand dtype and stored lane-aligned.
  """
  Wp = W + 2
  for ky in range(3):
    for kx in range(3):
      t = 3 * ky + kx
      start = ky * Wp + kx
      win = src_ref[0, pl.ds(start, Ms), :]
      slab_ref[:, t * Cp:(t + 1) * Cp] = transform(win, start).astype(mxu_dtype)


def _conv_matmul_stats_store(slab_ref, w_ref, mask_ref, y_ref, stats_ref, *,
                             W, Ms, P, Cp, act_dtype):
  """One fat MXU matmul (K = 9*Cp), masked f32 BN stats, padded writeback."""
  out_off = W + 3          # slab row o  <->  padded flat position o + out_off

  # Single K-deep matmul: the MXU's internal f32 accumulator performs the
  # 9-tap reduction (no accumulator round trips through VMEM).
  acc = jnp.dot(slab_ref[...], w_ref[...], preferred_element_type=jnp.float32)

  # Zero the junk rows (those landing on halo columns) before stats/writeback.
  acc = acc * mask_ref[pl.ds(out_off, Ms), :]

  # BatchNorm partial statistics from the f32 accumulator (before any
  # low-precision cast); only rows 0/1 are ever read downstream.
  stats_ref[0, pl.ds(0, 1), :] = jnp.sum(acc, axis=0, keepdims=True)
  stats_ref[0, pl.ds(1, 1), :] = jnp.sum(acc * acc, axis=0, keepdims=True)

  # Interior writeback in padded layout: junk rows are zero, so they land
  # exactly on the halo columns that must stay zero for the next conv.  The
  # few positions the slab does not cover (top halo row + stragglers at the
  # bottom) are zeroed explicitly with two tiny contiguous stores.
  y_ref[0, pl.ds(out_off, Ms), :] = acc.astype(act_dtype)
  y_ref[0, pl.ds(0, out_off), :] = jnp.zeros((out_off, Cp), act_dtype)
  tail = P - (out_off + Ms)  # == W + 3
  y_ref[0, pl.ds(out_off + Ms, tail), :] = jnp.zeros((tail, Cp), act_dtype)


def _conv1_kernel(x_ref, w_ref, mask_ref, y_ref, stats_ref, slab_ref, *,
                  W, Ms, P, Cp, mxu_dtype, act_dtype):
  """Pass 1: conv1 of one sample + bn1 partial statistics."""
  _build_im2col(x_ref, slab_ref, lambda win, start: win,
                W=W, Ms=Ms, Cp=Cp, mxu_dtype=mxu_dtype)
  _conv_matmul_stats_store(slab_ref, w_ref, mask_ref, y_ref, stats_ref,
                           W=W, Ms=Ms, P=P, Cp=Cp, act_dtype=act_dtype)


def _bn_relu_conv2_kernel(y1_ref, a_ref, c_ref, w_ref, mask_ref, y_ref,
                          stats_ref, slab_ref, *,
                          W, Ms, P, Cp, mxu_dtype, act_dtype):
  """Pass 2: bn1 (affine) + relu fused into the im2col build, conv2 + stats."""
  a = a_ref[...]   # (1, Cp) f32
  c = c_ref[...]   # (1, Cp) f32

  def bn_relu(win, start):
    # Compute in f32 (v5e has no bf16 VPU).  The halo mask restores the
    # zero-padding invariant that bn's "+c" / relu would otherwise break.
    z = jnp.maximum(win.astype(jnp.float32) * a + c, 0.0)
    return z * mask_ref[pl.ds(start, Ms), :]

  _build_im2col(y1_ref, slab_ref, bn_relu,
                W=W, Ms=Ms, Cp=Cp, mxu_dtype=mxu_dtype)
  _conv_matmul_stats_store(slab_ref, w_ref, mask_ref, y_ref, stats_ref,
                           W=W, Ms=Ms, P=P, Cp=Cp, act_dtype=act_dtype)


def _bn_add_relu_kernel(y2_ref, x_ref, a_ref, c_ref, mask_ref, out_ref, *,
                        Cp, act_dtype):
  """Pass 3: bn2 (affine) + residual add + relu.  Output aliased onto y2."""
  a = a_ref[...].reshape(1, 1, Cp)
  c = c_ref[...].reshape(1, 1, Cp)
  # Residual x stays f32; the add is performed in f32.
  out = jnp.maximum(y2_ref[...].astype(jnp.float32) * a + c + x_ref[...], 0.0)
  # The mask keeps the zero-halo invariant so the result could feed the next
  # block in the same padded layout without re-padding.
  out_ref[...] = (out * mask_ref[...]).astype(act_dtype)


# ---------------------------------------------------------------------------
# Host-side glue
# ---------------------------------------------------------------------------
def _bn_affine(stats, gamma, beta, count):
  """Per-sample (sum, sumsq) partials -> BN scale/shift (training mode,
  biased batch variance)."""
  s = jnp.sum(stats[:, 0, :], axis=0)
  ss = jnp.sum(stats[:, 1, :], axis=0)
  mean = s / count
  # TODO(synk): E[x^2]-E[x]^2 is cancellation-prone for very large counts /
  #             large means; use a shifted or Welford accumulation in prod.
  var = ss / count - mean * mean
  a = gamma * jax.lax.rsqrt(var + _EPS)
  c = beta - mean * a
  return a.reshape(1, -1), c.reshape(1, -1)


@functools.partial(jax.jit, static_argnames=("h", "w", "act_dtype"))
def basic_block_padded(x_pad, w1, g1, b1, w2, g2, b2, mask, *, h, w, act_dtype):
  """Hot path.  Activations in padded-flat layout (N, P, Cp), P=(h+2)*(w+2),
  channels padded to a multiple of 128, zero 1-pixel halo ring.  Weights are
  tap-major (9*Cp, Cp) matrices pre-cast to the MXU operand dtype."""
  n, p, cp = x_pad.shape
  ms = h * (w + 2) - 2          # im2col rows (largest in-bounds window)
  count = n * h * w             # valid elements per channel for BN
  mxu_dtype = w1.dtype

  act_spec = pl.BlockSpec((1, p, cp), lambda i: (i, 0, 0))
  # TODO(synk): for Cp >= 256 on v5e use pipeline_mode=pl.Buffered(1) here
  #             (constant index_map -> no need to double-buffer the weights)
  #             and set vmem_limit_bytes; unnecessary at these shapes.
  w_spec = pl.BlockSpec((9 * cp, cp), lambda i: (0, 0))
  vec_spec = pl.BlockSpec((1, cp), lambda i: (0, 0))
  mask_spec = pl.BlockSpec((p, 1), lambda i: (0, 0))
  stats_spec = pl.BlockSpec((1, 2, cp), lambda i: (i, 0, 0))

  act_shape = jax.ShapeDtypeStruct((n, p, cp), act_dtype)
  stats_shape = jax.ShapeDtypeStruct((n, 2, cp), jnp.float32)
  slab_scratch = pltpu.VMEM((ms, 9 * cp), mxu_dtype)
  # TODO(synk): for real ResNet stages add an H-row-tile grid axis (1-row
  #             halo) / pack samples per step to give v7x's two TensorCores
  #             and v6e's 256-wide MXU more parallel, fatter steps.
  par = pltpu.CompilerParams(dimension_semantics=("parallel",))
  common = dict(W=w, Ms=ms, P=p, Cp=cp, act_dtype=act_dtype)

  # ---- pass 1: conv1 + bn1 statistics -------------------------------------
  y1, st1 = pl.pallas_call(
      functools.partial(_conv1_kernel, mxu_dtype=mxu_dtype, **common),
      grid=(n,),
      in_specs=[act_spec, w_spec, mask_spec],
      out_specs=(act_spec, stats_spec),
      out_shape=(act_shape, stats_shape),
      scratch_shapes=[slab_scratch],
      compiler_params=par,
  )(x_pad, w1, mask)
  a1, c1 = _bn_affine(st1, g1, b1, count)

  # ---- pass 2: bn1 + relu + conv2 + bn2 statistics -------------------------
  y2, st2 = pl.pallas_call(
      functools.partial(_bn_relu_conv2_kernel, mxu_dtype=mxu_dtype, **common),
      grid=(n,),
      in_specs=[act_spec, vec_spec, vec_spec, w_spec, mask_spec],
      out_specs=(act_spec, stats_spec),
      out_shape=(act_shape, stats_shape),
      scratch_shapes=[slab_scratch],
      compiler_params=par,
  )(y1, a1, c1, w2, mask)
  a2, c2 = _bn_affine(st2, g2, b2, count)

  # ---- pass 3: bn2 + residual add + relu (output aliased onto y2) ----------
  out = pl.pallas_call(
      functools.partial(_bn_add_relu_kernel, Cp=cp, act_dtype=act_dtype),
      grid=(n,),
      in_specs=[act_spec, act_spec, vec_spec, vec_spec, mask_spec],
      out_specs=act_spec,
      out_shape=act_shape,
      input_output_aliases={0: 0},
      compiler_params=par,
  )(y2, x_pad, a2, c2, mask)
  return out


def prepare_block_params(w1_oihw, g1, b1, w2_oihw, g2, b2,
                         mxu_dtype=jnp.bfloat16):
  """One-time parameter prep (outside the per-step hot path): OIHW -> tap-major
  (9*Cp, Cp) matrices with channels zero-padded to a lane-dense multiple of
  128, pre-cast to the MXU operand dtype (bf16 is native on v5e/v6e/v7x)."""
  c_out, c_in = w1_oihw.shape[:2]
  assert c_out == c_in, "default BasicBlock has inplanes == planes, stride=1"
  cp = _round_up(c_out, _LANE)

  def prep_w(w):
    w = jnp.transpose(w, (2, 3, 1, 0)).astype(jnp.float32)            # HWIO
    w = jnp.pad(w, ((0, 0), (0, 0), (0, cp - c_in), (0, cp - c_out)))
    return w.reshape(9 * cp, cp).astype(mxu_dtype)                    # tap-major

  def prep_v(v):
    return jnp.pad(v.astype(jnp.float32), (0, cp - v.shape[0]))

  return (prep_w(w1_oihw), prep_v(g1), prep_v(b1),
          prep_w(w2_oihw), prep_v(g2), prep_v(b2))


def _make_halo_mask(h, w):
  """(P, 1) f32 validity mask of the padded-flat layout: 1 interior, 0 halo."""
  row = jnp.arange(h + 2).reshape(-1, 1)
  col = jnp.arange(w + 2).reshape(1, -1)
  interior = (row >= 1) & (row <= h) & (col >= 1) & (col <= w)
  return interior.astype(jnp.float32).reshape((h + 2) * (w + 2), 1)


def basic_block_pallas(x_nchw, w1_oihw, g1, b1, w2_oihw, g2, b2,
                       mxu_dtype=jnp.bfloat16, act_dtype=jnp.bfloat16):
  """PyTorch-layout convenience wrapper (NCHW activations, OIHW weights).

  Layout conversion, channel padding and spatial halo padding happen once at
  this boundary; a production pipeline keeps activations in the padded-flat
  layout end-to-end and calls `basic_block_padded` directly."""
  n, c, h, w = x_nchw.shape
  cp = _round_up(c, _LANE)
  params = prepare_block_params(w1_oihw, g1, b1, w2_oihw, g2, b2, mxu_dtype)
  x = jnp.transpose(x_nchw, (0, 2, 3, 1)).astype(jnp.float32)          # NHWC
  x = jnp.pad(x, ((0, 0), (1, 1), (1, 1), (0, cp - c)))                # halo + lanes
  x = x.reshape(n, (h + 2) * (w + 2), cp)
  mask = _make_halo_mask(h, w)
  out = basic_block_padded(x, *params, mask, h=h, w=w, act_dtype=act_dtype)
  out = out.reshape(n, h + 2, w + 2, cp)[:, 1:h + 1, 1:w + 1, :c]
  return jnp.transpose(out.astype(jnp.float32), (0, 3, 1, 2))


# ---------------------------------------------------------------------------
# Pure-JAX reference (mirrors the PyTorch forward, training-mode BN, NCHW)
# ---------------------------------------------------------------------------
def _reference(x_nchw, w1, g1, b1, w2, g2, b2):
  def conv(x, w):
    return jax.lax.conv_general_dilated(
        x, w, window_strides=(1, 1), padding="SAME",
        dimension_numbers=("NCHW", "OIHW", "NCHW"))

  def bn(y, g, b):
    mean = jnp.mean(y, axis=(0, 2, 3), keepdims=True)
    var = jnp.mean((y - mean) ** 2, axis=(0, 2, 3), keepdims=True)
    return ((y - mean) * jax.lax.rsqrt(var + _EPS)
            * g.reshape(1, -1, 1, 1) + b.reshape(1, -1, 1, 1))

  out = jnp.maximum(bn(conv(x_nchw, w1), g1, b1), 0.0)
  out = bn(conv(out, w2), g2, b2)
  return jnp.maximum(out + x_nchw, 0.0)


if __name__ == "__main__":
  # Small shapes consistent with BasicBlock(inplanes=4, planes=4, stride=1).
  N, C, H, W = 2, 4, 16, 16

  key = jax.random.PRNGKey(0)
  k_x, k_w1, k_w2 = jax.random.split(key, 3)

  x = jax.random.normal(k_x, (N, C, H, W), dtype=jnp.float32)
  w1 = jax.random.normal(k_w1, (C, C, 3, 3), dtype=jnp.float32) * 0.1  # OIHW
  w2 = jax.random.normal(k_w2, (C, C, 3, 3), dtype=jnp.float32) * 0.1  # OIHW
  # nn.BatchNorm2d default affine init: gamma=1, beta=0.
  g1 = jnp.ones((C,), jnp.float32)
  b1 = jnp.zeros((C,), jnp.float32)
  g2 = jnp.ones((C,), jnp.float32)
  b2 = jnp.zeros((C,), jnp.float32)

  ref = _reference(x, w1, g1, b1, w2, g2, b2)

  # 1) Numerics-validation config: f32 MXU operands + f32 intermediates.
  #    Strictly checks the im2col / padded-layout / BN-stats structure.
  out_f32 = basic_block_pallas(x, w1, g1, b1, w2, g2, b2,
                               mxu_dtype=jnp.float32, act_dtype=jnp.float32)
  out_f32 = jax.block_until_ready(out_f32)
  assert out_f32.shape == (N, C, H, W)
  assert jnp.allclose(out_f32, ref, atol=1e-3, rtol=1e-3), (
      float(jnp.max(jnp.abs(out_f32 - ref))))

  # 2) Production config: bf16 MXU operands + bf16 inter-pass activations
  #    (f32 accumulation, f32 BN stats, f32 residual add).  Compared to the
  #    f32 reference with a mixed-precision tolerance.
  out_bf16 = basic_block_pallas(x, w1, g1, b1, w2, g2, b2,
                                mxu_dtype=jnp.bfloat16, act_dtype=jnp.bfloat16)
  out_bf16 = jax.block_until_ready(out_bf16)
  assert out_bf16.shape == (N, C, H, W)
  assert jnp.allclose(out_bf16, ref, atol=5e-2, rtol=5e-2), (
      float(jnp.max(jnp.abs(out_bf16 - ref))))

  print("KERNEL_OK")
</pallas_src>

<mosaic_0001>
module attributes {stable_mosaic.version = 11 : i64} {
  func.func @_conv1_kernel(%arg0: i32, %arg1: memref<1x324x128xf32, #tpu.memory_space<vmem>>, %arg2: memref<1152x128xf32, #tpu.memory_space<vmem>>, %arg3: memref<324x1xf32, #tpu.memory_space<vmem>>, %arg4: memref<1x324x128xf32, #tpu.memory_space<vmem>>, %arg5: memref<1x2x128xf32, #tpu.memory_space<vmem>>, %arg6: memref<286x1152xf32, #tpu.memory_space<vmem>>) attributes {dimension_semantics = [#tpu.dimension_semantics<parallel>], iteration_bounds = array<i64: 2>, scalar_prefetch = 0 : i64, scratch_operands = 1 : i64, tpu.core_type = #tpu.core_type<tc>, window_params = [{transform_indices = @transform_0, window_bounds = array<i64: 1, 324, 128>}, {pipeline_mode = #tpu.pipeline_mode<synchronous>, transform_indices = @transform_1, window_bounds = array<i64: 1152, 128>}, {pipeline_mode = #tpu.pipeline_mode<synchronous>, transform_indices = @transform_2, window_bounds = array<i64: 324, 1>}, {transform_indices = @transform_3, window_bounds = array<i64: 1, 324, 128>}, {transform_indices = @transform_4, window_bounds = array<i64: 1, 2, 128>}]} {
    %c0 = arith.constant 0 : index
    %c0_0 = arith.constant 0 : index
    %c0_1 = arith.constant 0 : index
    %0 = vector.load %arg1[%c0, %c0_0, %c0_1] : memref<1x324x128xf32, #tpu.memory_space<vmem>>, vector<1x286x128xf32>
    %1 = vector.shape_cast %0 : vector<1x286x128xf32> to vector<286x128xf32>
    %c0_2 = arith.constant 0 : index
    %c0_3 = arith.constant 0 : index
    %2 = vector.load %arg6[%c0_2, %c0_3] : memref<286x1152xf32, #tpu.memory_space<vmem>>, vector<286x128xf32>
    tpu.vector_store %arg6[%c0_2, %c0_3], %1 {strides = array<i32>} : memref<286x1152xf32, #tpu.memory_space<vmem>>, vector<286x128xf32>,
    %c0_4 = arith.constant 0 : index
    %c1 = arith.constant 1 : index
    %c0_5 = arith.constant 0 : index
    %3 = vector.load %arg1[%c0_4, %c1, %c0_5] : memref<1x324x128xf32, #tpu.memory_space<vmem>>, vector<1x286x128xf32>
    %4 = vector.shape_cast %3 : vector<1x286x128xf32> to vector<286x128xf32>
    %c0_6 = arith.constant 0 : index
    %c128 = arith.constant 128 : index
    %5 = vector.load %arg6[%c0_6, %c128] : memref<286x1152xf32, #tpu.memory_space<vmem>>, vector<286x128xf32>
    tpu.vector_store %arg6[%c0_6, %c128], %4 {strides = array<i32>} : memref<286x1152xf32, #tpu.memory_space<vmem>>, vector<286x128xf32>,
    %c0_7 = arith.constant 0 : index
    %c2 = arith.constant 2 : index
    %c0_8 = arith.constant 0 : index
    %6 = vector.load %arg1[%c0_7, %c2, %c0_8] : memref<1x324x128xf32, #tpu.memory_space<vmem>>, vector<1x286x128xf32>
    %7 = vector.shape_cast %6 : vector<1x286x128xf32> to vector<286x128xf32>
    %c0_9 = arith.constant 0 : index
    %c256 = arith.constant 256 : index
    %8 = vector.load %arg6[%c0_9, %c256] : memref<286x1152xf32, #tpu.memory_space<vmem>>, vector<286x128xf32>
    tpu.vector_store %arg6[%c0_9, %c256], %7 {strides = array<i32>} : memref<286x1152xf32, #tpu.memory_space<vmem>>, vector<286x128xf32>,
    %c0_10 = arith.constant 0 : index
    %c18 = arith.constant 18 : index
    %c0_11 = arith.constant 0 : index
    %9 = vector.load %arg1[%c0_10, %c18, %c0_11] : memref<1x324x128xf32, #tpu.memory_space<vmem>>, vector<1x286x128xf32>
    %10 = vector.shape_cast %9 : vector<1x286x128xf32> to vector<286x128xf32>
    %c0_12 = arith.constant 0 : index
    %c384 = arith.constant 384 : index
    %11 = vector.load %arg6[%c0_12, %c384] : memref<286x1152xf32, #tpu.memory_space<vmem>>, vector<286x128xf32>
    tpu.vector_store %arg6[%c0_12, %c384], %10 {strides = array<i32>} : memref<286x1152xf32, #tpu.memory_space<vmem>>, vector<286x128xf32>,
    %c0_13 = arith.constant 0 : index
    %c19 = arith.constant 19 : index
    %c0_14 = arith.constant 0 : index
    %12 = vector.load %arg1[%c0_13, %c19, %c0_14] : memref<1x324x128xf32, #tpu.memory_space<vmem>>, vector<1x286x128xf32>
    %13 = vector.shape_cast %12 : vector<1x286x128xf32> to vector<286x128xf32>
    %c0_15 = arith.constant 0 : index
    %c512 = arith.constant 512 : index
    %14 = vector.load %arg6[%c0_15, %c512] : memref<286x1152xf32, #tpu.memory_space<vmem>>, vector<286x128xf32>
    tpu.vector_store %arg6[%c0_15, %c512], %13 {strides = array<i32>} : memref<286x1152xf32, #tpu.memory_space<vmem>>, vector<286x128xf32>,
    %c0_16 = arith.constant 0 : index
    %c20 = arith.constant 20 : index
    %c0_17 = arith.constant 0 : index
    %15 = vector.load %arg1[%c0_16, %c20, %c0_17] : memref<1x324x128xf32, #tpu.memory_space<vmem>>, vector<1x286x128xf32>
    %16 = vector.shape_cast %15 : vector<1x286x128xf32> to vector<286x128xf32>
    %c0_18 = arith.constant 0 : index
    %c640 = arith.constant 640 : index
    %17 = vector.load %arg6[%c0_18, %c640] : memref<286x1152xf32, #tpu.memory_space<vmem>>, vector<286x128xf32>
    tpu.vector_store %arg6[%c0_18, %c640], %16 {strides = array<i32>} : memref<286x1152xf32, #tpu.memory_space<vmem>>, vector<286x128xf32>,
    %c0_19 = arith.constant 0 : index
    %c36 = arith.constant 36 : index
    %c0_20 = arith.constant 0 : index
    %18 = vector.load %arg1[%c0_19, %c36, %c0_20] : memref<1x324x128xf32, #tpu.memory_space<vmem>>, vector<1x286x128xf32>
    %19 = vector.shape_cast %18 : vector<1x286x128xf32> to vector<286x128xf32>
    %c0_21 = arith.constant 0 : index
    %c768 = arith.constant 768 : index
    %20 = vector.load %arg6[%c0_21, %c768] : memref<286x1152xf32, #tpu.memory_space<vmem>>, vector<286x128xf32>
    tpu.vector_store %arg6[%c0_21, %c768], %19 {strides = array<i32>} : memref<286x1152xf32, #tpu.memory_space<vmem>>, vector<286x128xf32>,
    %c0_22 = arith.constant 0 : index
    %c37 = arith.constant 37 : index
    %c0_23 = arith.constant 0 : index
    %21 = vector.load %arg1[%c0_22, %c37, %c0_23] : memref<1x324x128xf32, #tpu.memory_space<vmem>>, vector<1x286x128xf32>
    %22 = vector.shape_cast %21 : vector<1x286x128xf32> to vector<286x128xf32>
    %c0_24 = arith.constant 0 : index
    %c896 = arith.constant 896 : index
    %23 = vector.load %arg6[%c0_24, %c896] : memref<286x1152xf32, #tpu.memory_space<vmem>>, vector<286x128xf32>
    tpu.vector_store %arg6[%c0_24, %c896], %22 {strides = array<i32>} : memref<286x1152xf32, #tpu.memory_space<vmem>>, vector<286x128xf32>,
    %c0_25 = arith.constant 0 : index
    %c38 = arith.constant 38 : index
    %c0_26 = arith.constant 0 : index
    %24 = vector.load %arg1[%c0_25, %c38, %c0_26] : memref<1x324x128xf32, #tpu.memory_space<vmem>>, vector<1x286x128xf32>
    %25 = vector.shape_cast %24 : vector<1x286x128xf32> to vector<286x128xf32>
    %c0_27 = arith.constant 0 : index
    %c1024 = arith.constant 1024 : index
    %26 = vector.load %arg6[%c0_27, %c1024] : memref<286x1152xf32, #tpu.memory_space<vmem>>, vector<286x128xf32>
    tpu.vector_store %arg6[%c0_27, %c1024], %25 {strides = array<i32>} : memref<286x1152xf32, #tpu.memory_space<vmem>>, vector<286x128xf32>,
    %c0_28 = arith.constant 0 : index
    %c0_29 = arith.constant 0 : index
    %27 = vector.load %arg6[%c0_28, %c0_29] : memref<286x1152xf32, #tpu.memory_space<vmem>>, vector<286x1152xf32>
    %c0_30 = arith.constant 0 : index
    %c0_31 = arith.constant 0 : index
    %28 = vector.load %arg2[%c0_30, %c0_31] : memref<1152x128xf32, #tpu.memory_space<vmem>>, vector<1152x128xf32>
    %cst = arith.constant dense<0.000000e+00> : vector<286x128xf32>
    %29 = tpu.matmul %27, %28, %cst {dimension_numbers = #tpu.dot_dimension_numbers<[1], [0], [0], [1], [0, 0, 1, 1], [], []>} : vector<286x1152xf32>, vector<1152x128xf32>, vector<286x128xf32> -> vector<286x128xf32>
    %c19_32 = arith.constant 19 : index
    %c0_33 = arith.constant 0 : index
    %30 = vector.load %arg3[%c19_32, %c0_33] : memref<324x1xf32, #tpu.memory_space<vmem>>, vector<286x1xf32>
    %31 = vector.broadcast %30 : vector<286x1xf32> to vector<286x128xf32>
    %32 = arith.mulf %29, %31 : vector<286x128xf32>
    %cst_34 = arith.constant dense<0.000000e+00> : vector<128xf32>
    %33 = vector.multi_reduction <add>, %32, %cst_34 [0] : vector<286x128xf32> to vector<128xf32>
    %34 = vector.shape_cast %33 : vector<128xf32> to vector<1x128xf32>
    %c0_35 = arith.constant 0 : index
    %c0_36 = arith.constant 0 : index
    %c0_37 = arith.constant 0 : index
    %35 = vector.load %arg5[%c0_35, %c0_36, %c0_37] : memref<1x2x128xf32, #tpu.memory_space<vmem>>, vector<1x1x128xf32>
    %36 = vector.shape_cast %35 : vector<1x1x128xf32> to vector<1x128xf32>
    %37 = vector.shape_cast %34 : vector<1x128xf32> to vector<1x1x128xf32>
    tpu.vector_store %arg5[%c0_35, %c0_36, %c0_37], %37 {strides = array<i32>} : memref<1x2x128xf32, #tpu.memory_space<vmem>>, vector<1x1x128xf32>,
    %38 = arith.mulf %32, %32 : vector<286x128xf32>
    %cst_38 = arith.constant dense<0.000000e+00> : vector<128xf32>
    %39 = vector.multi_reduction <add>, %38, %cst_38 [0] : vector<286x128xf32> to vector<128xf32>
    %40 = vector.shape_cast %39 : vector<128xf32> to vector<1x128xf32>
    %c0_39 = arith.constant 0 : index
    %c1_40 = arith.constant 1 : index
    %c0_41 = arith.constant 0 : index
    %41 = vector.load %arg5[%c0_39, %c1_40, %c0_41] : memref<1x2x128xf32, #tpu.memory_space<vmem>>, vector<1x1x128xf32>
    %42 = vector.shape_cast %41 : vector<1x1x128xf32> to vector<1x128xf32>
    %43 = vector.shape_cast %40 : vector<1x128xf32> to vector<1x1x128xf32>
    tpu.vector_store %arg5[%c0_39, %c1_40, %c0_41], %43 {strides = array<i32>} : memref<1x2x128xf32, #tpu.memory_space<vmem>>, vector<1x1x128xf32>,
    %c0_42 = arith.constant 0 : index
    %c19_43 = arith.constant 19 : index
    %c0_44 = arith.constant 0 : index
    %44 = vector.load %arg4[%c0_42, %c19_43, %c0_44] : memref<1x324x128xf32, #tpu.memory_space<vmem>>, vector<1x286x128xf32>
    %45 = vector.shape_cast %44 : vector<1x286x128xf32> to vector<286x128xf32>
    %46 = vector.shape_cast %32 : vector<286x128xf32> to vector<1x286x128xf32>
    tpu.vector_store %arg4[%c0_42, %c19_43, %c0_44], %46 {strides = array<i32>} : memref<1x324x128xf32, #tpu.memory_space<vmem>>, vector<1x286x128xf32>,
    %cst_45 = arith.constant 0.000000e+00 : f32
    %47 = vector.broadcast %cst_45 : f32 to vector<19x128xf32>
    %c0_46 = arith.constant 0 : index
    %c0_47 = arith.constant 0 : index
    %c0_48 = arith.constant 0 : index
    %48 = vector.load %arg4[%c0_46, %c0_47, %c0_48] : memref<1x324x128xf32, #tpu.memory_space<vmem>>, vector<1x19x128xf32>
    %49 = vector.shape_cast %48 : vector<1x19x128xf32> to vector<19x128xf32>
    %50 = vector.shape_cast %47 : vector<19x128xf32> to vector<1x19x128xf32>
    tpu.vector_store %arg4[%c0_46, %c0_47, %c0_48], %50 {strides = array<i32>} : memref<1x324x128xf32, #tpu.memory_space<vmem>>, vector<1x19x128xf32>,
    %cst_49 = arith.constant 0.000000e+00 : f32
    %51 = vector.broadcast %cst_49 : f32 to vector<19x128xf32>
    %c0_50 = arith.constant 0 : index
    %c305 = arith.constant 305 : index
    %c0_51 = arith.constant 0 : index
    %52 = vector.load %arg4[%c0_50, %c305, %c0_51] : memref<1x324x128xf32, #tpu.memory_space<vmem>>, vector<1x19x128xf32>
    %53 = vector.shape_cast %52 : vector<1x19x128xf32> to vector<19x128xf32>
    %54 = vector.shape_cast %51 : vector<19x128xf32> to vector<1x19x128xf32>
    tpu.vector_store %arg4[%c0_50, %c305, %c0_51], %54 {strides = array<i32>} : memref<1x324x128xf32, #tpu.memory_space<vmem>>, vector<1x19x128xf32>,
    return
  }
  func.func @transform_0(%arg0: i32) -> (i32, i32, i32) {
    %c0_i32 = arith.constant 0 : i32
    %c0_i32_0 = arith.constant 0 : i32
    %c0_i32_1 = arith.constant 0 : i32
    return %arg0, %c0_i32, %c0_i32_0 : i32, i32, i32
  }
  func.func @transform_1(%arg0: i32) -> (i32, i32) {
    %c0_i32 = arith.constant 0 : i32
    %c0_i32_0 = arith.constant 0 : i32
    %c0_i32_1 = arith.constant 0 : i32
    return %c0_i32, %c0_i32_0 : i32, i32
  }
  func.func @transform_2(%arg0: i32) -> (i32, i32) {
    %c0_i32 = arith.constant 0 : i32
    %c0_i32_0 = arith.constant 0 : i32
    %c0_i32_1 = arith.constant 0 : i32
    return %c0_i32, %c0_i32_0 : i32, i32
  }
  func.func @transform_3(%arg0: i32) -> (i32, i32, i32) {
    %c0_i32 = arith.constant 0 : i32
    %c0_i32_0 = arith.constant 0 : i32
    %c0_i32_1 = arith.constant 0 : i32
    return %arg0, %c0_i32, %c0_i32_0 : i32, i32, i32
  }
  func.func @transform_4(%arg0: i32) -> (i32, i32, i32) {
    %c0_i32 = arith.constant 0 : i32
    %c0_i32_0 = arith.constant 0 : i32
    %c0_i32_1 = arith.constant 0 : i32
    return %arg0, %c0_i32, %c0_i32_0 : i32, i32, i32
  }
}

module attributes {stable_mosaic.version = 11 : i64} {
  func.func @_bn_relu_conv2_kernel(%arg0: i32, %arg1: memref<1x324x128xf32, #tpu.memory_space<vmem>>, %arg2: memref<1x128xf32, #tpu.memory_space<vmem>>, %arg3: memref<1x128xf32, #tpu.memory_space<vmem>>, %arg4: memref<1152x128xf32, #tpu.memory_space<vmem>>, %arg5: memref<324x1xf32, #tpu.memory_space<vmem>>, %arg6: memref<1x324x128xf32, #tpu.memory_space<vmem>>, %arg7: memref<1x2x128xf32, #tpu.memory_space<vmem>>, %arg8: memref<286x1152xf32, #tpu.memory_space<vmem>>) attributes {dimension_semantics = [#tpu.dimension_semantics<parallel>], iteration_bounds = array<i64: 2>, scalar_prefetch = 0 : i64, scratch_operands = 1 : i64, tpu.core_type = #tpu.core_type<tc>, window_params = [{transform_indices = @transform_0, window_bounds = array<i64: 1, 324, 128>}, {pipeline_mode = #tpu.pipeline_mode<synchronous>, transform_indices = @transform_1, window_bounds = array<i64: 1, 128>}, {pipeline_mode = #tpu.pipeline_mode<synchronous>, transform_indices = @transform_2, window_bounds = array<i64: 1, 128>}, {pipeline_mode = #tpu.pipeline_mode<synchronous>, transform_indices = @transform_3, window_bounds = array<i64: 1152, 128>}, {pipeline_mode = #tpu.pipeline_mode<synchronous>, transform_indices = @transform_4, window_bounds = array<i64: 324, 1>}, {transform_indices = @transform_5, window_bounds = array<i64: 1, 324, 128>}, {transform_indices = @transform_6, window_bounds = array<i64: 1, 2, 128>}]} {
    %c0 = arith.constant 0 : index
    %c0_0 = arith.constant 0 : index
    %0 = vector.load %arg2[%c0, %c0_0] : memref<1x128xf32, #tpu.memory_space<vmem>>, vector<1x128xf32>
    %c0_1 = arith.constant 0 : index
    %c0_2 = arith.constant 0 : index
    %1 = vector.load %arg3[%c0_1, %c0_2] : memref<1x128xf32, #tpu.memory_space<vmem>>, vector<1x128xf32>
    %c0_3 = arith.constant 0 : index
    %c0_4 = arith.constant 0 : index
    %c0_5 = arith.constant 0 : index
    %2 = vector.load %arg1[%c0_3, %c0_4, %c0_5] : memref<1x324x128xf32, #tpu.memory_space<vmem>>, vector<1x286x128xf32>
    %3 = vector.shape_cast %2 : vector<1x286x128xf32> to vector<286x128xf32>
    %4 = vector.broadcast %0 : vector<1x128xf32> to vector<286x128xf32>
    %5 = arith.mulf %3, %4 : vector<286x128xf32>
    %6 = vector.broadcast %1 : vector<1x128xf32> to vector<286x128xf32>
    %7 = arith.addf %5, %6 : vector<286x128xf32>
    %cst = arith.constant 0.000000e+00 : f32
    %8 = vector.broadcast %cst : f32 to vector<286x128xf32>
    %9 = arith.maximumf %7, %8 : vector<286x128xf32>
    %c0_6 = arith.constant 0 : index
    %c0_7 = arith.constant 0 : index
    %10 = vector.load %arg5[%c0_6, %c0_7] : memref<324x1xf32, #tpu.memory_space<vmem>>, vector<286x1xf32>
    %11 = vector.broadcast %10 : vector<286x1xf32> to vector<286x128xf32>
    %12 = arith.mulf %9, %11 : vector<286x128xf32>
    %c0_8 = arith.constant 0 : index
    %c0_9 = arith.constant 0 : index
    %13 = vector.load %arg8[%c0_8, %c0_9] : memref<286x1152xf32, #tpu.memory_space<vmem>>, vector<286x128xf32>
    tpu.vector_store %arg8[%c0_8, %c0_9], %12 {strides = array<i32>} : memref<286x1152xf32, #tpu.memory_space<vmem>>, vector<286x128xf32>,
    %c0_10 = arith.constant 0 : index
    %c1 = arith.constant 1 : index
    %c0_11 = arith.constant 0 : index
    %14 = vector.load %arg1[%c0_10, %c1, %c0_11] : memref<1x324x128xf32, #tpu.memory_space<vmem>>, vector<1x286x128xf32>
    %15 = vector.shape_cast %14 : vector<1x286x128xf32> to vector<286x128xf32>
    %16 = vector.broadcast %0 : vector<1x128xf32> to vector<286x128xf32>
    %17 = arith.mulf %15, %16 : vector<286x128xf32>
    %18 = vector.broadcast %1 : vector<1x128xf32> to vector<286x128xf32>
    %19 = arith.addf %17, %18 : vector<286x128xf32>
    %cst_12 = arith.constant 0.000000e+00 : f32
    %20 = vector.broadcast %cst_12 : f32 to vector<286x128xf32>
    %21 = arith.maximumf %19, %20 : vector<286x128xf32>
    %c1_13 = arith.constant 1 : index
    %c0_14 = arith.constant 0 : index
    %22 = vector.load %arg5[%c1_13, %c0_14] : memref<324x1xf32, #tpu.memory_space<vmem>>, vector<286x1xf32>
    %23 = vector.broadcast %22 : vector<286x1xf32> to vector<286x128xf32>
    %24 = arith.mulf %21, %23 : vector<286x128xf32>
    %c0_15 = arith.constant 0 : index
    %c128 = arith.constant 128 : index
    %25 = vector.load %arg8[%c0_15, %c128] : memref<286x1152xf32, #tpu.memory_space<vmem>>, vector<286x128xf32>
    tpu.vector_store %arg8[%c0_15, %c128], %24 {strides = array<i32>} : memref<286x1152xf32, #tpu.memory_space<vmem>>, vector<286x128xf32>,
    %c0_16 = arith.constant 0 : index
    %c2 = arith.constant 2 : index
    %c0_17 = arith.constant 0 : index
    %26 = vector.load %arg1[%c0_16, %c2, %c0_17] : memref<1x324x128xf32, #tpu.memory_space<vmem>>, vector<1x286x128xf32>
    %27 = vector.shape_cast %26 : vector<1x286x128xf32> to vector<286x128xf32>
    %28 = vector.broadcast %0 : vector<1x128xf32> to vector<286x128xf32>
    %29 = arith.mulf %27, %28 : vector<286x128xf32>
    %30 = vector.broadcast %1 : vector<1x128xf32> to vector<286x128xf32>
    %31 = arith.addf %29, %30 : vector<286x128xf32>
    %cst_18 = arith.constant 0.000000e+00 : f32
    %32 = vector.broadcast %cst_18 : f32 to vector<286x128xf32>
    %33 = arith.maximumf %31, %32 : vector<286x128xf32>
    %c2_19 = arith.constant 2 : index
    %c0_20 = arith.constant 0 : index
    %34 = vector.load %arg5[%c2_19, %c0_20] : memref<324x1xf32, #tpu.memory_space<vmem>>, vector<286x1xf32>
    %35 = vector.broadcast %34 : vector<286x1xf32> to vector<286x128xf32>
    %36 = arith.mulf %33, %35 : vector<286x128xf32>
    %c0_21 = arith.constant 0 : index
    %c256 = arith.constant 256 : index
    %37 = vector.load %arg8[%c0_21, %c256] : memref<286x1152xf32, #tpu.memory_space<vmem>>, vector<286x128xf32>
    tpu.vector_store %arg8[%c0_21, %c256], %36 {strides = array<i32>} : memref<286x1152xf32, #tpu.memory_space<vmem>>, vector<286x128xf32>,
    %c0_22 = arith.constant 0 : index
    %c18 = arith.constant 18 : index
    %c0_23 = arith.constant 0 : index
    %38 = vector.load %arg1[%c0_22, %c18, %c0_23] : memref<1x324x128xf32, #tpu.memory_space<vmem>>, vector<1x286x128xf32>
    %39 = vector.shape_cast %38 : vector<1x286x128xf32> to vector<286x128xf32>
    %40 = vector.broadcast %0 : vector<1x128xf32> to vector<286x128xf32>
    %41 = arith.mulf %39, %40 : vector<286x128xf32>
    %42 = vector.broadcast %1 : vector<1x128xf32> to vector<286x128xf32>
    %43 = arith.addf %41, %42 : vector<286x128xf32>
    %cst_24 = arith.constant 0.000000e+00 : f32
    %44 = vector.broadcast %cst_24 : f32 to vector<286x128xf32>
    %45 = arith.maximumf %43, %44 : vector<286x128xf32>
    %c18_25 = arith.constant 18 : index
    %c0_26 = arith.constant 0 : index
    %46 = vector.load %arg5[%c18_25, %c0_26] : memref<324x1xf32, #tpu.memory_space<vmem>>, vector<286x1xf32>
    %47 = vector.broadcast %46 : vector<286x1xf32> to vector<286x128xf32>
    %48 = arith.mulf %45, %47 : vector<286x128xf32>
    %c0_27 = arith.constant 0 : index
    %c384 = arith.constant 384 : index
    %49 = vector.load %arg8[%c0_27, %c384] : memref<286x1152xf32, #tpu.memory_space<vmem>>, vector<286x128xf32>
    tpu.vector_store %arg8[%c0_27, %c384], %48 {strides = array<i32>} : memref<286x1152xf32, #tpu.memory_space<vmem>>, vector<286x128xf32>,
    %c0_28 = arith.constant 0 : index
    %c19 = arith.constant 19 : index
    %c0_29 = arith.constant 0 : index
    %50 = vector.load %arg1[%c0_28, %c19, %c0_29] : memref<1x324x128xf32, #tpu.memory_space<vmem>>, vector<1x286x128xf32>
    %51 = vector.shape_cast %50 : vector<1x286x128xf32> to vector<286x128xf32>
    %52 = vector.broadcast %0 : vector<1x128xf32> to vector<286x128xf32>
    %53 = arith.mulf %51, %52 : vector<286x128xf32>
    %54 = vector.broadcast %1 : vector<1x128xf32> to vector<286x128xf32>
    %55 = arith.addf %53, %54 : vector<286x128xf32>
    %cst_30 = arith.constant 0.000000e+00 : f32
    %56 = vector.broadcast %cst_30 : f32 to vector<286x128xf32>
    %57 = arith.maximumf %55, %56 : vector<286x128xf32>
    %c19_31 = arith.constant 19 : index
    %c0_32 = arith.constant 0 : index
    %58 = vector.load %arg5[%c19_31, %c0_32] : memref<324x1xf32, #tpu.memory_space<vmem>>, vector<286x1xf32>
    %59 = vector.broadcast %58 : vector<286x1xf32> to vector<286x128xf32>
    %60 = arith.mulf %57, %59 : vector<286x128xf32>
    %c0_33 = arith.constant 0 : index
    %c512 = arith.constant 512 : index
    %61 = vector.load %arg8[%c0_33, %c512] : memref<286x1152xf32, #tpu.memory_space<vmem>>, vector<286x128xf32>
    tpu.vector_store %arg8[%c0_33, %c512], %60 {strides = array<i32>} : memref<286x1152xf32, #tpu.memory_space<vmem>>, vector<286x128xf32>,
    %c0_34 = arith.constant 0 : index
    %c20 = arith.constant 20 : index
    %c0_35 = arith.constant 0 : index
    %62 = vector.load %arg1[%c0_34, %c20, %c0_35] : memref<1x324x128xf32, #tpu.memory_space<vmem>>, vector<1x286x128xf32>
    %63 = vector.shape_cast %62 : vector<1x286x128xf32> to vector<286x128xf32>
    %64 = vector.broadcast %0 : vector<1x128xf32> to vector<286x128xf32>
    %65 = arith.mulf %63, %64 : vector<286x128xf32>
    %66 = vector.broadcast %1 : vector<1x128xf32> to vector<286x128xf32>
    %67 = arith.addf %65, %66 : vector<286x128xf32>
    %cst_36 = arith.constant 0.000000e+00 : f32
    %68 = vector.broadcast %cst_36 : f32 to vector<286x128xf32>
    %69 = arith.maximumf %67, %68 : vector<286x128xf32>
    %c20_37 = arith.constant 20 : index
    %c0_38 = arith.constant 0 : index
    %70 = vector.load %arg5[%c20_37, %c0_38] : memref<324x1xf32, #tpu.memory_space<vmem>>, vector<286x1xf32>
    %71 = vector.broadcast %70 : vector<286x1xf32> to vector<286x128xf32>
    %72 = arith.mulf %69, %71 : vector<286x128xf32>
    %c0_39 = arith.constant 0 : index
    %c640 = arith.constant 640 : index
    %73 = vector.load %arg8[%c0_39, %c640] : memref<286x1152xf32, #tpu.memory_space<vmem>>, vector<286x128xf32>
    tpu.vector_store %arg8[%c0_39, %c640], %72 {strides = array<i32>} : memref<286x1152xf32, #tpu.memory_space<vmem>>, vector<286x128xf32>,
    %c0_40 = arith.constant 0 : index
    %c36 = arith.constant 36 : index
    %c0_41 = arith.constant 0 : index
    %74 = vector.load %arg1[%c0_40, %c36, %c0_41] : memref<1x324x128xf32, #tpu.memory_space<vmem>>, vector<1x286x128xf32>
    %75 = vector.shape_cast %74 : vector<1x286x128xf32> to vector<286x128xf32>
    %76 = vector.broadcast %0 : vector<1x128xf32> to vector<286x128xf32>
    %77 = arith.mulf %75, %76 : vector<286x128xf32>
    %78 = vector.broadcast %1 : vector<1x128xf32> to vector<286x128xf32>
    %79 = arith.addf %77, %78 : vector<286x128xf32>
    %cst_42 = arith.constant 0.000000e+00 : f32
    %80 = vector.broadcast %cst_42 : f32 to vector<286x128xf32>
    %81 = arith.maximumf %79, %80 : vector<286x128xf32>
    %c36_43 = arith.constant 36 : index
    %c0_44 = arith.constant 0 : index
    %82 = vector.load %arg5[%c36_43, %c0_44] : memref<324x1xf32, #tpu.memory_space<vmem>>, vector<286x1xf32>
    %83 = vector.broadcast %82 : vector<286x1xf32> to vector<286x128xf32>
    %84 = arith.mulf %81, %83 : vector<286x128xf32>
    %c0_45 = arith.constant 0 : index
    %c768 = arith.constant 768 : index
    %85 = vector.load %arg8[%c0_45, %c768] : memref<286x1152xf32, #tpu.memory_space<vmem>>, vector<286x128xf32>
    tpu.vector_store %arg8[%c0_45, %c768], %84 {strides = array<i32>} : memref<286x1152xf32, #tpu.memory_space<vmem>>, vector<286x128xf32>,
    %c0_46 = arith.constant 0 : index
    %c37 = arith.constant 37 : index
    %c0_47 = arith.constant 0 : index
    %86 = vector.load %arg1[%c0_46, %c37, %c0_47] : memref<1x324x128xf32, #tpu.memory_space<vmem>>, vector<1x286x128xf32>
    %87 = vector.shape_cast %86 : vector<1x286x128xf32> to vector<286x128xf32>
    %88 = vector.broadcast %0 : vector<1x128xf32> to vector<286x128xf32>
    %89 = arith.mulf %87, %88 : vector<286x128xf32>
    %90 = vector.broadcast %1 : vector<1x128xf32> to vector<286x128xf32>
    %91 = arith.addf %89, %90 : vector<286x128xf32>
    %cst_48 = arith.constant 0.000000e+00 : f32
    %92 = vector.broadcast %cst_48 : f32 to vector<286x128xf32>
    %93 = arith.maximumf %91, %92 : vector<286x128xf32>
    %c37_49 = arith.constant 37 : index
    %c0_50 = arith.constant 0 : index
    %94 = vector.load %arg5[%c37_49, %c0_50] : memref<324x1xf32, #tpu.memory_space<vmem>>, vector<286x1xf32>
    %95 = vector.broadcast %94 : vector<286x1xf32> to vector<286x128xf32>
    %96 = arith.mulf %93, %95 : vector<286x128xf32>
    %c0_51 = arith.constant 0 : index
    %c896 = arith.constant 896 : index
    %97 = vector.load %arg8[%c0_51, %c896] : memref<286x1152xf32, #tpu.memory_space<vmem>>, vector<286x128xf32>
    tpu.vector_store %arg8[%c0_51, %c896], %96 {strides = array<i32>} : memref<286x1152xf32, #tpu.memory_space<vmem>>, vector<286x128xf32>,
    %c0_52 = arith.constant 0 : index
    %c38 = arith.constant 38 : index
    %c0_53 = arith.constant 0 : index
    %98 = vector.load %arg1[%c0_52, %c38, %c0_53] : memref<1x324x128xf32, #tpu.memory_space<vmem>>, vector<1x286x128xf32>
    %99 = vector.shape_cast %98 : vector<1x286x128xf32> to vector<286x128xf32>
    %100 = vector.broadcast %0 : vector<1x128xf32> to vector<286x128xf32>
    %101 = arith.mulf %99, %100 : vector<286x128xf32>
    %102 = vector.broadcast %1 : vector<1x128xf32> to vector<286x128xf32>
    %103 = arith.addf %101, %102 : vector<286x128xf32>
    %cst_54 = arith.constant 0.000000e+00 : f32
    %104 = vector.broadcast %cst_54 : f32 to vector<286x128xf32>
    %105 = arith.maximumf %103, %104 : vector<286x128xf32>
    %c38_55 = arith.constant 38 : index
    %c0_56 = arith.constant 0 : index
    %106 = vector.load %arg5[%c38_55, %c0_56] : memref<324x1xf32, #tpu.memory_space<vmem>>, vector<286x1xf32>
    %107 = vector.broadcast %106 : vector<286x1xf32> to vector<286x128xf32>
    %108 = arith.mulf %105, %107 : vector<286x128xf32>
    %c0_57 = arith.constant 0 : index
    %c1024 = arith.constant 1024 : index
    %109 = vector.load %arg8[%c0_57, %c1024] : memref<286x1152xf32, #tpu.memory_space<vmem>>, vector<286x128xf32>
    tpu.vector_store %arg8[%c0_57, %c1024], %108 {strides = array<i32>} : memref<286x1152xf32, #tpu.memory_space<vmem>>, vector<286x128xf32>,
    %c0_58 = arith.constant 0 : index
    %c0_59 = arith.constant 0 : index
    %110 = vector.load %arg8[%c0_58, %c0_59] : memref<286x1152xf32, #tpu.memory_space<vmem>>, vector<286x1152xf32>
    %c0_60 = arith.constant 0 : index
    %c0_61 = arith.constant 0 : index
    %111 = vector.load %arg4[%c0_60, %c0_61] : memref<1152x128xf32, #tpu.memory_space<vmem>>, vector<1152x128xf32>
    %cst_62 = arith.constant dense<0.000000e+00> : vector<286x128xf32>
    %112 = tpu.matmul %110, %111, %cst_62 {dimension_numbers = #tpu.dot_dimension_numbers<[1], [0], [0], [1], [0, 0, 1, 1], [], []>} : vector<286x1152xf32>, vector<1152x128xf32>, vector<286x128xf32> -> vector<286x128xf32>
    %c19_63 = arith.constant 19 : index
    %c0_64 = arith.constant 0 : index
    %113 = vector.load %arg5[%c19_63, %c0_64] : memref<324x1xf32, #tpu.memory_space<vmem>>, vector<286x1xf32>
    %114 = vector.broadcast %113 : vector<286x1xf32> to vector<286x128xf32>
    %115 = arith.mulf %112, %114 : vector<286x128xf32>
    %cst_65 = arith.constant dense<0.000000e+00> : vector<128xf32>
    %116 = vector.multi_reduction <add>, %115, %cst_65 [0] : vector<286x128xf32> to vector<128xf32>
    %117 = vector.shape_cast %116 : vector<128xf32> to vector<1x128xf32>
    %c0_66 = arith.constant 0 : index
    %c0_67 = arith.constant 0 : index
    %c0_68 = arith.constant 0 : index
    %118 = vector.load %arg7[%c0_66, %c0_67, %c0_68] : memref<1x2x128xf32, #tpu.memory_space<vmem>>, vector<1x1x128xf32>
    %119 = vector.shape_cast %118 : vector<1x1x128xf32> to vector<1x128xf32>
    %120 = vector.shape_cast %117 : vector<1x128xf32> to vector<1x1x128xf32>
    tpu.vector_store %arg7[%c0_66, %c0_67, %c0_68], %120 {strides = array<i32>} : memref<1x2x128xf32, #tpu.memory_space<vmem>>, vector<1x1x128xf32>,
    %121 = arith.mulf %115, %115 : vector<286x128xf32>
    %cst_69 = arith.constant dense<0.000000e+00> : vector<128xf32>
    %122 = vector.multi_reduction <add>, %121, %cst_69 [0] : vector<286x128xf32> to vector<128xf32>
    %123 = vector.shape_cast %122 : vector<128xf32> to vector<1x128xf32>
    %c0_70 = arith.constant 0 : index
    %c1_71 = arith.constant 1 : index
    %c0_72 = arith.constant 0 : index
    %124 = vector.load %arg7[%c0_70, %c1_71, %c0_72] : memref<1x2x128xf32, #tpu.memory_space<vmem>>, vector<1x1x128xf32>
    %125 = vector.shape_cast %124 : vector<1x1x128xf32> to vector<1x128xf32>
    %126 = vector.shape_cast %123 : vector<1x128xf32> to vector<1x1x128xf32>
    tpu.vector_store %arg7[%c0_70, %c1_71, %c0_72], %126 {strides = array<i32>} : memref<1x2x128xf32, #tpu.memory_space<vmem>>, vector<1x1x128xf32>,
    %c0_73 = arith.constant 0 : index
    %c19_74 = arith.constant 19 : index
    %c0_75 = arith.constant 0 : index
    %127 = vector.load %arg6[%c0_73, %c19_74, %c0_75] : memref<1x324x128xf32, #tpu.memory_space<vmem>>, vector<1x286x128xf32>
    %128 = vector.shape_cast %127 : vector<1x286x128xf32> to vector<286x128xf32>
    %129 = vector.shape_cast %115 : vector<286x128xf32> to vector<1x286x128xf32>
    tpu.vector_store %arg6[%c0_73, %c19_74, %c0_75], %129 {strides = array<i32>} : memref<1x324x128xf32, #tpu.memory_space<vmem>>, vector<1x286x128xf32>,
    %cst_76 = arith.constant 0.000000e+00 : f32
    %130 = vector.broadcast %cst_76 : f32 to vector<19x128xf32>
    %c0_77 = arith.constant 0 : index
    %c0_78 = arith.constant 0 : index
    %c0_79 = arith.constant 0 : index
    %131 = vector.load %arg6[%c0_77, %c0_78, %c0_79] : memref<1x324x128xf32, #tpu.memory_space<vmem>>, vector<1x19x128xf32>
    %132 = vector.shape_cast %131 : vector<1x19x128xf32> to vector<19x128xf32>
    %133 = vector.shape_cast %130 : vector<19x128xf32> to vector<1x19x128xf32>
    tpu.vector_store %arg6[%c0_77, %c0_78, %c0_79], %133 {strides = array<i32>} : memref<1x324x128xf32, #tpu.memory_space<vmem>>, vector<1x19x128xf32>,
    %cst_80 = arith.constant 0.000000e+00 : f32
    %134 = vector.broadcast %cst_80 : f32 to vector<19x128xf32>
    %c0_81 = arith.constant 0 : index
    %c305 = arith.constant 305 : index
    %c0_82 = arith.constant 0 : index
    %135 = vector.load %arg6[%c0_81, %c305, %c0_82] : memref<1x324x128xf32, #tpu.memory_space<vmem>>, vector<1x19x128xf32>
    %136 = vector.shape_cast %135 : vector<1x19x128xf32> to vector<19x128xf32>
    %137 = vector.shape_cast %134 : vector<19x128xf32> to vector<1x19x128xf32>
    tpu.vector_store %arg6[%c0_81, %c305, %c0_82], %137 {strides = array<i32>} : memref<1x324x128xf32, #tpu.memory_space<vmem>>, vector<1x19x128xf32>,
    return
  }
  func.func @transform_0(%arg0: i32) -> (i32, i32, i32) {
    %c0_i32 = arith.constant 0 : i32
    %c0_i32_0 = arith.constant 0 : i32
    %c0_i32_1 = arith.constant 0 : i32
    return %arg0, %c0_i32, %c0_i32_0 : i32, i32, i32
  }
  func.func @transform_1(%arg0: i32) -> (i32, i32) {
    %c0_i32 = arith.constant 0 : i32
    %c0_i32_0 = arith.constant 0 : i32
    %c0_i32_1 = arith.constant 0 : i32
    return %c0_i32, %c0_i32_0 : i32, i32
  }
  func.func @transform_2(%arg0: i32) -> (i32, i32) {
    %c0_i32 = arith.constant 0 : i32
    %c0_i32_0 = arith.constant 0 : i32
    %c0_i32_1 = arith.constant 0 : i32
    return %c0_i32, %c0_i32_0 : i32, i32
  }
  func.func @transform_3(%arg0: i32) -> (i32, i32) {
    %c0_i32 = arith.constant 0 : i32
    %c0_i32_0 = arith.constant 0 : i32
    %c0_i32_1 = arith.constant 0 : i32
    return %c0_i32, %c0_i32_0 : i32, i32
  }
  func.func @transform_4(%arg0: i32) -> (i32, i32) {
    %c0_i32 = arith.constant 0 : i32
    %c0_i32_0 = arith.constant 0 : i32
    %c0_i32_1 = arith.constant 0 : i32
    return %c0_i32, %c0_i32_0 : i32, i32
  }
  func.func @transform_5(%arg0: i32) -> (i32, i32, i32) {
    %c0_i32 = arith.constant 0 : i32
    %c0_i32_0 = arith.constant 0 : i32
    %c0_i32_1 = arith.constant 0 : i32
    return %arg0, %c0_i32, %c0_i32_0 : i32, i32, i32
  }
  func.func @transform_6(%arg0: i32) -> (i32, i32, i32) {
    %c0_i32 = arith.constant 0 : i32
    %c0_i32_0 = arith.constant 0 : i32
    %c0_i32_1 = arith.constant 0 : i32
    return %arg0, %c0_i32, %c0_i32_0 : i32, i32, i32
  }
}

module attributes {stable_mosaic.version = 11 : i64} {
  func.func @_bn_add_relu_kernel(%arg0: i32, %arg1: memref<1x324x128xf32, #tpu.memory_space<vmem>>, %arg2: memref<1x324x128xf32, #tpu.memory_space<vmem>>, %arg3: memref<1x128xf32, #tpu.memory_space<vmem>>, %arg4: memref<1x128xf32, #tpu.memory_space<vmem>>, %arg5: memref<324x1xf32, #tpu.memory_space<vmem>>, %arg6: memref<1x324x128xf32, #tpu.memory_space<vmem>>) attributes {dimension_semantics = [#tpu.dimension_semantics<parallel>], iteration_bounds = array<i64: 2>, scalar_prefetch = 0 : i64, scratch_operands = 0 : i64, tpu.core_type = #tpu.core_type<tc>, window_params = [{transform_indices = @transform_0, window_bounds = array<i64: 1, 324, 128>}, {transform_indices = @transform_1, window_bounds = array<i64: 1, 324, 128>}, {pipeline_mode = #tpu.pipeline_mode<synchronous>, transform_indices = @transform_2, window_bounds = array<i64: 1, 128>}, {pipeline_mode = #tpu.pipeline_mode<synchronous>, transform_indices = @transform_3, window_bounds = array<i64: 1, 128>}, {pipeline_mode = #tpu.pipeline_mode<synchronous>, transform_indices = @transform_4, window_bounds = array<i64: 324, 1>}, {transform_indices = @transform_5, window_bounds = array<i64: 1, 324, 128>}]} {
    %c0 = arith.constant 0 : index
    %c0_0 = arith.constant 0 : index
    %0 = vector.load %arg3[%c0, %c0_0] : memref<1x128xf32, #tpu.memory_space<vmem>>, vector<1x128xf32>
    %1 = vector.shape_cast %0 : vector<1x128xf32> to vector<1x1x128xf32>
    %c0_1 = arith.constant 0 : index
    %c0_2 = arith.constant 0 : index
    %2 = vector.load %arg4[%c0_1, %c0_2] : memref<1x128xf32, #tpu.memory_space<vmem>>, vector<1x128xf32>
    %3 = vector.shape_cast %2 : vector<1x128xf32> to vector<1x1x128xf32>
    %c0_3 = arith.constant 0 : index
    %c0_4 = arith.constant 0 : index
    %c0_5 = arith.constant 0 : index
    %4 = vector.load %arg1[%c0_3, %c0_4, %c0_5] : memref<1x324x128xf32, #tpu.memory_space<vmem>>, vector<1x324x128xf32>
    %5 = vector.broadcast %1 : vector<1x1x128xf32> to vector<1x324x128xf32>
    %6 = arith.mulf %4, %5 : vector<1x324x128xf32>
    %7 = vector.broadcast %3 : vector<1x1x128xf32> to vector<1x324x128xf32>
    %8 = arith.addf %6, %7 : vector<1x324x128xf32>
    %c0_6 = arith.constant 0 : index
    %c0_7 = arith.constant 0 : index
    %c0_8 = arith.constant 0 : index
    %9 = vector.load %arg2[%c0_6, %c0_7, %c0_8] : memref<1x324x128xf32, #tpu.memory_space<vmem>>, vector<1x324x128xf32>
    %10 = arith.addf %8, %9 : vector<1x324x128xf32>
    %cst = arith.constant 0.000000e+00 : f32
    %11 = vector.broadcast %cst : f32 to vector<1x324x128xf32>
    %12 = arith.maximumf %10, %11 : vector<1x324x128xf32>
    %c0_9 = arith.constant 0 : index
    %c0_10 = arith.constant 0 : index
    %13 = vector.load %arg5[%c0_9, %c0_10] : memref<324x1xf32, #tpu.memory_space<vmem>>, vector<324x1xf32>
    %14 = vector.shape_cast %13 : vector<324x1xf32> to vector<1x324x1xf32>
    %15 = vector.broadcast %14 : vector<1x324x1xf32> to vector<1x324x128xf32>
    %16 = arith.mulf %12, %15 : vector<1x324x128xf32>
    %c0_11 = arith.constant 0 : index
    %c0_12 = arith.constant 0 : index
    %c0_13 = arith.constant 0 : index
    %17 = vector.load %arg6[%c0_11, %c0_12, %c0_13] : memref<1x324x128xf32, #tpu.memory_space<vmem>>, vector<1x324x128xf32>
    tpu.vector_store %arg6[%c0_11, %c0_12, %c0_13], %16 {strides = array<i32>} : memref<1x324x128xf32, #tpu.memory_space<vmem>>, vector<1x324x128xf32>,
    return
  }
  func.func @transform_0(%arg0: i32) -> (i32, i32, i32) {
    %c0_i32 = arith.constant 0 : i32
    %c0_i32_0 = arith.constant 0 : i32
    %c0_i32_1 = arith.constant 0 : i32
    return %arg0, %c0_i32, %c0_i32_0 : i32, i32, i32
  }
  func.func @transform_1(%arg0: i32) -> (i32, i32, i32) {
    %c0_i32 = arith.constant 0 : i32
    %c0_i32_0 = arith.constant 0 : i32
    %c0_i32_1 = arith.constant 0 : i32
    return %arg0, %c0_i32, %c0_i32_0 : i32, i32, i32
  }
  func.func @transform_2(%arg0: i32) -> (i32, i32) {
    %c0_i32 = arith.constant 0 : i32
    %c0_i32_0 = arith.constant 0 : i32
    %c0_i32_1 = arith.constant 0 : i32
    return %c0_i32, %c0_i32_0 : i32, i32
  }
  func.func @transform_3(%arg0: i32) -> (i32, i32) {
    %c0_i32 = arith.constant 0 : i32
    %c0_i32_0 = arith.constant 0 : i32
    %c0_i32_1 = arith.constant 0 : i32
    return %c0_i32, %c0_i32_0 : i32, i32
  }
  func.func @transform_4(%arg0: i32) -> (i32, i32) {
    %c0_i32 = arith.constant 0 : i32
    %c0_i32_0 = arith.constant 0 : i32
    %c0_i32_1 = arith.constant 0 : i32
    return %c0_i32, %c0_i32_0 : i32, i32
  }
  func.func @transform_5(%arg0: i32) -> (i32, i32, i32) {
    %c0_i32 = arith.constant 0 : i32
    %c0_i32_0 = arith.constant 0 : i32
    %c0_i32_1 = arith.constant 0 : i32
    return %arg0, %c0_i32, %c0_i32_0 : i32, i32, i32
  }
}

</mosaic_0001>

<llo_original>
// kernel: basic_block_padded.5
$region0: #{basic_block_padded.5}
  #allocation0 [shape = 'u32[]', space=smem, size = 0x4, offset = 0x4, fixed_abs, tag = 'smem constant byte address 0x4 - core index']
  #allocation1 [shape = 'u32[72,128]{1,0:T(1,128)}', space=vmem, size = 0x9000, scoped, tag = 'internal scratch']
  %s0 = inlined_call_operand.vmem [shape: f32[2,324,128], index: 0, kind: input, shape index: {}, may-alias: {0,5}]
  %s1 = inlined_call_operand.vmem [shape: f32[2,324,128], index: 1, kind: input, shape index: {}]
  %s2 = inlined_call_operand.vmem [shape: f32[1,128], index: 2, kind: input, shape index: {}]
  %s3 = inlined_call_operand.vmem [shape: f32[1,128], index: 3, kind: input, shape index: {}]
  %s4 = inlined_call_operand.vmem [shape: f32[324,1], index: 4, kind: input, shape index: {}]
  %s5 = inlined_call_operand.vmem [shape: f32[2,324,128], index: 5, kind: output, shape index: {}, may-alias: {0,5}]
  %s6 = sld [smem:[#allocation0]]
  $region53: #{basic_block_padded.5} parent=0
    _
  %s8 = ssub.s32 1, %s6
  %s9 = scalar_select 0, %s8, %s6
  loop: start=0, step=1, limit=4
  $region2: #{basic_block_padded.5} parent=0 // loop_pre_header
    _
  $region3: #{basic_block_padded.5} parent=0 // loop_header
    %s11 = sphi 0, %s15
    %p12 = scmp.ge.s32.totalorder %s11, 4
    %s21 = sphi 0, %s23
    %s24 = sphi 0, %s21
    %s25 = sphi 0, %s24
    %s41 = sphi 0, %s25
    %s47 = sphi 0, %s49
    %s50 = sphi 0, %s47
    %s51 = sphi 0, %s50
    %s67 = sphi 0, %s51
    %s71 = sphi 0, %s71
    %s73 = sphi 0, %s71
    %s74 = sphi 0, %s73
    %s88 = sphi 0, %s74
    %s92 = sphi 0, %s92
    %s94 = sphi 0, %s92
    %s95 = sphi 0, %s94
    %s109 = sphi 0, %s95
    %s113 = sphi 0, %s113
    %s115 = sphi 0, %s113
    %s116 = sphi 0, %s115
    %s130 = sphi 0, %s116
    %s136 = sphi 0, %s138
    %s139 = sphi 0, %s136
    %s140 = sphi 0, %s139
    %s156 = sphi 0, %s140
  $region4: #{basic_block_padded.5} parent=0 // loop_header_branch
    %14 = sbr.rel (%p12) target = $region8
  $region5: #{basic_block_padded.5} parent=0 // loop_body
    %s16 = ssub.s32 %s11, 1
    %s17 = ssub.s32 %s11, 2
    %s18 = sadd.s32 %s11, 1
    %s19 = ssub.s32 %s11, %s18
    %p20 = scmp.eq.s32.totalorder %s19, 0
    %s22 = sadd.s32 %s21, 1
    %s23 = scalar_select %p20, %s21, %s22
    %p26 = pneg %p20
    %p27 = scmp.eq.s32.totalorder %s11, 1
    %p28 = por %p26, %p27
    %p29 = scmp.ne.s32.totalorder %s21, %s24
    %p30 = scmp.eq.s32.totalorder %s11, 0
    %p31 = por %p29, %p30
    %p32 = scmp.ne.s32.totalorder %s21, %s24
    %p33 = scmp.eq.s32.totalorder %s16, 1
    %p34 = por %p32, %p33
    %p35 = scmp.ne.s32.totalorder %s24, %s25
    %p36 = scmp.eq.s32.totalorder %s16, 0
    %p37 = por %p35, %p36
    %p38 = scmp.ne.s32.totalorder %s24, %s25
    %p39 = scmp.eq.s32.totalorder %s17, 1
    %p40 = por %p38, %p39
    %p42 = scmp.ne.s32.totalorder %s25, %s41
    %p43 = scmp.eq.s32.totalorder %s17, 0
    %p44 = por %p42, %p43
    %s45 = ssub.s32 %s11, %s18
    %p46 = scmp.eq.s32.totalorder %s45, 0
    %s48 = sadd.s32 %s47, 1
    %s49 = scalar_select %p46, %s47, %s48
    %p52 = pneg %p46
    %p53 = scmp.eq.s32.totalorder %s11, 1
    %p54 = por %p52, %p53
    %p55 = scmp.ne.s32.totalorder %s47, %s50
    %p56 = scmp.eq.s32.totalorder %s11, 0
    %p57 = por %p55, %p56
    %p58 = scmp.ne.s32.totalorder %s47, %s50
    %p59 = scmp.eq.s32.totalorder %s16, 1
    %p60 = por %p58, %p59
    %p61 = scmp.ne.s32.totalorder %s50, %s51
    %p62 = scmp.eq.s32.totalorder %s16, 0
    %p63 = por %p61, %p62
    %p64 = scmp.ne.s32.totalorder %s50, %s51
    %p65 = scmp.eq.s32.totalorder %s17, 1
    %p66 = por %p64, %p65
    %p68 = scmp.ne.s32.totalorder %s51, %s67
    %p69 = scmp.eq.s32.totalorder %s17, 0
    %p70 = por %p68, %p69
    %s72 = sadd.s32 %s71, 1
    %p75 = scmp.eq.s32.totalorder %s11, 1
    %p76 = scmp.ne.s32.totalorder %s71, %s73
    %p77 = scmp.eq.s32.totalorder %s11, 0
    %p78 = por %p76, %p77
    %p79 = scmp.ne.s32.totalorder %s71, %s73
    %p80 = scmp.eq.s32.totalorder %s16, 1
    %p81 = por %p79, %p80
    %p82 = scmp.ne.s32.totalorder %s73, %s74
    %p83 = scmp.eq.s32.totalorder %s16, 0
    %p84 = por %p82, %p83
    %p85 = scmp.ne.s32.totalorder %s73, %s74
    %p86 = scmp.eq.s32.totalorder %s17, 1
    %p87 = por %p85, %p86
    %p89 = scmp.ne.s32.totalorder %s74, %s88
    %p90 = scmp.eq.s32.totalorder %s17, 0
    %p91 = por %p89, %p90
    %s93 = sadd.s32 %s92, 1
    %p96 = scmp.eq.s32.totalorder %s11, 1
    %p97 = scmp.ne.s32.totalorder %s92, %s94
    %p98 = scmp.eq.s32.totalorder %s11, 0
    %p99 = por %p97, %p98
    %p100 = scmp.ne.s32.totalorder %s92, %s94
    %p101 = scmp.eq.s32.totalorder %s16, 1
    %p102 = por %p100, %p101
    %p103 = scmp.ne.s32.totalorder %s94, %s95
    %p104 = scmp.eq.s32.totalorder %s16, 0
    %p105 = por %p103, %p104
    %p106 = scmp.ne.s32.totalorder %s94, %s95
    %p107 = scmp.eq.s32.totalorder %s17, 1
    %p108 = por %p106, %p107
    %p110 = scmp.ne.s32.totalorder %s95, %s109
    %p111 = scmp.eq.s32.totalorder %s17, 0
    %p112 = por %p110, %p111
    %s114 = sadd.s32 %s113, 1
    %p117 = scmp.eq.s32.totalorder %s11, 1
    %p118 = scmp.ne.s32.totalorder %s113, %s115
    %p119 = scmp.eq.s32.totalorder %s11, 0
    %p120 = por %p118, %p119
    %p121 = scmp.ne.s32.totalorder %s113, %s115
    %p122 = scmp.eq.s32.totalorder %s16, 1
    %p123 = por %p121, %p122
    %p124 = scmp.ne.s32.totalorder %s115, %s116
    %p125 = scmp.eq.s32.totalorder %s16, 0
    %p126 = por %p124, %p125
    %p127 = scmp.ne.s32.totalorder %s115, %s116
    %p128 = scmp.eq.s32.totalorder %s17, 1
    %p129 = por %p127, %p128
    %p131 = scmp.ne.s32.totalorder %s116, %s130
    %p132 = scmp.eq.s32.totalorder %s17, 0
    %p133 = por %p131, %p132
    %s134 = ssub.s32 %s11, %s18
    %p135 = scmp.eq.s32.totalorder %s134, 0
    %s137 = sadd.s32 %s136, 1
    %s138 = scalar_select %p135, %s136, %s137
    %p141 = pneg %p135
    %p142 = scmp.eq.s32.totalorder %s11, 1
    %p143 = por %p141, %p142
    %p144 = scmp.ne.s32.totalorder %s136, %s139
    %p145 = scmp.eq.s32.totalorder %s11, 0
    %p146 = por %p144, %p145
    %p147 = scmp.ne.s32.totalorder %s136, %s139
    %p148 = scmp.eq.s32.totalorder %s16, 1
    %p149 = por %p147, %p148
    %p150 = scmp.ne.s32.totalorder %s139, %s140
    %p151 = scmp.eq.s32.totalorder %s16, 0
    %p152 = por %p150, %p151
    %p153 = scmp.ne.s32.totalorder %s139, %s140
    %p154 = scmp.eq.s32.totalorder %s17, 1
    %p155 = por %p153, %p154
    %p157 = scmp.ne.s32.totalorder %s140, %s156
    %p158 = scmp.eq.s32.totalorder %s17, 0
    %p159 = por %p157, %p158
    %p160 = scmp.le.s32.totalorder 1, %s11
    %p161 = scmp.lt.s32.totalorder %s11, 3
    %p162 = pnand %p160, %p161
    %p163 = pneg %p162
    // Predicated region
    $region9: #{basic_block_padded.5} parent=5 // pred_check
      _
    $region10: #{basic_block_padded.5} parent=5 // pred_check_branch
      %165 = sbr.rel (%p162) target = $region12
    $region11: #{basic_block_padded.5} parent=5 // pred_region
      %s166 = ssub.s32 %s11, 1
      // Predicated region
      $region13: #{basic_block_padded.5} parent=11 // pred_check
        %p167 = pneg %p84
      $region14: #{basic_block_padded.5} parent=11 // pred_check_branch
        %169 = sbr.rel (%p167) target = $region16
      $region15: #{basic_block_padded.5} parent=11 // pred_region
        _
      $region16: #{basic_block_padded.5} parent=11 // pred_fallthru
        _
      // Predicated region
      $region17: #{basic_block_padded.5} parent=11 // pred_check
        %p170 = pneg %p105
      $region18: #{basic_block_padded.5} parent=11 // pred_check_branch
        %172 = sbr.rel (%p170) target = $region20
      $region19: #{basic_block_padded.5} parent=11 // pred_region
        _
      $region20: #{basic_block_padded.5} parent=11 // pred_fallthru
        _
      // Predicated region
      $region21: #{basic_block_padded.5} parent=11 // pred_check
        %p173 = pneg %p126
      $region22: #{basic_block_padded.5} parent=11 // pred_check_branch
        %175 = sbr.rel (%p173) target = $region24
      $region23: #{basic_block_padded.5} parent=11 // pred_region
        _
      $region24: #{basic_block_padded.5} parent=11 // pred_fallthru
        _
    $region12: #{basic_block_padded.5} parent=5 // pred_fallthru
      _
    %p176 = scmp.lt.s32.totalorder %s11, 2
    // Predicated region
    $region25: #{basic_block_padded.5} parent=5 // pred_check
      %p177 = pneg %p176
    $region26: #{basic_block_padded.5} parent=5 // pred_check_branch
      %179 = sbr.rel (%p177) target = $region28
    $region27: #{basic_block_padded.5} parent=5 // pred_region
      // Predicated region
      $region29: #{basic_block_padded.5} parent=27 // pred_check
        %p180 = pneg %p31
      $region30: #{basic_block_padded.5} parent=27 // pred_check_branch
        %182 = sbr.rel (%p180) target = $region32
      $region31: #{basic_block_padded.5} parent=27 // pred_region
        %p183 = scmp.lt.s32.totalorder %s11, 1
        %s184 = scalar_select %p183, %s11, 1
        %s185 = smul.addr %s184, 41
        %s186 = smul.addr %s185, 8
        %s187 = scalar_lea.vmem %s0, %s186
      $region32: #{basic_block_padded.5} parent=27 // pred_fallthru
        _
      // Predicated region
      $region33: #{basic_block_padded.5} parent=27 // pred_check
        %p188 = pneg %p57
      $region34: #{basic_block_padded.5} parent=27 // pred_check_branch
        %190 = sbr.rel (%p188) target = $region36
      $region35: #{basic_block_padded.5} parent=27 // pred_region
        %p191 = scmp.lt.s32.totalorder %s11, 1
        %s192 = scalar_select %p191, %s11, 1
        %s193 = smul.addr %s192, 41
        %s194 = smul.addr %s193, 8
        %s195 = scalar_lea.vmem %s1, %s194
      $region36: #{basic_block_padded.5} parent=27 // pred_fallthru
        _
    $region28: #{basic_block_padded.5} parent=5 // pred_fallthru
      _
    %p196 = scmp.le.s32.totalorder 1, %s11
    %p197 = scmp.lt.s32.totalorder %s11, 3
    %p198 = pnand %p196, %p197
    %p199 = pneg %p198
    // Predicated region
    $region37: #{basic_block_padded.5} parent=5 // pred_check
      _
    $region38: #{basic_block_padded.5} parent=5 // pred_check_branch
      %201 = sbr.rel (%p198) target = $region40
    $region39: #{basic_block_padded.5} parent=5 // pred_region
      %s202 = ssub.s32 %s11, 1
      %p203 = scmp.lt.s32.totalorder %s16, 1
      %s204 = scalar_select %p203, %s16, 1
      %s205 = smul.addr %s204, 41
      %s206 = smul.addr %s205, 8
      %s207 = scalar_lea.vmem %s0, %s206
      %p208 = pneg %p37
      %p209 = pneg %p34
      %p210 = scmp.lt.s32.totalorder %s16, 1
      %s211 = scalar_select %p210, %s16, 1
      %s212 = smul.addr %s211, 41
      %s213 = smul.addr %s212, 8
      %s214 = scalar_lea.vmem %s1, %s213
      %p215 = pneg %p63
      %p216 = pneg %p60
      %p217 = pneg %p84
      %p218 = pneg %p81
      %p219 = pneg %p105
      %p220 = pneg %p102
      %p221 = pneg %p126
      %p222 = pneg %p123
      %p223 = pneg %p152
      %p224 = pneg %p149
      %p225 = scmp.lt.s32.totalorder %s16, 1
      %s226 = scalar_select %p225, %s16, 1
      %s227 = smul.addr %s226, 41
      %s228 = smul.addr %s227, 8
      %s229 = scalar_lea.vmem %s5, %s228
      %p230 = scmp.lt.s32.totalorder %s16, 1
      %s231 = scalar_select %p230, %s16, 1
      %s232 = smul.addr %s231, 41
      %s233 = smul.addr %s232, 8
      %s234 = scalar_lea.vmem %s0, %s233
      %p235 = scmp.lt.s32.totalorder %s16, 1
      %s236 = scalar_select %p235, %s16, 1
      %s237 = smul.addr %s236, 41
      %s238 = smul.addr %s237, 8
      %s239 = scalar_lea.vmem %s1, %s238
      %p240 = scmp.lt.s32.totalorder %s16, 1
      %s241 = scalar_select %p240, %s16, 1
      %s242 = smul.addr %s241, 41
      %s243 = smul.addr %s242, 8
      %s244 = scalar_lea.vmem %s5, %s243
      %v245 = vld [vmem:[%s2] sm:$0x1]
      %v246 = vld [vmem:[%s3] sm:$0x1]
      %v247 = vld [vmem:[%s234] sm:$0xff]
      %v248 = vld [vmem:[%s234 + $0x8] sm:$0xff]
      %v249 = vld [vmem:[%s234 + $0x10] sm:$0xff]
      %v250 = vld [vmem:[%s234 + $0x18] sm:$0xff]
      %v251 = vld [vmem:[%s234 + $0x20] sm:$0xff]
      %v252 = vld [vmem:[%s234 + $0x28] sm:$0xff]
      %v253 = vld [vmem:[%s234 + $0x30] sm:$0xff]
      %v254 = vld [vmem:[%s234 + $0x38] sm:$0xff]
      %v255 = vld [vmem:[%s234 + $0x40] sm:$0xff]
      %v256 = vld [vmem:[%s234 + $0x48] sm:$0xff]
      %v257 = vld [vmem:[%s234 + $0x50] sm:$0xff]
      %v258 = vld [vmem:[%s234 + $0x58] sm:$0xff]
      %v259 = vld [vmem:[%s234 + $0x60] sm:$0xff]
      %v260 = vld [vmem:[%s234 + $0x68] sm:$0xff]
      %v261 = vld [vmem:[%s234 + $0x70] sm:$0xff]
      %v262 = vld [vmem:[%s234 + $0x78] sm:$0xff]
      %v263 = vld [vmem:[%s234 + $0x80] sm:$0xff]
      %v264 = vld [vmem:[%s234 + $0x88] sm:$0xff]
      %v265 = vld [vmem:[%s234 + $0x90] sm:$0xff]
      %v266 = vld [vmem:[%s234 + $0x98] sm:$0xff]
      %v267 = vld [vmem:[%s234 + $0xa0] sm:$0xff]
      %v268 = vld [vmem:[%s234 + $0xa8] sm:$0xff]
      %v269 = vld [vmem:[%s234 + $0xb0] sm:$0xff]
      %v270 = vld [vmem:[%s234 + $0xb8] sm:$0xff]
      %v271 = vld [vmem:[%s234 + $0xc0] sm:$0xff]
      %v272 = vld [vmem:[%s234 + $0xc8] sm:$0xff]
      %v273 = vld [vmem:[%s234 + $0xd0] sm:$0xff]
      %v274 = vld [vmem:[%s234 + $0xd8] sm:$0xff]
      %v275 = vld [vmem:[%s234 + $0xe0] sm:$0xff]
      %v276 = vld [vmem:[%s234 + $0xe8] sm:$0xff]
      %v277 = vld [vmem:[%s234 + $0xf0] sm:$0xff]
      %v278 = vld [vmem:[%s234 + $0xf8] sm:$0xff]
      %v279 = vld [vmem:[%s234 + $0x100] sm:$0xff]
      %v280 = vld [vmem:[%s234 + $0x108] sm:$0xff]
      %v281 = vld [vmem:[%s234 + $0x110] sm:$0xff]
      %v282 = vld [vmem:[%s234 + $0x118] sm:$0xff]
      %v283 = vld [vmem:[%s234 + $0x120] sm:$0xff]
      %v284 = vld [vmem:[%s234 + $0x128] sm:$0xff]
      %v285 = vld [vmem:[%s234 + $0x130] sm:$0xff]
      %v286 = vld [vmem:[%s234 + $0x138] sm:$0xff]
      %v287 = vld [vmem:[%s234 + $0x140] sm:$0xf]
      %v289 = vperm.slane %v245, 0
      %v291 = vmul.f32 %v247, %v289
      %v292 = vmul.f32 %v248, %v289
      %v293 = vmul.f32 %v249, %v289
      %v294 = vmul.f32 %v250, %v289
      %v295 = vmul.f32 %v251, %v289
      %v296 = vmul.f32 %v252, %v289
      %v297 = vmul.f32 %v253, %v289
      %v298 = vmul.f32 %v254, %v289
      %v299 = vmul.f32 %v255, %v289
      %v300 = vmul.f32 %v256, %v289
      %v301 = vmul.f32 %v257, %v289
      %v302 = vmul.f32 %v258, %v289
      %v303 = vmul.f32 %v259, %v289
      %v304 = vmul.f32 %v260, %v289
      %v305 = vmul.f32 %v261, %v289
      %v306 = vmul.f32 %v262, %v289
      %v307 = vmul.f32 %v263, %v289
      %v308 = vmul.f32 %v264, %v289
      %v309 = vmul.f32 %v265, %v289
      %v310 = vmul.f32 %v266, %v289
      %v311 = vmul.f32 %v267, %v289
      %v312 = vmul.f32 %v268, %v289
      %v313 = vmul.f32 %v269, %v289
      %v314 = vmul.f32 %v270, %v289
      %v315 = vmul.f32 %v271, %v289
      %v316 = vmul.f32 %v272, %v289
      %v317 = vmul.f32 %v273, %v289
      %v318 = vmul.f32 %v274, %v289
      %v319 = vmul.f32 %v275, %v289
      %v320 = vmul.f32 %v276, %v289
      %v321 = vmul.f32 %v277, %v289
      %v322 = vmul.f32 %v278, %v289
      %v323 = vmul.f32 %v279, %v289
      %v324 = vmul.f32 %v280, %v289
      %v325 = vmul.f32 %v281, %v289
      %v326 = vmul.f32 %v282, %v289
      %v327 = vmul.f32 %v283, %v289
      %v328 = vmul.f32 %v284, %v289
      %v329 = vmul.f32 %v285, %v289
      %v330 = vmul.f32 %v286, %v289
      %v331 = vmul.f32 %v287, %v289
      %v333 = vperm.slane %v246, 0
      %v335 = vadd.f32 %v291, %v333
      %v336 = vadd.f32 %v292, %v333
      %v337 = vadd.f32 %v293, %v333
      %v338 = vadd.f32 %v294, %v333
      %v339 = vadd.f32 %v295, %v333
      %v340 = vadd.f32 %v296, %v333
      %v341 = vadd.f32 %v297, %v333
      %v342 = vadd.f32 %v298, %v333
      %v343 = vadd.f32 %v299, %v333
      %v344 = vadd.f32 %v300, %v333
      %v345 = vadd.f32 %v301, %v333
      %v346 = vadd.f32 %v302, %v333
      %v347 = vadd.f32 %v303, %v333
      %v348 = vadd.f32 %v304, %v333
      %v349 = vadd.f32 %v305, %v333
      %v350 = vadd.f32 %v306, %v333
      %v351 = vadd.f32 %v307, %v333
      %v352 = vadd.f32 %v308, %v333
      %v353 = vadd.f32 %v309, %v333
      %v354 = vadd.f32 %v310, %v333
      %v355 = vadd.f32 %v311, %v333
      %v356 = vadd.f32 %v312, %v333
      %v357 = vadd.f32 %v313, %v333
      %v358 = vadd.f32 %v314, %v333
      %v359 = vadd.f32 %v315, %v333
      %v360 = vadd.f32 %v316, %v333
      %v361 = vadd.f32 %v317, %v333
      %v362 = vadd.f32 %v318, %v333
      %v363 = vadd.f32 %v319, %v333
      %v364 = vadd.f32 %v320, %v333
      %v365 = vadd.f32 %v321, %v333
      %v366 = vadd.f32 %v322, %v333
      %v367 = vadd.f32 %v323, %v333
      %v368 = vadd.f32 %v324, %v333
      %v369 = vadd.f32 %v325, %v333
      %v370 = vadd.f32 %v326, %v333
      %v371 = vadd.f32 %v327, %v333
      %v372 = vadd.f32 %v328, %v333
      %v373 = vadd.f32 %v329, %v333
      %v374 = vadd.f32 %v330, %v333
      %v375 = vadd.f32 %v331, %v333
      %v376 = vld [vmem:[%s239] sm:$0xff]
      %v377 = vld [vmem:[%s239 + $0x8] sm:$0xff]
      %v378 = vld [vmem:[%s239 + $0x10] sm:$0xff]
      %v379 = vld [vmem:[%s239 + $0x18] sm:$0xff]
      %v380 = vld [vmem:[%s239 + $0x20] sm:$0xff]
      %v381 = vld [vmem:[%s239 + $0x28] sm:$0xff]
      %v382 = vld [vmem:[%s239 + $0x30] sm:$0xff]
      %v383 = vld [vmem:[%s239 + $0x38] sm:$0xff]
      %v384 = vld [vmem:[%s239 + $0x40] sm:$0xff]
      %v385 = vld [vmem:[%s239 + $0x48] sm:$0xff]
      %v386 = vld [vmem:[%s239 + $0x50] sm:$0xff]
      %v387 = vld [vmem:[%s239 + $0x58] sm:$0xff]
      %v388 = vld [vmem:[%s239 + $0x60] sm:$0xff]
      %v389 = vld [vmem:[%s239 + $0x68] sm:$0xff]
      %v390 = vld [vmem:[%s239 + $0x70] sm:$0xff]
      %v391 = vld [vmem:[%s239 + $0x78] sm:$0xff]
      %v392 = vld [vmem:[%s239 + $0x80] sm:$0xff]
      %v393 = vld [vmem:[%s239 + $0x88] sm:$0xff]
      %v394 = vld [vmem:[%s239 + $0x90] sm:$0xff]
      %v395 = vld [vmem:[%s239 + $0x98] sm:$0xff]
      %v396 = vld [vmem:[%s239 + $0xa0] sm:$0xff]
      %v397 = vld [vmem:[%s239 + $0xa8] sm:$0xff]
      %v398 = vld [vmem:[%s239 + $0xb0] sm:$0xff]
      %v399 = vld [vmem:[%s239 + $0xb8] sm:$0xff]
      %v400 = vld [vmem:[%s239 + $0xc0] sm:$0xff]
      %v401 = vld [vmem:[%s239 + $0xc8] sm:$0xff]
      %v402 = vld [vmem:[%s239 + $0xd0] sm:$0xff]
      %v403 = vld [vmem:[%s239 + $0xd8] sm:$0xff]
      %v404 = vld [vmem:[%s239 + $0xe0] sm:$0xff]
      %v405 = vld [vmem:[%s239 + $0xe8] sm:$0xff]
      %v406 = vld [vmem:[%s239 + $0xf0] sm:$0xff]
      %v407 = vld [vmem:[%s239 + $0xf8] sm:$0xff]
      %v408 = vld [vmem:[%s239 + $0x100] sm:$0xff]
      %v409 = vld [vmem:[%s239 + $0x108] sm:$0xff]
      %v410 = vld [vmem:[%s239 + $0x110] sm:$0xff]
      %v411 = vld [vmem:[%s239 + $0x118] sm:$0xff]
      %v412 = vld [vmem:[%s239 + $0x120] sm:$0xff]
      %v413 = vld [vmem:[%s239 + $0x128] sm:$0xff]
      %v414 = vld [vmem:[%s239 + $0x130] sm:$0xff]
      %v415 = vld [vmem:[%s239 + $0x138] sm:$0xff]
      %v416 = vld [vmem:[%s239 + $0x140] sm:$0xf]
      %v417 = vadd.f32 %v335, %v376
      %v418 = vadd.f32 %v336, %v377
      %v419 = vadd.f32 %v337, %v378
      %v420 = vadd.f32 %v338, %v379
      %v421 = vadd.f32 %v339, %v380
      %v422 = vadd.f32 %v340, %v381
      %v423 = vadd.f32 %v341, %v382
      %v424 = vadd.f32 %v342, %v383
      %v425 = vadd.f32 %v343, %v384
      %v426 = vadd.f32 %v344, %v385
      %v427 = vadd.f32 %v345, %v386
      %v428 = vadd.f32 %v346, %v387
      %v429 = vadd.f32 %v347, %v388
      %v430 = vadd.f32 %v348, %v389
      %v431 = vadd.f32 %v349, %v390
      %v432 = vadd.f32 %v350, %v391
      %v433 = vadd.f32 %v351, %v392
      %v434 = vadd.f32 %v352, %v393
      %v435 = vadd.f32 %v353, %v394
      %v436 = vadd.f32 %v354, %v395
      %v437 = vadd.f32 %v355, %v396
      %v438 = vadd.f32 %v356, %v397
      %v439 = vadd.f32 %v357, %v398
      %v440 = vadd.f32 %v358, %v399
      %v441 = vadd.f32 %v359, %v400
      %v442 = vadd.f32 %v360, %v401
      %v443 = vadd.f32 %v361, %v402
      %v444 = vadd.f32 %v362, %v403
      %v445 = vadd.f32 %v363, %v404
      %v446 = vadd.f32 %v364, %v405
      %v447 = vadd.f32 %v365, %v406
      %v448 = vadd.f32 %v366, %v407
      %v449 = vadd.f32 %v367, %v408
      %v450 = vadd.f32 %v368, %v409
      %v451 = vadd.f32 %v369, %v410
      %v452 = vadd.f32 %v370, %v411
      %v453 = vadd.f32 %v371, %v412
      %v454 = vadd.f32 %v372, %v413
      %v455 = vadd.f32 %v373, %v414
      %v456 = vadd.f32 %v374, %v415
      %v457 = vadd.f32 %v375, %v416
      %v458 = vmax.f32 %v417, 0.0
      %v459 = vmax.f32 %v418, 0.0
      %v460 = vmax.f32 %v419, 0.0
      %v461 = vmax.f32 %v420, 0.0
      %v462 = vmax.f32 %v421, 0.0
      %v463 = vmax.f32 %v422, 0.0
      %v464 = vmax.f32 %v423, 0.0
      %v465 = vmax.f32 %v424, 0.0
      %v466 = vmax.f32 %v425, 0.0
      %v467 = vmax.f32 %v426, 0.0
      %v468 = vmax.f32 %v427, 0.0
      %v469 = vmax.f32 %v428, 0.0
      %v470 = vmax.f32 %v429, 0.0
      %v471 = vmax.f32 %v430, 0.0
      %v472 = vmax.f32 %v431, 0.0
      %v473 = vmax.f32 %v432, 0.0
      %v474 = vmax.f32 %v433, 0.0
      %v475 = vmax.f32 %v434, 0.0
      %v476 = vmax.f32 %v435, 0.0
      %v477 = vmax.f32 %v436, 0.0
      %v478 = vmax.f32 %v437, 0.0
      %v479 = vmax.f32 %v438, 0.0
      %v480 = vmax.f32 %v439, 0.0
      %v481 = vmax.f32 %v440, 0.0
      %v482 = vmax.f32 %v441, 0.0
      %v483 = vmax.f32 %v442, 0.0
      %v484 = vmax.f32 %v443, 0.0
      %v485 = vmax.f32 %v444, 0.0
      %v486 = vmax.f32 %v445, 0.0
      %v487 = vmax.f32 %v446, 0.0
      %v488 = vmax.f32 %v447, 0.0
      %v489 = vmax.f32 %v448, 0.0
      %v490 = vmax.f32 %v449, 0.0
      %v491 = vmax.f32 %v450, 0.0
      %v492 = vmax.f32 %v451, 0.0
      %v493 = vmax.f32 %v452, 0.0
      %v494 = vmax.f32 %v453, 0.0
      %v495 = vmax.f32 %v454, 0.0
      %v496 = vmax.f32 %v455, 0.0
      %v497 = vmax.f32 %v456, 0.0
      %v498 = vmax.f32 %v457, 0.0
      %v499 = vld [vmem:[%s4] sm:$0xff]
      %v500 = vld [vmem:[%s4 + $0x8] sm:$0xff]
      %v501 = vld [vmem:[%s4 + $0x10] sm:$0xff]
      %v502 = vld [vmem:[%s4 + $0x18] sm:$0xff]
      %v503 = vld [vmem:[%s4 + $0x20] sm:$0xff]
      %v504 = vld [vmem:[%s4 + $0x28] sm:$0xff]
      %v505 = vld [vmem:[%s4 + $0x30] sm:$0xff]
      %v506 = vld [vmem:[%s4 + $0x38] sm:$0xff]
      %v507 = vld [vmem:[%s4 + $0x40] sm:$0xff]
      %v508 = vld [vmem:[%s4 + $0x48] sm:$0xff]
      %v509 = vld [vmem:[%s4 + $0x50] sm:$0xff]
      %v510 = vld [vmem:[%s4 + $0x58] sm:$0xff]
      %v511 = vld [vmem:[%s4 + $0x60] sm:$0xff]
      %v512 = vld [vmem:[%s4 + $0x68] sm:$0xff]
      %v513 = vld [vmem:[%s4 + $0x70] sm:$0xff]
      %v514 = vld [vmem:[%s4 + $0x78] sm:$0xff]
      %v515 = vld [vmem:[%s4 + $0x80] sm:$0xff]
      %v516 = vld [vmem:[%s4 + $0x88] sm:$0xff]
      %v517 = vld [vmem:[%s4 + $0x90] sm:$0xff]
      %v518 = vld [vmem:[%s4 + $0x98] sm:$0xff]
      %v519 = vld [vmem:[%s4 + $0xa0] sm:$0xff]
      %v520 = vld [vmem:[%s4 + $0xa8] sm:$0xff]
      %v521 = vld [vmem:[%s4 + $0xb0] sm:$0xff]
      %v522 = vld [vmem:[%s4 + $0xb8] sm:$0xff]
      %v523 = vld [vmem:[%s4 + $0xc0] sm:$0xff]
      %v524 = vld [vmem:[%s4 + $0xc8] sm:$0xff]
      %v525 = vld [vmem:[%s4 + $0xd0] sm:$0xff]
      %v526 = vld [vmem:[%s4 + $0xd8] sm:$0xff]
      %v527 = vld [vmem:[%s4 + $0xe0] sm:$0xff]
      %v528 = vld [vmem:[%s4 + $0xe8] sm:$0xff]
      %v529 = vld [vmem:[%s4 + $0xf0] sm:$0xff]
      %v530 = vld [vmem:[%s4 + $0xf8] sm:$0xff]
      %v531 = vld [vmem:[%s4 + $0x100] sm:$0xff]
      %v532 = vld [vmem:[%s4 + $0x108] sm:$0xff]
      %v533 = vld [vmem:[%s4 + $0x110] sm:$0xff]
      %v534 = vld [vmem:[%s4 + $0x118] sm:$0xff]
      %v535 = vld [vmem:[%s4 + $0x120] sm:$0xff]
      %v536 = vld [vmem:[%s4 + $0x128] sm:$0xff]
      %v537 = vld [vmem:[%s4 + $0x130] sm:$0xff]
      %v538 = vld [vmem:[%s4 + $0x138] sm:$0xff]
      %v539 = vld [vmem:[%s4 + $0x140] sm:$0xf]
      %541 = vset.pattern.permute.xlu0 0
      %542 = vperm.xlu0 %541, %v499
      %v543 = vpop.permute.xlu0 %542
      %546 = vset.pattern.permute.xlu0 0
      %547 = vperm.xlu0 %546, %v500
      %v548 = vpop.permute.xlu0 %547
      %551 = vset.pattern.permute.xlu0 0
      %552 = vperm.xlu0 %551, %v501
      %v553 = vpop.permute.xlu0 %552
      %556 = vset.pattern.permute.xlu0 0
      %557 = vperm.xlu0 %556, %v502
      %v558 = vpop.permute.xlu0 %557
      %561 = vset.pattern.permute.xlu0 0
      %562 = vperm.xlu0 %561, %v503
      %v563 = vpop.permute.xlu0 %562
      %566 = vset.pattern.permute.xlu0 0
      %567 = vperm.xlu0 %566, %v504
      %v568 = vpop.permute.xlu0 %567
      %571 = vset.pattern.permute.xlu0 0
      %572 = vperm.xlu0 %571, %v505
      %v573 = vpop.permute.xlu0 %572
      %576 = vset.pattern.permute.xlu0 0
      %577 = vperm.xlu0 %576, %v506
      %v578 = vpop.permute.xlu0 %577
      %581 = vset.pattern.permute.xlu0 0
      %582 = vperm.xlu0 %581, %v507
      %v583 = vpop.permute.xlu0 %582
      %586 = vset.pattern.permute.xlu0 0
      %587 = vperm.xlu0 %586, %v508
      %v588 = vpop.permute.xlu0 %587
      %591 = vset.pattern.permute.xlu0 0
      %592 = vperm.xlu0 %591, %v509
      %v593 = vpop.permute.xlu0 %592
      %596 = vset.pattern.permute.xlu0 0
      %597 = vperm.xlu0 %596, %v510
      %v598 = vpop.permute.xlu0 %597
      %601 = vset.pattern.permute.xlu0 0
      %602 = vperm.xlu0 %601, %v511
      %v603 = vpop.permute.xlu0 %602
      %606 = vset.pattern.permute.xlu0 0
      %607 = vperm.xlu0 %606, %v512
      %v608 = vpop.permute.xlu0 %607
      %611 = vset.pattern.permute.xlu0 0
      %612 = vperm.xlu0 %611, %v513
      %v613 = vpop.permute.xlu0 %612
      %616 = vset.pattern.permute.xlu0 0
      %617 = vperm.xlu0 %616, %v514
      %v618 = vpop.permute.xlu0 %617
      %621 = vset.pattern.permute.xlu0 0
      %622 = vperm.xlu0 %621, %v515
      %v623 = vpop.permute.xlu0 %622
      %626 = vset.pattern.permute.xlu0 0
      %627 = vperm.xlu0 %626, %v516
      %v628 = vpop.permute.xlu0 %627
      %631 = vset.pattern.permute.xlu0 0
      %632 = vperm.xlu0 %631, %v517
      %v633 = vpop.permute.xlu0 %632
      %636 = vset.pattern.permute.xlu0 0
      %637 = vperm.xlu0 %636, %v518
      %v638 = vpop.permute.xlu0 %637
      %641 = vset.pattern.permute.xlu0 0
      %642 = vperm.xlu0 %641, %v519
      %v643 = vpop.permute.xlu0 %642
      %646 = vset.pattern.permute.xlu0 0
      %647 = vperm.xlu0 %646, %v520
      %v648 = vpop.permute.xlu0 %647
      %651 = vset.pattern.permute.xlu0 0
      %652 = vperm.xlu0 %651, %v521
      %v653 = vpop.permute.xlu0 %652
      %656 = vset.pattern.permute.xlu0 0
      %657 = vperm.xlu0 %656, %v522
      %v658 = vpop.permute.xlu0 %657
      %661 = vset.pattern.permute.xlu0 0
      %662 = vperm.xlu0 %661, %v523
      %v663 = vpop.permute.xlu0 %662
      %666 = vset.pattern.permute.xlu0 0
      %667 = vperm.xlu0 %666, %v524
      %v668 = vpop.permute.xlu0 %667
      %671 = vset.pattern.permute.xlu0 0
      %672 = vperm.xlu0 %671, %v525
      %v673 = vpop.permute.xlu0 %672
      %676 = vset.pattern.permute.xlu0 0
      %677 = vperm.xlu0 %676, %v526
      %v678 = vpop.permute.xlu0 %677
      %681 = vset.pattern.permute.xlu0 0
      %682 = vperm.xlu0 %681, %v527
      %v683 = vpop.permute.xlu0 %682
      %686 = vset.pattern.permute.xlu0 0
      %687 = vperm.xlu0 %686, %v528
      %v688 = vpop.permute.xlu0 %687
      %691 = vset.pattern.permute.xlu0 0
      %692 = vperm.xlu0 %691, %v529
      %v693 = vpop.permute.xlu0 %692
      %696 = vset.pattern.permute.xlu0 0
      %697 = vperm.xlu0 %696, %v530
      %v698 = vpop.permute.xlu0 %697
      %701 = vset.pattern.permute.xlu0 0
      %702 = vperm.xlu0 %701, %v531
      %v703 = vpop.permute.xlu0 %702
      %706 = vset.pattern.permute.xlu0 0
      %707 = vperm.xlu0 %706, %v532
      %v708 = vpop.permute.xlu0 %707
      %711 = vset.pattern.permute.xlu0 0
      %712 = vperm.xlu0 %711, %v533
      %v713 = vpop.permute.xlu0 %712
      %716 = vset.pattern.permute.xlu0 0
      %717 = vperm.xlu0 %716, %v534
      %v718 = vpop.permute.xlu0 %717
      %721 = vset.pattern.permute.xlu0 0
      %722 = vperm.xlu0 %721, %v535
      %v723 = vpop.permute.xlu0 %722
      %726 = vset.pattern.permute.xlu0 0
      %727 = vperm.xlu0 %726, %v536
      %v728 = vpop.permute.xlu0 %727
      %731 = vset.pattern.permute.xlu0 0
      %732 = vperm.xlu0 %731, %v537
      %v733 = vpop.permute.xlu0 %732
      %736 = vset.pattern.permute.xlu0 0
      %737 = vperm.xlu0 %736, %v538
      %v738 = vpop.permute.xlu0 %737
      %741 = vset.pattern.permute.xlu0 0
      %742 = vperm.xlu0 %741, %v539
      %v743 = vpop.permute.xlu0 %742
      %v745 = vmul.f32 %v458, %v543
      %v746 = vmul.f32 %v459, %v548
      %v747 = vmul.f32 %v460, %v553
      %v748 = vmul.f32 %v461, %v558
      %v749 = vmul.f32 %v462, %v563
      %v750 = vmul.f32 %v463, %v568
      %v751 = vmul.f32 %v464, %v573
      %v752 = vmul.f32 %v465, %v578
      %v753 = vmul.f32 %v466, %v583
      %v754 = vmul.f32 %v467, %v588
      %v755 = vmul.f32 %v468, %v593
      %v756 = vmul.f32 %v469, %v598
      %v757 = vmul.f32 %v470, %v603
      %v758 = vmul.f32 %v471, %v608
      %v759 = vmul.f32 %v472, %v613
      %v760 = vmul.f32 %v473, %v618
      %v761 = vmul.f32 %v474, %v623
      %v762 = vmul.f32 %v475, %v628
      %v763 = vmul.f32 %v476, %v633
      %v764 = vmul.f32 %v477, %v638
      %v765 = vmul.f32 %v478, %v643
      %v766 = vmul.f32 %v479, %v648
      %v767 = vmul.f32 %v480, %v653
      %v768 = vmul.f32 %v481, %v658
      %v769 = vmul.f32 %v482, %v663
      %v770 = vmul.f32 %v483, %v668
      %v771 = vmul.f32 %v484, %v673
      %v772 = vmul.f32 %v485, %v678
      %v773 = vmul.f32 %v486, %v683
      %v774 = vmul.f32 %v487, %v688
      %v775 = vmul.f32 %v488, %v693
      %v776 = vmul.f32 %v489, %v698
      %v777 = vmul.f32 %v490, %v703
      %v778 = vmul.f32 %v491, %v708
      %v779 = vmul.f32 %v492, %v713
      %v780 = vmul.f32 %v493, %v718
      %v781 = vmul.f32 %v494, %v723
      %v782 = vmul.f32 %v495, %v728
      %v783 = vmul.f32 %v496, %v733
      %v784 = vmul.f32 %v497, %v738
      %v785 = vmul.f32 %v498, %v743
      %786 = vst [vmem:[%s244] sm:$0xff] %v745
      %787 = vst [vmem:[%s244 + $0x8] sm:$0xff] %v746
      %788 = vst [vmem:[%s244 + $0x10] sm:$0xff] %v747
      %789 = vst [vmem:[%s244 + $0x18] sm:$0xff] %v748
      %790 = vst [vmem:[%s244 + $0x20] sm:$0xff] %v749
      %791 = vst [vmem:[%s244 + $0x28] sm:$0xff] %v750
      %792 = vst [vmem:[%s244 + $0x30] sm:$0xff] %v751
      %793 = vst [vmem:[%s244 + $0x38] sm:$0xff] %v752
      %794 = vst [vmem:[%s244 + $0x40] sm:$0xff] %v753
      %795 = vst [vmem:[%s244 + $0x48] sm:$0xff] %v754
      %796 = vst [vmem:[%s244 + $0x50] sm:$0xff] %v755
      %797 = vst [vmem:[%s244 + $0x58] sm:$0xff] %v756
      %798 = vst [vmem:[%s244 + $0x60] sm:$0xff] %v757
      %799 = vst [vmem:[%s244 + $0x68] sm:$0xff] %v758
      %800 = vst [vmem:[%s244 + $0x70] sm:$0xff] %v759
      %801 = vst [vmem:[%s244 + $0x78] sm:$0xff] %v760
      %802 = vst [vmem:[%s244 + $0x80] sm:$0xff] %v761
      %803 = vst [vmem:[%s244 + $0x88] sm:$0xff] %v762
      %804 = vst [vmem:[%s244 + $0x90] sm:$0xff] %v763
      %805 = vst [vmem:[%s244 + $0x98] sm:$0xff] %v764
      %806 = vst [vmem:[%s244 + $0xa0] sm:$0xff] %v765
      %807 = vst [vmem:[%s244 + $0xa8] sm:$0xff] %v766
      %808 = vst [vmem:[%s244 + $0xb0] sm:$0xff] %v767
      %809 = vst [vmem:[%s244 + $0xb8] sm:$0xff] %v768
      %810 = vst [vmem:[%s244 + $0xc0] sm:$0xff] %v769
      %811 = vst [vmem:[%s244 + $0xc8] sm:$0xff] %v770
      %812 = vst [vmem:[%s244 + $0xd0] sm:$0xff] %v771
      %813 = vst [vmem:[%s244 + $0xd8] sm:$0xff] %v772
      %814 = vst [vmem:[%s244 + $0xe0] sm:$0xff] %v773
      %815 = vst [vmem:[%s244 + $0xe8] sm:$0xff] %v774
      %816 = vst [vmem:[%s244 + $0xf0] sm:$0xff] %v775
      %817 = vst [vmem:[%s244 + $0xf8] sm:$0xff] %v776
      %818 = vst [vmem:[%s244 + $0x100] sm:$0xff] %v777
      %819 = vst [vmem:[%s244 + $0x108] sm:$0xff] %v778
      %820 = vst [vmem:[%s244 + $0x110] sm:$0xff] %v779
      %821 = vst [vmem:[%s244 + $0x118] sm:$0xff] %v780
      %822 = vst [vmem:[%s244 + $0x120] sm:$0xff] %v781
      %823 = vst [vmem:[%s244 + $0x128] sm:$0xff] %v782
      %824 = vst [vmem:[%s244 + $0x130] sm:$0xff] %v783
      %825 = vst [vmem:[%s244 + $0x138] sm:$0xff] %v784
      %826 = vst [vmem:[%s244 + $0x140] sm:$0xf] %v785
      %p827 = scmp.lt.s32.totalorder %s16, 1
      %s828 = scalar_select %p827, %s16, 1
      %s829 = smul.addr %s828, 41
      %s830 = smul.addr %s829, 8
      %s831 = scalar_lea.vmem %s5, %s830
      // Predicated region
      $region41: #{basic_block_padded.5} parent=39 // pred_check
        %p832 = pneg %p149
      $region42: #{basic_block_padded.5} parent=39 // pred_check_branch
        %834 = sbr.rel (%p832) target = $region44
      $region43: #{basic_block_padded.5} parent=39 // pred_region
        _
      $region44: #{basic_block_padded.5} parent=39 // pred_fallthru
        _
    $region40: #{basic_block_padded.5} parent=5 // pred_fallthru
      _
    %p835 = scmp.le.s32.totalorder 2, %s11
    // Predicated region
    $region45: #{basic_block_padded.5} parent=5 // pred_check
      %p836 = pneg %p835
    $region46: #{basic_block_padded.5} parent=5 // pred_check_branch
      %838 = sbr.rel (%p836) target = $region48
    $region47: #{basic_block_padded.5} parent=5 // pred_region
      %s839 = ssub.s32 %s11, 2
      // Predicated region
      $region49: #{basic_block_padded.5} parent=47 // pred_check
        %p840 = pneg %p155
      $region50: #{basic_block_padded.5} parent=47 // pred_check_branch
        %842 = sbr.rel (%p840) target = $region52
      $region51: #{basic_block_padded.5} parent=47 // pred_region
        %p843 = scmp.lt.s32.totalorder %s17, 1
        %s844 = scalar_select %p843, %s17, 1
        %s845 = smul.addr %s844, 41
        %s846 = smul.addr %s845, 8
        %s847 = scalar_lea.vmem %s5, %s846
      $region52: #{basic_block_padded.5} parent=47 // pred_fallthru
        _
    $region48: #{basic_block_padded.5} parent=5 // pred_fallthru
      _
  $region6: #{basic_block_padded.5} parent=0 // loop_footer
    %s15 = sadd.s32 1, %s11
  $region7: #{basic_block_padded.5} parent=0 // loop_footer_branch
    %10 = sbr.rel target = $region3
  $region8: #{basic_block_padded.5} parent=0 // loop_exit
    _

// kernel: basic_block_padded.3
$region0: #{basic_block_padded.3}
  #allocation0 [shape = 'u32[]', space=smem, size = 0x4, offset = 0x4, fixed_abs, tag = 'smem constant byte address 0x4 - core index']
  #allocation1 [shape = 'u32[72,128]{1,0:T(1,128)}', space=vmem, size = 0x9000, scoped, tag = 'internal scratch']
  #allocation2 [shape = 'f32[286,1152]{1,0:T(8,128)}', space=vmem, size = 0x144000, scoped, tag = 'scratch operand']
  %s0 = inlined_call_operand.vmem [shape: f32[2,324,128], index: 0, kind: input, shape index: {}]
  %s1 = inlined_call_operand.vmem [shape: f32[1152,128], index: 1, kind: input, shape index: {}]
  %s2 = inlined_call_operand.vmem [shape: f32[324,1], index: 2, kind: input, shape index: {}]
  %s3 = inlined_call_operand.vmem [shape: f32[2,324,128], index: 3, kind: output, shape index: {0}]
  %s4 = inlined_call_operand.vmem [shape: f32[2,2,128], index: 4, kind: output, shape index: {1}]
  %5 = xla_tuple %s3, %s4
  %s6 = sld [smem:[#allocation0]]
  $region53: #{basic_block_padded.3} parent=0
    _
  %s8 = ssub.s32 1, %s6
  %s9 = scalar_select 0, %s8, %s6
  loop: start=0, step=1, limit=4
  $region2: #{basic_block_padded.3} parent=0 // loop_pre_header
    _
  $region3: #{basic_block_padded.3} parent=0 // loop_header
    %s11 = sphi 0, %s15
    %p12 = scmp.ge.s32.totalorder %s11, 4
    %s21 = sphi 0, %s23
    %s24 = sphi 0, %s21
    %s25 = sphi 0, %s24
    %s41 = sphi 0, %s25
    %s45 = sphi 0, %s45
    %s47 = sphi 0, %s45
    %s48 = sphi 0, %s47
    %s62 = sphi 0, %s48
    %s66 = sphi 0, %s66
    %s68 = sphi 0, %s66
    %s69 = sphi 0, %s68
    %s83 = sphi 0, %s69
    %s89 = sphi 0, %s91
    %s92 = sphi 0, %s89
    %s93 = sphi 0, %s92
    %s109 = sphi 0, %s93
    %s115 = sphi 0, %s117
    %s118 = sphi 0, %s115
    %s119 = sphi 0, %s118
    %s135 = sphi 0, %s119
  $region4: #{basic_block_padded.3} parent=0 // loop_header_branch
    %14 = sbr.rel (%p12) target = $region8
  $region5: #{basic_block_padded.3} parent=0 // loop_body
    %s16 = ssub.s32 %s11, 1
    %s17 = ssub.s32 %s11, 2
    %s18 = sadd.s32 %s11, 1
    %s19 = ssub.s32 %s11, %s18
    %p20 = scmp.eq.s32.totalorder %s19, 0
    %s22 = sadd.s32 %s21, 1
    %s23 = scalar_select %p20, %s21, %s22
    %p26 = pneg %p20
    %p27 = scmp.eq.s32.totalorder %s11, 1
    %p28 = por %p26, %p27
    %p29 = scmp.ne.s32.totalorder %s21, %s24
    %p30 = scmp.eq.s32.totalorder %s11, 0
    %p31 = por %p29, %p30
    %p32 = scmp.ne.s32.totalorder %s21, %s24
    %p33 = scmp.eq.s32.totalorder %s16, 1
    %p34 = por %p32, %p33
    %p35 = scmp.ne.s32.totalorder %s24, %s25
    %p36 = scmp.eq.s32.totalorder %s16, 0
    %p37 = por %p35, %p36
    %p38 = scmp.ne.s32.totalorder %s24, %s25
    %p39 = scmp.eq.s32.totalorder %s17, 1
    %p40 = por %p38, %p39
    %p42 = scmp.ne.s32.totalorder %s25, %s41
    %p43 = scmp.eq.s32.totalorder %s17, 0
    %p44 = por %p42, %p43
    %s46 = sadd.s32 %s45, 1
    %p49 = scmp.eq.s32.totalorder %s11, 1
    %p50 = scmp.ne.s32.totalorder %s45, %s47
    %p51 = scmp.eq.s32.totalorder %s11, 0
    %p52 = por %p50, %p51
    %p53 = scmp.ne.s32.totalorder %s45, %s47
    %p54 = scmp.eq.s32.totalorder %s16, 1
    %p55 = por %p53, %p54
    %p56 = scmp.ne.s32.totalorder %s47, %s48
    %p57 = scmp.eq.s32.totalorder %s16, 0
    %p58 = por %p56, %p57
    %p59 = scmp.ne.s32.totalorder %s47, %s48
    %p60 = scmp.eq.s32.totalorder %s17, 1
    %p61 = por %p59, %p60
    %p63 = scmp.ne.s32.totalorder %s48, %s62
    %p64 = scmp.eq.s32.totalorder %s17, 0
    %p65 = por %p63, %p64
    %s67 = sadd.s32 %s66, 1
    %p70 = scmp.eq.s32.totalorder %s11, 1
    %p71 = scmp.ne.s32.totalorder %s66, %s68
    %p72 = scmp.eq.s32.totalorder %s11, 0
    %p73 = por %p71, %p72
    %p74 = scmp.ne.s32.totalorder %s66, %s68
    %p75 = scmp.eq.s32.totalorder %s16, 1
    %p76 = por %p74, %p75
    %p77 = scmp.ne.s32.totalorder %s68, %s69
    %p78 = scmp.eq.s32.totalorder %s16, 0
    %p79 = por %p77, %p78
    %p80 = scmp.ne.s32.totalorder %s68, %s69
    %p81 = scmp.eq.s32.totalorder %s17, 1
    %p82 = por %p80, %p81
    %p84 = scmp.ne.s32.totalorder %s69, %s83
    %p85 = scmp.eq.s32.totalorder %s17, 0
    %p86 = por %p84, %p85
    %s87 = ssub.s32 %s11, %s18
    %p88 = scmp.eq.s32.totalorder %s87, 0
    %s90 = sadd.s32 %s89, 1
    %s91 = scalar_select %p88, %s89, %s90
    %p94 = pneg %p88
    %p95 = scmp.eq.s32.totalorder %s11, 1
    %p96 = por %p94, %p95
    %p97 = scmp.ne.s32.totalorder %s89, %s92
    %p98 = scmp.eq.s32.totalorder %s11, 0
    %p99 = por %p97, %p98
    %p100 = scmp.ne.s32.totalorder %s89, %s92
    %p101 = scmp.eq.s32.totalorder %s16, 1
    %p102 = por %p100, %p101
    %p103 = scmp.ne.s32.totalorder %s92, %s93
    %p104 = scmp.eq.s32.totalorder %s16, 0
    %p105 = por %p103, %p104
    %p106 = scmp.ne.s32.totalorder %s92, %s93
    %p107 = scmp.eq.s32.totalorder %s17, 1
    %p108 = por %p106, %p107
    %p110 = scmp.ne.s32.totalorder %s93, %s109
    %p111 = scmp.eq.s32.totalorder %s17, 0
    %p112 = por %p110, %p111
    %s113 = ssub.s32 %s11, %s18
    %p114 = scmp.eq.s32.totalorder %s113, 0
    %s116 = sadd.s32 %s115, 1
    %s117 = scalar_select %p114, %s115, %s116
    %p120 = pneg %p114
    %p121 = scmp.eq.s32.totalorder %s11, 1
    %p122 = por %p120, %p121
    %p123 = scmp.ne.s32.totalorder %s115, %s118
    %p124 = scmp.eq.s32.totalorder %s11, 0
    %p125 = por %p123, %p124
    %p126 = scmp.ne.s32.totalorder %s115, %s118
    %p127 = scmp.eq.s32.totalorder %s16, 1
    %p128 = por %p126, %p127
    %p129 = scmp.ne.s32.totalorder %s118, %s119
    %p130 = scmp.eq.s32.totalorder %s16, 0
    %p131 = por %p129, %p130
    %p132 = scmp.ne.s32.totalorder %s118, %s119
    %p133 = scmp.eq.s32.totalorder %s17, 1
    %p134 = por %p132, %p133
    %p136 = scmp.ne.s32.totalorder %s119, %s135
    %p137 = scmp.eq.s32.totalorder %s17, 0
    %p138 = por %p136, %p137
    %p139 = scmp.le.s32.totalorder 1, %s11
    %p140 = scmp.lt.s32.totalorder %s11, 3
    %p141 = pnand %p139, %p140
    %p142 = pneg %p141
    // Predicated region
    $region9: #{basic_block_padded.3} parent=5 // pred_check
      _
    $region10: #{basic_block_padded.3} parent=5 // pred_check_branch
      %144 = sbr.rel (%p141) target = $region12
    $region11: #{basic_block_padded.3} parent=5 // pred_region
      %s145 = ssub.s32 %s11, 1
      // Predicated region
      $region13: #{basic_block_padded.3} parent=11 // pred_check
        %p146 = pneg %p58
      $region14: #{basic_block_padded.3} parent=11 // pred_check_branch
        %148 = sbr.rel (%p146) target = $region16
      $region15: #{basic_block_padded.3} parent=11 // pred_region
        _
      $region16: #{basic_block_padded.3} parent=11 // pred_fallthru
        _
      // Predicated region
      $region17: #{basic_block_padded.3} parent=11 // pred_check
        %p149 = pneg %p79
      $region18: #{basic_block_padded.3} parent=11 // pred_check_branch
        %151 = sbr.rel (%p149) target = $region20
      $region19: #{basic_block_padded.3} parent=11 // pred_region
        _
      $region20: #{basic_block_padded.3} parent=11 // pred_fallthru
        _
    $region12: #{basic_block_padded.3} parent=5 // pred_fallthru
      _
    %p152 = scmp.lt.s32.totalorder %s11, 2
    // Predicated region
    $region21: #{basic_block_padded.3} parent=5 // pred_check
      %p153 = pneg %p152
    $region22: #{basic_block_padded.3} parent=5 // pred_check_branch
      %155 = sbr.rel (%p153) target = $region24
    $region23: #{basic_block_padded.3} parent=5 // pred_region
      // Predicated region
      $region25: #{basic_block_padded.3} parent=23 // pred_check
        %p156 = pneg %p31
      $region26: #{basic_block_padded.3} parent=23 // pred_check_branch
        %158 = sbr.rel (%p156) target = $region28
      $region27: #{basic_block_padded.3} parent=23 // pred_region
        %p159 = scmp.lt.s32.totalorder %s11, 1
        %s160 = scalar_select %p159, %s11, 1
        %s161 = smul.addr %s160, 41
        %s162 = smul.addr %s161, 8
        %s163 = scalar_lea.vmem %s0, %s162
      $region28: #{basic_block_padded.3} parent=23 // pred_fallthru
        _
    $region24: #{basic_block_padded.3} parent=5 // pred_fallthru
      _
    %p164 = scmp.le.s32.totalorder 1, %s11
    %p165 = scmp.lt.s32.totalorder %s11, 3
    %p166 = pnand %p164, %p165
    %p167 = pneg %p166
    // Predicated region
    $region29: #{basic_block_padded.3} parent=5 // pred_check
      _
    $region30: #{basic_block_padded.3} parent=5 // pred_check_branch
      %169 = sbr.rel (%p166) target = $region32
    $region31: #{basic_block_padded.3} parent=5 // pred_region
      %s170 = ssub.s32 %s11, 1
      %p171 = scmp.lt.s32.totalorder %s16, 1
      %s172 = scalar_select %p171, %s16, 1
      %s173 = smul.addr %s172, 41
      %s174 = smul.addr %s173, 8
      %s175 = scalar_lea.vmem %s0, %s174
      %p176 = pneg %p37
      %p177 = pneg %p34
      %p178 = pneg %p58
      %p179 = pneg %p55
      %p180 = pneg %p79
      %p181 = pneg %p76
      %p182 = pneg %p105
      %p183 = pneg %p102
      %p184 = scmp.lt.s32.totalorder %s16, 1
      %s185 = scalar_select %p184, %s16, 1
      %s186 = smul.addr %s185, 41
      %s187 = smul.addr %s186, 8
      %s188 = scalar_lea.vmem %s3, %s187
      %p189 = pneg %p131
      %p190 = pneg %p128
      %p191 = scmp.lt.s32.totalorder %s16, 1
      %s192 = scalar_select %p191, %s16, 1
      %s193 = smul.addr %s192, 2
      %s194 = scalar_lea.vmem %s4, %s193
      %p195 = scmp.lt.s32.totalorder %s16, 1
      %s196 = scalar_select %p195, %s16, 1
      %s197 = smul.addr %s196, 41
      %s198 = smul.addr %s197, 8
      %s199 = scalar_lea.vmem %s0, %s198
      %p200 = scmp.lt.s32.totalorder %s16, 1
      %s201 = scalar_select %p200, %s16, 1
      %s202 = smul.addr %s201, 41
      %s203 = smul.addr %s202, 8
      %s204 = scalar_lea.vmem %s3, %s203
      %p205 = scmp.lt.s32.totalorder %s16, 1
      %s206 = scalar_select %p205, %s16, 1
      %s207 = smul.addr %s206, 2
      %s208 = scalar_lea.vmem %s4, %s207
      %v209 = vld [vmem:[%s199] sm:$0xff]
      %v210 = vld [vmem:[%s199 + $0x8] sm:$0xff]
      %v211 = vld [vmem:[%s199 + $0x10] sm:$0xff]
      %v212 = vld [vmem:[%s199 + $0x18] sm:$0xff]
      %v213 = vld [vmem:[%s199 + $0x20] sm:$0xff]
      %v214 = vld [vmem:[%s199 + $0x28] sm:$0xff]
      %v215 = vld [vmem:[%s199 + $0x30] sm:$0xff]
      %v216 = vld [vmem:[%s199 + $0x38] sm:$0xff]
      %v217 = vld [vmem:[%s199 + $0x40] sm:$0xff]
      %v218 = vld [vmem:[%s199 + $0x48] sm:$0xff]
      %v219 = vld [vmem:[%s199 + $0x50] sm:$0xff]
      %v220 = vld [vmem:[%s199 + $0x58] sm:$0xff]
      %v221 = vld [vmem:[%s199 + $0x60] sm:$0xff]
      %v222 = vld [vmem:[%s199 + $0x68] sm:$0xff]
      %v223 = vld [vmem:[%s199 + $0x70] sm:$0xff]
      %v224 = vld [vmem:[%s199 + $0x78] sm:$0xff]
      %v225 = vld [vmem:[%s199 + $0x80] sm:$0xff]
      %v226 = vld [vmem:[%s199 + $0x88] sm:$0xff]
      %v227 = vld [vmem:[%s199 + $0x90] sm:$0xff]
      %v228 = vld [vmem:[%s199 + $0x98] sm:$0xff]
      %v229 = vld [vmem:[%s199 + $0xa0] sm:$0xff]
      %v230 = vld [vmem:[%s199 + $0xa8] sm:$0xff]
      %v231 = vld [vmem:[%s199 + $0xb0] sm:$0xff]
      %v232 = vld [vmem:[%s199 + $0xb8] sm:$0xff]
      %v233 = vld [vmem:[%s199 + $0xc0] sm:$0xff]
      %v234 = vld [vmem:[%s199 + $0xc8] sm:$0xff]
      %v235 = vld [vmem:[%s199 + $0xd0] sm:$0xff]
      %v236 = vld [vmem:[%s199 + $0xd8] sm:$0xff]
      %v237 = vld [vmem:[%s199 + $0xe0] sm:$0xff]
      %v238 = vld [vmem:[%s199 + $0xe8] sm:$0xff]
      %v239 = vld [vmem:[%s199 + $0xf0] sm:$0xff]
      %v240 = vld [vmem:[%s199 + $0xf8] sm:$0xff]
      %v241 = vld [vmem:[%s199 + $0x100] sm:$0xff]
      %v242 = vld [vmem:[%s199 + $0x108] sm:$0xff]
      %v243 = vld [vmem:[%s199 + $0x110] sm:$0xff]
      %v244 = vld [vmem:[%s199 + $0x118] sm:$0x3f]
      %245 = vst [vmem:[#allocation2] sm:$0xff] %v209
      %246 = vst [vmem:[#allocation2 + $0x48] sm:$0xff] %v210
      %247 = vst [vmem:[#allocation2 + $0x90] sm:$0xff] %v211
      %248 = vst [vmem:[#allocation2 + $0xd8] sm:$0xff] %v212
      %249 = vst [vmem:[#allocation2 + $0x120] sm:$0xff] %v213
      %250 = vst [vmem:[#allocation2 + $0x168] sm:$0xff] %v214
      %251 = vst [vmem:[#allocation2 + $0x1b0] sm:$0xff] %v215
      %252 = vst [vmem:[#allocation2 + $0x1f8] sm:$0xff] %v216
      %253 = vst [vmem:[#allocation2 + $0x240] sm:$0xff] %v217
      %254 = vst [vmem:[#allocation2 + $0x288] sm:$0xff] %v218
      %255 = vst [vmem:[#allocation2 + $0x2d0] sm:$0xff] %v219
      %256 = vst [vmem:[#allocation2 + $0x318] sm:$0xff] %v220
      %257 = vst [vmem:[#allocation2 + $0x360] sm:$0xff] %v221
      %258 = vst [vmem:[#allocation2 + $0x3a8] sm:$0xff] %v222
      %259 = vst [vmem:[#allocation2 + $0x3f0] sm:$0xff] %v223
      %260 = vst [vmem:[#allocation2 + $0x438] sm:$0xff] %v224
      %261 = vst [vmem:[#allocation2 + $0x480] sm:$0xff] %v225
      %262 = vst [vmem:[#allocation2 + $0x4c8] sm:$0xff] %v226
      %263 = vst [vmem:[#allocation2 + $0x510] sm:$0xff] %v227
      %264 = vst [vmem:[#allocation2 + $0x558] sm:$0xff] %v228
      %265 = vst [vmem:[#allocation2 + $0x5a0] sm:$0xff] %v229
      %266 = vst [vmem:[#allocation2 + $0x5e8] sm:$0xff] %v230
      %267 = vst [vmem:[#allocation2 + $0x630] sm:$0xff] %v231
      %268 = vst [vmem:[#allocation2 + $0x678] sm:$0xff] %v232
      %269 = vst [vmem:[#allocation2 + $0x6c0] sm:$0xff] %v233
      %270 = vst [vmem:[#allocation2 + $0x708] sm:$0xff] %v234
      %271 = vst [vmem:[#allocation2 + $0x750] sm:$0xff] %v235
      %272 = vst [vmem:[#allocation2 + $0x798] sm:$0xff] %v236
      %273 = vst [vmem:[#allocation2 + $0x7e0] sm:$0xff] %v237
      %274 = vst [vmem:[#allocation2 + $0x828] sm:$0xff] %v238
      %275 = vst [vmem:[#allocation2 + $0x870] sm:$0xff] %v239
      %276 = vst [vmem:[#allocation2 + $0x8b8] sm:$0xff] %v240
      %277 = vst [vmem:[#allocation2 + $0x900] sm:$0xff] %v241
      %278 = vst [vmem:[#allocation2 + $0x948] sm:$0xff] %v242
      %279 = vst [vmem:[#allocation2 + $0x990] sm:$0xff] %v243
      %280 = vst [vmem:[#allocation2 + $0x9d8] sm:$0x3f] %v244
      %v281 = vld [vmem:[%s199 + $0x1] sm:$0xff]
      %v282 = vld [vmem:[%s199 + $0x9] sm:$0xff]
      %v283 = vld [vmem:[%s199 + $0x11] sm:$0xff]
      %v284 = vld [vmem:[%s199 + $0x19] sm:$0xff]
      %v285 = vld [vmem:[%s199 + $0x21] sm:$0xff]
      %v286 = vld [vmem:[%s199 + $0x29] sm:$0xff]
      %v287 = vld [vmem:[%s199 + $0x31] sm:$0xff]
      %v288 = vld [vmem:[%s199 + $0x39] sm:$0xff]
      %v289 = vld [vmem:[%s199 + $0x41] sm:$0xff]
      %v290 = vld [vmem:[%s199 + $0x49] sm:$0xff]
      %v291 = vld [vmem:[%s199 + $0x51] sm:$0xff]
      %v292 = vld [vmem:[%s199 + $0x59] sm:$0xff]
      %v293 = vld [vmem:[%s199 + $0x61] sm:$0xff]
      %v294 = vld [vmem:[%s199 + $0x69] sm:$0xff]
      %v295 = vld [vmem:[%s199 + $0x71] sm:$0xff]
      %v296 = vld [vmem:[%s199 + $0x79] sm:$0xff]
      %v297 = vld [vmem:[%s199 + $0x81] sm:$0xff]
      %v298 = vld [vmem:[%s199 + $0x89] sm:$0xff]
      %v299 = vld [vmem:[%s199 + $0x91] sm:$0xff]
      %v300 = vld [vmem:[%s199 + $0x99] sm:$0xff]
      %v301 = vld [vmem:[%s199 + $0xa1] sm:$0xff]
      %v302 = vld [vmem:[%s199 + $0xa9] sm:$0xff]
      %v303 = vld [vmem:[%s199 + $0xb1] sm:$0xff]
      %v304 = vld [vmem:[%s199 + $0xb9] sm:$0xff]
      %v305 = vld [vmem:[%s199 + $0xc1] sm:$0xff]
      %v306 = vld [vmem:[%s199 + $0xc9] sm:$0xff]
      %v307 = vld [vmem:[%s199 + $0xd1] sm:$0xff]
      %v308 = vld [vmem:[%s199 + $0xd9] sm:$0xff]
      %v309 = vld [vmem:[%s199 + $0xe1] sm:$0xff]
      %v310 = vld [vmem:[%s199 + $0xe9] sm:$0xff]
      %v311 = vld [vmem:[%s199 + $0xf1] sm:$0xff]
      %v312 = vld [vmem:[%s199 + $0xf9] sm:$0xff]
      %v313 = vld [vmem:[%s199 + $0x101] sm:$0xff]
      %v314 = vld [vmem:[%s199 + $0x109] sm:$0xff]
      %v315 = vld [vmem:[%s199 + $0x111] sm:$0xff]
      %v316 = vld [vmem:[%s199 + $0x119] sm:$0x3f]
      %317 = vst [vmem:[#allocation2 + $0x8] sm:$0xff] %v281
      %318 = vst [vmem:[#allocation2 + $0x50] sm:$0xff] %v282
      %319 = vst [vmem:[#allocation2 + $0x98] sm:$0xff] %v283
      %320 = vst [vmem:[#allocation2 + $0xe0] sm:$0xff] %v284
      %321 = vst [vmem:[#allocation2 + $0x128] sm:$0xff] %v285
      %322 = vst [vmem:[#allocation2 + $0x170] sm:$0xff] %v286
      %323 = vst [vmem:[#allocation2 + $0x1b8] sm:$0xff] %v287
      %324 = vst [vmem:[#allocation2 + $0x200] sm:$0xff] %v288
      %325 = vst [vmem:[#allocation2 + $0x248] sm:$0xff] %v289
      %326 = vst [vmem:[#allocation2 + $0x290] sm:$0xff] %v290
      %327 = vst [vmem:[#allocation2 + $0x2d8] sm:$0xff] %v291
      %328 = vst [vmem:[#allocation2 + $0x320] sm:$0xff] %v292
      %329 = vst [vmem:[#allocation2 + $0x368] sm:$0xff] %v293
      %330 = vst [vmem:[#allocation2 + $0x3b0] sm:$0xff] %v294
      %331 = vst [vmem:[#allocation2 + $0x3f8] sm:$0xff] %v295
      %332 = vst [vmem:[#allocation2 + $0x440] sm:$0xff] %v296
      %333 = vst [vmem:[#allocation2 + $0x488] sm:$0xff] %v297
      %334 = vst [vmem:[#allocation2 + $0x4d0] sm:$0xff] %v298
      %335 = vst [vmem:[#allocation2 + $0x518] sm:$0xff] %v299
      %336 = vst [vmem:[#allocation2 + $0x560] sm:$0xff] %v300
      %337 = vst [vmem:[#allocation2 + $0x5a8] sm:$0xff] %v301
      %338 = vst [vmem:[#allocation2 + $0x5f0] sm:$0xff] %v302
      %339 = vst [vmem:[#allocation2 + $0x638] sm:$0xff] %v303
      %340 = vst [vmem:[#allocation2 + $0x680] sm:$0xff] %v304
      %341 = vst [vmem:[#allocation2 + $0x6c8] sm:$0xff] %v305
      %342 = vst [vmem:[#allocation2 + $0x710] sm:$0xff] %v306
      %343 = vst [vmem:[#allocation2 + $0x758] sm:$0xff] %v307
      %344 = vst [vmem:[#allocation2 + $0x7a0] sm:$0xff] %v308
      %345 = vst [vmem:[#allocation2 + $0x7e8] sm:$0xff] %v309
      %346 = vst [vmem:[#allocation2 + $0x830] sm:$0xff] %v310
      %347 = vst [vmem:[#allocation2 + $0x878] sm:$0xff] %v311
      %348 = vst [vmem:[#allocation2 + $0x8c0] sm:$0xff] %v312
      %349 = vst [vmem:[#allocation2 + $0x908] sm:$0xff] %v313
      %350 = vst [vmem:[#allocation2 + $0x950] sm:$0xff] %v314
      %351 = vst [vmem:[#allocation2 + $0x998] sm:$0xff] %v315
      %352 = vst [vmem:[#allocation2 + $0x9e0] sm:$0x3f] %v316
      %v353 = vld [vmem:[%s199 + $0x2] sm:$0xff]
      %v354 = vld [vmem:[%s199 + $0xa] sm:$0xff]
      %v355 = vld [vmem:[%s199 + $0x12] sm:$0xff]
      %v356 = vld [vmem:[%s199 + $0x1a] sm:$0xff]
      %v357 = vld [vmem:[%s199 + $0x22] sm:$0xff]
      %v358 = vld [vmem:[%s199 + $0x2a] sm:$0xff]
      %v359 = vld [vmem:[%s199 + $0x32] sm:$0xff]
      %v360 = vld [vmem:[%s199 + $0x3a] sm:$0xff]
      %v361 = vld [vmem:[%s199 + $0x42] sm:$0xff]
      %v362 = vld [vmem:[%s199 + $0x4a] sm:$0xff]
      %v363 = vld [vmem:[%s199 + $0x52] sm:$0xff]
      %v364 = vld [vmem:[%s199 + $0x5a] sm:$0xff]
      %v365 = vld [vmem:[%s199 + $0x62] sm:$0xff]
      %v366 = vld [vmem:[%s199 + $0x6a] sm:$0xff]
      %v367 = vld [vmem:[%s199 + $0x72] sm:$0xff]
      %v368 = vld [vmem:[%s199 + $0x7a] sm:$0xff]
      %v369 = vld [vmem:[%s199 + $0x82] sm:$0xff]
      %v370 = vld [vmem:[%s199 + $0x8a] sm:$0xff]
      %v371 = vld [vmem:[%s199 + $0x92] sm:$0xff]
      %v372 = vld [vmem:[%s199 + $0x9a] sm:$0xff]
      %v373 = vld [vmem:[%s199 + $0xa2] sm:$0xff]
      %v374 = vld [vmem:[%s199 + $0xaa] sm:$0xff]
      %v375 = vld [vmem:[%s199 + $0xb2] sm:$0xff]
      %v376 = vld [vmem:[%s199 + $0xba] sm:$0xff]
      %v377 = vld [vmem:[%s199 + $0xc2] sm:$0xff]
      %v378 = vld [vmem:[%s199 + $0xca] sm:$0xff]
      %v379 = vld [vmem:[%s199 + $0xd2] sm:$0xff]
      %v380 = vld [vmem:[%s199 + $0xda] sm:$0xff]
      %v381 = vld [vmem:[%s199 + $0xe2] sm:$0xff]
      %v382 = vld [vmem:[%s199 + $0xea] sm:$0xff]
      %v383 = vld [vmem:[%s199 + $0xf2] sm:$0xff]
      %v384 = vld [vmem:[%s199 + $0xfa] sm:$0xff]
      %v385 = vld [vmem:[%s199 + $0x102] sm:$0xff]
      %v386 = vld [vmem:[%s199 + $0x10a] sm:$0xff]
      %v387 = vld [vmem:[%s199 + $0x112] sm:$0xff]
      %v388 = vld [vmem:[%s199 + $0x11a] sm:$0x3f]
      %389 = vst [vmem:[#allocation2 + $0x10] sm:$0xff] %v353
      %390 = vst [vmem:[#allocation2 + $0x58] sm:$0xff] %v354
      %391 = vst [vmem:[#allocation2 + $0xa0] sm:$0xff] %v355
      %392 = vst [vmem:[#allocation2 + $0xe8] sm:$0xff] %v356
      %393 = vst [vmem:[#allocation2 + $0x130] sm:$0xff] %v357
      %394 = vst [vmem:[#allocation2 + $0x178] sm:$0xff] %v358
      %395 = vst [vmem:[#allocation2 + $0x1c0] sm:$0xff] %v359
      %396 = vst [vmem:[#allocation2 + $0x208] sm:$0xff] %v360
      %397 = vst [vmem:[#allocation2 + $0x250] sm:$0xff] %v361
      %398 = vst [vmem:[#allocation2 + $0x298] sm:$0xff] %v362
      %399 = vst [vmem:[#allocation2 + $0x2e0] sm:$0xff] %v363
      %400 = vst [vmem:[#allocation2 + $0x328] sm:$0xff] %v364
      %401 = vst [vmem:[#allocation2 + $0x370] sm:$0xff] %v365
      %402 = vst [vmem:[#allocation2 + $0x3b8] sm:$0xff] %v366
      %403 = vst [vmem:[#allocation2 + $0x400] sm:$0xff] %v367
      %404 = vst [vmem:[#allocation2 + $0x448] sm:$0xff] %v368
      %405 = vst [vmem:[#allocation2 + $0x490] sm:$0xff] %v369
      %406 = vst [vmem:[#allocation2 + $0x4d8] sm:$0xff] %v370
      %407 = vst [vmem:[#allocation2 + $0x520] sm:$0xff] %v371
      %408 = vst [vmem:[#allocation2 + $0x568] sm:$0xff] %v372
      %409 = vst [vmem:[#allocation2 + $0x5b0] sm:$0xff] %v373
      %410 = vst [vmem:[#allocation2 + $0x5f8] sm:$0xff] %v374
      %411 = vst [vmem:[#allocation2 + $0x640] sm:$0xff] %v375
      %412 = vst [vmem:[#allocation2 + $0x688] sm:$0xff] %v376
      %413 = vst [vmem:[#allocation2 + $0x6d0] sm:$0xff] %v377
      %414 = vst [vmem:[#allocation2 + $0x718] sm:$0xff] %v378
      %415 = vst [vmem:[#allocation2 + $0x760] sm:$0xff] %v379
      %416 = vst [vmem:[#allocation2 + $0x7a8] sm:$0xff] %v380
      %417 = vst [vmem:[#allocation2 + $0x7f0] sm:$0xff] %v381
      %418 = vst [vmem:[#allocation2 + $0x838] sm:$0xff] %v382
      %419 = vst [vmem:[#allocation2 + $0x880] sm:$0xff] %v383
      %420 = vst [vmem:[#allocation2 + $0x8c8] sm:$0xff] %v384
      %421 = vst [vmem:[#allocation2 + $0x910] sm:$0xff] %v385
      %422 = vst [vmem:[#allocation2 + $0x958] sm:$0xff] %v386
      %423 = vst [vmem:[#allocation2 + $0x9a0] sm:$0xff] %v387
      %424 = vst [vmem:[#allocation2 + $0x9e8] sm:$0x3f] %v388
      %v425 = vld [vmem:[%s199 + $0x12] sm:$0xff]
      %v426 = vld [vmem:[%s199 + $0x1a] sm:$0xff]
      %v427 = vld [vmem:[%s199 + $0x22] sm:$0xff]
      %v428 = vld [vmem:[%s199 + $0x2a] sm:$0xff]
      %v429 = vld [vmem:[%s199 + $0x32] sm:$0xff]
      %v430 = vld [vmem:[%s199 + $0x3a] sm:$0xff]
      %v431 = vld [vmem:[%s199 + $0x42] sm:$0xff]
      %v432 = vld [vmem:[%s199 + $0x4a] sm:$0xff]
      %v433 = vld [vmem:[%s199 + $0x52] sm:$0xff]
      %v434 = vld [vmem:[%s199 + $0x5a] sm:$0xff]
      %v435 = vld [vmem:[%s199 + $0x62] sm:$0xff]
      %v436 = vld [vmem:[%s199 + $0x6a] sm:$0xff]
      %v437 = vld [vmem:[%s199 + $0x72] sm:$0xff]
      %v438 = vld [vmem:[%s199 + $0x7a] sm:$0xff]
      %v439 = vld [vmem:[%s199 + $0x82] sm:$0xff]
      %v440 = vld [vmem:[%s199 + $0x8a] sm:$0xff]
      %v441 = vld [vmem:[%s199 + $0x92] sm:$0xff]
      %v442 = vld [vmem:[%s199 + $0x9a] sm:$0xff]
      %v443 = vld [vmem:[%s199 + $0xa2] sm:$0xff]
      %v444 = vld [vmem:[%s199 + $0xaa] sm:$0xff]
      %v445 = vld [vmem:[%s199 + $0xb2] sm:$0xff]
      %v446 = vld [vmem:[%s199 + $0xba] sm:$0xff]
      %v447 = vld [vmem:[%s199 + $0xc2] sm:$0xff]
      %v448 = vld [vmem:[%s199 + $0xca] sm:$0xff]
      %v449 = vld [vmem:[%s199 + $0xd2] sm:$0xff]
      %v450 = vld [vmem:[%s199 + $0xda] sm:$0xff]
      %v451 = vld [vmem:[%s199 + $0xe2] sm:$0xff]
      %v452 = vld [vmem:[%s199 + $0xea] sm:$0xff]
      %v453 = vld [vmem:[%s199 + $0xf2] sm:$0xff]
      %v454 = vld [vmem:[%s199 + $0xfa] sm:$0xff]
      %v455 = vld [vmem:[%s199 + $0x102] sm:$0xff]
      %v456 = vld [vmem:[%s199 + $0x10a] sm:$0xff]
      %v457 = vld [vmem:[%s199 + $0x112] sm:$0xff]
      %v458 = vld [vmem:[%s199 + $0x11a] sm:$0xff]
      %v459 = vld [vmem:[%s199 + $0x122] sm:$0xff]
      %v460 = vld [vmem:[%s199 + $0x12a] sm:$0x3f]
      %461 = vst [vmem:[#allocation2 + $0x18] sm:$0xff] %v425
      %462 = vst [vmem:[#allocation2 + $0x60] sm:$0xff] %v426
      %463 = vst [vmem:[#allocation2 + $0xa8] sm:$0xff] %v427
      %464 = vst [vmem:[#allocation2 + $0xf0] sm:$0xff] %v428
      %465 = vst [vmem:[#allocation2 + $0x138] sm:$0xff] %v429
      %466 = vst [vmem:[#allocation2 + $0x180] sm:$0xff] %v430
      %467 = vst [vmem:[#allocation2 + $0x1c8] sm:$0xff] %v431
      %468 = vst [vmem:[#allocation2 + $0x210] sm:$0xff] %v432
      %469 = vst [vmem:[#allocation2 + $0x258] sm:$0xff] %v433
      %470 = vst [vmem:[#allocation2 + $0x2a0] sm:$0xff] %v434
      %471 = vst [vmem:[#allocation2 + $0x2e8] sm:$0xff] %v435
      %472 = vst [vmem:[#allocation2 + $0x330] sm:$0xff] %v436
      %473 = vst [vmem:[#allocation2 + $0x378] sm:$0xff] %v437
      %474 = vst [vmem:[#allocation2 + $0x3c0] sm:$0xff] %v438
      %475 = vst [vmem:[#allocation2 + $0x408] sm:$0xff] %v439
      %476 = vst [vmem:[#allocation2 + $0x450] sm:$0xff] %v440
      %477 = vst [vmem:[#allocation2 + $0x498] sm:$0xff] %v441
      %478 = vst [vmem:[#allocation2 + $0x4e0] sm:$0xff] %v442
      %479 = vst [vmem:[#allocation2 + $0x528] sm:$0xff] %v443
      %480 = vst [vmem:[#allocation2 + $0x570] sm:$0xff] %v444
      %481 = vst [vmem:[#allocation2 + $0x5b8] sm:$0xff] %v445
      %482 = vst [vmem:[#allocation2 + $0x600] sm:$0xff] %v446
      %483 = vst [vmem:[#allocation2 + $0x648] sm:$0xff] %v447
      %484 = vst [vmem:[#allocation2 + $0x690] sm:$0xff] %v448
      %485 = vst [vmem:[#allocation2 + $0x6d8] sm:$0xff] %v449
      %486 = vst [vmem:[#allocation2 + $0x720] sm:$0xff] %v450
      %487 = vst [vmem:[#allocation2 + $0x768] sm:$0xff] %v451
      %488 = vst [vmem:[#allocation2 + $0x7b0] sm:$0xff] %v452
      %489 = vst [vmem:[#allocation2 + $0x7f8] sm:$0xff] %v453
      %490 = vst [vmem:[#allocation2 + $0x840] sm:$0xff] %v454
      %491 = vst [vmem:[#allocation2 + $0x888] sm:$0xff] %v455
      %492 = vst [vmem:[#allocation2 + $0x8d0] sm:$0xff] %v456
      %493 = vst [vmem:[#allocation2 + $0x918] sm:$0xff] %v457
      %494 = vst [vmem:[#allocation2 + $0x960] sm:$0xff] %v458
      %495 = vst [vmem:[#allocation2 + $0x9a8] sm:$0xff] %v459
      %496 = vst [vmem:[#allocation2 + $0x9f0] sm:$0x3f] %v460
      %v497 = vld [vmem:[%s199 + $0x13] sm:$0xff]
      %v498 = vld [vmem:[%s199 + $0x1b] sm:$0xff]
      %v499 = vld [vmem:[%s199 + $0x23] sm:$0xff]
      %v500 = vld [vmem:[%s199 + $0x2b] sm:$0xff]
      %v501 = vld [vmem:[%s199 + $0x33] sm:$0xff]
      %v502 = vld [vmem:[%s199 + $0x3b] sm:$0xff]
      %v503 = vld [vmem:[%s199 + $0x43] sm:$0xff]
      %v504 = vld [vmem:[%s199 + $0x4b] sm:$0xff]
      %v505 = vld [vmem:[%s199 + $0x53] sm:$0xff]
      %v506 = vld [vmem:[%s199 + $0x5b] sm:$0xff]
      %v507 = vld [vmem:[%s199 + $0x63] sm:$0xff]
      %v508 = vld [vmem:[%s199 + $0x6b] sm:$0xff]
      %v509 = vld [vmem:[%s199 + $0x73] sm:$0xff]
      %v510 = vld [vmem:[%s199 + $0x7b] sm:$0xff]
      %v511 = vld [vmem:[%s199 + $0x83] sm:$0xff]
      %v512 = vld [vmem:[%s199 + $0x8b] sm:$0xff]
      %v513 = vld [vmem:[%s199 + $0x93] sm:$0xff]
      %v514 = vld [vmem:[%s199 + $0x9b] sm:$0xff]
      %v515 = vld [vmem:[%s199 + $0xa3] sm:$0xff]
      %v516 = vld [vmem:[%s199 + $0xab] sm:$0xff]
      %v517 = vld [vmem:[%s199 + $0xb3] sm:$0xff]
      %v518 = vld [vmem:[%s199 + $0xbb] sm:$0xff]
      %v519 = vld [vmem:[%s199 + $0xc3] sm:$0xff]
      %v520 = vld [vmem:[%s199 + $0xcb] sm:$0xff]
      %v521 = vld [vmem:[%s199 + $0xd3] sm:$0xff]
      %v522 = vld [vmem:[%s199 + $0xdb] sm:$0xff]
      %v523 = vld [vmem:[%s199 + $0xe3] sm:$0xff]
      %v524 = vld [vmem:[%s199 + $0xeb] sm:$0xff]
      %v525 = vld [vmem:[%s199 + $0xf3] sm:$0xff]
      %v526 = vld [vmem:[%s199 + $0xfb] sm:$0xff]
      %v527 = vld [vmem:[%s199 + $0x103] sm:$0xff]
      %v528 = vld [vmem:[%s199 + $0x10b] sm:$0xff]
      %v529 = vld [vmem:[%s199 + $0x113] sm:$0xff]
      %v530 = vld [vmem:[%s199 + $0x11b] sm:$0xff]
      %v531 = vld [vmem:[%s199 + $0x123] sm:$0xff]
      %v532 = vld [vmem:[%s199 + $0x12b] sm:$0x3f]
      %533 = vst [vmem:[#allocation2 + $0x20] sm:$0xff] %v497
      %534 = vst [vmem:[#allocation2 + $0x68] sm:$0xff] %v498
      %535 = vst [vmem:[#allocation2 + $0xb0] sm:$0xff] %v499
      %536 = vst [vmem:[#allocation2 + $0xf8] sm:$0xff] %v500
      %537 = vst [vmem:[#allocation2 + $0x140] sm:$0xff] %v501
      %538 = vst [vmem:[#allocation2 + $0x188] sm:$0xff] %v502
      %539 = vst [vmem:[#allocation2 + $0x1d0] sm:$0xff] %v503
      %540 = vst [vmem:[#allocation2 + $0x218] sm:$0xff] %v504
      %541 = vst [vmem:[#allocation2 + $0x260] sm:$0xff] %v505
      %542 = vst [vmem:[#allocation2 + $0x2a8] sm:$0xff] %v506
      %543 = vst [vmem:[#allocation2 + $0x2f0] sm:$0xff] %v507
      %544 = vst [vmem:[#allocation2 + $0x338] sm:$0xff] %v508
      %545 = vst [vmem:[#allocation2 + $0x380] sm:$0xff] %v509
      %546 = vst [vmem:[#allocation2 + $0x3c8] sm:$0xff] %v510
      %547 = vst [vmem:[#allocation2 + $0x410] sm:$0xff] %v511
      %548 = vst [vmem:[#allocation2 + $0x458] sm:$0xff] %v512
      %549 = vst [vmem:[#allocation2 + $0x4a0] sm:$0xff] %v513
      %550 = vst [vmem:[#allocation2 + $0x4e8] sm:$0xff] %v514
      %551 = vst [vmem:[#allocation2 + $0x530] sm:$0xff] %v515
      %552 = vst [vmem:[#allocation2 + $0x578] sm:$0xff] %v516
      %553 = vst [vmem:[#allocation2 + $0x5c0] sm:$0xff] %v517
      %554 = vst [vmem:[#allocation2 + $0x608] sm:$0xff] %v518
      %555 = vst [vmem:[#allocation2 + $0x650] sm:$0xff] %v519
      %556 = vst [vmem:[#allocation2 + $0x698] sm:$0xff] %v520
      %557 = vst [vmem:[#allocation2 + $0x6e0] sm:$0xff] %v521
      %558 = vst [vmem:[#allocation2 + $0x728] sm:$0xff] %v522
      %559 = vst [vmem:[#allocation2 + $0x770] sm:$0xff] %v523
      %560 = vst [vmem:[#allocation2 + $0x7b8] sm:$0xff] %v524
      %561 = vst [vmem:[#allocation2 + $0x800] sm:$0xff] %v525
      %562 = vst [vmem:[#allocation2 + $0x848] sm:$0xff] %v526
      %563 = vst [vmem:[#allocation2 + $0x890] sm:$0xff] %v527
      %564 = vst [vmem:[#allocation2 + $0x8d8] sm:$0xff] %v528
      %565 = vst [vmem:[#allocation2 + $0x920] sm:$0xff] %v529
      %566 = vst [vmem:[#allocation2 + $0x968] sm:$0xff] %v530
      %567 = vst [vmem:[#allocation2 + $0x9b0] sm:$0xff] %v531
      %568 = vst [vmem:[#allocation2 + $0x9f8] sm:$0x3f] %v532
      %v569 = vld [vmem:[%s199 + $0x14] sm:$0xff]
      %v570 = vld [vmem:[%s199 + $0x1c] sm:$0xff]
      %v571 = vld [vmem:[%s199 + $0x24] sm:$0xff]
      %v572 = vld [vmem:[%s199 + $0x2c] sm:$0xff]
      %v573 = vld [vmem:[%s199 + $0x34] sm:$0xff]
      %v574 = vld [vmem:[%s199 + $0x3c] sm:$0xff]
      %v575 = vld [vmem:[%s199 + $0x44] sm:$0xff]
      %v576 = vld [vmem:[%s199 + $0x4c] sm:$0xff]
      %v577 = vld [vmem:[%s199 + $0x54] sm:$0xff]
      %v578 = vld [vmem:[%s199 + $0x5c] sm:$0xff]
      %v579 = vld [vmem:[%s199 + $0x64] sm:$0xff]
      %v580 = vld [vmem:[%s199 + $0x6c] sm:$0xff]
      %v581 = vld [vmem:[%s199 + $0x74] sm:$0xff]
      %v582 = vld [vmem:[%s199 + $0x7c] sm:$0xff]
      %v583 = vld [vmem:[%s199 + $0x84] sm:$0xff]
      %v584 = vld [vmem:[%s199 + $0x8c] sm:$0xff]
      %v585 = vld [vmem:[%s199 + $0x94] sm:$0xff]
      %v586 = vld [vmem:[%s199 + $0x9c] sm:$0xff]
      %v587 = vld [vmem:[%s199 + $0xa4] sm:$0xff]
      %v588 = vld [vmem:[%s199 + $0xac] sm:$0xff]
      %v589 = vld [vmem:[%s199 + $0xb4] sm:$0xff]
      %v590 = vld [vmem:[%s199 + $0xbc] sm:$0xff]
      %v591 = vld [vmem:[%s199 + $0xc4] sm:$0xff]
      %v592 = vld [vmem:[%s199 + $0xcc] sm:$0xff]
      %v593 = vld [vmem:[%s199 + $0xd4] sm:$0xff]
      %v594 = vld [vmem:[%s199 + $0xdc] sm:$0xff]
      %v595 = vld [vmem:[%s199 + $0xe4] sm:$0xff]
      %v596 = vld [vmem:[%s199 + $0xec] sm:$0xff]
      %v597 = vld [vmem:[%s199 + $0xf4] sm:$0xff]
      %v598 = vld [vmem:[%s199 + $0xfc] sm:$0xff]
      %v599 = vld [vmem:[%s199 + $0x104] sm:$0xff]
      %v600 = vld [vmem:[%s199 + $0x10c] sm:$0xff]
      %v601 = vld [vmem:[%s199 + $0x114] sm:$0xff]
      %v602 = vld [vmem:[%s199 + $0x11c] sm:$0xff]
      %v603 = vld [vmem:[%s199 + $0x124] sm:$0xff]
      %v604 = vld [vmem:[%s199 + $0x12c] sm:$0x3f]
      %605 = vst [vmem:[#allocation2 + $0x28] sm:$0xff] %v569
      %606 = vst [vmem:[#allocation2 + $0x70] sm:$0xff] %v570
      %607 = vst [vmem:[#allocation2 + $0xb8] sm:$0xff] %v571
      %608 = vst [vmem:[#allocation2 + $0x100] sm:$0xff] %v572
      %609 = vst [vmem:[#allocation2 + $0x148] sm:$0xff] %v573
      %610 = vst [vmem:[#allocation2 + $0x190] sm:$0xff] %v574
      %611 = vst [vmem:[#allocation2 + $0x1d8] sm:$0xff] %v575
      %612 = vst [vmem:[#allocation2 + $0x220] sm:$0xff] %v576
      %613 = vst [vmem:[#allocation2 + $0x268] sm:$0xff] %v577
      %614 = vst [vmem:[#allocation2 + $0x2b0] sm:$0xff] %v578
      %615 = vst [vmem:[#allocation2 + $0x2f8] sm:$0xff] %v579
      %616 = vst [vmem:[#allocation2 + $0x340] sm:$0xff] %v580
      %617 = vst [vmem:[#allocation2 + $0x388] sm:$0xff] %v581
      %618 = vst [vmem:[#allocation2 + $0x3d0] sm:$0xff] %v582
      %619 = vst [vmem:[#allocation2 + $0x418] sm:$0xff] %v583
      %620 = vst [vmem:[#allocation2 + $0x460] sm:$0xff] %v584
      %621 = vst [vmem:[#allocation2 + $0x4a8] sm:$0xff] %v585
      %622 = vst [vmem:[#allocation2 + $0x4f0] sm:$0xff] %v586
      %623 = vst [vmem:[#allocation2 + $0x538] sm:$0xff] %v587
      %624 = vst [vmem:[#allocation2 + $0x580] sm:$0xff] %v588
      %625 = vst [vmem:[#allocation2 + $0x5c8] sm:$0xff] %v589
      %626 = vst [vmem:[#allocation2 + $0x610] sm:$0xff] %v590
      %627 = vst [vmem:[#allocation2 + $0x658] sm:$0xff] %v591
      %628 = vst [vmem:[#allocation2 + $0x6a0] sm:$0xff] %v592
      %629 = vst [vmem:[#allocation2 + $0x6e8] sm:$0xff] %v593
      %630 = vst [vmem:[#allocation2 + $0x730] sm:$0xff] %v594
      %631 = vst [vmem:[#allocation2 + $0x778] sm:$0xff] %v595
      %632 = vst [vmem:[#allocation2 + $0x7c0] sm:$0xff] %v596
      %633 = vst [vmem:[#allocation2 + $0x808] sm:$0xff] %v597
      %634 = vst [vmem:[#allocation2 + $0x850] sm:$0xff] %v598
      %635 = vst [vmem:[#allocation2 + $0x898] sm:$0xff] %v599
      %636 = vst [vmem:[#allocation2 + $0x8e0] sm:$0xff] %v600
      %637 = vst [vmem:[#allocation2 + $0x928] sm:$0xff] %v601
      %638 = vst [vmem:[#allocation2 + $0x970] sm:$0xff] %v602
      %639 = vst [vmem:[#allocation2 + $0x9b8] sm:$0xff] %v603
      %640 = vst [vmem:[#allocation2 + $0xa00] sm:$0x3f] %v604
      %v641 = vld [vmem:[%s199 + $0x24] sm:$0xff]
      %v642 = vld [vmem:[%s199 + $0x2c] sm:$0xff]
      %v643 = vld [vmem:[%s199 + $0x34] sm:$0xff]
      %v644 = vld [vmem:[%s199 + $0x3c] sm:$0xff]
      %v645 = vld [vmem:[%s199 + $0x44] sm:$0xff]
      %v646 = vld [vmem:[%s199 + $0x4c] sm:$0xff]
      %v647 = vld [vmem:[%s199 + $0x54] sm:$0xff]
      %v648 = vld [vmem:[%s199 + $0x5c] sm:$0xff]
      %v649 = vld [vmem:[%s199 + $0x64] sm:$0xff]
      %v650 = vld [vmem:[%s199 + $0x6c] sm:$0xff]
      %v651 = vld [vmem:[%s199 + $0x74] sm:$0xff]
      %v652 = vld [vmem:[%s199 + $0x7c] sm:$0xff]
      %v653 = vld [vmem:[%s199 + $0x84] sm:$0xff]
      %v654 = vld [vmem:[%s199 + $0x8c] sm:$0xff]
      %v655 = vld [vmem:[%s199 + $0x94] sm:$0xff]
      %v656 = vld [vmem:[%s199 + $0x9c] sm:$0xff]
      %v657 = vld [vmem:[%s199 + $0xa4] sm:$0xff]
      %v658 = vld [vmem:[%s199 + $0xac] sm:$0xff]
      %v659 = vld [vmem:[%s199 + $0xb4] sm:$0xff]
      %v660 = vld [vmem:[%s199 + $0xbc] sm:$0xff]
      %v661 = vld [vmem:[%s199 + $0xc4] sm:$0xff]
      %v662 = vld [vmem:[%s199 + $0xcc] sm:$0xff]
      %v663 = vld [vmem:[%s199 + $0xd4] sm:$0xff]
      %v664 = vld [vmem:[%s199 + $0xdc] sm:$0xff]
      %v665 = vld [vmem:[%s199 + $0xe4] sm:$0xff]
      %v666 = vld [vmem:[%s199 + $0xec] sm:$0xff]
      %v667 = vld [vmem:[%s199 + $0xf4] sm:$0xff]
      %v668 = vld [vmem:[%s199 + $0xfc] sm:$0xff]
      %v669 = vld [vmem:[%s199 + $0x104] sm:$0xff]
      %v670 = vld [vmem:[%s199 + $0x10c] sm:$0xff]
      %v671 = vld [vmem:[%s199 + $0x114] sm:$0xff]
      %v672 = vld [vmem:[%s199 + $0x11c] sm:$0xff]
      %v673 = vld [vmem:[%s199 + $0x124] sm:$0xff]
      %v674 = vld [vmem:[%s199 + $0x12c] sm:$0xff]
      %v675 = vld [vmem:[%s199 + $0x134] sm:$0xff]
      %v676 = vld [vmem:[%s199 + $0x13c] sm:$0x3f]
      %677 = vst [vmem:[#allocation2 + $0x30] sm:$0xff] %v641
      %678 = vst [vmem:[#allocation2 + $0x78] sm:$0xff] %v642
      %679 = vst [vmem:[#allocation2 + $0xc0] sm:$0xff] %v643
      %680 = vst [vmem:[#allocation2 + $0x108] sm:$0xff] %v644
      %681 = vst [vmem:[#allocation2 + $0x150] sm:$0xff] %v645
      %682 = vst [vmem:[#allocation2 + $0x198] sm:$0xff] %v646
      %683 = vst [vmem:[#allocation2 + $0x1e0] sm:$0xff] %v647
      %684 = vst [vmem:[#allocation2 + $0x228] sm:$0xff] %v648
      %685 = vst [vmem:[#allocation2 + $0x270] sm:$0xff] %v649
      %686 = vst [vmem:[#allocation2 + $0x2b8] sm:$0xff] %v650
      %687 = vst [vmem:[#allocation2 + $0x300] sm:$0xff] %v651
      %688 = vst [vmem:[#allocation2 + $0x348] sm:$0xff] %v652
      %689 = vst [vmem:[#allocation2 + $0x390] sm:$0xff] %v653
      %690 = vst [vmem:[#allocation2 + $0x3d8] sm:$0xff] %v654
      %691 = vst [vmem:[#allocation2 + $0x420] sm:$0xff] %v655
      %692 = vst [vmem:[#allocation2 + $0x468] sm:$0xff] %v656
      %693 = vst [vmem:[#allocation2 + $0x4b0] sm:$0xff] %v657
      %694 = vst [vmem:[#allocation2 + $0x4f8] sm:$0xff] %v658
      %695 = vst [vmem:[#allocation2 + $0x540] sm:$0xff] %v659
      %696 = vst [vmem:[#allocation2 + $0x588] sm:$0xff] %v660
      %697 = vst [vmem:[#allocation2 + $0x5d0] sm:$0xff] %v661
      %698 = vst [vmem:[#allocation2 + $0x618] sm:$0xff] %v662
      %699 = vst [vmem:[#allocation2 + $0x660] sm:$0xff] %v663
      %700 = vst [vmem:[#allocation2 + $0x6a8] sm:$0xff] %v664
      %701 = vst [vmem:[#allocation2 + $0x6f0] sm:$0xff] %v665
      %702 = vst [vmem:[#allocation2 + $0x738] sm:$0xff] %v666
      %703 = vst [vmem:[#allocation2 + $0x780] sm:$0xff] %v667
      %704 = vst [vmem:[#allocation2 + $0x7c8] sm:$0xff] %v668
      %705 = vst [vmem:[#allocation2 + $0x810] sm:$0xff] %v669
      %706 = vst [vmem:[#allocation2 + $0x858] sm:$0xff] %v670
      %707 = vst [vmem:[#allocation2 + $0x8a0] sm:$0xff] %v671
      %708 = vst [vmem:[#allocation2 + $0x8e8] sm:$0xff] %v672
      %709 = vst [vmem:[#allocation2 + $0x930] sm:$0xff] %v673
      %710 = vst [vmem:[#allocation2 + $0x978] sm:$0xff] %v674
      %711 = vst [vmem:[#allocation2 + $0x9c0] sm:$0xff] %v675
      %712 = vst [vmem:[#allocation2 + $0xa08] sm:$0x3f] %v676
      %v713 = vld [vmem:[%s199 + $0x25] sm:$0xff]
      %v714 = vld [vmem:[%s199 + $0x2d] sm:$0xff]
      %v715 = vld [vmem:[%s199 + $0x35] sm:$0xff]
      %v716 = vld [vmem:[%s199 + $0x3d] sm:$0xff]
      %v717 = vld [vmem:[%s199 + $0x45] sm:$0xff]
      %v718 = vld [vmem:[%s199 + $0x4d] sm:$0xff]
      %v719 = vld [vmem:[%s199 + $0x55] sm:$0xff]
      %v720 = vld [vmem:[%s199 + $0x5d] sm:$0xff]
      %v721 = vld [vmem:[%s199 + $0x65] sm:$0xff]
      %v722 = vld [vmem:[%s199 + $0x6d] sm:$0xff]
      %v723 = vld [vmem:[%s199 + $0x75] sm:$0xff]
      %v724 = vld [vmem:[%s199 + $0x7d] sm:$0xff]
      %v725 = vld [vmem:[%s199 + $0x85] sm:$0xff]
      %v726 = vld [vmem:[%s199 + $0x8d] sm:$0xff]
      %v727 = vld [vmem:[%s199 + $0x95] sm:$0xff]
      %v728 = vld [vmem:[%s199 + $0x9d] sm:$0xff]
      %v729 = vld [vmem:[%s199 + $0xa5] sm:$0xff]
      %v730 = vld [vmem:[%s199 + $0xad] sm:$0xff]
      %v731 = vld [vmem:[%s199 + $0xb5] sm:$0xff]
      %v732 = vld [vmem:[%s199 + $0xbd] sm:$0xff]
      %v733 = vld [vmem:[%s199 + $0xc5] sm:$0xff]
      %v734 = vld [vmem:[%s199 + $0xcd] sm:$0xff]
      %v735 = vld [vmem:[%s199 + $0xd5] sm:$0xff]
      %v736 = vld [vmem:[%s199 + $0xdd] sm:$0xff]
      %v737 = vld [vmem:[%s199 + $0xe5] sm:$0xff]
      %v738 = vld [vmem:[%s199 + $0xed] sm:$0xff]
      %v739 = vld [vmem:[%s199 + $0xf5] sm:$0xff]
      %v740 = vld [vmem:[%s199 + $0xfd] sm:$0xff]
      %v741 = vld [vmem:[%s199 + $0x105] sm:$0xff]
      %v742 = vld [vmem:[%s199 + $0x10d] sm:$0xff]
      %v743 = vld [vmem:[%s199 + $0x115] sm:$0xff]
      %v744 = vld [vmem:[%s199 + $0x11d] sm:$0xff]
      %v745 = vld [vmem:[%s199 + $0x125] sm:$0xff]
      %v746 = vld [vmem:[%s199 + $0x12d] sm:$0xff]
      %v747 = vld [vmem:[%s199 + $0x135] sm:$0xff]
      %v748 = vld [vmem:[%s199 + $0x13d] sm:$0x3f]
      %749 = vst [vmem:[#allocation2 + $0x38] sm:$0xff] %v713
      %750 = vst [vmem:[#allocation2 + $0x80] sm:$0xff] %v714
      %751 = vst [vmem:[#allocation2 + $0xc8] sm:$0xff] %v715
      %752 = vst [vmem:[#allocation2 + $0x110] sm:$0xff] %v716
      %753 = vst [vmem:[#allocation2 + $0x158] sm:$0xff] %v717
      %754 = vst [vmem:[#allocation2 + $0x1a0] sm:$0xff] %v718
      %755 = vst [vmem:[#allocation2 + $0x1e8] sm:$0xff] %v719
      %756 = vst [vmem:[#allocation2 + $0x230] sm:$0xff] %v720
      %757 = vst [vmem:[#allocation2 + $0x278] sm:$0xff] %v721
      %758 = vst [vmem:[#allocation2 + $0x2c0] sm:$0xff] %v722
      %759 = vst [vmem:[#allocation2 + $0x308] sm:$0xff] %v723
      %760 = vst [vmem:[#allocation2 + $0x350] sm:$0xff] %v724
      %761 = vst [vmem:[#allocation2 + $0x398] sm:$0xff] %v725
      %762 = vst [vmem:[#allocation2 + $0x3e0] sm:$0xff] %v726
      %763 = vst [vmem:[#allocation2 + $0x428] sm:$0xff] %v727
      %764 = vst [vmem:[#allocation2 + $0x470] sm:$0xff] %v728
      %765 = vst [vmem:[#allocation2 + $0x4b8] sm:$0xff] %v729
      %766 = vst [vmem:[#allocation2 + $0x500] sm:$0xff] %v730
      %767 = vst [vmem:[#allocation2 + $0x548] sm:$0xff] %v731
      %768 = vst [vmem:[#allocation2 + $0x590] sm:$0xff] %v732
      %769 = vst [vmem:[#allocation2 + $0x5d8] sm:$0xff] %v733
      %770 = vst [vmem:[#allocation2 + $0x620] sm:$0xff] %v734
      %771 = vst [vmem:[#allocation2 + $0x668] sm:$0xff] %v735
      %772 = vst [vmem:[#allocation2 + $0x6b0] sm:$0xff] %v736
      %773 = vst [vmem:[#allocation2 + $0x6f8] sm:$0xff] %v737
      %774 = vst [vmem:[#allocation2 + $0x740] sm:$0xff] %v738
      %775 = vst [vmem:[#allocation2 + $0x788] sm:$0xff] %v739
      %776 = vst [vmem:[#allocation2 + $0x7d0] sm:$0xff] %v740
      %777 = vst [vmem:[#allocation2 + $0x818] sm:$0xff] %v741
      %778 = vst [vmem:[#allocation2 + $0x860] sm:$0xff] %v742
      %779 = vst [vmem:[#allocation2 + $0x8a8] sm:$0xff] %v743
      %780 = vst [vmem:[#allocation2 + $0x8f0] sm:$0xff] %v744
      %781 = vst [vmem:[#allocation2 + $0x938] sm:$0xff] %v745
      %782 = vst [vmem:[#allocation2 + $0x980] sm:$0xff] %v746
      %783 = vst [vmem:[#allocation2 + $0x9c8] sm:$0xff] %v747
      %784 = vst [vmem:[#allocation2 + $0xa10] sm:$0x3f] %v748
      %v785 = vld [vmem:[%s199 + $0x26] sm:$0xff]
      %v786 = vld [vmem:[%s199 + $0x2e] sm:$0xff]
      %v787 = vld [vmem:[%s199 + $0x36] sm:$0xff]
      %v788 = vld [vmem:[%s199 + $0x3e] sm:$0xff]
      %v789 = vld [vmem:[%s199 + $0x46] sm:$0xff]
      %v790 = vld [vmem:[%s199 + $0x4e] sm:$0xff]
      %v791 = vld [vmem:[%s199 + $0x56] sm:$0xff]
      %v792 = vld [vmem:[%s199 + $0x5e] sm:$0xff]
      %v793 = vld [vmem:[%s199 + $0x66] sm:$0xff]
      %v794 = vld [vmem:[%s199 + $0x6e] sm:$0xff]
      %v795 = vld [vmem:[%s199 + $0x76] sm:$0xff]
      %v796 = vld [vmem:[%s199 + $0x7e] sm:$0xff]
      %v797 = vld [vmem:[%s199 + $0x86] sm:$0xff]
      %v798 = vld [vmem:[%s199 + $0x8e] sm:$0xff]
      %v799 = vld [vmem:[%s199 + $0x96] sm:$0xff]
      %v800 = vld [vmem:[%s199 + $0x9e] sm:$0xff]
      %v801 = vld [vmem:[%s199 + $0xa6] sm:$0xff]
      %v802 = vld [vmem:[%s199 + $0xae] sm:$0xff]
      %v803 = vld [vmem:[%s199 + $0xb6] sm:$0xff]
      %v804 = vld [vmem:[%s199 + $0xbe] sm:$0xff]
      %v805 = vld [vmem:[%s199 + $0xc6] sm:$0xff]
      %v806 = vld [vmem:[%s199 + $0xce] sm:$0xff]
      %v807 = vld [vmem:[%s199 + $0xd6] sm:$0xff]
      %v808 = vld [vmem:[%s199 + $0xde] sm:$0xff]
      %v809 = vld [vmem:[%s199 + $0xe6] sm:$0xff]
      %v810 = vld [vmem:[%s199 + $0xee] sm:$0xff]
      %v811 = vld [vmem:[%s199 + $0xf6] sm:$0xff]
      %v812 = vld [vmem:[%s199 + $0xfe] sm:$0xff]
      %v813 = vld [vmem:[%s199 + $0x106] sm:$0xff]
      %v814 = vld [vmem:[%s199 + $0x10e] sm:$0xff]
      %v815 = vld [vmem:[%s199 + $0x116] sm:$0xff]
      %v816 = vld [vmem:[%s199 + $0x11e] sm:$0xff]
      %v817 = vld [vmem:[%s199 + $0x126] sm:$0xff]
      %v818 = vld [vmem:[%s199 + $0x12e] sm:$0xff]
      %v819 = vld [vmem:[%s199 + $0x136] sm:$0xff]
      %v820 = vld [vmem:[%s199 + $0x13e] sm:$0x3f]
      %821 = vst [vmem:[#allocation2 + $0x40] sm:$0xff] %v785
      %822 = vst [vmem:[#allocation2 + $0x88] sm:$0xff] %v786
      %823 = vst [vmem:[#allocation2 + $0xd0] sm:$0xff] %v787
      %824 = vst [vmem:[#allocation2 + $0x118] sm:$0xff] %v788
      %825 = vst [vmem:[#allocation2 + $0x160] sm:$0xff] %v789
      %826 = vst [vmem:[#allocation2 + $0x1a8] sm:$0xff] %v790
      %827 = vst [vmem:[#allocation2 + $0x1f0] sm:$0xff] %v791
      %828 = vst [vmem:[#allocation2 + $0x238] sm:$0xff] %v792
      %829 = vst [vmem:[#allocation2 + $0x280] sm:$0xff] %v793
      %830 = vst [vmem:[#allocation2 + $0x2c8] sm:$0xff] %v794
      %831 = vst [vmem:[#allocation2 + $0x310] sm:$0xff] %v795
      %832 = vst [vmem:[#allocation2 + $0x358] sm:$0xff] %v796
      %833 = vst [vmem:[#allocation2 + $0x3a0] sm:$0xff] %v797
      %834 = vst [vmem:[#allocation2 + $0x3e8] sm:$0xff] %v798
      %835 = vst [vmem:[#allocation2 + $0x430] sm:$0xff] %v799
      %836 = vst [vmem:[#allocation2 + $0x478] sm:$0xff] %v800
      %837 = vst [vmem:[#allocation2 + $0x4c0] sm:$0xff] %v801
      %838 = vst [vmem:[#allocation2 + $0x508] sm:$0xff] %v802
      %839 = vst [vmem:[#allocation2 + $0x550] sm:$0xff] %v803
      %840 = vst [vmem:[#allocation2 + $0x598] sm:$0xff] %v804
      %841 = vst [vmem:[#allocation2 + $0x5e0] sm:$0xff] %v805
      %842 = vst [vmem:[#allocation2 + $0x628] sm:$0xff] %v806
      %843 = vst [vmem:[#allocation2 + $0x670] sm:$0xff] %v807
      %844 = vst [vmem:[#allocation2 + $0x6b8] sm:$0xff] %v808
      %845 = vst [vmem:[#allocation2 + $0x700] sm:$0xff] %v809
      %846 = vst [vmem:[#allocation2 + $0x748] sm:$0xff] %v810
      %847 = vst [vmem:[#allocation2 + $0x790] sm:$0xff] %v811
      %848 = vst [vmem:[#allocation2 + $0x7d8] sm:$0xff] %v812
      %849 = vst [vmem:[#allocation2 + $0x820] sm:$0xff] %v813
      %850 = vst [vmem:[#allocation2 + $0x868] sm:$0xff] %v814
      %851 = vst [vmem:[#allocation2 + $0x8b0] sm:$0xff] %v815
      %852 = vst [vmem:[#allocation2 + $0x8f8] sm:$0xff] %v816
      %853 = vst [vmem:[#allocation2 + $0x940] sm:$0xff] %v817
      %854 = vst [vmem:[#allocation2 + $0x988] sm:$0xff] %v818
      %855 = vst [vmem:[#allocation2 + $0x9d0] sm:$0xff] %v819
      %856 = vst [vmem:[#allocation2 + $0xa18] sm:$0x3f] %v820
      %v857 = vld [vmem:[#allocation2] sm:$0xff]
      %v858 = vld [vmem:[#allocation2 + $0x8] sm:$0xff]
      %v859 = vld [vmem:[#allocation2 + $0x10] sm:$0xff]
      %v860 = vld [vmem:[#allocation2 + $0x18] sm:$0xff]
      %v861 = vld [vmem:[#allocation2 + $0x20] sm:$0xff]
      %v862 = vld [vmem:[#allocation2 + $0x28] sm:$0xff]
      %v863 = vld [vmem:[#allocation2 + $0x30] sm:$0xff]
      %v864 = vld [vmem:[#allocation2 + $0x38] sm:$0xff]
      %v865 = vld [vmem:[#allocation2 + $0x40] sm:$0xff]
      %v866 = vld [vmem:[#allocation2 + $0x48] sm:$0xff]
      %v867 = vld [vmem:[#allocation2 + $0x50] sm:$0xff]
      %v868 = vld [vmem:[#allocation2 + $0x58] sm:$0xff]
      %v869 = vld [vmem:[#allocation2 + $0x60] sm:$0xff]
      %v870 = vld [vmem:[#allocation2 + $0x68] sm:$0xff]
      %v871 = vld [vmem:[#allocation2 + $0x70] sm:$0xff]
      %v872 = vld [vmem:[#allocation2 + $0x78] sm:$0xff]
      %v873 = vld [vmem:[#allocation2 + $0x80] sm:$0xff]
      %v874 = vld [vmem:[#allocation2 + $0x88] sm:$0xff]
      %v875 = vld [vmem:[#allocation2 + $0x90] sm:$0xff]
      %v876 = vld [vmem:[#allocation2 + $0x98] sm:$0xff]
      %v877 = vld [vmem:[#allocation2 + $0xa0] sm:$0xff]
      %v878 = vld [vmem:[#allocation2 + $0xa8] sm:$0xff]
      %v879 = vld [vmem:[#allocation2 + $0xb0] sm:$0xff]
      %v880 = vld [vmem:[#allocation2 + $0xb8] sm:$0xff]
      %v881 = vld [vmem:[#allocation2 + $0xc0] sm:$0xff]
      %v882 = vld [vmem:[#allocation2 + $0xc8] sm:$0xff]
      %v883 = vld [vmem:[#allocation2 + $0xd0] sm:$0xff]
      %v884 = vld [vmem:[#allocation2 + $0xd8] sm:$0xff]
      %v885 = vld [vmem:[#allocation2 + $0xe0] sm:$0xff]
      %v886 = vld [vmem:[#allocation2 + $0xe8] sm:$0xff]
      %v887 = vld [vmem:[#allocation2 + $0xf0] sm:$0xff]
      %v888 = vld [vmem:[#allocation2 + $0xf8] sm:$0xff]
      %v889 = vld [vmem:[#allocation2 + $0x100] sm:$0xff]
      %v890 = vld [vmem:[#allocation2 + $0x108] sm:$0xff]
      %v891 = vld [vmem:[#allocation2 + $0x110] sm:$0xff]
      %v892 = vld [vmem:[#allocation2 + $0x118] sm:$0xff]
      %v893 = vld [vmem:[#allocation2 + $0x120] sm:$0xff]
      %v894 = vld [vmem:[#allocation2 + $0x128] sm:$0xff]
      %v895 = vld [vmem:[#allocation2 + $0x130] sm:$0xff]
      %v896 = vld [vmem:[#allocation2 + $0x138] sm:$0xff]
      %v897 = vld [vmem:[#allocation2 + $0x140] sm:$0xff]
      %v898 = vld [vmem:[#allocation2 + $0x148] sm:$0xff]
      %v899 = vld [vmem:[#allocation2 + $0x150] sm:$0xff]
      %v900 = vld [vmem:[#allocation2 + $0x158] sm:$0xff]
      %v901 = vld [vmem:[#allocation2 + $0x160] sm:$0xff]
      %v902 = vld [vmem:[#allocation2 + $0x168] sm:$0xff]
      %v903 = vld [vmem:[#allocation2 + $0x170] sm:$0xff]
      %v904 = vld [vmem:[#allocation2 + $0x178] sm:$0xff]
      %v905 = vld [vmem:[#allocation2 + $0x180] sm:$0xff]
      %v906 = vld [vmem:[#allocation2 + $0x188] sm:$0xff]
      %v907 = vld [vmem:[#allocation2 + $0x190] sm:$0xff]
      %v908 = vld [vmem:[#allocation2 + $0x198] sm:$0xff]
      %v909 = vld [vmem:[#allocation2 + $0x1a0] sm:$0xff]
      %v910 = vld [vmem:[#allocation2 + $0x1a8] sm:$0xff]
      %v911 = vld [vmem:[#allocation2 + $0x1b0] sm:$0xff]
      %v912 = vld [vmem:[#allocation2 + $0x1b8] sm:$0xff]
      %v913 = vld [vmem:[#allocation2 + $0x1c0] sm:$0xff]
      %v914 = vld [vmem:[#allocation2 + $0x1c8] sm:$0xff]
      %v915 = vld [vmem:[#allocation2 + $0x1d0] sm:$0xff]
      %v916 = vld [vmem:[#allocation2 + $0x1d8] sm:$0xff]
      %v917 = vld [vmem:[#allocation2 + $0x1e0] sm:$0xff]
      %v918 = vld [vmem:[#allocation2 + $0x1e8] sm:$0xff]
      %v919 = vld [vmem:[#allocation2 + $0x1f0] sm:$0xff]
      %v920 = vld [vmem:[#allocation2 + $0x1f8] sm:$0xff]
      %v921 = vld [vmem:[#allocation2 + $0x200] sm:$0xff]
      %v922 = vld [vmem:[#allocation2 + $0x208] sm:$0xff]
      %v923 = vld [vmem:[#allocation2 + $0x210] sm:$0xff]
      %v924 = vld [vmem:[#allocation2 + $0x218] sm:$0xff]
      %v925 = vld [vmem:[#allocation2 + $0x220] sm:$0xff]
      %v926 = vld [vmem:[#allocation2 + $0x228] sm:$0xff]
      %v927 = vld [vmem:[#allocation2 + $0x230] sm:$0xff]
      %v928 = vld [vmem:[#allocation2 + $0x238] sm:$0xff]
      %v929 = vld [vmem:[#allocation2 + $0x240] sm:$0xff]
      %v930 = vld [vmem:[#allocation2 + $0x248] sm:$0xff]
      %v931 = vld [vmem:[#allocation2 + $0x250] sm:$0xff]
      %v932 = vld [vmem:[#allocation2 + $0x258] sm:$0xff]
      %v933 = vld [vmem:[#allocation2 + $0x260] sm:$0xff]
      %v934 = vld [vmem:[#allocation2 + $0x268] sm:$0xff]
      %v935 = vld [vmem:[#allocation2 + $0x270] sm:$0xff]
      %v936 = vld [vmem:[#allocation2 + $0x278] sm:$0xff]
      %v937 = vld [vmem:[#allocation2 + $0x280] sm:$0xff]
      %v938 = vld [vmem:[#allocation2 + $0x288] sm:$0xff]
      %v939 = vld [vmem:[#allocation2 + $0x290] sm:$0xff]
      %v940 = vld [vmem:[#allocation2 + $0x298] sm:$0xff]
      %v941 = vld [vmem:[#allocation2 + $0x2a0] sm:$0xff]
      %v942 = vld [vmem:[#allocation2 + $0x2a8] sm:$0xff]
      %v943 = vld [vmem:[#allocation2 + $0x2b0] sm:$0xff]
      %v944 = vld [vmem:[#allocation2 + $0x2b8] sm:$0xff]
      %v945 = vld [vmem:[#allocation2 + $0x2c0] sm:$0xff]
      %v946 = vld [vmem:[#allocation2 + $0x2c8] sm:$0xff]
      %v947 = vld [vmem:[#allocation2 + $0x2d0] sm:$0xff]
      %v948 = vld [vmem:[#allocation2 + $0x2d8] sm:$0xff]
      %v949 = vld [vmem:[#allocation2 + $0x2e0] sm:$0xff]
      %v950 = vld [vmem:[#allocation2 + $0x2e8] sm:$0xff]
      %v951 = vld [vmem:[#allocation2 + $0x2f0] sm:$0xff]
      %v952 = vld [vmem:[#allocation2 + $0x2f8] sm:$0xff]
      %v953 = vld [vmem:[#allocation2 + $0x300] sm:$0xff]
      %v954 = vld [vmem:[#allocation2 + $0x308] sm:$0xff]
      %v955 = vld [vmem:[#allocation2 + $0x310] sm:$0xff]
      %v956 = vld [vmem:[#allocation2 + $0x318] sm:$0xff]
      %v957 = vld [vmem:[#allocation2 + $0x320] sm:$0xff]
      %v958 = vld [vmem:[#allocation2 + $0x328] sm:$0xff]
      %v959 = vld [vmem:[#allocation2 + $0x330] sm:$0xff]
      %v960 = vld [vmem:[#allocation2 + $0x338] sm:$0xff]
      %v961 = vld [vmem:[#allocation2 + $0x340] sm:$0xff]
      %v962 = vld [vmem:[#allocation2 + $0x348] sm:$0xff]
      %v963 = vld [vmem:[#allocation2 + $0x350] sm:$0xff]
      %v964 = vld [vmem:[#allocation2 + $0x358] sm:$0xff]
      %v965 = vld [vmem:[#allocation2 + $0x360] sm:$0xff]
      %v966 = vld [vmem:[#allocation2 + $0x368] sm:$0xff]
      %v967 = vld [vmem:[#allocation2 + $0x370] sm:$0xff]
      %v968 = vld [vmem:[#allocation2 + $0x378] sm:$0xff]
      %v969 = vld [vmem:[#allocation2 + $0x380] sm:$0xff]
      %v970 = vld [vmem:[#allocation2 + $0x388] sm:$0xff]
      %v971 = vld [vmem:[#allocation2 + $0x390] sm:$0xff]
      %v972 = vld [vmem:[#allocation2 + $0x398] sm:$0xff]
      %v973 = vld [vmem:[#allocation2 + $0x3a0] sm:$0xff]
      %v974 = vld [vmem:[#allocation2 + $0x3a8] sm:$0xff]
      %v975 = vld [vmem:[#allocation2 + $0x3b0] sm:$0xff]
      %v976 = vld [vmem:[#allocation2 + $0x3b8] sm:$0xff]
      %v977 = vld [vmem:[#allocation2 + $0x3c0] sm:$0xff]
      %v978 = vld [vmem:[#allocation2 + $0x3c8] sm:$0xff]
      %v979 = vld [vmem:[#allocation2 + $0x3d0] sm:$0xff]
      %v980 = vld [vmem:[#allocation2 + $0x3d8] sm:$0xff]
      %v981 = vld [vmem:[#allocation2 + $0x3e0] sm:$0xff]
      %v982 = vld [vmem:[#allocation2 + $0x3e8] sm:$0xff]
      %v983 = vld [vmem:[#allocation2 + $0x3f0] sm:$0xff]
      %v984 = vld [vmem:[#allocation2 + $0x3f8] sm:$0xff]
      %v985 = vld [vmem:[#allocation2 + $0x400] sm:$0xff]
      %v986 = vld [vmem:[#allocation2 + $0x408] sm:$0xff]
      %v987 = vld [vmem:[#allocation2 + $0x410] sm:$0xff]
      %v988 = vld [vmem:[#allocation2 + $0x418] sm:$0xff]
      %v989 = vld [vmem:[#allocation2 + $0x420] sm:$0xff]
      %v990 = vld [vmem:[#allocation2 + $0x428] sm:$0xff]
      %v991 = vld [vmem:[#allocation2 + $0x430] sm:$0xff]
      %v992 = vld [vmem:[#allocation2 + $0x438] sm:$0xff]
      %v993 = vld [vmem:[#allocation2 + $0x440] sm:$0xff]
      %v994 = vld [vmem:[#allocation2 + $0x448] sm:$0xff]
      %v995 = vld [vmem:[#allocation2 + $0x450] sm:$0xff]
      %v996 = vld [vmem:[#allocation2 + $0x458] sm:$0xff]
      %v997 = vld [vmem:[#allocation2 + $0x460] sm:$0xff]
      %v998 = vld [vmem:[#allocation2 + $0x468] sm:$0xff]
      %v999 = vld [vmem:[#allocation2 + $0x470] sm:$0xff]
      %v1000 = vld [vmem:[#allocation2 + $0x478] sm:$0xff]
      %v1001 = vld [vmem:[#allocation2 + $0x480] sm:$0xff]
      %v1002 = vld [vmem:[#allocation2 + $0x488] sm:$0xff]
      %v1003 = vld [vmem:[#allocation2 + $0x490] sm:$0xff]
      %v1004 = vld [vmem:[#allocation2 + $0x498] sm:$0xff]
      %v1005 = vld [vmem:[#allocation2 + $0x4a0] sm:$0xff]
      %v1006 = vld [vmem:[#allocation2 + $0x4a8] sm:$0xff]
      %v1007 = vld [vmem:[#allocation2 + $0x4b0] sm:$0xff]
      %v1008 = vld [vmem:[#allocation2 + $0x4b8] sm:$0xff]
      %v1009 = vld [vmem:[#allocation2 + $0x4c0] sm:$0xff]
      %v1010 = vld [vmem:[#allocation2 + $0x4c8] sm:$0xff]
      %v1011 = vld [vmem:[#allocation2 + $0x4d0] sm:$0xff]
      %v1012 = vld [vmem:[#allocation2 + $0x4d8] sm:$0xff]
      %v1013 = vld [vmem:[#allocation2 + $0x4e0] sm:$0xff]
      %v1014 = vld [vmem:[#allocation2 + $0x4e8] sm:$0xff]
      %v1015 = vld [vmem:[#allocation2 + $0x4f0] sm:$0xff]
      %v1016 = vld [vmem:[#allocation2 + $0x4f8] sm:$0xff]
      %v1017 = vld [vmem:[#allocation2 + $0x500] sm:$0xff]
      %v1018 = vld [vmem:[#allocation2 + $0x508] sm:$0xff]
      %v1019 = vld [vmem:[#allocation2 + $0x510] sm:$0xff]
      %v1020 = vld [vmem:[#allocation2 + $0x518] sm:$0xff]
      %v1021 = vld [vmem:[#allocation2 + $0x520] sm:$0xff]
      %v1022 = vld [vmem:[#allocation2 + $0x528] sm:$0xff]
      %v1023 = vld [vmem:[#allocation2 + $0x530] sm:$0xff]
      %v1024 = vld [vmem:[#allocation2 + $0x538] sm:$0xff]
      %v1025 = vld [vmem:[#allocation2 + $0x540] sm:$0xff]
      %v1026 = vld [vmem:[#allocation2 + $0x548] sm:$0xff]
      %v1027 = vld [vmem:[#allocation2 + $0x550] sm:$0xff]
      %v1028 = vld [vmem:[#allocation2 + $0x558] sm:$0xff]
      %v1029 = vld [vmem:[#allocation2 + $0x560] sm:$0xff]
      %v1030 = vld [vmem:[#allocation2 + $0x568] sm:$0xff]
      %v1031 = vld [vmem:[#allocation2 + $0x570] sm:$0xff]
      %v1032 = vld [vmem:[#allocation2 + $0x578] sm:$0xff]
      %v1033 = vld [vmem:[#allocation2 + $0x580] sm:$0xff]
      %v1034 = vld [vmem:[#allocation2 + $0x588] sm:$0xff]
      %v1035 = vld [vmem:[#allocation2 + $0x590] sm:$0xff]
      %v1036 = vld [vmem:[#allocation2 + $0x598] sm:$0xff]
      %v1037 = vld [vmem:[#allocation2 + $0x5a0] sm:$0xff]
      %v1038 = vld [vmem:[#allocation2 + $0x5a8] sm:$0xff]
      %v1039 = vld [vmem:[#allocation2 + $0x5b0] sm:$0xff]
      %v1040 = vld [vmem:[#allocation2 + $0x5b8] sm:$0xff]
      %v1041 = vld [vmem:[#allocation2 + $0x5c0] sm:$0xff]
      %v1042 = vld [vmem:[#allocation2 + $0x5c8] sm:$0xff]
      %v1043 = vld [vmem:[#allocation2 + $0x5d0] sm:$0xff]
      %v1044 = vld [vmem:[#allocation2 + $0x5d8] sm:$0xff]
      %v1045 = vld [vmem:[#allocation2 + $0x5e0] sm:$0xff]
      %v1046 = vld [vmem:[#allocation2 + $0x5e8] sm:$0xff]
      %v1047 = vld [vmem:[#allocation2 + $0x5f0] sm:$0xff]
      %v1048 = vld [vmem:[#allocation2 + $0x5f8] sm:$0xff]
      %v1049 = vld [vmem:[#allocation2 + $0x600] sm:$0xff]
      %v1050 = vld [vmem:[#allocation2 + $0x608] sm:$0xff]
      %v1051 = vld [vmem:[#allocation2 + $0x610] sm:$0xff]
      %v1052 = vld [vmem:[#allocation2 + $0x618] sm:$0xff]
      %v1053 = vld [vmem:[#allocation2 + $0x620] sm:$0xff]
      %v1054 = vld [vmem:[#allocation2 + $0x628] sm:$0xff]
      %v1055 = vld [vmem:[#allocation2 + $0x630] sm:$0xff]
      %v1056 = vld [vmem:[#allocation2 + $0x638] sm:$0xff]
      %v1057 = vld [vmem:[#allocation2 + $0x640] sm:$0xff]
      %v1058 = vld [vmem:[#allocation2 + $0x648] sm:$0xff]
      %v1059 = vld [vmem:[#allocation2 + $0x650] sm:$0xff]
      %v1060 = vld [vmem:[#allocation2 + $0x658] sm:$0xff]
      %v1061 = vld [vmem:[#allocation2 + $0x660] sm:$0xff]
      %v1062 = vld [vmem:[#allocation2 + $0x668] sm:$0xff]
      %v1063 = vld [vmem:[#allocation2 + $0x670] sm:$0xff]
      %v1064 = vld [vmem:[#allocation2 + $0x678] sm:$0xff]
      %v1065 = vld [vmem:[#allocation2 + $0x680] sm:$0xff]
      %v1066 = vld [vmem:[#allocation2 + $0x688] sm:$0xff]
      %v1067 = vld [vmem:[#allocation2 + $0x690] sm:$0xff]
      %v1068 = vld [vmem:[#allocation2 + $0x698] sm:$0xff]
      %v1069 = vld [vmem:[#allocation2 + $0x6a0] sm:$0xff]
      %v1070 = vld [vmem:[#allocation2 + $0x6a8] sm:$0xff]
      %v1071 = vld [vmem:[#allocation2 + $0x6b0] sm:$0xff]
      %v1072 = vld [vmem:[#allocation2 + $0x6b8] sm:$0xff]
      %v1073 = vld [vmem:[#allocation2 + $0x6c0] sm:$0xff]
      %v1074 = vld [vmem:[#allocation2 + $0x6c8] sm:$0xff]
      %v1075 = vld [vmem:[#allocation2 + $0x6d0] sm:$0xff]
      %v1076 = vld [vmem:[#allocation2 + $0x6d8] sm:$0xff]
      %v1077 = vld [vmem:[#allocation2 + $0x6e0] sm:$0xff]
      %v1078 = vld [vmem:[#allocation2 + $0x6e8] sm:$0xff]
      %v1079 = vld [vmem:[#allocation2 + $0x6f0] sm:$0xff]
      %v1080 = vld [vmem:[#allocation2 + $0x6f8] sm:$0xff]
      %v1081 = vld [vmem:[#allocation2 + $0x700] sm:$0xff]
      %v1082 = vld [vmem:[#allocation2 + $0x708] sm:$0xff]
      %v1083 = vld [vmem:[#allocation2 + $0x710] sm:$0xff]
      %v1084 = vld [vmem:[#allocation2 + $0x718] sm:$0xff]
      %v1085 = vld [vmem:[#allocation2 + $0x720] sm:$0xff]
      %v1086 = vld [vmem:[#allocation2 + $0x728] sm:$0xff]
      %v1087 = vld [vmem:[#allocation2 + $0x730] sm:$0xff]
      %v1088 = vld [vmem:[#allocation2 + $0x738] sm:$0xff]
      %v1089 = vld [vmem:[#allocation2 + $0x740] sm:$0xff]
      %v1090 = vld [vmem:[#allocation2 + $0x748] sm:$0xff]
      %v1091 = vld [vmem:[#allocation2 + $0x750] sm:$0xff]
      %v1092 = vld [vmem:[#allocation2 + $0x758] sm:$0xff]
      %v1093 = vld [vmem:[#allocation2 + $0x760] sm:$0xff]
      %v1094 = vld [vmem:[#allocation2 + $0x768] sm:$0xff]
      %v1095 = vld [vmem:[#allocation2 + $0x770] sm:$0xff]
      %v1096 = vld [vmem:[#allocation2 + $0x778] sm:$0xff]
      %v1097 = vld [vmem:[#allocation2 + $0x780] sm:$0xff]
      %v1098 = vld [vmem:[#allocation2 + $0x788] sm:$0xff]
      %v1099 = vld [vmem:[#allocation2 + $0x790] sm:$0xff]
      %v1100 = vld [vmem:[#allocation2 + $0x798] sm:$0xff]
      %v1101 = vld [vmem:[#allocation2 + $0x7a0] sm:$0xff]
      %v1102 = vld [vmem:[#allocation2 + $0x7a8] sm:$0xff]
      %v1103 = vld [vmem:[#allocation2 + $0x7b0] sm:$0xff]
      %v1104 = vld [vmem:[#allocation2 + $0x7b8] sm:$0xff]
      %v1105 = vld [vmem:[#allocation2 + $0x7c0] sm:$0xff]
      %v1106 = vld [vmem:[#allocation2 + $0x7c8] sm:$0xff]
      %v1107 = vld [vmem:[#allocation2 + $0x7d0] sm:$0xff]
      %v1108 = vld [vmem:[#allocation2 + $0x7d8] sm:$0xff]
      %v1109 = vld [vmem:[#allocation2 + $0x7e0] sm:$0xff]
      %v1110 = vld [vmem:[#allocation2 + $0x7e8] sm:$0xff]
      %v1111 = vld [vmem:[#allocation2 + $0x7f0] sm:$0xff]
      %v1112 = vld [vmem:[#allocation2 + $0x7f8] sm:$0xff]
      %v1113 = vld [vmem:[#allocation2 + $0x800] sm:$0xff]
      %v1114 = vld [vmem:[#allocation2 + $0x808] sm:$0xff]
      %v1115 = vld [vmem:[#allocation2 + $0x810] sm:$0xff]
      %v1116 = vld [vmem:[#allocation2 + $0x818] sm:$0xff]
      %v1117 = vld [vmem:[#allocation2 + $0x820] sm:$0xff]
      %v1118 = vld [vmem:[#allocation2 + $0x828] sm:$0xff]
      %v1119 = vld [vmem:[#allocation2 + $0x830] sm:$0xff]
      %v1120 = vld [vmem:[#allocation2 + $0x838] sm:$0xff]
      %v1121 = vld [vmem:[#allocation2 + $0x840] sm:$0xff]
      %v1122 = vld [vmem:[#allocation2 + $0x848] sm:$0xff]
      %v1123 = vld [vmem:[#allocation2 + $0x850] sm:$0xff]
      %v1124 = vld [vmem:[#allocation2 + $0x858] sm:$0xff]
      %v1125 = vld [vmem:[#allocation2 + $0x860] sm:$0xff]
      %v1126 = vld [vmem:[#allocation2 + $0x868] sm:$0xff]
      %v1127 = vld [vmem:[#allocation2 + $0x870] sm:$0xff]
      %v1128 = vld [vmem:[#allocation2 + $0x878] sm:$0xff]
      %v1129 = vld [vmem:[#allocation2 + $0x880] sm:$0xff]
      %v1130 = vld [vmem:[#allocation2 + $0x888] sm:$0xff]
      %v1131 = vld [vmem:[#allocation2 + $0x890] sm:$0xff]
      %v1132 = vld [vmem:[#allocation2 + $0x898] sm:$0xff]
      %v1133 = vld [vmem:[#allocation2 + $0x8a0] sm:$0xff]
      %v1134 = vld [vmem:[#allocation2 + $0x8a8] sm:$0xff]
      %v1135 = vld [vmem:[#allocation2 + $0x8b0] sm:$0xff]
      %v1136 = vld [vmem:[#allocation2 + $0x8b8] sm:$0xff]
      %v1137 = vld [vmem:[#allocation2 + $0x8c0] sm:$0xff]
      %v1138 = vld [vmem:[#allocation2 + $0x8c8] sm:$0xff]
      %v1139 = vld [vmem:[#allocation2 + $0x8d0] sm:$0xff]
      %v1140 = vld [vmem:[#allocation2 + $0x8d8] sm:$0xff]
      %v1141 = vld [vmem:[#allocation2 + $0x8e0] sm:$0xff]
      %v1142 = vld [vmem:[#allocation2 + $0x8e8] sm:$0xff]
      %v1143 = vld [vmem:[#allocation2 + $0x8f0] sm:$0xff]
      %v1144 = vld [vmem:[#allocation2 + $0x8f8] sm:$0xff]
      %v1145 = vld [vmem:[#allocation2 + $0x900] sm:$0xff]
      %v1146 = vld [vmem:[#allocation2 + $0x908] sm:$0xff]
      %v1147 = vld [vmem:[#allocation2 + $0x910] sm:$0xff]
      %v1148 = vld [vmem:[#allocation2 + $0x918] sm:$0xff]
      %v1149 = vld [vmem:[#allocation2 + $0x920] sm:$0xff]
      %v1150 = vld [vmem:[#allocation2 + $0x928] sm:$0xff]
      %v1151 = vld [vmem:[#allocation2 + $0x930] sm:$0xff]
      %v1152 = vld [vmem:[#allocation2 + $0x938] sm:$0xff]
      %v1153 = vld [vmem:[#allocation2 + $0x940] sm:$0xff]
      %v1154 = vld [vmem:[#allocation2 + $0x948] sm:$0xff]
      %v1155 = vld [vmem:[#allocation2 + $0x950] sm:$0xff]
      %v1156 = vld [vmem:[#allocation2 + $0x958] sm:$0xff]
      %v1157 = vld [vmem:[#allocation2 + $0x960] sm:$0xff]
      %v1158 = vld [vmem:[#allocation2 + $0x968] sm:$0xff]
      %v1159 = vld [vmem:[#allocation2 + $0x970] sm:$0xff]
      %v1160 = vld [vmem:[#allocation2 + $0x978] sm:$0xff]
      %v1161 = vld [vmem:[#allocation2 + $0x980] sm:$0xff]
      %v1162 = vld [vmem:[#allocation2 + $0x988] sm:$0xff]
      %v1163 = vld [vmem:[#allocation2 + $0x990] sm:$0xff]
      %v1164 = vld [vmem:[#allocation2 + $0x998] sm:$0xff]
      %v1165 = vld [vmem:[#allocation2 + $0x9a0] sm:$0xff]
      %v1166 = vld [vmem:[#allocation2 + $0x9a8] sm:$0xff]
      %v1167 = vld [vmem:[#allocation2 + $0x9b0] sm:$0xff]
      %v1168 = vld [vmem:[#allocation2 + $0x9b8] sm:$0xff]
      %v1169 = vld [vmem:[#allocation2 + $0x9c0] sm:$0xff]
      %v1170 = vld [vmem:[#allocation2 + $0x9c8] sm:$0xff]
      %v1171 = vld [vmem:[#allocation2 + $0x9d0] sm:$0xff]
      %v1172 = vld [vmem:[#allocation2 + $0x9d8] sm:$0x3f]
      %v1173 = vld [vmem:[#allocation2 + $0x9e0] sm:$0x3f]
      %v1174 = vld [vmem:[#allocation2 + $0x9e8] sm:$0x3f]
      %v1175 = vld [vmem:[#allocation2 + $0x9f0] sm:$0x3f]
      %v1176 = vld [vmem:[#allocation2 + $0x9f8] sm:$0x3f]
      %v1177 = vld [vmem:[#allocation2 + $0xa00] sm:$0x3f]
      %v1178 = vld [vmem:[#allocation2 + $0xa08] sm:$0x3f]
      %v1179 = vld [vmem:[#allocation2 + $0xa10] sm:$0x3f]
      %v1180 = vld [vmem:[#allocation2 + $0xa18] sm:$0x3f]
      %v1181 = vld [vmem:[%s1] sm:$0xff]
      %v1182 = vld [vmem:[%s1 + $0x8] sm:$0xff]
      %v1183 = vld [vmem:[%s1 + $0x10] sm:$0xff]
      %v1184 = vld [vmem:[%s1 + $0x18] sm:$0xff]
      %v1185 = vld [vmem:[%s1 + $0x20] sm:$0xff]
      %v1186 = vld [vmem:[%s1 + $0x28] sm:$0xff]
      %v1187 = vld [vmem:[%s1 + $0x30] sm:$0xff]
      %v1188 = vld [vmem:[%s1 + $0x38] sm:$0xff]
      %v1189 = vld [vmem:[%s1 + $0x40] sm:$0xff]
      %v1190 = vld [vmem:[%s1 + $0x48] sm:$0xff]
      %v1191 = vld [vmem:[%s1 + $0x50] sm:$0xff]
      %v1192 = vld [vmem:[%s1 + $0x58] sm:$0xff]
      %v1193 = vld [vmem:[%s1 + $0x60] sm:$0xff]
      %v1194 = vld [vmem:[%s1 + $0x68] sm:$0xff]
      %v1195 = vld [vmem:[%s1 + $0x70] sm:$0xff]
      %v1196 = vld [vmem:[%s1 + $0x78] sm:$0xff]
      %v1197 = vld [vmem:[%s1 + $0x80] sm:$0xff]
      %v1198 = vld [vmem:[%s1 + $0x88] sm:$0xff]
      %v1199 = vld [vmem:[%s1 + $0x90] sm:$0xff]
      %v1200 = vld [vmem:[%s1 + $0x98] sm:$0xff]
      %v1201 = vld [vmem:[%s1 + $0xa0] sm:$0xff]
      %v1202 = vld [vmem:[%s1 + $0xa8] sm:$0xff]
      %v1203 = vld [vmem:[%s1 + $0xb0] sm:$0xff]
      %v1204 = vld [vmem:[%s1 + $0xb8] sm:$0xff]
      %v1205 = vld [vmem:[%s1 + $0xc0] sm:$0xff]
      %v1206 = vld [vmem:[%s1 + $0xc8] sm:$0xff]
      %v1207 = vld [vmem:[%s1 + $0xd0] sm:$0xff]
      %v1208 = vld [vmem:[%s1 + $0xd8] sm:$0xff]
      %v1209 = vld [vmem:[%s1 + $0xe0] sm:$0xff]
      %v1210 = vld [vmem:[%s1 + $0xe8] sm:$0xff]
      %v1211 = vld [vmem:[%s1 + $0xf0] sm:$0xff]
      %v1212 = vld [vmem:[%s1 + $0xf8] sm:$0xff]
      %v1213 = vld [vmem:[%s1 + $0x100] sm:$0xff]
      %v1214 = vld [vmem:[%s1 + $0x108] sm:$0xff]
      %v1215 = vld [vmem:[%s1 + $0x110] sm:$0xff]
      %v1216 = vld [vmem:[%s1 + $0x118] sm:$0xff]
      %v1217 = vld [vmem:[%s1 + $0x120] sm:$0xff]
      %v1218 = vld [vmem:[%s1 + $0x128] sm:$0xff]
      %v1219 = vld [vmem:[%s1 + $0x130] sm:$0xff]
      %v1220 = vld [vmem:[%s1 + $0x138] sm:$0xff]
      %v1221 = vld [vmem:[%s1 + $0x140] sm:$0xff]
      %v1222 = vld [vmem:[%s1 + $0x148] sm:$0xff]
      %v1223 = vld [vmem:[%s1 + $0x150] sm:$0xff]
      %v1224 = vld [vmem:[%s1 + $0x158] sm:$0xff]
      %v1225 = vld [vmem:[%s1 + $0x160] sm:$0xff]
      %v1226 = vld [vmem:[%s1 + $0x168] sm:$0xff]
      %v1227 = vld [vmem:[%s1 + $0x170] sm:$0xff]
      %v1228 = vld [vmem:[%s1 + $0x178] sm:$0xff]
      %v1229 = vld [vmem:[%s1 + $0x180] sm:$0xff]
      %v1230 = vld [vmem:[%s1 + $0x188] sm:$0xff]
      %v1231 = vld [vmem:[%s1 + $0x190] sm:$0xff]
      %v1232 = vld [vmem:[%s1 + $0x198] sm:$0xff]
      %v1233 = vld [vmem:[%s1 + $0x1a0] sm:$0xff]
      %v1234 = vld [vmem:[%s1 + $0x1a8] sm:$0xff]
      %v1235 = vld [vmem:[%s1 + $0x1b0] sm:$0xff]
      %v1236 = vld [vmem:[%s1 + $0x1b8] sm:$0xff]
      %v1237 = vld [vmem:[%s1 + $0x1c0] sm:$0xff]
      %v1238 = vld [vmem:[%s1 + $0x1c8] sm:$0xff]
      %v1239 = vld [vmem:[%s1 + $0x1d0] sm:$0xff]
      %v1240 = vld [vmem:[%s1 + $0x1d8] sm:$0xff]
      %v1241 = vld [vmem:[%s1 + $0x1e0] sm:$0xff]
      %v1242 = vld [vmem:[%s1 + $0x1e8] sm:$0xff]
      %v1243 = vld [vmem:[%s1 + $0x1f0] sm:$0xff]
      %v1244 = vld [vmem:[%s1 + $0x1f8] sm:$0xff]
      %v1245 = vld [vmem:[%s1 + $0x200] sm:$0xff]
      %v1246 = vld [vmem:[%s1 + $0x208] sm:$0xff]
      %v1247 = vld [vmem:[%s1 + $0x210] sm:$0xff]
      %v1248 = vld [vmem:[%s1 + $0x218] sm:$0xff]
      %v1249 = vld [vmem:[%s1 + $0x220] sm:$0xff]
      %v1250 = vld [vmem:[%s1 + $0x228] sm:$0xff]
      %v1251 = vld [vmem:[%s1 + $0x230] sm:$0xff]
      %v1252 = vld [vmem:[%s1 + $0x238] sm:$0xff]
      %v1253 = vld [vmem:[%s1 + $0x240] sm:$0xff]
      %v1254 = vld [vmem:[%s1 + $0x248] sm:$0xff]
      %v1255 = vld [vmem:[%s1 + $0x250] sm:$0xff]
      %v1256 = vld [vmem:[%s1 + $0x258] sm:$0xff]
      %v1257 = vld [vmem:[%s1 + $0x260] sm:$0xff]
      %v1258 = vld [vmem:[%s1 + $0x268] sm:$0xff]
      %v1259 = vld [vmem:[%s1 + $0x270] sm:$0xff]
      %v1260 = vld [vmem:[%s1 + $0x278] sm:$0xff]
      %v1261 = vld [vmem:[%s1 + $0x280] sm:$0xff]
      %v1262 = vld [vmem:[%s1 + $0x288] sm:$0xff]
      %v1263 = vld [vmem:[%s1 + $0x290] sm:$0xff]
      %v1264 = vld [vmem:[%s1 + $0x298] sm:$0xff]
      %v1265 = vld [vmem:[%s1 + $0x2a0] sm:$0xff]
      %v1266 = vld [vmem:[%s1 + $0x2a8] sm:$0xff]
      %v1267 = vld [vmem:[%s1 + $0x2b0] sm:$0xff]
      %v1268 = vld [vmem:[%s1 + $0x2b8] sm:$0xff]
      %v1269 = vld [vmem:[%s1 + $0x2c0] sm:$0xff]
      %v1270 = vld [vmem:[%s1 + $0x2c8] sm:$0xff]
      %v1271 = vld [vmem:[%s1 + $0x2d0] sm:$0xff]
      %v1272 = vld [vmem:[%s1 + $0x2d8] sm:$0xff]
      %v1273 = vld [vmem:[%s1 + $0x2e0] sm:$0xff]
      %v1274 = vld [vmem:[%s1 + $0x2e8] sm:$0xff]
      %v1275 = vld [vmem:[%s1 + $0x2f0] sm:$0xff]
      %v1276 = vld [vmem:[%s1 + $0x2f8] sm:$0xff]
      %v1277 = vld [vmem:[%s1 + $0x300] sm:$0xff]
      %v1278 = vld [vmem:[%s1 + $0x308] sm:$0xff]
      %v1279 = vld [vmem:[%s1 + $0x310] sm:$0xff]
      %v1280 = vld [vmem:[%s1 + $0x318] sm:$0xff]
      %v1281 = vld [vmem:[%s1 + $0x320] sm:$0xff]
      %v1282 = vld [vmem:[%s1 + $0x328] sm:$0xff]
      %v1283 = vld [vmem:[%s1 + $0x330] sm:$0xff]
      %v1284 = vld [vmem:[%s1 + $0x338] sm:$0xff]
      %v1285 = vld [vmem:[%s1 + $0x340] sm:$0xff]
      %v1286 = vld [vmem:[%s1 + $0x348] sm:$0xff]
      %v1287 = vld [vmem:[%s1 + $0x350] sm:$0xff]
      %v1288 = vld [vmem:[%s1 + $0x358] sm:$0xff]
      %v1289 = vld [vmem:[%s1 + $0x360] sm:$0xff]
      %v1290 = vld [vmem:[%s1 + $0x368] sm:$0xff]
      %v1291 = vld [vmem:[%s1 + $0x370] sm:$0xff]
      %v1292 = vld [vmem:[%s1 + $0x378] sm:$0xff]
      %v1293 = vld [vmem:[%s1 + $0x380] sm:$0xff]
      %v1294 = vld [vmem:[%s1 + $0x388] sm:$0xff]
      %v1295 = vld [vmem:[%s1 + $0x390] sm:$0xff]
      %v1296 = vld [vmem:[%s1 + $0x398] sm:$0xff]
      %v1297 = vld [vmem:[%s1 + $0x3a0] sm:$0xff]
      %v1298 = vld [vmem:[%s1 + $0x3a8] sm:$0xff]
      %v1299 = vld [vmem:[%s1 + $0x3b0] sm:$0xff]
      %v1300 = vld [vmem:[%s1 + $0x3b8] sm:$0xff]
      %v1301 = vld [vmem:[%s1 + $0x3c0] sm:$0xff]
      %v1302 = vld [vmem:[%s1 + $0x3c8] sm:$0xff]
      %v1303 = vld [vmem:[%s1 + $0x3d0] sm:$0xff]
      %v1304 = vld [vmem:[%s1 + $0x3d8] sm:$0xff]
      %v1305 = vld [vmem:[%s1 + $0x3e0] sm:$0xff]
      %v1306 = vld [vmem:[%s1 + $0x3e8] sm:$0xff]
      %v1307 = vld [vmem:[%s1 + $0x3f0] sm:$0xff]
      %v1308 = vld [vmem:[%s1 + $0x3f8] sm:$0xff]
      %v1309 = vld [vmem:[%s1 + $0x400] sm:$0xff]
      %v1310 = vld [vmem:[%s1 + $0x408] sm:$0xff]
      %v1311 = vld [vmem:[%s1 + $0x410] sm:$0xff]
      %v1312 = vld [vmem:[%s1 + $0x418] sm:$0xff]
      %v1313 = vld [vmem:[%s1 + $0x420] sm:$0xff]
      %v1314 = vld [vmem:[%s1 + $0x428] sm:$0xff]
      %v1315 = vld [vmem:[%s1 + $0x430] sm:$0xff]
      %v1316 = vld [vmem:[%s1 + $0x438] sm:$0xff]
      %v1317 = vld [vmem:[%s1 + $0x440] sm:$0xff]
      %v1318 = vld [vmem:[%s1 + $0x448] sm:$0xff]
      %v1319 = vld [vmem:[%s1 + $0x450] sm:$0xff]
      %v1320 = vld [vmem:[%s1 + $0x458] sm:$0xff]
      %v1321 = vld [vmem:[%s1 + $0x460] sm:$0xff]
      %v1322 = vld [vmem:[%s1 + $0x468] sm:$0xff]
      %v1323 = vld [vmem:[%s1 + $0x470] sm:$0xff]
      %v1324 = vld [vmem:[%s1 + $0x478] sm:$0xff]
      %1325 = vmatpush.msra.mxu0 %v1196
      %1326 = vmatpush.msra.mxu0 %v1195
      %1327 = vmatpush.msra.mxu0 %v1194
      %1328 = vmatpush.msra.mxu0 %v1193
      %1329 = vmatpush.msra.mxu0 %v1192
      %1330 = vmatpush.msra.mxu0 %v1191
      %1331 = vmatpush.msra.mxu0 %v1190
      %1332 = vmatpush.msra.mxu0 %v1189
      %1333 = vmatpush.msra.mxu0 %v1188
      %1334 = vmatpush.msra.mxu0 %v1187
      %1335 = vmatpush.msra.mxu0 %v1186
      %1336 = vmatpush.msra.mxu0 %v1185
      %1337 = vmatpush.msra.mxu0 %v1184
      %1338 = vmatpush.msra.mxu0 %v1183
      %1339 = vmatpush.msra.mxu0 %v1182
      %1340 = vmatpush.msra.mxu0 %v1181
      %1341 = vmatmul.f32.gmra.mxu0 %v857
      %v1342 = vpop.f32.mrf.mxu0
      %v1343 = vadd.f32 0.0, %v1342
      %1344 = vmatmul.f32.gmra.mxu0 %v866
      %v1345 = vpop.f32.mrf.mxu0
      %v1346 = vadd.f32 0.0, %v1345
      %1347 = vmatmul.f32.gmra.mxu0 %v875
      %v1348 = vpop.f32.mrf.mxu0
      %v1349 = vadd.f32 0.0, %v1348
      %1350 = vmatmul.f32.gmra.mxu0 %v884
      %v1351 = vpop.f32.mrf.mxu0
      %v1352 = vadd.f32 0.0, %v1351
      %1353 = vmatmul.f32.gmra.mxu0 %v893
      %v1354 = vpop.f32.mrf.mxu0
      %v1355 = vadd.f32 0.0, %v1354
      %1356 = vmatmul.f32.gmra.mxu0 %v902
      %v1357 = vpop.f32.mrf.mxu0
      %v1358 = vadd.f32 0.0, %v1357
      %1359 = vmatmul.f32.gmra.mxu0 %v911
      %v1360 = vpop.f32.mrf.mxu0
      %v1361 = vadd.f32 0.0, %v1360
      %1362 = vmatmul.f32.gmra.mxu0 %v920
      %v1363 = vpop.f32.mrf.mxu0
      %v1364 = vadd.f32 0.0, %v1363
      %1365 = vmatmul.f32.gmra.mxu0 %v929
      %v1366 = vpop.f32.mrf.mxu0
      %v1367 = vadd.f32 0.0, %v1366
      %1368 = vmatmul.f32.gmra.mxu0 %v938
      %v1369 = vpop.f32.mrf.mxu0
      %v1370 = vadd.f32 0.0, %v1369
      %1371 = vmatmul.f32.gmra.mxu0 %v947
      %v1372 = vpop.f32.mrf.mxu0
      %v1373 = vadd.f32 0.0, %v1372
      %1374 = vmatmul.f32.gmra.mxu0 %v956
      %v1375 = vpop.f32.mrf.mxu0
      %v1376 = vadd.f32 0.0, %v1375
      %1377 = vmatmul.f32.gmra.mxu0 %v965
      %v1378 = vpop.f32.mrf.mxu0
      %v1379 = vadd.f32 0.0, %v1378
      %1380 = vmatmul.f32.gmra.mxu0 %v974
      %v1381 = vpop.f32.mrf.mxu0
      %v1382 = vadd.f32 0.0, %v1381
      %1383 = vmatmul.f32.gmra.mxu0 %v983
      %v1384 = vpop.f32.mrf.mxu0
      %v1385 = vadd.f32 0.0, %v1384
      %1386 = vmatmul.f32.gmra.mxu0 %v992
      %v1387 = vpop.f32.mrf.mxu0
      %v1388 = vadd.f32 0.0, %v1387
      %1389 = vmatmul.f32.gmra.mxu0 %v1001
      %v1390 = vpop.f32.mrf.mxu0
      %v1391 = vadd.f32 0.0, %v1390
      %1392 = vmatmul.f32.gmra.mxu0 %v1010
      %v1393 = vpop.f32.mrf.mxu0
      %v1394 = vadd.f32 0.0, %v1393
      %1395 = vmatmul.f32.gmra.mxu0 %v1019
      %v1396 = vpop.f32.mrf.mxu0
      %v1397 = vadd.f32 0.0, %v1396
      %1398 = vmatmul.f32.gmra.mxu0 %v1028
      %v1399 = vpop.f32.mrf.mxu0
      %v1400 = vadd.f32 0.0, %v1399
      %1401 = vmatmul.f32.gmra.mxu0 %v1037
      %v1402 = vpop.f32.mrf.mxu0
      %v1403 = vadd.f32 0.0, %v1402
      %1404 = vmatmul.f32.gmra.mxu0 %v1046
      %v1405 = vpop.f32.mrf.mxu0
      %v1406 = vadd.f32 0.0, %v1405
      %1407 = vmatmul.f32.gmra.mxu0 %v1055
      %v1408 = vpop.f32.mrf.mxu0
      %v1409 = vadd.f32 0.0, %v1408
      %1410 = vmatmul.f32.gmra.mxu0 %v1064
      %v1411 = vpop.f32.mrf.mxu0
      %v1412 = vadd.f32 0.0, %v1411
      %1413 = vmatmul.f32.gmra.mxu0 %v1073
      %v1414 = vpop.f32.mrf.mxu0
      %v1415 = vadd.f32 0.0, %v1414
      %1416 = vmatmul.f32.gmra.mxu0 %v1082
      %v1417 = vpop.f32.mrf.mxu0
      %v1418 = vadd.f32 0.0, %v1417
      %1419 = vmatmul.f32.gmra.mxu0 %v1091
      %v1420 = vpop.f32.mrf.mxu0
      %v1421 = vadd.f32 0.0, %v1420
      %1422 = vmatmul.f32.gmra.mxu0 %v1100
      %v1423 = vpop.f32.mrf.mxu0
      %v1424 = vadd.f32 0.0, %v1423
      %1425 = vmatmul.f32.gmra.mxu0 %v1109
      %v1426 = vpop.f32.mrf.mxu0
      %v1427 = vadd.f32 0.0, %v1426
      %1428 = vmatmul.f32.gmra.mxu0 %v1118
      %v1429 = vpop.f32.mrf.mxu0
      %v1430 = vadd.f32 0.0, %v1429
      %1431 = vmatmul.f32.gmra.mxu0 %v1127
      %v1432 = vpop.f32.mrf.mxu0
      %v1433 = vadd.f32 0.0, %v1432
      %1434 = vmatmul.f32.gmra.mxu0 %v1136
      %v1435 = vpop.f32.mrf.mxu0
      %v1436 = vadd.f32 0.0, %v1435
      %1437 = vmatmul.f32.gmra.mxu0 %v1145
      %v1438 = vpop.f32.mrf.mxu0
      %v1439 = vadd.f32 0.0, %v1438
      %1440 = vmatmul.f32.gmra.mxu0 %v1154
      %v1441 = vpop.f32.mrf.mxu0
      %v1442 = vadd.f32 0.0, %v1441
      %1443 = vmatmul.f32.gmra.mxu0 %v1163
      %v1444 = vpop.f32.mrf.mxu0
      %v1445 = vadd.f32 0.0, %v1444
      %1446 = vmatmul.f32.gmra.mxu0 %v1172
      %v1447 = vpop.f32.mrf.mxu0
      %v1448 = vadd.f32 0.0, %v1447
      %1449 = vdwg.mxu0
      %1450 = vmatpush.msra.mxu0 %v1212
      %1451 = vmatpush.msra.mxu0 %v1211
      %1452 = vmatpush.msra.mxu0 %v1210
      %1453 = vmatpush.msra.mxu0 %v1209
      %1454 = vmatpush.msra.mxu0 %v1208
      %1455 = vmatpush.msra.mxu0 %v1207
      %1456 = vmatpush.msra.mxu0 %v1206
      %1457 = vmatpush.msra.mxu0 %v1205
      %1458 = vmatpush.msra.mxu0 %v1204
      %1459 = vmatpush.msra.mxu0 %v1203
      %1460 = vmatpush.msra.mxu0 %v1202
      %1461 = vmatpush.msra.mxu0 %v1201
      %1462 = vmatpush.msra.mxu0 %v1200
      %1463 = vmatpush.msra.mxu0 %v1199
      %1464 = vmatpush.msra.mxu0 %v1198
      %1465 = vmatpush.msra.mxu0 %v1197
      %1466 = vmatmul.f32.gmra.mxu0 %v858
      %v1467 = vpop.f32.mrf.mxu0
      %v1468 = vadd.f32 %v1343, %v1467
      %1469 = vmatmul.f32.gmra.mxu0 %v867
      %v1470 = vpop.f32.mrf.mxu0
      %v1471 = vadd.f32 %v1346, %v1470
      %1472 = vmatmul.f32.gmra.mxu0 %v876
      %v1473 = vpop.f32.mrf.mxu0
      %v1474 = vadd.f32 %v1349, %v1473
      %1475 = vmatmul.f32.gmra.mxu0 %v885
      %v1476 = vpop.f32.mrf.mxu0
      %v1477 = vadd.f32 %v1352, %v1476
      %1478 = vmatmul.f32.gmra.mxu0 %v894
      %v1479 = vpop.f32.mrf.mxu0
      %v1480 = vadd.f32 %v1355, %v1479
      %1481 = vmatmul.f32.gmra.mxu0 %v903
      %v1482 = vpop.f32.mrf.mxu0
      %v1483 = vadd.f32 %v1358, %v1482
      %1484 = vmatmul.f32.gmra.mxu0 %v912
      %v1485 = vpop.f32.mrf.mxu0
      %v1486 = vadd.f32 %v1361, %v1485
      %1487 = vmatmul.f32.gmra.mxu0 %v921
      %v1488 = vpop.f32.mrf.mxu0
      %v1489 = vadd.f32 %v1364, %v1488
      %1490 = vmatmul.f32.gmra.mxu0 %v930
      %v1491 = vpop.f32.mrf.mxu0
      %v1492 = vadd.f32 %v1367, %v1491
      %1493 = vmatmul.f32.gmra.mxu0 %v939
      %v1494 = vpop.f32.mrf.mxu0
      %v1495 = vadd.f32 %v1370, %v1494
      %1496 = vmatmul.f32.gmra.mxu0 %v948
      %v1497 = vpop.f32.mrf.mxu0
      %v1498 = vadd.f32 %v1373, %v1497
      %1499 = vmatmul.f32.gmra.mxu0 %v957
      %v1500 = vpop.f32.mrf.mxu0
      %v1501 = vadd.f32 %v1376, %v1500
      %1502 = vmatmul.f32.gmra.mxu0 %v966
      %v1503 = vpop.f32.mrf.mxu0
      %v1504 = vadd.f32 %v1379, %v1503
      %1505 = vmatmul.f32.gmra.mxu0 %v975
      %v1506 = vpop.f32.mrf.mxu0
      %v1507 = vadd.f32 %v1382, %v1506
      %1508 = vmatmul.f32.gmra.mxu0 %v984
      %v1509 = vpop.f32.mrf.mxu0
      %v1510 = vadd.f32 %v1385, %v1509
      %1511 = vmatmul.f32.gmra.mxu0 %v993
      %v1512 = vpop.f32.mrf.mxu0
      %v1513 = vadd.f32 %v1388, %v1512
      %1514 = vmatmul.f32.gmra.mxu0 %v1002
      %v1515 = vpop.f32.mrf.mxu0
      %v1516 = vadd.f32 %v1391, %v1515
      %1517 = vmatmul.f32.gmra.mxu0 %v1011
      %v1518 = vpop.f32.mrf.mxu0
      %v1519 = vadd.f32 %v1394, %v1518
      %1520 = vmatmul.f32.gmra.mxu0 %v1020
      %v1521 = vpop.f32.mrf.mxu0
      %v1522 = vadd.f32 %v1397, %v1521
      %1523 = vmatmul.f32.gmra.mxu0 %v1029
      %v1524 = vpop.f32.mrf.mxu0
      %v1525 = vadd.f32 %v1400, %v1524
      %1526 = vmatmul.f32.gmra.mxu0 %v1038
      %v1527 = vpop.f32.mrf.mxu0
      %v1528 = vadd.f32 %v1403, %v1527
      %1529 = vmatmul.f32.gmra.mxu0 %v1047
      %v1530 = vpop.f32.mrf.mxu0
      %v1531 = vadd.f32 %v1406, %v1530
      %1532 = vmatmul.f32.gmra.mxu0 %v1056
      %v1533 = vpop.f32.mrf.mxu0
      %v1534 = vadd.f32 %v1409, %v1533
      %1535 = vmatmul.f32.gmra.mxu0 %v1065
      %v1536 = vpop.f32.mrf.mxu0
      %v1537 = vadd.f32 %v1412, %v1536
      %1538 = vmatmul.f32.gmra.mxu0 %v1074
      %v1539 = vpop.f32.mrf.mxu0
      %v1540 = vadd.f32 %v1415, %v1539
      %1541 = vmatmul.f32.gmra.mxu0 %v1083
      %v1542 = vpop.f32.mrf.mxu0
      %v1543 = vadd.f32 %v1418, %v1542
      %1544 = vmatmul.f32.gmra.mxu0 %v1092
      %v1545 = vpop.f32.mrf.mxu0
      %v1546 = vadd.f32 %v1421, %v1545
      %1547 = vmatmul.f32.gmra.mxu0 %v1101
      %v1548 = vpop.f32.mrf.mxu0
      %v1549 = vadd.f32 %v1424, %v1548
      %1550 = vmatmul.f32.gmra.mxu0 %v1110
      %v1551 = vpop.f32.mrf.mxu0
      %v1552 = vadd.f32 %v1427, %v1551
      %1553 = vmatmul.f32.gmra.mxu0 %v1119
      %v1554 = vpop.f32.mrf.mxu0
      %v1555 = vadd.f32 %v1430, %v1554
      %1556 = vmatmul.f32.gmra.mxu0 %v1128
      %v1557 = vpop.f32.mrf.mxu0
      %v1558 = vadd.f32 %v1433, %v1557
      %1559 = vmatmul.f32.gmra.mxu0 %v1137
      %v1560 = vpop.f32.mrf.mxu0
      %v1561 = vadd.f32 %v1436, %v1560
      %1562 = vmatmul.f32.gmra.mxu0 %v1146
      %v1563 = vpop.f32.mrf.mxu0
      %v1564 = vadd.f32 %v1439, %v1563
      %1565 = vmatmul.f32.gmra.mxu0 %v1155
      %v1566 = vpop.f32.mrf.mxu0
      %v1567 = vadd.f32 %v1442, %v1566
      %1568 = vmatmul.f32.gmra.mxu0 %v1164
      %v1569 = vpop.f32.mrf.mxu0
      %v1570 = vadd.f32 %v1445, %v1569
      %1571 = vmatmul.f32.gmra.mxu0 %v1173
      %v1572 = vpop.f32.mrf.mxu0
      %v1573 = vadd.f32 %v1448, %v1572
      %1574 = vdwg.mxu0
      %1575 = vmatpush.msra.mxu0 %v1228
      %1576 = vmatpush.msra.mxu0 %v1227
      %1577 = vmatpush.msra.mxu0 %v1226
      %1578 = vmatpush.msra.mxu0 %v1225
      %1579 = vmatpush.msra.mxu0 %v1224
      %1580 = vmatpush.msra.mxu0 %v1223
      %1581 = vmatpush.msra.mxu0 %v1222
      %1582 = vmatpush.msra.mxu0 %v1221
      %1583 = vmatpush.msra.mxu0 %v1220
      %1584 = vmatpush.msra.mxu0 %v1219
      %1585 = vmatpush.msra.mxu0 %v1218
      %1586 = vmatpush.msra.mxu0 %v1217
      %1587 = vmatpush.msra.mxu0 %v1216
      %1588 = vmatpush.msra.mxu0 %v1215
      %1589 = vmatpush.msra.mxu0 %v1214
      %1590 = vmatpush.msra.mxu0 %v1213
      %1591 = vmatmul.f32.gmra.mxu0 %v859
      %v1592 = vpop.f32.mrf.mxu0
      %v1593 = vadd.f32 %v1468, %v1592
      %1594 = vmatmul.f32.gmra.mxu0 %v868
      %v1595 = vpop.f32.mrf.mxu0
      %v1596 = vadd.f32 %v1471, %v1595
      %1597 = vmatmul.f32.gmra.mxu0 %v877
      %v1598 = vpop.f32.mrf.mxu0
      %v1599 = vadd.f32 %v1474, %v1598
      %1600 = vmatmul.f32.gmra.mxu0 %v886
      %v1601 = vpop.f32.mrf.mxu0
      %v1602 = vadd.f32 %v1477, %v1601
      %1603 = vmatmul.f32.gmra.mxu0 %v895
      %v1604 = vpop.f32.mrf.mxu0
      %v1605 = vadd.f32 %v1480, %v1604
      %1606 = vmatmul.f32.gmra.mxu0 %v904
      %v1607 = vpop.f32.mrf.mxu0
      %v1608 = vadd.f32 %v1483, %v1607
      %1609 = vmatmul.f32.gmra.mxu0 %v913
      %v1610 = vpop.f32.mrf.mxu0
      %v1611 = vadd.f32 %v1486, %v1610
      %1612 = vmatmul.f32.gmra.mxu0 %v922
      %v1613 = vpop.f32.mrf.mxu0
      %v1614 = vadd.f32 %v1489, %v1613
      %1615 = vmatmul.f32.gmra.mxu0 %v931
      %v1616 = vpop.f32.mrf.mxu0
      %v1617 = vadd.f32 %v1492, %v1616
      %1618 = vmatmul.f32.gmra.mxu0 %v940
      %v1619 = vpop.f32.mrf.mxu0
      %v1620 = vadd.f32 %v1495, %v1619
      %1621 = vmatmul.f32.gmra.mxu0 %v949
      %v1622 = vpop.f32.mrf.mxu0
      %v1623 = vadd.f32 %v1498, %v1622
      %1624 = vmatmul.f32.gmra.mxu0 %v958
      %v1625 = vpop.f32.mrf.mxu0
      %v1626 = vadd.f32 %v1501, %v1625
      %1627 = vmatmul.f32.gmra.mxu0 %v967
      %v1628 = vpop.f32.mrf.mxu0
      %v1629 = vadd.f32 %v1504, %v1628
      %1630 = vmatmul.f32.gmra.mxu0 %v976
      %v1631 = vpop.f32.mrf.mxu0
      %v1632 = vadd.f32 %v1507, %v1631
      %1633 = vmatmul.f32.gmra.mxu0 %v985
      %v1634 = vpop.f32.mrf.mxu0
      %v1635 = vadd.f32 %v1510, %v1634
      %1636 = vmatmul.f32.gmra.mxu0 %v994
      %v1637 = vpop.f32.mrf.mxu0
      %v1638 = vadd.f32 %v1513, %v1637
      %1639 = vmatmul.f32.gmra.mxu0 %v1003
      %v1640 = vpop.f32.mrf.mxu0
      %v1641 = vadd.f32 %v1516, %v1640
      %1642 = vmatmul.f32.gmra.mxu0 %v1012
      %v1643 = vpop.f32.mrf.mxu0
      %v1644 = vadd.f32 %v1519, %v1643
      %1645 = vmatmul.f32.gmra.mxu0 %v1021
      %v1646 = vpop.f32.mrf.mxu0
      %v1647 = vadd.f32 %v1522, %v1646
      %1648 = vmatmul.f32.gmra.mxu0 %v1030
      %v1649 = vpop.f32.mrf.mxu0
      %v1650 = vadd.f32 %v1525, %v1649
      %1651 = vmatmul.f32.gmra.mxu0 %v1039
      %v1652 = vpop.f32.mrf.mxu0
      %v1653 = vadd.f32 %v1528, %v1652
      %1654 = vmatmul.f32.gmra.mxu0 %v1048
      %v1655 = vpop.f32.mrf.mxu0
      %v1656 = vadd.f32 %v1531, %v1655
      %1657 = vmatmul.f32.gmra.mxu0 %v1057
      %v1658 = vpop.f32.mrf.mxu0
      %v1659 = vadd.f32 %v1534, %v1658
      %1660 = vmatmul.f32.gmra.mxu0 %v1066
      %v1661 = vpop.f32.mrf.mxu0
      %v1662 = vadd.f32 %v1537, %v1661
      %1663 = vmatmul.f32.gmra.mxu0 %v1075
      %v1664 = vpop.f32.mrf.mxu0
      %v1665 = vadd.f32 %v1540, %v1664
      %1666 = vmatmul.f32.gmra.mxu0 %v1084
      %v1667 = vpop.f32.mrf.mxu0
      %v1668 = vadd.f32 %v1543, %v1667
      %1669 = vmatmul.f32.gmra.mxu0 %v1093
      %v1670 = vpop.f32.mrf.mxu0
      %v1671 = vadd.f32 %v1546, %v1670
      %1672 = vmatmul.f32.gmra.mxu0 %v1102
      %v1673 = vpop.f32.mrf.mxu0
      %v1674 = vadd.f32 %v1549, %v1673
      %1675 = vmatmul.f32.gmra.mxu0 %v1111
      %v1676 = vpop.f32.mrf.mxu0
      %v1677 = vadd.f32 %v1552, %v1676
      %1678 = vmatmul.f32.gmra.mxu0 %v1120
      %v1679 = vpop.f32.mrf.mxu0
      %v1680 = vadd.f32 %v1555, %v1679
      %1681 = vmatmul.f32.gmra.mxu0 %v1129
      %v1682 = vpop.f32.mrf.mxu0
      %v1683 = vadd.f32 %v1558, %v1682
      %1684 = vmatmul.f32.gmra.mxu0 %v1138
      %v1685 = vpop.f32.mrf.mxu0
      %v1686 = vadd.f32 %v1561, %v1685
      %1687 = vmatmul.f32.gmra.mxu0 %v1147
      %v1688 = vpop.f32.mrf.mxu0
      %v1689 = vadd.f32 %v1564, %v1688
      %1690 = vmatmul.f32.gmra.mxu0 %v1156
      %v1691 = vpop.f32.mrf.mxu0
      %v1692 = vadd.f32 %v1567, %v1691
      %1693 = vmatmul.f32.gmra.mxu0 %v1165
      %v1694 = vpop.f32.mrf.mxu0
      %v1695 = vadd.f32 %v1570, %v1694
      %1696 = vmatmul.f32.gmra.mxu0 %v1174
      %v1697 = vpop.f32.mrf.mxu0
      %v1698 = vadd.f32 %v1573, %v1697
      %1699 = vdwg.mxu0
      %1700 = vmatpush.msra.mxu0 %v1244
      %1701 = vmatpush.msra.mxu0 %v1243
      %1702 = vmatpush.msra.mxu0 %v1242
      %1703 = vmatpush.msra.mxu0 %v1241
      %1704 = vmatpush.msra.mxu0 %v1240
      %1705 = vmatpush.msra.mxu0 %v1239
      %1706 = vmatpush.msra.mxu0 %v1238
      %1707 = vmatpush.msra.mxu0 %v1237
      %1708 = vmatpush.msra.mxu0 %v1236
      %1709 = vmatpush.msra.mxu0 %v1235
      %1710 = vmatpush.msra.mxu0 %v1234
      %1711 = vmatpush.msra.mxu0 %v1233
      %1712 = vmatpush.msra.mxu0 %v1232
      %1713 = vmatpush.msra.mxu0 %v1231
      %1714 = vmatpush.msra.mxu0 %v1230
      %1715 = vmatpush.msra.mxu0 %v1229
      %1716 = vmatmul.f32.gmra.mxu0 %v860
      %v1717 = vpop.f32.mrf.mxu0
      %v1718 = vadd.f32 %v1593, %v1717
      %1719 = vmatmul.f32.gmra.mxu0 %v869
      %v1720 = vpop.f32.mrf.mxu0
      %v1721 = vadd.f32 %v1596, %v1720
      %1722 = vmatmul.f32.gmra.mxu0 %v878
      %v1723 = vpop.f32.mrf.mxu0
      %v1724 = vadd.f32 %v1599, %v1723
      %1725 = vmatmul.f32.gmra.mxu0 %v887
      %v1726 = vpop.f32.mrf.mxu0
      %v1727 = vadd.f32 %v1602, %v1726
      %1728 = vmatmul.f32.gmra.mxu0 %v896
      %v1729 = vpop.f32.mrf.mxu0
      %v1730 = vadd.f32 %v1605, %v1729
      %1731 = vmatmul.f32.gmra.mxu0 %v905
      %v1732 = vpop.f32.mrf.mxu0
      %v1733 = vadd.f32 %v1608, %v1732
      %1734 = vmatmul.f32.gmra.mxu0 %v914
      %v1735 = vpop.f32.mrf.mxu0
      %v1736 = vadd.f32 %v1611, %v1735
      %1737 = vmatmul.f32.gmra.mxu0 %v923
      %v1738 = vpop.f32.mrf.mxu0
      %v1739 = vadd.f32 %v1614, %v1738
      %1740 = vmatmul.f32.gmra.mxu0 %v932
      %v1741 = vpop.f32.mrf.mxu0
      %v1742 = vadd.f32 %v1617, %v1741
      %1743 = vmatmul.f32.gmra.mxu0 %v941
      %v1744 = vpop.f32.mrf.mxu0
      %v1745 = vadd.f32 %v1620, %v1744
      %1746 = vmatmul.f32.gmra.mxu0 %v950
      %v1747 = vpop.f32.mrf.mxu0
      %v1748 = vadd.f32 %v1623, %v1747
      %1749 = vmatmul.f32.gmra.mxu0 %v959
      %v1750 = vpop.f32.mrf.mxu0
      %v1751 = vadd.f32 %v1626, %v1750
      %1752 = vmatmul.f32.gmra.mxu0 %v968
      %v1753 = vpop.f32.mrf.mxu0
      %v1754 = vadd.f32 %v1629, %v1753
      %1755 = vmatmul.f32.gmra.mxu0 %v977
      %v1756 = vpop.f32.mrf.mxu0
      %v1757 = vadd.f32 %v1632, %v1756
      %1758 = vmatmul.f32.gmra.mxu0 %v986
      %v1759 = vpop.f32.mrf.mxu0
      %v1760 = vadd.f32 %v1635, %v1759
      %1761 = vmatmul.f32.gmra.mxu0 %v995
      %v1762 = vpop.f32.mrf.mxu0
      %v1763 = vadd.f32 %v1638, %v1762
      %1764 = vmatmul.f32.gmra.mxu0 %v1004
      %v1765 = vpop.f32.mrf.mxu0
      %v1766 = vadd.f32 %v1641, %v1765
      %1767 = vmatmul.f32.gmra.mxu0 %v1013
      %v1768 = vpop.f32.mrf.mxu0
      %v1769 = vadd.f32 %v1644, %v1768
      %1770 = vmatmul.f32.gmra.mxu0 %v1022
      %v1771 = vpop.f32.mrf.mxu0
      %v1772 = vadd.f32 %v1647, %v1771
      %1773 = vmatmul.f32.gmra.mxu0 %v1031
      %v1774 = vpop.f32.mrf.mxu0
      %v1775 = vadd.f32 %v1650, %v1774
      %1776 = vmatmul.f32.gmra.mxu0 %v1040
      %v1777 = vpop.f32.mrf.mxu0
      %v1778 = vadd.f32 %v1653, %v1777
      %1779 = vmatmul.f32.gmra.mxu0 %v1049
      %v1780 = vpop.f32.mrf.mxu0
      %v1781 = vadd.f32 %v1656, %v1780
      %1782 = vmatmul.f32.gmra.mxu0 %v1058
      %v1783 = vpop.f32.mrf.mxu0
      %v1784 = vadd.f32 %v1659, %v1783
      %1785 = vmatmul.f32.gmra.mxu0 %v1067
      %v1786 = vpop.f32.mrf.mxu0
      %v1787 = vadd.f32 %v1662, %v1786
      %1788 = vmatmul.f32.gmra.mxu0 %v1076
      %v1789 = vpop.f32.mrf.mxu0
      %v1790 = vadd.f32 %v1665, %v1789
      %1791 = vmatmul.f32.gmra.mxu0 %v1085
      %v1792 = vpop.f32.mrf.mxu0
      %v1793 = vadd.f32 %v1668, %v1792
      %1794 = vmatmul.f32.gmra.mxu0 %v1094
      %v1795 = vpop.f32.mrf.mxu0
      %v1796 = vadd.f32 %v1671, %v1795
      %1797 = vmatmul.f32.gmra.mxu0 %v1103
      %v1798 = vpop.f32.mrf.mxu0
      %v1799 = vadd.f32 %v1674, %v1798
      %1800 = vmatmul.f32.gmra.mxu0 %v1112
      %v1801 = vpop.f32.mrf.mxu0
      %v1802 = vadd.f32 %v1677, %v1801
      %1803 = vmatmul.f32.gmra.mxu0 %v1121
      %v1804 = vpop.f32.mrf.mxu0
      %v1805 = vadd.f32 %v1680, %v1804
      %1806 = vmatmul.f32.gmra.mxu0 %v1130
      %v1807 = vpop.f32.mrf.mxu0
      %v1808 = vadd.f32 %v1683, %v1807
      %1809 = vmatmul.f32.gmra.mxu0 %v1139
      %v1810 = vpop.f32.mrf.mxu0
      %v1811 = vadd.f32 %v1686, %v1810
      %1812 = vmatmul.f32.gmra.mxu0 %v1148
      %v1813 = vpop.f32.mrf.mxu0
      %v1814 = vadd.f32 %v1689, %v1813
      %1815 = vmatmul.f32.gmra.mxu0 %v1157
      %v1816 = vpop.f32.mrf.mxu0
      %v1817 = vadd.f32 %v1692, %v1816
      %1818 = vmatmul.f32.gmra.mxu0 %v1166
      %v1819 = vpop.f32.mrf.mxu0
      %v1820 = vadd.f32 %v1695, %v1819
      %1821 = vmatmul.f32.gmra.mxu0 %v1175
      %v1822 = vpop.f32.mrf.mxu0
      %v1823 = vadd.f32 %v1698, %v1822
      %1824 = vdwg.mxu0
      %1825 = vmatpush.msra.mxu0 %v1260
      %1826 = vmatpush.msra.mxu0 %v1259
      %1827 = vmatpush.msra.mxu0 %v1258
      %1828 = vmatpush.msra.mxu0 %v1257
      %1829 = vmatpush.msra.mxu0 %v1256
      %1830 = vmatpush.msra.mxu0 %v1255
      %1831 = vmatpush.msra.mxu0 %v1254
      %1832 = vmatpush.msra.mxu0 %v1253
      %1833 = vmatpush.msra.mxu0 %v1252
      %1834 = vmatpush.msra.mxu0 %v1251
      %1835 = vmatpush.msra.mxu0 %v1250
      %1836 = vmatpush.msra.mxu0 %v1249
      %1837 = vmatpush.msra.mxu0 %v1248
      %1838 = vmatpush.msra.mxu0 %v1247
      %1839 = vmatpush.msra.mxu0 %v1246
      %1840 = vmatpush.msra.mxu0 %v1245
      %1841 = vmatmul.f32.gmra.mxu0 %v861
      %v1842 = vpop.f32.mrf.mxu0
      %v1843 = vadd.f32 %v1718, %v1842
      %1844 = vmatmul.f32.gmra.mxu0 %v870
      %v1845 = vpop.f32.mrf.mxu0
      %v1846 = vadd.f32 %v1721, %v1845
      %1847 = vmatmul.f32.gmra.mxu0 %v879
      %v1848 = vpop.f32.mrf.mxu0
      %v1849 = vadd.f32 %v1724, %v1848
      %1850 = vmatmul.f32.gmra.mxu0 %v888
      %v1851 = vpop.f32.mrf.mxu0
      %v1852 = vadd.f32 %v1727, %v1851
      %1853 = vmatmul.f32.gmra.mxu0 %v897
      %v1854 = vpop.f32.mrf.mxu0
      %v1855 = vadd.f32 %v1730, %v1854
      %1856 = vmatmul.f32.gmra.mxu0 %v906
      %v1857 = vpop.f32.mrf.mxu0
      %v1858 = vadd.f32 %v1733, %v1857
      %1859 = vmatmul.f32.gmra.mxu0 %v915
      %v1860 = vpop.f32.mrf.mxu0
      %v1861 = vadd.f32 %v1736, %v1860
      %1862 = vmatmul.f32.gmra.mxu0 %v924
      %v1863 = vpop.f32.mrf.mxu0
      %v1864 = vadd.f32 %v1739, %v1863
      %1865 = vmatmul.f32.gmra.mxu0 %v933
      %v1866 = vpop.f32.mrf.mxu0
      %v1867 = vadd.f32 %v1742, %v1866
      %1868 = vmatmul.f32.gmra.mxu0 %v942
      %v1869 = vpop.f32.mrf.mxu0
      %v1870 = vadd.f32 %v1745, %v1869
      %1871 = vmatmul.f32.gmra.mxu0 %v951
      %v1872 = vpop.f32.mrf.mxu0
      %v1873 = vadd.f32 %v1748, %v1872
      %1874 = vmatmul.f32.gmra.mxu0 %v960
      %v1875 = vpop.f32.mrf.mxu0
      %v1876 = vadd.f32 %v1751, %v1875
      %1877 = vmatmul.f32.gmra.mxu0 %v969
      %v1878 = vpop.f32.mrf.mxu0
      %v1879 = vadd.f32 %v1754, %v1878
      %1880 = vmatmul.f32.gmra.mxu0 %v978
      %v1881 = vpop.f32.mrf.mxu0
      %v1882 = vadd.f32 %v1757, %v1881
      %1883 = vmatmul.f32.gmra.mxu0 %v987
      %v1884 = vpop.f32.mrf.mxu0
      %v1885 = vadd.f32 %v1760, %v1884
      %1886 = vmatmul.f32.gmra.mxu0 %v996
      %v1887 = vpop.f32.mrf.mxu0
      %v1888 = vadd.f32 %v1763, %v1887
      %1889 = vmatmul.f32.gmra.mxu0 %v1005
      %v1890 = vpop.f32.mrf.mxu0
      %v1891 = vadd.f32 %v1766, %v1890
      %1892 = vmatmul.f32.gmra.mxu0 %v1014
      %v1893 = vpop.f32.mrf.mxu0
      %v1894 = vadd.f32 %v1769, %v1893
      %1895 = vmatmul.f32.gmra.mxu0 %v1023
      %v1896 = vpop.f32.mrf.mxu0
      %v1897 = vadd.f32 %v1772, %v1896
      %1898 = vmatmul.f32.gmra.mxu0 %v1032
      %v1899 = vpop.f32.mrf.mxu0
      %v1900 = vadd.f32 %v1775, %v1899
      %1901 = vmatmul.f32.gmra.mxu0 %v1041
      %v1902 = vpop.f32.mrf.mxu0
      %v1903 = vadd.f32 %v1778, %v1902
      %1904 = vmatmul.f32.gmra.mxu0 %v1050
      %v1905 = vpop.f32.mrf.mxu0
      %v1906 = vadd.f32 %v1781, %v1905
      %1907 = vmatmul.f32.gmra.mxu0 %v1059
      %v1908 = vpop.f32.mrf.mxu0
      %v1909 = vadd.f32 %v1784, %v1908
      %1910 = vmatmul.f32.gmra.mxu0 %v1068
      %v1911 = vpop.f32.mrf.mxu0
      %v1912 = vadd.f32 %v1787, %v1911
      %1913 = vmatmul.f32.gmra.mxu0 %v1077
      %v1914 = vpop.f32.mrf.mxu0
      %v1915 = vadd.f32 %v1790, %v1914
      %1916 = vmatmul.f32.gmra.mxu0 %v1086
      %v1917 = vpop.f32.mrf.mxu0
      %v1918 = vadd.f32 %v1793, %v1917
      %1919 = vmatmul.f32.gmra.mxu0 %v1095
      %v1920 = vpop.f32.mrf.mxu0
      %v1921 = vadd.f32 %v1796, %v1920
      %1922 = vmatmul.f32.gmra.mxu0 %v1104
      %v1923 = vpop.f32.mrf.mxu0
      %v1924 = vadd.f32 %v1799, %v1923
      %1925 = vmatmul.f32.gmra.mxu0 %v1113
      %v1926 = vpop.f32.mrf.mxu0
      %v1927 = vadd.f32 %v1802, %v1926
      %1928 = vmatmul.f32.gmra.mxu0 %v1122
      %v1929 = vpop.f32.mrf.mxu0
      %v1930 = vadd.f32 %v1805, %v1929
      %1931 = vmatmul.f32.gmra.mxu0 %v1131
      %v1932 = vpop.f32.mrf.mxu0
      %v1933 = vadd.f32 %v1808, %v1932
      %1934 = vmatmul.f32.gmra.mxu0 %v1140
      %v1935 = vpop.f32.mrf.mxu0
      %v1936 = vadd.f32 %v1811, %v1935
      %1937 = vmatmul.f32.gmra.mxu0 %v1149
      %v1938 = vpop.f32.mrf.mxu0
      %v1939 = vadd.f32 %v1814, %v1938
      %1940 = vmatmul.f32.gmra.mxu0 %v1158
      %v1941 = vpop.f32.mrf.mxu0
      %v1942 = vadd.f32 %v1817, %v1941
      %1943 = vmatmul.f32.gmra.mxu0 %v1167
      %v1944 = vpop.f32.mrf.mxu0
      %v1945 = vadd.f32 %v1820, %v1944
      %1946 = vmatmul.f32.gmra.mxu0 %v1176
      %v1947 = vpop.f32.mrf.mxu0
      %v1948 = vadd.f32 %v1823, %v1947
      %1949 = vdwg.mxu0
      %1950 = vmatpush.msra.mxu0 %v1276
      %1951 = vmatpush.msra.mxu0 %v1275
      %1952 = vmatpush.msra.mxu0 %v1274
      %1953 = vmatpush.msra.mxu0 %v1273
      %1954 = vmatpush.msra.mxu0 %v1272
      %1955 = vmatpush.msra.mxu0 %v1271
      %1956 = vmatpush.msra.mxu0 %v1270
      %1957 = vmatpush.msra.mxu0 %v1269
      %1958 = vmatpush.msra.mxu0 %v1268
      %1959 = vmatpush.msra.mxu0 %v1267
      %1960 = vmatpush.msra.mxu0 %v1266
      %1961 = vmatpush.msra.mxu0 %v1265
      %1962 = vmatpush.msra.mxu0 %v1264
      %1963 = vmatpush.msra.mxu0 %v1263
      %1964 = vmatpush.msra.mxu0 %v1262
      %1965 = vmatpush.msra.mxu0 %v1261
      %1966 = vmatmul.f32.gmra.mxu0 %v862
      %v1967 = vpop.f32.mrf.mxu0
      %v1968 = vadd.f32 %v1843, %v1967
      %1969 = vmatmul.f32.gmra.mxu0 %v871
      %v1970 = vpop.f32.mrf.mxu0
      %v1971 = vadd.f32 %v1846, %v1970
      %1972 = vmatmul.f32.gmra.mxu0 %v880
      %v1973 = vpop.f32.mrf.mxu0
      %v1974 = vadd.f32 %v1849, %v1973
      %1975 = vmatmul.f32.gmra.mxu0 %v889
      %v1976 = vpop.f32.mrf.mxu0
      %v1977 = vadd.f32 %v1852, %v1976
      %1978 = vmatmul.f32.gmra.mxu0 %v898
      %v1979 = vpop.f32.mrf.mxu0
      %v1980 = vadd.f32 %v1855, %v1979
      %1981 = vmatmul.f32.gmra.mxu0 %v907
      %v1982 = vpop.f32.mrf.mxu0
      %v1983 = vadd.f32 %v1858, %v1982
      %1984 = vmatmul.f32.gmra.mxu0 %v916
      %v1985 = vpop.f32.mrf.mxu0
      %v1986 = vadd.f32 %v1861, %v1985
      %1987 = vmatmul.f32.gmra.mxu0 %v925
      %v1988 = vpop.f32.mrf.mxu0
      %v1989 = vadd.f32 %v1864, %v1988
      %1990 = vmatmul.f32.gmra.mxu0 %v934
      %v1991 = vpop.f32.mrf.mxu0
      %v1992 = vadd.f32 %v1867, %v1991
      %1993 = vmatmul.f32.gmra.mxu0 %v943
      %v1994 = vpop.f32.mrf.mxu0
      %v1995 = vadd.f32 %v1870, %v1994
      %1996 = vmatmul.f32.gmra.mxu0 %v952
      %v1997 = vpop.f32.mrf.mxu0
      %v1998 = vadd.f32 %v1873, %v1997
      %1999 = vmatmul.f32.gmra.mxu0 %v961
      %v2000 = vpop.f32.mrf.mxu0
      %v2001 = vadd.f32 %v1876, %v2000
      %2002 = vmatmul.f32.gmra.mxu0 %v970
      %v2003 = vpop.f32.mrf.mxu0
      %v2004 = vadd.f32 %v1879, %v2003
      %2005 = vmatmul.f32.gmra.mxu0 %v979
      %v2006 = vpop.f32.mrf.mxu0
      %v2007 = vadd.f32 %v1882, %v2006
      %2008 = vmatmul.f32.gmra.mxu0 %v988
      %v2009 = vpop.f32.mrf.mxu0
      %v2010 = vadd.f32 %v1885, %v2009
      %2011 = vmatmul.f32.gmra.mxu0 %v997
      %v2012 = vpop.f32.mrf.mxu0
      %v2013 = vadd.f32 %v1888, %v2012
      %2014 = vmatmul.f32.gmra.mxu0 %v1006
      %v2015 = vpop.f32.mrf.mxu0
      %v2016 = vadd.f32 %v1891, %v2015
      %2017 = vmatmul.f32.gmra.mxu0 %v1015
      %v2018 = vpop.f32.mrf.mxu0
      %v2019 = vadd.f32 %v1894, %v2018
      %2020 = vmatmul.f32.gmra.mxu0 %v1024
      %v2021 = vpop.f32.mrf.mxu0
      %v2022 = vadd.f32 %v1897, %v2021
      %2023 = vmatmul.f32.gmra.mxu0 %v1033
      %v2024 = vpop.f32.mrf.mxu0
      %v2025 = vadd.f32 %v1900, %v2024
      %2026 = vmatmul.f32.gmra.mxu0 %v1042
      %v2027 = vpop.f32.mrf.mxu0
      %v2028 = vadd.f32 %v1903, %v2027
      %2029 = vmatmul.f32.gmra.mxu0 %v1051
      %v2030 = vpop.f32.mrf.mxu0
      %v2031 = vadd.f32 %v1906, %v2030
      %2032 = vmatmul.f32.gmra.mxu0 %v1060
      %v2033 = vpop.f32.mrf.mxu0
      %v2034 = vadd.f32 %v1909, %v2033
      %2035 = vmatmul.f32.gmra.mxu0 %v1069
      %v2036 = vpop.f32.mrf.mxu0
      %v2037 = vadd.f32 %v1912, %v2036
      %2038 = vmatmul.f32.gmra.mxu0 %v1078
      %v2039 = vpop.f32.mrf.mxu0
      %v2040 = vadd.f32 %v1915, %v2039
      %2041 = vmatmul.f32.gmra.mxu0 %v1087
      %v2042 = vpop.f32.mrf.mxu0
      %v2043 = vadd.f32 %v1918, %v2042
      %2044 = vmatmul.f32.gmra.mxu0 %v1096
      %v2045 = vpop.f32.mrf.mxu0
      %v2046 = vadd.f32 %v1921, %v2045
      %2047 = vmatmul.f32.gmra.mxu0 %v1105
      %v2048 = vpop.f32.mrf.mxu0
      %v2049 = vadd.f32 %v1924, %v2048
      %2050 = vmatmul.f32.gmra.mxu0 %v1114
      %v2051 = vpop.f32.mrf.mxu0
      %v2052 = vadd.f32 %v1927, %v2051
      %2053 = vmatmul.f32.gmra.mxu0 %v1123
      %v2054 = vpop.f32.mrf.mxu0
      %v2055 = vadd.f32 %v1930, %v2054
      %2056 = vmatmul.f32.gmra.mxu0 %v1132
      %v2057 = vpop.f32.mrf.mxu0
      %v2058 = vadd.f32 %v1933, %v2057
      %2059 = vmatmul.f32.gmra.mxu0 %v1141
      %v2060 = vpop.f32.mrf.mxu0
      %v2061 = vadd.f32 %v1936, %v2060
      %2062 = vmatmul.f32.gmra.mxu0 %v1150
      %v2063 = vpop.f32.mrf.mxu0
      %v2064 = vadd.f32 %v1939, %v2063
      %2065 = vmatmul.f32.gmra.mxu0 %v1159
      %v2066 = vpop.f32.mrf.mxu0
      %v2067 = vadd.f32 %v1942, %v2066
      %2068 = vmatmul.f32.gmra.mxu0 %v1168
      %v2069 = vpop.f32.mrf.mxu0
      %v2070 = vadd.f32 %v1945, %v2069
      %2071 = vmatmul.f32.gmra.mxu0 %v1177
      %v2072 = vpop.f32.mrf.mxu0
      %v2073 = vadd.f32 %v1948, %v2072
      %2074 = vdwg.mxu0
      %2075 = vmatpush.msra.mxu0 %v1292
      %2076 = vmatpush.msra.mxu0 %v1291
      %2077 = vmatpush.msra.mxu0 %v1290
      %2078 = vmatpush.msra.mxu0 %v1289
      %2079 = vmatpush.msra.mxu0 %v1288
      %2080 = vmatpush.msra.mxu0 %v1287
      %2081 = vmatpush.msra.mxu0 %v1286
      %2082 = vmatpush.msra.mxu0 %v1285
      %2083 = vmatpush.msra.mxu0 %v1284
      %2084 = vmatpush.msra.mxu0 %v1283
      %2085 = vmatpush.msra.mxu0 %v1282
      %2086 = vmatpush.msra.mxu0 %v1281
      %2087 = vmatpush.msra.mxu0 %v1280
      %2088 = vmatpush.msra.mxu0 %v1279
      %2089 = vmatpush.msra.mxu0 %v1278
      %2090 = vmatpush.msra.mxu0 %v1277
      %2091 = vmatmul.f32.gmra.mxu0 %v863
      %v2092 = vpop.f32.mrf.mxu0
      %v2093 = vadd.f32 %v1968, %v2092
      %2094 = vmatmul.f32.gmra.mxu0 %v872
      %v2095 = vpop.f32.mrf.mxu0
      %v2096 = vadd.f32 %v1971, %v2095
      %2097 = vmatmul.f32.gmra.mxu0 %v881
      %v2098 = vpop.f32.mrf.mxu0
      %v2099 = vadd.f32 %v1974, %v2098
      %2100 = vmatmul.f32.gmra.mxu0 %v890
      %v2101 = vpop.f32.mrf.mxu0
      %v2102 = vadd.f32 %v1977, %v2101
      %2103 = vmatmul.f32.gmra.mxu0 %v899
      %v2104 = vpop.f32.mrf.mxu0
      %v2105 = vadd.f32 %v1980, %v2104
      %2106 = vmatmul.f32.gmra.mxu0 %v908
      %v2107 = vpop.f32.mrf.mxu0
      %v2108 = vadd.f32 %v1983, %v2107
      %2109 = vmatmul.f32.gmra.mxu0 %v917
      %v2110 = vpop.f32.mrf.mxu0
      %v2111 = vadd.f32 %v1986, %v2110
      %2112 = vmatmul.f32.gmra.mxu0 %v926
      %v2113 = vpop.f32.mrf.mxu0
      %v2114 = vadd.f32 %v1989, %v2113
      %2115 = vmatmul.f32.gmra.mxu0 %v935
      %v2116 = vpop.f32.mrf.mxu0
      %v2117 = vadd.f32 %v1992, %v2116
      %2118 = vmatmul.f32.gmra.mxu0 %v944
      %v2119 = vpop.f32.mrf.mxu0
      %v2120 = vadd.f32 %v1995, %v2119
      %2121 = vmatmul.f32.gmra.mxu0 %v953
      %v2122 = vpop.f32.mrf.mxu0
      %v2123 = vadd.f32 %v1998, %v2122
      %2124 = vmatmul.f32.gmra.mxu0 %v962
      %v2125 = vpop.f32.mrf.mxu0
      %v2126 = vadd.f32 %v2001, %v2125
      %2127 = vmatmul.f32.gmra.mxu0 %v971
      %v2128 = vpop.f32.mrf.mxu0
      %v2129 = vadd.f32 %v2004, %v2128
      %2130 = vmatmul.f32.gmra.mxu0 %v980
      %v2131 = vpop.f32.mrf.mxu0
      %v2132 = vadd.f32 %v2007, %v2131
      %2133 = vmatmul.f32.gmra.mxu0 %v989
      %v2134 = vpop.f32.mrf.mxu0
      %v2135 = vadd.f32 %v2010, %v2134
      %2136 = vmatmul.f32.gmra.mxu0 %v998
      %v2137 = vpop.f32.mrf.mxu0
      %v2138 = vadd.f32 %v2013, %v2137
      %2139 = vmatmul.f32.gmra.mxu0 %v1007
      %v2140 = vpop.f32.mrf.mxu0
      %v2141 = vadd.f32 %v2016, %v2140
      %2142 = vmatmul.f32.gmra.mxu0 %v1016
      %v2143 = vpop.f32.mrf.mxu0
      %v2144 = vadd.f32 %v2019, %v2143
      %2145 = vmatmul.f32.gmra.mxu0 %v1025
      %v2146 = vpop.f32.mrf.mxu0
      %v2147 = vadd.f32 %v2022, %v2146
      %2148 = vmatmul.f32.gmra.mxu0 %v1034
      %v2149 = vpop.f32.mrf.mxu0
      %v2150 = vadd.f32 %v2025, %v2149
      %2151 = vmatmul.f32.gmra.mxu0 %v1043
      %v2152 = vpop.f32.mrf.mxu0
      %v2153 = vadd.f32 %v2028, %v2152
      %2154 = vmatmul.f32.gmra.mxu0 %v1052
      %v2155 = vpop.f32.mrf.mxu0
      %v2156 = vadd.f32 %v2031, %v2155
      %2157 = vmatmul.f32.gmra.mxu0 %v1061
      %v2158 = vpop.f32.mrf.mxu0
      %v2159 = vadd.f32 %v2034, %v2158
      %2160 = vmatmul.f32.gmra.mxu0 %v1070
      %v2161 = vpop.f32.mrf.mxu0
      %v2162 = vadd.f32 %v2037, %v2161
      %2163 = vmatmul.f32.gmra.mxu0 %v1079
      %v2164 = vpop.f32.mrf.mxu0
      %v2165 = vadd.f32 %v2040, %v2164
      %2166 = vmatmul.f32.gmra.mxu0 %v1088
      %v2167 = vpop.f32.mrf.mxu0
      %v2168 = vadd.f32 %v2043, %v2167
      %2169 = vmatmul.f32.gmra.mxu0 %v1097
      %v2170 = vpop.f32.mrf.mxu0
      %v2171 = vadd.f32 %v2046, %v2170
      %2172 = vmatmul.f32.gmra.mxu0 %v1106
      %v2173 = vpop.f32.mrf.mxu0
      %v2174 = vadd.f32 %v2049, %v2173
      %2175 = vmatmul.f32.gmra.mxu0 %v1115
      %v2176 = vpop.f32.mrf.mxu0
      %v2177 = vadd.f32 %v2052, %v2176
      %2178 = vmatmul.f32.gmra.mxu0 %v1124
      %v2179 = vpop.f32.mrf.mxu0
      %v2180 = vadd.f32 %v2055, %v2179
      %2181 = vmatmul.f32.gmra.mxu0 %v1133
      %v2182 = vpop.f32.mrf.mxu0
      %v2183 = vadd.f32 %v2058, %v2182
      %2184 = vmatmul.f32.gmra.mxu0 %v1142
      %v2185 = vpop.f32.mrf.mxu0
      %v2186 = vadd.f32 %v2061, %v2185
      %2187 = vmatmul.f32.gmra.mxu0 %v1151
      %v2188 = vpop.f32.mrf.mxu0
      %v2189 = vadd.f32 %v2064, %v2188
      %2190 = vmatmul.f32.gmra.mxu0 %v1160
      %v2191 = vpop.f32.mrf.mxu0
      %v2192 = vadd.f32 %v2067, %v2191
      %2193 = vmatmul.f32.gmra.mxu0 %v1169
      %v2194 = vpop.f32.mrf.mxu0
      %v2195 = vadd.f32 %v2070, %v2194
      %2196 = vmatmul.f32.gmra.mxu0 %v1178
      %v2197 = vpop.f32.mrf.mxu0
      %v2198 = vadd.f32 %v2073, %v2197
      %2199 = vdwg.mxu0
      %2200 = vmatpush.msra.mxu0 %v1308
      %2201 = vmatpush.msra.mxu0 %v1307
      %2202 = vmatpush.msra.mxu0 %v1306
      %2203 = vmatpush.msra.mxu0 %v1305
      %2204 = vmatpush.msra.mxu0 %v1304
      %2205 = vmatpush.msra.mxu0 %v1303
      %2206 = vmatpush.msra.mxu0 %v1302
      %2207 = vmatpush.msra.mxu0 %v1301
      %2208 = vmatpush.msra.mxu0 %v1300
      %2209 = vmatpush.msra.mxu0 %v1299
      %2210 = vmatpush.msra.mxu0 %v1298
      %2211 = vmatpush.msra.mxu0 %v1297
      %2212 = vmatpush.msra.mxu0 %v1296
      %2213 = vmatpush.msra.mxu0 %v1295
      %2214 = vmatpush.msra.mxu0 %v1294
      %2215 = vmatpush.msra.mxu0 %v1293
      %2216 = vmatmul.f32.gmra.mxu0 %v864
      %v2217 = vpop.f32.mrf.mxu0
      %v2218 = vadd.f32 %v2093, %v2217
      %2219 = vmatmul.f32.gmra.mxu0 %v873
      %v2220 = vpop.f32.mrf.mxu0
      %v2221 = vadd.f32 %v2096, %v2220
      %2222 = vmatmul.f32.gmra.mxu0 %v882
      %v2223 = vpop.f32.mrf.mxu0
      %v2224 = vadd.f32 %v2099, %v2223
      %2225 = vmatmul.f32.gmra.mxu0 %v891
      %v2226 = vpop.f32.mrf.mxu0
      %v2227 = vadd.f32 %v2102, %v2226
      %2228 = vmatmul.f32.gmra.mxu0 %v900
      %v2229 = vpop.f32.mrf.mxu0
      %v2230 = vadd.f32 %v2105, %v2229
      %2231 = vmatmul.f32.gmra.mxu0 %v909
      %v2232 = vpop.f32.mrf.mxu0
      %v2233 = vadd.f32 %v2108, %v2232
      %2234 = vmatmul.f32.gmra.mxu0 %v918
      %v2235 = vpop.f32.mrf.mxu0
      %v2236 = vadd.f32 %v2111, %v2235
      %2237 = vmatmul.f32.gmra.mxu0 %v927
      %v2238 = vpop.f32.mrf.mxu0
      %v2239 = vadd.f32 %v2114, %v2238
      %2240 = vmatmul.f32.gmra.mxu0 %v936
      %v2241 = vpop.f32.mrf.mxu0
      %v2242 = vadd.f32 %v2117, %v2241
      %2243 = vmatmul.f32.gmra.mxu0 %v945
      %v2244 = vpop.f32.mrf.mxu0
      %v2245 = vadd.f32 %v2120, %v2244
      %2246 = vmatmul.f32.gmra.mxu0 %v954
      %v2247 = vpop.f32.mrf.mxu0
      %v2248 = vadd.f32 %v2123, %v2247
      %2249 = vmatmul.f32.gmra.mxu0 %v963
      %v2250 = vpop.f32.mrf.mxu0
      %v2251 = vadd.f32 %v2126, %v2250
      %2252 = vmatmul.f32.gmra.mxu0 %v972
      %v2253 = vpop.f32.mrf.mxu0
      %v2254 = vadd.f32 %v2129, %v2253
      %2255 = vmatmul.f32.gmra.mxu0 %v981
      %v2256 = vpop.f32.mrf.mxu0
      %v2257 = vadd.f32 %v2132, %v2256
      %2258 = vmatmul.f32.gmra.mxu0 %v990
      %v2259 = vpop.f32.mrf.mxu0
      %v2260 = vadd.f32 %v2135, %v2259
      %2261 = vmatmul.f32.gmra.mxu0 %v999
      %v2262 = vpop.f32.mrf.mxu0
      %v2263 = vadd.f32 %v2138, %v2262
      %2264 = vmatmul.f32.gmra.mxu0 %v1008
      %v2265 = vpop.f32.mrf.mxu0
      %v2266 = vadd.f32 %v2141, %v2265
      %2267 = vmatmul.f32.gmra.mxu0 %v1017
      %v2268 = vpop.f32.mrf.mxu0
      %v2269 = vadd.f32 %v2144, %v2268
      %2270 = vmatmul.f32.gmra.mxu0 %v1026
      %v2271 = vpop.f32.mrf.mxu0
      %v2272 = vadd.f32 %v2147, %v2271
      %2273 = vmatmul.f32.gmra.mxu0 %v1035
      %v2274 = vpop.f32.mrf.mxu0
      %v2275 = vadd.f32 %v2150, %v2274
      %2276 = vmatmul.f32.gmra.mxu0 %v1044
      %v2277 = vpop.f32.mrf.mxu0
      %v2278 = vadd.f32 %v2153, %v2277
      %2279 = vmatmul.f32.gmra.mxu0 %v1053
      %v2280 = vpop.f32.mrf.mxu0
      %v2281 = vadd.f32 %v2156, %v2280
      %2282 = vmatmul.f32.gmra.mxu0 %v1062
      %v2283 = vpop.f32.mrf.mxu0
      %v2284 = vadd.f32 %v2159, %v2283
      %2285 = vmatmul.f32.gmra.mxu0 %v1071
      %v2286 = vpop.f32.mrf.mxu0
      %v2287 = vadd.f32 %v2162, %v2286
      %2288 = vmatmul.f32.gmra.mxu0 %v1080
      %v2289 = vpop.f32.mrf.mxu0
      %v2290 = vadd.f32 %v2165, %v2289
      %2291 = vmatmul.f32.gmra.mxu0 %v1089
      %v2292 = vpop.f32.mrf.mxu0
      %v2293 = vadd.f32 %v2168, %v2292
      %2294 = vmatmul.f32.gmra.mxu0 %v1098
      %v2295 = vpop.f32.mrf.mxu0
      %v2296 = vadd.f32 %v2171, %v2295
      %2297 = vmatmul.f32.gmra.mxu0 %v1107
      %v2298 = vpop.f32.mrf.mxu0
      %v2299 = vadd.f32 %v2174, %v2298
      %2300 = vmatmul.f32.gmra.mxu0 %v1116
      %v2301 = vpop.f32.mrf.mxu0
      %v2302 = vadd.f32 %v2177, %v2301
      %2303 = vmatmul.f32.gmra.mxu0 %v1125
      %v2304 = vpop.f32.mrf.mxu0
      %v2305 = vadd.f32 %v2180, %v2304
      %2306 = vmatmul.f32.gmra.mxu0 %v1134
      %v2307 = vpop.f32.mrf.mxu0
      %v2308 = vadd.f32 %v2183, %v2307
      %2309 = vmatmul.f32.gmra.mxu0 %v1143
      %v2310 = vpop.f32.mrf.mxu0
      %v2311 = vadd.f32 %v2186, %v2310
      %2312 = vmatmul.f32.gmra.mxu0 %v1152
      %v2313 = vpop.f32.mrf.mxu0
      %v2314 = vadd.f32 %v2189, %v2313
      %2315 = vmatmul.f32.gmra.mxu0 %v1161
      %v2316 = vpop.f32.mrf.mxu0
      %v2317 = vadd.f32 %v2192, %v2316
      %2318 = vmatmul.f32.gmra.mxu0 %v1170
      %v2319 = vpop.f32.mrf.mxu0
      %v2320 = vadd.f32 %v2195, %v2319
      %2321 = vmatmul.f32.gmra.mxu0 %v1179
      %v2322 = vpop.f32.mrf.mxu0
      %v2323 = vadd.f32 %v2198, %v2322
      %2324 = vdwg.mxu0
      %2325 = vmatpush.msra.mxu0 %v1324
      %2326 = vmatpush.msra.mxu0 %v1323
      %2327 = vmatpush.msra.mxu0 %v1322
      %2328 = vmatpush.msra.mxu0 %v1321
      %2329 = vmatpush.msra.mxu0 %v1320
      %2330 = vmatpush.msra.mxu0 %v1319
      %2331 = vmatpush.msra.mxu0 %v1318
      %2332 = vmatpush.msra.mxu0 %v1317
      %2333 = vmatpush.msra.mxu0 %v1316
      %2334 = vmatpush.msra.mxu0 %v1315
      %2335 = vmatpush.msra.mxu0 %v1314
      %2336 = vmatpush.msra.mxu0 %v1313
      %2337 = vmatpush.msra.mxu0 %v1312
      %2338 = vmatpush.msra.mxu0 %v1311
      %2339 = vmatpush.msra.mxu0 %v1310
      %2340 = vmatpush.msra.mxu0 %v1309
      %2341 = vmatmul.f32.gmra.mxu0 %v865
      %v2342 = vpop.f32.mrf.mxu0
      %v2343 = vadd.f32 %v2218, %v2342
      %2344 = vmatmul.f32.gmra.mxu0 %v874
      %v2345 = vpop.f32.mrf.mxu0
      %v2346 = vadd.f32 %v2221, %v2345
      %2347 = vmatmul.f32.gmra.mxu0 %v883
      %v2348 = vpop.f32.mrf.mxu0
      %v2349 = vadd.f32 %v2224, %v2348
      %2350 = vmatmul.f32.gmra.mxu0 %v892
      %v2351 = vpop.f32.mrf.mxu0
      %v2352 = vadd.f32 %v2227, %v2351
      %2353 = vmatmul.f32.gmra.mxu0 %v901
      %v2354 = vpop.f32.mrf.mxu0
      %v2355 = vadd.f32 %v2230, %v2354
      %2356 = vmatmul.f32.gmra.mxu0 %v910
      %v2357 = vpop.f32.mrf.mxu0
      %v2358 = vadd.f32 %v2233, %v2357
      %2359 = vmatmul.f32.gmra.mxu0 %v919
      %v2360 = vpop.f32.mrf.mxu0
      %v2361 = vadd.f32 %v2236, %v2360
      %2362 = vmatmul.f32.gmra.mxu0 %v928
      %v2363 = vpop.f32.mrf.mxu0
      %v2364 = vadd.f32 %v2239, %v2363
      %2365 = vmatmul.f32.gmra.mxu0 %v937
      %v2366 = vpop.f32.mrf.mxu0
      %v2367 = vadd.f32 %v2242, %v2366
      %2368 = vmatmul.f32.gmra.mxu0 %v946
      %v2369 = vpop.f32.mrf.mxu0
      %v2370 = vadd.f32 %v2245, %v2369
      %2371 = vmatmul.f32.gmra.mxu0 %v955
      %v2372 = vpop.f32.mrf.mxu0
      %v2373 = vadd.f32 %v2248, %v2372
      %2374 = vmatmul.f32.gmra.mxu0 %v964
      %v2375 = vpop.f32.mrf.mxu0
      %v2376 = vadd.f32 %v2251, %v2375
      %2377 = vmatmul.f32.gmra.mxu0 %v973
      %v2378 = vpop.f32.mrf.mxu0
      %v2379 = vadd.f32 %v2254, %v2378
      %2380 = vmatmul.f32.gmra.mxu0 %v982
      %v2381 = vpop.f32.mrf.mxu0
      %v2382 = vadd.f32 %v2257, %v2381
      %2383 = vmatmul.f32.gmra.mxu0 %v991
      %v2384 = vpop.f32.mrf.mxu0
      %v2385 = vadd.f32 %v2260, %v2384
      %2386 = vmatmul.f32.gmra.mxu0 %v1000
      %v2387 = vpop.f32.mrf.mxu0
      %v2388 = vadd.f32 %v2263, %v2387
      %2389 = vmatmul.f32.gmra.mxu0 %v1009
      %v2390 = vpop.f32.mrf.mxu0
      %v2391 = vadd.f32 %v2266, %v2390
      %2392 = vmatmul.f32.gmra.mxu0 %v1018
      %v2393 = vpop.f32.mrf.mxu0
      %v2394 = vadd.f32 %v2269, %v2393
      %2395 = vmatmul.f32.gmra.mxu0 %v1027
      %v2396 = vpop.f32.mrf.mxu0
      %v2397 = vadd.f32 %v2272, %v2396
      %2398 = vmatmul.f32.gmra.mxu0 %v1036
      %v2399 = vpop.f32.mrf.mxu0
      %v2400 = vadd.f32 %v2275, %v2399
      %2401 = vmatmul.f32.gmra.mxu0 %v1045
      %v2402 = vpop.f32.mrf.mxu0
      %v2403 = vadd.f32 %v2278, %v2402
      %2404 = vmatmul.f32.gmra.mxu0 %v1054
      %v2405 = vpop.f32.mrf.mxu0
      %v2406 = vadd.f32 %v2281, %v2405
      %2407 = vmatmul.f32.gmra.mxu0 %v1063
      %v2408 = vpop.f32.mrf.mxu0
      %v2409 = vadd.f32 %v2284, %v2408
      %2410 = vmatmul.f32.gmra.mxu0 %v1072
      %v2411 = vpop.f32.mrf.mxu0
      %v2412 = vadd.f32 %v2287, %v2411
      %2413 = vmatmul.f32.gmra.mxu0 %v1081
      %v2414 = vpop.f32.mrf.mxu0
      %v2415 = vadd.f32 %v2290, %v2414
      %2416 = vmatmul.f32.gmra.mxu0 %v1090
      %v2417 = vpop.f32.mrf.mxu0
      %v2418 = vadd.f32 %v2293, %v2417
      %2419 = vmatmul.f32.gmra.mxu0 %v1099
      %v2420 = vpop.f32.mrf.mxu0
      %v2421 = vadd.f32 %v2296, %v2420
      %2422 = vmatmul.f32.gmra.mxu0 %v1108
      %v2423 = vpop.f32.mrf.mxu0
      %v2424 = vadd.f32 %v2299, %v2423
      %2425 = vmatmul.f32.gmra.mxu0 %v1117
      %v2426 = vpop.f32.mrf.mxu0
      %v2427 = vadd.f32 %v2302, %v2426
      %2428 = vmatmul.f32.gmra.mxu0 %v1126
      %v2429 = vpop.f32.mrf.mxu0
      %v2430 = vadd.f32 %v2305, %v2429
      %2431 = vmatmul.f32.gmra.mxu0 %v1135
      %v2432 = vpop.f32.mrf.mxu0
      %v2433 = vadd.f32 %v2308, %v2432
      %2434 = vmatmul.f32.gmra.mxu0 %v1144
      %v2435 = vpop.f32.mrf.mxu0
      %v2436 = vadd.f32 %v2311, %v2435
      %2437 = vmatmul.f32.gmra.mxu0 %v1153
      %v2438 = vpop.f32.mrf.mxu0
      %v2439 = vadd.f32 %v2314, %v2438
      %2440 = vmatmul.f32.gmra.mxu0 %v1162
      %v2441 = vpop.f32.mrf.mxu0
      %v2442 = vadd.f32 %v2317, %v2441
      %2443 = vmatmul.f32.gmra.mxu0 %v1171
      %v2444 = vpop.f32.mrf.mxu0
      %v2445 = vadd.f32 %v2320, %v2444
      %2446 = vmatmul.f32.gmra.mxu0 %v1180
      %v2447 = vpop.f32.mrf.mxu0
      %v2448 = vadd.f32 %v2323, %v2447
      %2449 = vdwg.mxu0
      %v2450 = vld [vmem:[%s2 + $0x13] sm:$0xff]
      %v2451 = vld [vmem:[%s2 + $0x1b] sm:$0xff]
      %v2452 = vld [vmem:[%s2 + $0x23] sm:$0xff]
      %v2453 = vld [vmem:[%s2 + $0x2b] sm:$0xff]
      %v2454 = vld [vmem:[%s2 + $0x33] sm:$0xff]
      %v2455 = vld [vmem:[%s2 + $0x3b] sm:$0xff]
      %v2456 = vld [vmem:[%s2 + $0x43] sm:$0xff]
      %v2457 = vld [vmem:[%s2 + $0x4b] sm:$0xff]
      %v2458 = vld [vmem:[%s2 + $0x53] sm:$0xff]
      %v2459 = vld [vmem:[%s2 + $0x5b] sm:$0xff]
      %v2460 = vld [vmem:[%s2 + $0x63] sm:$0xff]
      %v2461 = vld [vmem:[%s2 + $0x6b] sm:$0xff]
      %v2462 = vld [vmem:[%s2 + $0x73] sm:$0xff]
      %v2463 = vld [vmem:[%s2 + $0x7b] sm:$0xff]
      %v2464 = vld [vmem:[%s2 + $0x83] sm:$0xff]
      %v2465 = vld [vmem:[%s2 + $0x8b] sm:$0xff]
      %v2466 = vld [vmem:[%s2 + $0x93] sm:$0xff]
      %v2467 = vld [vmem:[%s2 + $0x9b] sm:$0xff]
      %v2468 = vld [vmem:[%s2 + $0xa3] sm:$0xff]
      %v2469 = vld [vmem:[%s2 + $0xab] sm:$0xff]
      %v2470 = vld [vmem:[%s2 + $0xb3] sm:$0xff]
      %v2471 = vld [vmem:[%s2 + $0xbb] sm:$0xff]
      %v2472 = vld [vmem:[%s2 + $0xc3] sm:$0xff]
      %v2473 = vld [vmem:[%s2 + $0xcb] sm:$0xff]
      %v2474 = vld [vmem:[%s2 + $0xd3] sm:$0xff]
      %v2475 = vld [vmem:[%s2 + $0xdb] sm:$0xff]
      %v2476 = vld [vmem:[%s2 + $0xe3] sm:$0xff]
      %v2477 = vld [vmem:[%s2 + $0xeb] sm:$0xff]
      %v2478 = vld [vmem:[%s2 + $0xf3] sm:$0xff]
      %v2479 = vld [vmem:[%s2 + $0xfb] sm:$0xff]
      %v2480 = vld [vmem:[%s2 + $0x103] sm:$0xff]
      %v2481 = vld [vmem:[%s2 + $0x10b] sm:$0xff]
      %v2482 = vld [vmem:[%s2 + $0x113] sm:$0xff]
      %v2483 = vld [vmem:[%s2 + $0x11b] sm:$0xff]
      %v2484 = vld [vmem:[%s2 + $0x123] sm:$0xff]
      %v2485 = vld [vmem:[%s2 + $0x12b] sm:$0x3f]
      %2487 = vset.pattern.permute.xlu0 0
      %2488 = vperm.xlu0 %2487, %v2450
      %v2489 = vpop.permute.xlu0 %2488
      %2492 = vset.pattern.permute.xlu0 0
      %2493 = vperm.xlu0 %2492, %v2451
      %v2494 = vpop.permute.xlu0 %2493
      %2497 = vset.pattern.permute.xlu0 0
      %2498 = vperm.xlu0 %2497, %v2452
      %v2499 = vpop.permute.xlu0 %2498
      %2502 = vset.pattern.permute.xlu0 0
      %2503 = vperm.xlu0 %2502, %v2453
      %v2504 = vpop.permute.xlu0 %2503
      %2507 = vset.pattern.permute.xlu0 0
      %2508 = vperm.xlu0 %2507, %v2454
      %v2509 = vpop.permute.xlu0 %2508
      %2512 = vset.pattern.permute.xlu0 0
      %2513 = vperm.xlu0 %2512, %v2455
      %v2514 = vpop.permute.xlu0 %2513
      %2517 = vset.pattern.permute.xlu0 0
      %2518 = vperm.xlu0 %2517, %v2456
      %v2519 = vpop.permute.xlu0 %2518
      %2522 = vset.pattern.permute.xlu0 0
      %2523 = vperm.xlu0 %2522, %v2457
      %v2524 = vpop.permute.xlu0 %2523
      %2527 = vset.pattern.permute.xlu0 0
      %2528 = vperm.xlu0 %2527, %v2458
      %v2529 = vpop.permute.xlu0 %2528
      %2532 = vset.pattern.permute.xlu0 0
      %2533 = vperm.xlu0 %2532, %v2459
      %v2534 = vpop.permute.xlu0 %2533
      %2537 = vset.pattern.permute.xlu0 0
      %2538 = vperm.xlu0 %2537, %v2460
      %v2539 = vpop.permute.xlu0 %2538
      %2542 = vset.pattern.permute.xlu0 0
      %2543 = vperm.xlu0 %2542, %v2461
      %v2544 = vpop.permute.xlu0 %2543
      %2547 = vset.pattern.permute.xlu0 0
      %2548 = vperm.xlu0 %2547, %v2462
      %v2549 = vpop.permute.xlu0 %2548
      %2552 = vset.pattern.permute.xlu0 0
      %2553 = vperm.xlu0 %2552, %v2463
      %v2554 = vpop.permute.xlu0 %2553
      %2557 = vset.pattern.permute.xlu0 0
      %2558 = vperm.xlu0 %2557, %v2464
      %v2559 = vpop.permute.xlu0 %2558
      %2562 = vset.pattern.permute.xlu0 0
      %2563 = vperm.xlu0 %2562, %v2465
      %v2564 = vpop.permute.xlu0 %2563
      %2567 = vset.pattern.permute.xlu0 0
      %2568 = vperm.xlu0 %2567, %v2466
      %v2569 = vpop.permute.xlu0 %2568
      %2572 = vset.pattern.permute.xlu0 0
      %2573 = vperm.xlu0 %2572, %v2467
      %v2574 = vpop.permute.xlu0 %2573
      %2577 = vset.pattern.permute.xlu0 0
      %2578 = vperm.xlu0 %2577, %v2468
      %v2579 = vpop.permute.xlu0 %2578
      %2582 = vset.pattern.permute.xlu0 0
      %2583 = vperm.xlu0 %2582, %v2469
      %v2584 = vpop.permute.xlu0 %2583
      %2587 = vset.pattern.permute.xlu0 0
      %2588 = vperm.xlu0 %2587, %v2470
      %v2589 = vpop.permute.xlu0 %2588
      %2592 = vset.pattern.permute.xlu0 0
      %2593 = vperm.xlu0 %2592, %v2471
      %v2594 = vpop.permute.xlu0 %2593
      %2597 = vset.pattern.permute.xlu0 0
      %2598 = vperm.xlu0 %2597, %v2472
      %v2599 = vpop.permute.xlu0 %2598
      %2602 = vset.pattern.permute.xlu0 0
      %2603 = vperm.xlu0 %2602, %v2473
      %v2604 = vpop.permute.xlu0 %2603
      %2607 = vset.pattern.permute.xlu0 0
      %2608 = vperm.xlu0 %2607, %v2474
      %v2609 = vpop.permute.xlu0 %2608
      %2612 = vset.pattern.permute.xlu0 0
      %2613 = vperm.xlu0 %2612, %v2475
      %v2614 = vpop.permute.xlu0 %2613
      %2617 = vset.pattern.permute.xlu0 0
      %2618 = vperm.xlu0 %2617, %v2476
      %v2619 = vpop.permute.xlu0 %2618
      %2622 = vset.pattern.permute.xlu0 0
      %2623 = vperm.xlu0 %2622, %v2477
      %v2624 = vpop.permute.xlu0 %2623
      %2627 = vset.pattern.permute.xlu0 0
      %2628 = vperm.xlu0 %2627, %v2478
      %v2629 = vpop.permute.xlu0 %2628
      %2632 = vset.pattern.permute.xlu0 0
      %2633 = vperm.xlu0 %2632, %v2479
      %v2634 = vpop.permute.xlu0 %2633
      %2637 = vset.pattern.permute.xlu0 0
      %2638 = vperm.xlu0 %2637, %v2480
      %v2639 = vpop.permute.xlu0 %2638
      %2642 = vset.pattern.permute.xlu0 0
      %2643 = vperm.xlu0 %2642, %v2481
      %v2644 = vpop.permute.xlu0 %2643
      %2647 = vset.pattern.permute.xlu0 0
      %2648 = vperm.xlu0 %2647, %v2482
      %v2649 = vpop.permute.xlu0 %2648
      %2652 = vset.pattern.permute.xlu0 0
      %2653 = vperm.xlu0 %2652, %v2483
      %v2654 = vpop.permute.xlu0 %2653
      %2657 = vset.pattern.permute.xlu0 0
      %2658 = vperm.xlu0 %2657, %v2484
      %v2659 = vpop.permute.xlu0 %2658
      %2662 = vset.pattern.permute.xlu0 0
      %2663 = vperm.xlu0 %2662, %v2485
      %v2664 = vpop.permute.xlu0 %2663
      %v2666 = vmul.f32 %v2343, %v2489
      %v2667 = vmul.f32 %v2346, %v2494
      %v2668 = vmul.f32 %v2349, %v2499
      %v2669 = vmul.f32 %v2352, %v2504
      %v2670 = vmul.f32 %v2355, %v2509
      %v2671 = vmul.f32 %v2358, %v2514
      %v2672 = vmul.f32 %v2361, %v2519
      %v2673 = vmul.f32 %v2364, %v2524
      %v2674 = vmul.f32 %v2367, %v2529
      %v2675 = vmul.f32 %v2370, %v2534
      %v2676 = vmul.f32 %v2373, %v2539
      %v2677 = vmul.f32 %v2376, %v2544
      %v2678 = vmul.f32 %v2379, %v2549
      %v2679 = vmul.f32 %v2382, %v2554
      %v2680 = vmul.f32 %v2385, %v2559
      %v2681 = vmul.f32 %v2388, %v2564
      %v2682 = vmul.f32 %v2391, %v2569
      %v2683 = vmul.f32 %v2394, %v2574
      %v2684 = vmul.f32 %v2397, %v2579
      %v2685 = vmul.f32 %v2400, %v2584
      %v2686 = vmul.f32 %v2403, %v2589
      %v2687 = vmul.f32 %v2406, %v2594
      %v2688 = vmul.f32 %v2409, %v2599
      %v2689 = vmul.f32 %v2412, %v2604
      %v2690 = vmul.f32 %v2415, %v2609
      %v2691 = vmul.f32 %v2418, %v2614
      %v2692 = vmul.f32 %v2421, %v2619
      %v2693 = vmul.f32 %v2424, %v2624
      %v2694 = vmul.f32 %v2427, %v2629
      %v2695 = vmul.f32 %v2430, %v2634
      %v2696 = vmul.f32 %v2433, %v2639
      %v2697 = vmul.f32 %v2436, %v2644
      %v2698 = vmul.f32 %v2439, %v2649
      %v2699 = vmul.f32 %v2442, %v2654
      %v2700 = vmul.f32 %v2445, %v2659
      %v2701 = vmul.f32 %v2448, %v2664
      %v2702 = vadd.f32 %v2666, %v2667
      %v2703 = vadd.f32 %v2702, %v2668
      %v2704 = vadd.f32 %v2703, %v2669
      %v2705 = vadd.f32 %v2704, %v2670
      %v2706 = vadd.f32 %v2705, %v2671
      %v2707 = vadd.f32 %v2706, %v2672
      %v2708 = vadd.f32 %v2707, %v2673
      %v2709 = vadd.f32 %v2708, %v2674
      %v2710 = vadd.f32 %v2709, %v2675
      %v2711 = vadd.f32 %v2710, %v2676
      %v2712 = vadd.f32 %v2711, %v2677
      %v2713 = vadd.f32 %v2712, %v2678
      %v2714 = vadd.f32 %v2713, %v2679
      %v2715 = vadd.f32 %v2714, %v2680
      %v2716 = vadd.f32 %v2715, %v2681
      %v2717 = vadd.f32 %v2716, %v2682
      %v2718 = vadd.f32 %v2717, %v2683
      %v2719 = vadd.f32 %v2718, %v2684
      %v2720 = vadd.f32 %v2719, %v2685
      %v2721 = vadd.f32 %v2720, %v2686
      %v2722 = vadd.f32 %v2721, %v2687
      %v2723 = vadd.f32 %v2722, %v2688
      %v2724 = vadd.f32 %v2723, %v2689
      %v2725 = vadd.f32 %v2724, %v2690
      %v2726 = vadd.f32 %v2725, %v2691
      %v2727 = vadd.f32 %v2726, %v2692
      %v2728 = vadd.f32 %v2727, %v2693
      %v2729 = vadd.f32 %v2728, %v2694
      %v2730 = vadd.f32 %v2729, %v2695
      %v2731 = vadd.f32 %v2730, %v2696
      %v2732 = vadd.f32 %v2731, %v2697
      %v2733 = vadd.f32 %v2732, %v2698
      %v2734 = vadd.f32 %v2733, %v2699
      %v2735 = vadd.f32 %v2734, %v2700
      %vm2736 = vcmask 1045504
      %v2737 = vsel %vm2736, %v2701, 0.0
      %v2738 = vadd.f32 %v2735, %v2737
      %v2739 = vrot.slane %v2738, 4
      %v2740 = vadd.f32 %v2738, %v2739
      %v2741 = vrot.slane %v2740, 2
      %v2742 = vadd.f32 %v2740, %v2741
      %v2743 = vrot.slane %v2742, 1
      %v2744 = vadd.f32 %v2742, %v2743
      %2745 = vst [vmem:[%s208] sm:$0x1] %v2744
      %v2746 = vmul.f32 %v2666, %v2666
      %v2747 = vmul.f32 %v2667, %v2667
      %v2748 = vmul.f32 %v2668, %v2668
      %v2749 = vmul.f32 %v2669, %v2669
      %v2750 = vmul.f32 %v2670, %v2670
      %v2751 = vmul.f32 %v2671, %v2671
      %v2752 = vmul.f32 %v2672, %v2672
      %v2753 = vmul.f32 %v2673, %v2673
      %v2754 = vmul.f32 %v2674, %v2674
      %v2755 = vmul.f32 %v2675, %v2675
      %v2756 = vmul.f32 %v2676, %v2676
      %v2757 = vmul.f32 %v2677, %v2677
      %v2758 = vmul.f32 %v2678, %v2678
      %v2759 = vmul.f32 %v2679, %v2679
      %v2760 = vmul.f32 %v2680, %v2680
      %v2761 = vmul.f32 %v2681, %v2681
      %v2762 = vmul.f32 %v2682, %v2682
      %v2763 = vmul.f32 %v2683, %v2683
      %v2764 = vmul.f32 %v2684, %v2684
      %v2765 = vmul.f32 %v2685, %v2685
      %v2766 = vmul.f32 %v2686, %v2686
      %v2767 = vmul.f32 %v2687, %v2687
      %v2768 = vmul.f32 %v2688, %v2688
      %v2769 = vmul.f32 %v2689, %v2689
      %v2770 = vmul.f32 %v2690, %v2690
      %v2771 = vmul.f32 %v2691, %v2691
      %v2772 = vmul.f32 %v2692, %v2692
      %v2773 = vmul.f32 %v2693, %v2693
      %v2774 = vmul.f32 %v2694, %v2694
      %v2775 = vmul.f32 %v2695, %v2695
      %v2776 = vmul.f32 %v2696, %v2696
      %v2777 = vmul.f32 %v2697, %v2697
      %v2778 = vmul.f32 %v2698, %v2698
      %v2779 = vmul.f32 %v2699, %v2699
      %v2780 = vmul.f32 %v2700, %v2700
      %v2781 = vmul.f32 %v2701, %v2701
      %v2782 = vadd.f32 %v2746, %v2747
      %v2783 = vadd.f32 %v2782, %v2748
      %v2784 = vadd.f32 %v2783, %v2749
      %v2785 = vadd.f32 %v2784, %v2750
      %v2786 = vadd.f32 %v2785, %v2751
      %v2787 = vadd.f32 %v2786, %v2752
      %v2788 = vadd.f32 %v2787, %v2753
      %v2789 = vadd.f32 %v2788, %v2754
      %v2790 = vadd.f32 %v2789, %v2755
      %v2791 = vadd.f32 %v2790, %v2756
      %v2792 = vadd.f32 %v2791, %v2757
      %v2793 = vadd.f32 %v2792, %v2758
      %v2794 = vadd.f32 %v2793, %v2759
      %v2795 = vadd.f32 %v2794, %v2760
      %v2796 = vadd.f32 %v2795, %v2761
      %v2797 = vadd.f32 %v2796, %v2762
      %v2798 = vadd.f32 %v2797, %v2763
      %v2799 = vadd.f32 %v2798, %v2764
      %v2800 = vadd.f32 %v2799, %v2765
      %v2801 = vadd.f32 %v2800, %v2766
      %v2802 = vadd.f32 %v2801, %v2767
      %v2803 = vadd.f32 %v2802, %v2768
      %v2804 = vadd.f32 %v2803, %v2769
      %v2805 = vadd.f32 %v2804, %v2770
      %v2806 = vadd.f32 %v2805, %v2771
      %v2807 = vadd.f32 %v2806, %v2772
      %v2808 = vadd.f32 %v2807, %v2773
      %v2809 = vadd.f32 %v2808, %v2774
      %v2810 = vadd.f32 %v2809, %v2775
      %v2811 = vadd.f32 %v2810, %v2776
      %v2812 = vadd.f32 %v2811, %v2777
      %v2813 = vadd.f32 %v2812, %v2778
      %v2814 = vadd.f32 %v2813, %v2779
      %v2815 = vadd.f32 %v2814, %v2780
      %v2816 = vsel %vm2736, %v2781, 0.0
      %v2817 = vadd.f32 %v2815, %v2816
      %v2818 = vrot.slane %v2817, 4
      %v2819 = vadd.f32 %v2817, %v2818
      %v2820 = vrot.slane %v2819, 2
      %v2821 = vadd.f32 %v2819, %v2820
      %v2822 = vrot.slane %v2821, 1
      %v2823 = vadd.f32 %v2821, %v2822
      %2824 = vst [vmem:[%s208 + $0x1] sm:$0x1] %v2823
      %2825 = vst [vmem:[%s204 + $0x13] sm:$0xff] %v2666
      %2826 = vst [vmem:[%s204 + $0x1b] sm:$0xff] %v2667
      %2827 = vst [vmem:[%s204 + $0x23] sm:$0xff] %v2668
      %2828 = vst [vmem:[%s204 + $0x2b] sm:$0xff] %v2669
      %2829 = vst [vmem:[%s204 + $0x33] sm:$0xff] %v2670
      %2830 = vst [vmem:[%s204 + $0x3b] sm:$0xff] %v2671
      %2831 = vst [vmem:[%s204 + $0x43] sm:$0xff] %v2672
      %2832 = vst [vmem:[%s204 + $0x4b] sm:$0xff] %v2673
      %2833 = vst [vmem:[%s204 + $0x53] sm:$0xff] %v2674
      %2834 = vst [vmem:[%s204 + $0x5b] sm:$0xff] %v2675
      %2835 = vst [vmem:[%s204 + $0x63] sm:$0xff] %v2676
      %2836 = vst [vmem:[%s204 + $0x6b] sm:$0xff] %v2677
      %2837 = vst [vmem:[%s204 + $0x73] sm:$0xff] %v2678
      %2838 = vst [vmem:[%s204 + $0x7b] sm:$0xff] %v2679
      %2839 = vst [vmem:[%s204 + $0x83] sm:$0xff] %v2680
      %2840 = vst [vmem:[%s204 + $0x8b] sm:$0xff] %v2681
      %2841 = vst [vmem:[%s204 + $0x93] sm:$0xff] %v2682
      %2842 = vst [vmem:[%s204 + $0x9b] sm:$0xff] %v2683
      %2843 = vst [vmem:[%s204 + $0xa3] sm:$0xff] %v2684
      %2844 = vst [vmem:[%s204 + $0xab] sm:$0xff] %v2685
      %2845 = vst [vmem:[%s204 + $0xb3] sm:$0xff] %v2686
      %2846 = vst [vmem:[%s204 + $0xbb] sm:$0xff] %v2687
      %2847 = vst [vmem:[%s204 + $0xc3] sm:$0xff] %v2688
      %2848 = vst [vmem:[%s204 + $0xcb] sm:$0xff] %v2689
      %2849 = vst [vmem:[%s204 + $0xd3] sm:$0xff] %v2690
      %2850 = vst [vmem:[%s204 + $0xdb] sm:$0xff] %v2691
      %2851 = vst [vmem:[%s204 + $0xe3] sm:$0xff] %v2692
      %2852 = vst [vmem:[%s204 + $0xeb] sm:$0xff] %v2693
      %2853 = vst [vmem:[%s204 + $0xf3] sm:$0xff] %v2694
      %2854 = vst [vmem:[%s204 + $0xfb] sm:$0xff] %v2695
      %2855 = vst [vmem:[%s204 + $0x103] sm:$0xff] %v2696
      %2856 = vst [vmem:[%s204 + $0x10b] sm:$0xff] %v2697
      %2857 = vst [vmem:[%s204 + $0x113] sm:$0xff] %v2698
      %2858 = vst [vmem:[%s204 + $0x11b] sm:$0xff] %v2699
      %2859 = vst [vmem:[%s204 + $0x123] sm:$0xff] %v2700
      %2860 = vst [vmem:[%s204 + $0x12b] sm:$0x3f] %v2701
      %2861 = vst [vmem:[%s204] sm:$0xff] 0.0
      %2862 = vst [vmem:[%s204 + $0x8] sm:$0xff] 0.0
      %2863 = vst [vmem:[%s204 + $0x10] sm:$0x7] 0.0
      %2864 = vst [vmem:[%s204 + $0x131] sm:$0xff] 0.0
      %2865 = vst [vmem:[%s204 + $0x139] sm:$0xff] 0.0
      %2866 = vst [vmem:[%s204 + $0x141] sm:$0x7] 0.0
      %p2867 = scmp.lt.s32.totalorder %s16, 1
      %s2868 = scalar_select %p2867, %s16, 1
      %s2869 = smul.addr %s2868, 41
      %s2870 = smul.addr %s2869, 8
      %s2871 = scalar_lea.vmem %s3, %s2870
      %p2872 = scmp.lt.s32.totalorder %s16, 1
      %s2873 = scalar_select %p2872, %s16, 1
      %s2874 = smul.addr %s2873, 2
      %s2875 = scalar_lea.vmem %s4, %s2874
      // Predicated region
      $region33: #{basic_block_padded.3} parent=31 // pred_check
        %p2876 = pneg %p102
      $region34: #{basic_block_padded.3} parent=31 // pred_check_branch
        %2878 = sbr.rel (%p2876) target = $region36
      $region35: #{basic_block_padded.3} parent=31 // pred_region
        _
      $region36: #{basic_block_padded.3} parent=31 // pred_fallthru
        _
      // Predicated region
      $region37: #{basic_block_padded.3} parent=31 // pred_check
        %p2879 = pneg %p128
      $region38: #{basic_block_padded.3} parent=31 // pred_check_branch
        %2881 = sbr.rel (%p2879) target = $region40
      $region39: #{basic_block_padded.3} parent=31 // pred_region
        _
      $region40: #{basic_block_padded.3} parent=31 // pred_fallthru
        _
    $region32: #{basic_block_padded.3} parent=5 // pred_fallthru
      _
    %p2882 = scmp.le.s32.totalorder 2, %s11
    // Predicated region
    $region41: #{basic_block_padded.3} parent=5 // pred_check
      %p2883 = pneg %p2882
    $region42: #{basic_block_padded.3} parent=5 // pred_check_branch
      %2885 = sbr.rel (%p2883) target = $region44
    $region43: #{basic_block_padded.3} parent=5 // pred_region
      %s2886 = ssub.s32 %s11, 2
      // Predicated region
      $region45: #{basic_block_padded.3} parent=43 // pred_check
        %p2887 = pneg %p108
      $region46: #{basic_block_padded.3} parent=43 // pred_check_branch
        %2889 = sbr.rel (%p2887) target = $region48
      $region47: #{basic_block_padded.3} parent=43 // pred_region
        %p2890 = scmp.lt.s32.totalorder %s17, 1
        %s2891 = scalar_select %p2890, %s17, 1
        %s2892 = smul.addr %s2891, 41
        %s2893 = smul.addr %s2892, 8
        %s2894 = scalar_lea.vmem %s3, %s2893
      $region48: #{basic_block_padded.3} parent=43 // pred_fallthru
        _
      // Predicated region
      $region49: #{basic_block_padded.3} parent=43 // pred_check
        %p2895 = pneg %p134
      $region50: #{basic_block_padded.3} parent=43 // pred_check_branch
        %2897 = sbr.rel (%p2895) target = $region52
      $region51: #{basic_block_padded.3} parent=43 // pred_region
        %p2898 = scmp.lt.s32.totalorder %s17, 1
        %s2899 = scalar_select %p2898, %s17, 1
        %s2900 = smul.addr %s2899, 2
        %s2901 = scalar_lea.vmem %s4, %s2900
      $region52: #{basic_block_padded.3} parent=43 // pred_fallthru
        _
    $region44: #{basic_block_padded.3} parent=5 // pred_fallthru
      _
  $region6: #{basic_block_padded.3} parent=0 // loop_footer
    %s15 = sadd.s32 1, %s11
  $region7: #{basic_block_padded.3} parent=0 // loop_footer_branch
    %10 = sbr.rel target = $region3
  $region8: #{basic_block_padded.3} parent=0 // loop_exit
    _

// kernel: basic_block_padded.4
$region0: #{basic_block_padded.4}
  #allocation0 [shape = 'u32[]', space=smem, size = 0x4, offset = 0x4, fixed_abs, tag = 'smem constant byte address 0x4 - core index']
  #allocation1 [shape = 'u32[72,128]{1,0:T(1,128)}', space=vmem, size = 0x9000, scoped, tag = 'internal scratch']
  #allocation2 [shape = 'f32[286,1152]{1,0:T(8,128)}', space=vmem, size = 0x144000, scoped, tag = 'scratch operand']
  %s0 = inlined_call_operand.vmem [shape: f32[2,324,128], index: 0, kind: input, shape index: {}]
  %s1 = inlined_call_operand.vmem [shape: f32[1,128], index: 1, kind: input, shape index: {}]
  %s2 = inlined_call_operand.vmem [shape: f32[1,128], index: 2, kind: input, shape index: {}]
  %s3 = inlined_call_operand.hbm [shape: f32[1152,128], index: 3, kind: input, shape index: {}]
  %s4 = inlined_call_operand.vmem [shape: f32[324,1], index: 4, kind: input, shape index: {}]
  %s5 = inlined_call_operand.vmem [shape: f32[2,324,128], index: 5, kind: output, shape index: {0}]
  %s6 = inlined_call_operand.vmem [shape: f32[2,2,128], index: 6, kind: output, shape index: {1}]
  %7 = xla_tuple %s5, %s6
  %s8 = sld [smem:[#allocation0]]
  $region65: #{basic_block_padded.4} parent=0
    _
  %s10 = ssub.s32 1, %s8
  %s11 = scalar_select 0, %s10, %s8
  $region1: #{basic_block_padded.4} parent=0
    #allocation3 [shape = 'u8[589824]{0}', space=vmem, size = 0x90000, scoped, tag = 'input window, operand 3, single buffered']
    #allocation4 [shape = 's32[2]{0}', space=sflag, size = 0x8, scoped, tag = 'scoped memory for basic_block_padded.4']
    %12 = vsyncpa [#allocation4], 0
    loop: start=0, step=1, limit=4
    $region2: #{basic_block_padded.4} parent=1 // loop_pre_header
      _
    $region3: #{basic_block_padded.4} parent=1 // loop_header
      %s14 = sphi 0, %s18
      %p15 = scmp.ge.s32.totalorder %s14, 4
      %s24 = sphi 0, %s26
      %s27 = sphi 0, %s24
      %s28 = sphi 0, %s27
      %s44 = sphi 0, %s28
      %s48 = sphi 0, %s48
      %s50 = sphi 0, %s48
      %s51 = sphi 0, %s50
      %s65 = sphi 0, %s51
      %s69 = sphi 0, %s69
      %s71 = sphi 0, %s69
      %s72 = sphi 0, %s71
      %s86 = sphi 0, %s72
      %s90 = sphi 0, %s90
      %s92 = sphi 0, %s90
      %s93 = sphi 0, %s92
      %s107 = sphi 0, %s93
      %s111 = sphi 0, %s111
      %s113 = sphi 0, %s111
      %s114 = sphi 0, %s113
      %s128 = sphi 0, %s114
      %s134 = sphi 0, %s136
      %s137 = sphi 0, %s134
      %s138 = sphi 0, %s137
      %s154 = sphi 0, %s138
      %s160 = sphi 0, %s162
      %s163 = sphi 0, %s160
      %s164 = sphi 0, %s163
      %s180 = sphi 0, %s164
    $region4: #{basic_block_padded.4} parent=1 // loop_header_branch
      %17 = sbr.rel (%p15) target = $region8
    $region5: #{basic_block_padded.4} parent=1 // loop_body
      %s19 = ssub.s32 %s14, 1
      %s20 = ssub.s32 %s14, 2
      %s21 = sadd.s32 %s14, 1
      %s22 = ssub.s32 %s14, %s21
      %p23 = scmp.eq.s32.totalorder %s22, 0
      %s25 = sadd.s32 %s24, 1
      %s26 = scalar_select %p23, %s24, %s25
      %p29 = pneg %p23
      %p30 = scmp.eq.s32.totalorder %s14, 1
      %p31 = por %p29, %p30
      %p32 = scmp.ne.s32.totalorder %s24, %s27
      %p33 = scmp.eq.s32.totalorder %s14, 0
      %p34 = por %p32, %p33
      %p35 = scmp.ne.s32.totalorder %s24, %s27
      %p36 = scmp.eq.s32.totalorder %s19, 1
      %p37 = por %p35, %p36
      %p38 = scmp.ne.s32.totalorder %s27, %s28
      %p39 = scmp.eq.s32.totalorder %s19, 0
      %p40 = por %p38, %p39
      %p41 = scmp.ne.s32.totalorder %s27, %s28
      %p42 = scmp.eq.s32.totalorder %s20, 1
      %p43 = por %p41, %p42
      %p45 = scmp.ne.s32.totalorder %s28, %s44
      %p46 = scmp.eq.s32.totalorder %s20, 0
      %p47 = por %p45, %p46
      %s49 = sadd.s32 %s48, 1
      %p52 = scmp.eq.s32.totalorder %s14, 1
      %p53 = scmp.ne.s32.totalorder %s48, %s50
      %p54 = scmp.eq.s32.totalorder %s14, 0
      %p55 = por %p53, %p54
      %p56 = scmp.ne.s32.totalorder %s48, %s50
      %p57 = scmp.eq.s32.totalorder %s19, 1
      %p58 = por %p56, %p57
      %p59 = scmp.ne.s32.totalorder %s50, %s51
      %p60 = scmp.eq.s32.totalorder %s19, 0
      %p61 = por %p59, %p60
      %p62 = scmp.ne.s32.totalorder %s50, %s51
      %p63 = scmp.eq.s32.totalorder %s20, 1
      %p64 = por %p62, %p63
      %p66 = scmp.ne.s32.totalorder %s51, %s65
      %p67 = scmp.eq.s32.totalorder %s20, 0
      %p68 = por %p66, %p67
      %s70 = sadd.s32 %s69, 1
      %p73 = scmp.eq.s32.totalorder %s14, 1
      %p74 = scmp.ne.s32.totalorder %s69, %s71
      %p75 = scmp.eq.s32.totalorder %s14, 0
      %p76 = por %p74, %p75
      %p77 = scmp.ne.s32.totalorder %s69, %s71
      %p78 = scmp.eq.s32.totalorder %s19, 1
      %p79 = por %p77, %p78
      %p80 = scmp.ne.s32.totalorder %s71, %s72
      %p81 = scmp.eq.s32.totalorder %s19, 0
      %p82 = por %p80, %p81
      %p83 = scmp.ne.s32.totalorder %s71, %s72
      %p84 = scmp.eq.s32.totalorder %s20, 1
      %p85 = por %p83, %p84
      %p87 = scmp.ne.s32.totalorder %s72, %s86
      %p88 = scmp.eq.s32.totalorder %s20, 0
      %p89 = por %p87, %p88
      %s91 = sadd.s32 %s90, 1
      %p94 = scmp.eq.s32.totalorder %s14, 1
      %p95 = scmp.ne.s32.totalorder %s90, %s92
      %p96 = scmp.eq.s32.totalorder %s14, 0
      %p97 = por %p95, %p96
      %p98 = scmp.ne.s32.totalorder %s90, %s92
      %p99 = scmp.eq.s32.totalorder %s19, 1
      %p100 = por %p98, %p99
      %p101 = scmp.ne.s32.totalorder %s92, %s93
      %p102 = scmp.eq.s32.totalorder %s19, 0
      %p103 = por %p101, %p102
      %p104 = scmp.ne.s32.totalorder %s92, %s93
      %p105 = scmp.eq.s32.totalorder %s20, 1
      %p106 = por %p104, %p105
      %p108 = scmp.ne.s32.totalorder %s93, %s107
      %p109 = scmp.eq.s32.totalorder %s20, 0
      %p110 = por %p108, %p109
      %s112 = sadd.s32 %s111, 1
      %p115 = scmp.eq.s32.totalorder %s14, 1
      %p116 = scmp.ne.s32.totalorder %s111, %s113
      %p117 = scmp.eq.s32.totalorder %s14, 0
      %p118 = por %p116, %p117
      %p119 = scmp.ne.s32.totalorder %s111, %s113
      %p120 = scmp.eq.s32.totalorder %s19, 1
      %p121 = por %p119, %p120
      %p122 = scmp.ne.s32.totalorder %s113, %s114
      %p123 = scmp.eq.s32.totalorder %s19, 0
      %p124 = por %p122, %p123
      %p125 = scmp.ne.s32.totalorder %s113, %s114
      %p126 = scmp.eq.s32.totalorder %s20, 1
      %p127 = por %p125, %p126
      %p129 = scmp.ne.s32.totalorder %s114, %s128
      %p130 = scmp.eq.s32.totalorder %s20, 0
      %p131 = por %p129, %p130
      %s132 = ssub.s32 %s14, %s21
      %p133 = scmp.eq.s32.totalorder %s132, 0
      %s135 = sadd.s32 %s134, 1
      %s136 = scalar_select %p133, %s134, %s135
      %p139 = pneg %p133
      %p140 = scmp.eq.s32.totalorder %s14, 1
      %p141 = por %p139, %p140
      %p142 = scmp.ne.s32.totalorder %s134, %s137
      %p143 = scmp.eq.s32.totalorder %s14, 0
      %p144 = por %p142, %p143
      %p145 = scmp.ne.s32.totalorder %s134, %s137
      %p146 = scmp.eq.s32.totalorder %s19, 1
      %p147 = por %p145, %p146
      %p148 = scmp.ne.s32.totalorder %s137, %s138
      %p149 = scmp.eq.s32.totalorder %s19, 0
      %p150 = por %p148, %p149
      %p151 = scmp.ne.s32.totalorder %s137, %s138
      %p152 = scmp.eq.s32.totalorder %s20, 1
      %p153 = por %p151, %p152
      %p155 = scmp.ne.s32.totalorder %s138, %s154
      %p156 = scmp.eq.s32.totalorder %s20, 0
      %p157 = por %p155, %p156
      %s158 = ssub.s32 %s14, %s21
      %p159 = scmp.eq.s32.totalorder %s158, 0
      %s161 = sadd.s32 %s160, 1
      %s162 = scalar_select %p159, %s160, %s161
      %p165 = pneg %p159
      %p166 = scmp.eq.s32.totalorder %s14, 1
      %p167 = por %p165, %p166
      %p168 = scmp.ne.s32.totalorder %s160, %s163
      %p169 = scmp.eq.s32.totalorder %s14, 0
      %p170 = por %p168, %p169
      %p171 = scmp.ne.s32.totalorder %s160, %s163
      %p172 = scmp.eq.s32.totalorder %s19, 1
      %p173 = por %p171, %p172
      %p174 = scmp.ne.s32.totalorder %s163, %s164
      %p175 = scmp.eq.s32.totalorder %s19, 0
      %p176 = por %p174, %p175
      %p177 = scmp.ne.s32.totalorder %s163, %s164
      %p178 = scmp.eq.s32.totalorder %s20, 1
      %p179 = por %p177, %p178
      %p181 = scmp.ne.s32.totalorder %s164, %s180
      %p182 = scmp.eq.s32.totalorder %s20, 0
      %p183 = por %p181, %p182
      %p184 = scmp.le.s32.totalorder 1, %s14
      %p185 = scmp.lt.s32.totalorder %s14, 3
      %p186 = pnand %p184, %p185
      %p187 = pneg %p186
      // Predicated region
      $region9: #{basic_block_padded.4} parent=5 // pred_check
        _
      $region10: #{basic_block_padded.4} parent=5 // pred_check_branch
        %189 = sbr.rel (%p186) target = $region12
      $region11: #{basic_block_padded.4} parent=5 // pred_region
        %s190 = ssub.s32 %s14, 1
        // Predicated region
        $region13: #{basic_block_padded.4} parent=11 // pred_check
          %p191 = pneg %p61
        $region14: #{basic_block_padded.4} parent=11 // pred_check_branch
          %193 = sbr.rel (%p191) target = $region16
        $region15: #{basic_block_padded.4} parent=11 // pred_region
          _
        $region16: #{basic_block_padded.4} parent=11 // pred_fallthru
          _
        // Predicated region
        $region17: #{basic_block_padded.4} parent=11 // pred_check
          %p194 = pneg %p82
        $region18: #{basic_block_padded.4} parent=11 // pred_check_branch
          %196 = sbr.rel (%p194) target = $region20
        $region19: #{basic_block_padded.4} parent=11 // pred_region
          _
        $region20: #{basic_block_padded.4} parent=11 // pred_fallthru
          _
        // Predicated region
        $region21: #{basic_block_padded.4} parent=11 // pred_check
          %p197 = pneg %p103
        $region22: #{basic_block_padded.4} parent=11 // pred_check_branch
          %199 = sbr.rel (%p197) target = $region24
        $region23: #{basic_block_padded.4} parent=11 // pred_region
          %201 = vsyncadd [#allocation4], 0
          %s202 = sshll.u32 %s3, 4
          %s203 = int_to_ptr.hbm [resolvable:$true] %s202
          %s204 = sshll.u32 [#allocation3], 4
          %s205 = int_to_ptr.vmem [resolvable:$true] %s204
          %210 = dma.hbm_to_vmem [thread:$0]  %s203, 18432, %s205, [#allocation4], 128, 128, 8
        $region24: #{basic_block_padded.4} parent=11 // pred_fallthru
          _
        // Predicated region
        $region25: #{basic_block_padded.4} parent=11 // pred_check
          %p211 = pneg %p124
        $region26: #{basic_block_padded.4} parent=11 // pred_check_branch
          %213 = sbr.rel (%p211) target = $region28
        $region27: #{basic_block_padded.4} parent=11 // pred_region
          _
        $region28: #{basic_block_padded.4} parent=11 // pred_fallthru
          _
      $region12: #{basic_block_padded.4} parent=5 // pred_fallthru
        _
      %p214 = scmp.lt.s32.totalorder %s14, 2
      // Predicated region
      $region29: #{basic_block_padded.4} parent=5 // pred_check
        %p215 = pneg %p214
      $region30: #{basic_block_padded.4} parent=5 // pred_check_branch
        %217 = sbr.rel (%p215) target = $region32
      $region31: #{basic_block_padded.4} parent=5 // pred_region
        // Predicated region
        $region33: #{basic_block_padded.4} parent=31 // pred_check
          %p218 = pneg %p34
        $region34: #{basic_block_padded.4} parent=31 // pred_check_branch
          %220 = sbr.rel (%p218) target = $region36
        $region35: #{basic_block_padded.4} parent=31 // pred_region
          %p221 = scmp.lt.s32.totalorder %s14, 1
          %s222 = scalar_select %p221, %s14, 1
          %s223 = smul.addr %s222, 41
          %s224 = smul.addr %s223, 8
          %s225 = scalar_lea.vmem %s0, %s224
        $region36: #{basic_block_padded.4} parent=31 // pred_fallthru
          _
      $region32: #{basic_block_padded.4} parent=5 // pred_fallthru
        _
      %p226 = scmp.le.s32.totalorder 1, %s14
      %p227 = scmp.lt.s32.totalorder %s14, 3
      %p228 = pnand %p226, %p227
      %p229 = pneg %p228
      // Predicated region
      $region37: #{basic_block_padded.4} parent=5 // pred_check
        _
      $region38: #{basic_block_padded.4} parent=5 // pred_check_branch
        %231 = sbr.rel (%p228) target = $region40
      $region39: #{basic_block_padded.4} parent=5 // pred_region
        %s232 = ssub.s32 %s14, 1
        // Predicated region
        $region41: #{basic_block_padded.4} parent=39 // pred_check
          %p233 = pneg %p103
        $region42: #{basic_block_padded.4} parent=39 // pred_check_branch
          %235 = sbr.rel (%p233) target = $region44
        $region43: #{basic_block_padded.4} parent=39 // pred_region
          %237 = dma.done [#allocation4], 18432
        $region44: #{basic_block_padded.4} parent=39 // pred_fallthru
          _
        %p238 = scmp.lt.s32.totalorder %s19, 1
        %s239 = scalar_select %p238, %s19, 1
        %s240 = smul.addr %s239, 41
        %s241 = smul.addr %s240, 8
        %s242 = scalar_lea.vmem %s0, %s241
        %p243 = pneg %p40
        %p244 = pneg %p37
        %p245 = pneg %p61
        %p246 = pneg %p58
        %p247 = pneg %p82
        %p248 = pneg %p79
        %p249 = pneg %p103
        %p250 = pneg %p100
        %p251 = pneg %p124
        %p252 = pneg %p121
        %p253 = pneg %p150
        %p254 = pneg %p147
        %p255 = scmp.lt.s32.totalorder %s19, 1
        %s256 = scalar_select %p255, %s19, 1
        %s257 = smul.addr %s256, 41
        %s258 = smul.addr %s257, 8
        %s259 = scalar_lea.vmem %s5, %s258
        %p260 = pneg %p176
        %p261 = pneg %p173
        %p262 = scmp.lt.s32.totalorder %s19, 1
        %s263 = scalar_select %p262, %s19, 1
        %s264 = smul.addr %s263, 2
        %s265 = scalar_lea.vmem %s6, %s264
        %p266 = scmp.lt.s32.totalorder %s19, 1
        %s267 = scalar_select %p266, %s19, 1
        %s268 = smul.addr %s267, 41
        %s269 = smul.addr %s268, 8
        %s270 = scalar_lea.vmem %s0, %s269
        %p271 = scmp.lt.s32.totalorder %s19, 1
        %s272 = scalar_select %p271, %s19, 1
        %s273 = smul.addr %s272, 41
        %s274 = smul.addr %s273, 8
        %s275 = scalar_lea.vmem %s5, %s274
        %p276 = scmp.lt.s32.totalorder %s19, 1
        %s277 = scalar_select %p276, %s19, 1
        %s278 = smul.addr %s277, 2
        %s279 = scalar_lea.vmem %s6, %s278
        %v280 = vld [vmem:[%s1] sm:$0x1]
        %v281 = vld [vmem:[%s2] sm:$0x1]
        %v282 = vld [vmem:[%s270] sm:$0xff]
        %v283 = vld [vmem:[%s270 + $0x8] sm:$0xff]
        %v284 = vld [vmem:[%s270 + $0x10] sm:$0xff]
        %v285 = vld [vmem:[%s270 + $0x18] sm:$0xff]
        %v286 = vld [vmem:[%s270 + $0x20] sm:$0xff]
        %v287 = vld [vmem:[%s270 + $0x28] sm:$0xff]
        %v288 = vld [vmem:[%s270 + $0x30] sm:$0xff]
        %v289 = vld [vmem:[%s270 + $0x38] sm:$0xff]
        %v290 = vld [vmem:[%s270 + $0x40] sm:$0xff]
        %v291 = vld [vmem:[%s270 + $0x48] sm:$0xff]
        %v292 = vld [vmem:[%s270 + $0x50] sm:$0xff]
        %v293 = vld [vmem:[%s270 + $0x58] sm:$0xff]
        %v294 = vld [vmem:[%s270 + $0x60] sm:$0xff]
        %v295 = vld [vmem:[%s270 + $0x68] sm:$0xff]
        %v296 = vld [vmem:[%s270 + $0x70] sm:$0xff]
        %v297 = vld [vmem:[%s270 + $0x78] sm:$0xff]
        %v298 = vld [vmem:[%s270 + $0x80] sm:$0xff]
        %v299 = vld [vmem:[%s270 + $0x88] sm:$0xff]
        %v300 = vld [vmem:[%s270 + $0x90] sm:$0xff]
        %v301 = vld [vmem:[%s270 + $0x98] sm:$0xff]
        %v302 = vld [vmem:[%s270 + $0xa0] sm:$0xff]
        %v303 = vld [vmem:[%s270 + $0xa8] sm:$0xff]
        %v304 = vld [vmem:[%s270 + $0xb0] sm:$0xff]
        %v305 = vld [vmem:[%s270 + $0xb8] sm:$0xff]
        %v306 = vld [vmem:[%s270 + $0xc0] sm:$0xff]
        %v307 = vld [vmem:[%s270 + $0xc8] sm:$0xff]
        %v308 = vld [vmem:[%s270 + $0xd0] sm:$0xff]
        %v309 = vld [vmem:[%s270 + $0xd8] sm:$0xff]
        %v310 = vld [vmem:[%s270 + $0xe0] sm:$0xff]
        %v311 = vld [vmem:[%s270 + $0xe8] sm:$0xff]
        %v312 = vld [vmem:[%s270 + $0xf0] sm:$0xff]
        %v313 = vld [vmem:[%s270 + $0xf8] sm:$0xff]
        %v314 = vld [vmem:[%s270 + $0x100] sm:$0xff]
        %v315 = vld [vmem:[%s270 + $0x108] sm:$0xff]
        %v316 = vld [vmem:[%s270 + $0x110] sm:$0xff]
        %v317 = vld [vmem:[%s270 + $0x118] sm:$0x3f]
        %v319 = vperm.slane %v280, 0
        %v321 = vmul.f32 %v282, %v319
        %v322 = vmul.f32 %v283, %v319
        %v323 = vmul.f32 %v284, %v319
        %v324 = vmul.f32 %v285, %v319
        %v325 = vmul.f32 %v286, %v319
        %v326 = vmul.f32 %v287, %v319
        %v327 = vmul.f32 %v288, %v319
        %v328 = vmul.f32 %v289, %v319
        %v329 = vmul.f32 %v290, %v319
        %v330 = vmul.f32 %v291, %v319
        %v331 = vmul.f32 %v292, %v319
        %v332 = vmul.f32 %v293, %v319
        %v333 = vmul.f32 %v294, %v319
        %v334 = vmul.f32 %v295, %v319
        %v335 = vmul.f32 %v296, %v319
        %v336 = vmul.f32 %v297, %v319
        %v337 = vmul.f32 %v298, %v319
        %v338 = vmul.f32 %v299, %v319
        %v339 = vmul.f32 %v300, %v319
        %v340 = vmul.f32 %v301, %v319
        %v341 = vmul.f32 %v302, %v319
        %v342 = vmul.f32 %v303, %v319
        %v343 = vmul.f32 %v304, %v319
        %v344 = vmul.f32 %v305, %v319
        %v345 = vmul.f32 %v306, %v319
        %v346 = vmul.f32 %v307, %v319
        %v347 = vmul.f32 %v308, %v319
        %v348 = vmul.f32 %v309, %v319
        %v349 = vmul.f32 %v310, %v319
        %v350 = vmul.f32 %v311, %v319
        %v351 = vmul.f32 %v312, %v319
        %v352 = vmul.f32 %v313, %v319
        %v353 = vmul.f32 %v314, %v319
        %v354 = vmul.f32 %v315, %v319
        %v355 = vmul.f32 %v316, %v319
        %v356 = vmul.f32 %v317, %v319
        %v358 = vperm.slane %v281, 0
        %v360 = vadd.f32 %v321, %v358
        %v361 = vadd.f32 %v322, %v358
        %v362 = vadd.f32 %v323, %v358
        %v363 = vadd.f32 %v324, %v358
        %v364 = vadd.f32 %v325, %v358
        %v365 = vadd.f32 %v326, %v358
        %v366 = vadd.f32 %v327, %v358
        %v367 = vadd.f32 %v328, %v358
        %v368 = vadd.f32 %v329, %v358
        %v369 = vadd.f32 %v330, %v358
        %v370 = vadd.f32 %v331, %v358
        %v371 = vadd.f32 %v332, %v358
        %v372 = vadd.f32 %v333, %v358
        %v373 = vadd.f32 %v334, %v358
        %v374 = vadd.f32 %v335, %v358
        %v375 = vadd.f32 %v336, %v358
        %v376 = vadd.f32 %v337, %v358
        %v377 = vadd.f32 %v338, %v358
        %v378 = vadd.f32 %v339, %v358
        %v379 = vadd.f32 %v340, %v358
        %v380 = vadd.f32 %v341, %v358
        %v381 = vadd.f32 %v342, %v358
        %v382 = vadd.f32 %v343, %v358
        %v383 = vadd.f32 %v344, %v358
        %v384 = vadd.f32 %v345, %v358
        %v385 = vadd.f32 %v346, %v358
        %v386 = vadd.f32 %v347, %v358
        %v387 = vadd.f32 %v348, %v358
        %v388 = vadd.f32 %v349, %v358
        %v389 = vadd.f32 %v350, %v358
        %v390 = vadd.f32 %v351, %v358
        %v391 = vadd.f32 %v352, %v358
        %v392 = vadd.f32 %v353, %v358
        %v393 = vadd.f32 %v354, %v358
        %v394 = vadd.f32 %v355, %v358
        %v395 = vadd.f32 %v356, %v358
        %v396 = vmax.f32 %v360, 0.0
        %v397 = vmax.f32 %v361, 0.0
        %v398 = vmax.f32 %v362, 0.0
        %v399 = vmax.f32 %v363, 0.0
        %v400 = vmax.f32 %v364, 0.0
        %v401 = vmax.f32 %v365, 0.0
        %v402 = vmax.f32 %v366, 0.0
        %v403 = vmax.f32 %v367, 0.0
        %v404 = vmax.f32 %v368, 0.0
        %v405 = vmax.f32 %v369, 0.0
        %v406 = vmax.f32 %v370, 0.0
        %v407 = vmax.f32 %v371, 0.0
        %v408 = vmax.f32 %v372, 0.0
        %v409 = vmax.f32 %v373, 0.0
        %v410 = vmax.f32 %v374, 0.0
        %v411 = vmax.f32 %v375, 0.0
        %v412 = vmax.f32 %v376, 0.0
        %v413 = vmax.f32 %v377, 0.0
        %v414 = vmax.f32 %v378, 0.0
        %v415 = vmax.f32 %v379, 0.0
        %v416 = vmax.f32 %v380, 0.0
        %v417 = vmax.f32 %v381, 0.0
        %v418 = vmax.f32 %v382, 0.0
        %v419 = vmax.f32 %v383, 0.0
        %v420 = vmax.f32 %v384, 0.0
        %v421 = vmax.f32 %v385, 0.0
        %v422 = vmax.f32 %v386, 0.0
        %v423 = vmax.f32 %v387, 0.0
        %v424 = vmax.f32 %v388, 0.0
        %v425 = vmax.f32 %v389, 0.0
        %v426 = vmax.f32 %v390, 0.0
        %v427 = vmax.f32 %v391, 0.0
        %v428 = vmax.f32 %v392, 0.0
        %v429 = vmax.f32 %v393, 0.0
        %v430 = vmax.f32 %v394, 0.0
        %v431 = vmax.f32 %v395, 0.0
        %v432 = vld [vmem:[%s4] sm:$0xff]
        %v433 = vld [vmem:[%s4 + $0x8] sm:$0xff]
        %v434 = vld [vmem:[%s4 + $0x10] sm:$0xff]
        %v435 = vld [vmem:[%s4 + $0x18] sm:$0xff]
        %v436 = vld [vmem:[%s4 + $0x20] sm:$0xff]
        %v437 = vld [vmem:[%s4 + $0x28] sm:$0xff]
        %v438 = vld [vmem:[%s4 + $0x30] sm:$0xff]
        %v439 = vld [vmem:[%s4 + $0x38] sm:$0xff]
        %v440 = vld [vmem:[%s4 + $0x40] sm:$0xff]
        %v441 = vld [vmem:[%s4 + $0x48] sm:$0xff]
        %v442 = vld [vmem:[%s4 + $0x50] sm:$0xff]
        %v443 = vld [vmem:[%s4 + $0x58] sm:$0xff]
        %v444 = vld [vmem:[%s4 + $0x60] sm:$0xff]
        %v445 = vld [vmem:[%s4 + $0x68] sm:$0xff]
        %v446 = vld [vmem:[%s4 + $0x70] sm:$0xff]
        %v447 = vld [vmem:[%s4 + $0x78] sm:$0xff]
        %v448 = vld [vmem:[%s4 + $0x80] sm:$0xff]
        %v449 = vld [vmem:[%s4 + $0x88] sm:$0xff]
        %v450 = vld [vmem:[%s4 + $0x90] sm:$0xff]
        %v451 = vld [vmem:[%s4 + $0x98] sm:$0xff]
        %v452 = vld [vmem:[%s4 + $0xa0] sm:$0xff]
        %v453 = vld [vmem:[%s4 + $0xa8] sm:$0xff]
        %v454 = vld [vmem:[%s4 + $0xb0] sm:$0xff]
        %v455 = vld [vmem:[%s4 + $0xb8] sm:$0xff]
        %v456 = vld [vmem:[%s4 + $0xc0] sm:$0xff]
        %v457 = vld [vmem:[%s4 + $0xc8] sm:$0xff]
        %v458 = vld [vmem:[%s4 + $0xd0] sm:$0xff]
        %v459 = vld [vmem:[%s4 + $0xd8] sm:$0xff]
        %v460 = vld [vmem:[%s4 + $0xe0] sm:$0xff]
        %v461 = vld [vmem:[%s4 + $0xe8] sm:$0xff]
        %v462 = vld [vmem:[%s4 + $0xf0] sm:$0xff]
        %v463 = vld [vmem:[%s4 + $0xf8] sm:$0xff]
        %v464 = vld [vmem:[%s4 + $0x100] sm:$0xff]
        %v465 = vld [vmem:[%s4 + $0x108] sm:$0xff]
        %v466 = vld [vmem:[%s4 + $0x110] sm:$0xff]
        %v467 = vld [vmem:[%s4 + $0x118] sm:$0x3f]
        %469 = vset.pattern.permute.xlu0 0
        %470 = vperm.xlu0 %469, %v432
        %v471 = vpop.permute.xlu0 %470
        %474 = vset.pattern.permute.xlu0 0
        %475 = vperm.xlu0 %474, %v433
        %v476 = vpop.permute.xlu0 %475
        %479 = vset.pattern.permute.xlu0 0
        %480 = vperm.xlu0 %479, %v434
        %v481 = vpop.permute.xlu0 %480
        %484 = vset.pattern.permute.xlu0 0
        %485 = vperm.xlu0 %484, %v435
        %v486 = vpop.permute.xlu0 %485
        %489 = vset.pattern.permute.xlu0 0
        %490 = vperm.xlu0 %489, %v436
        %v491 = vpop.permute.xlu0 %490
        %494 = vset.pattern.permute.xlu0 0
        %495 = vperm.xlu0 %494, %v437
        %v496 = vpop.permute.xlu0 %495
        %499 = vset.pattern.permute.xlu0 0
        %500 = vperm.xlu0 %499, %v438
        %v501 = vpop.permute.xlu0 %500
        %504 = vset.pattern.permute.xlu0 0
        %505 = vperm.xlu0 %504, %v439
        %v506 = vpop.permute.xlu0 %505
        %509 = vset.pattern.permute.xlu0 0
        %510 = vperm.xlu0 %509, %v440
        %v511 = vpop.permute.xlu0 %510
        %514 = vset.pattern.permute.xlu0 0
        %515 = vperm.xlu0 %514, %v441
        %v516 = vpop.permute.xlu0 %515
        %519 = vset.pattern.permute.xlu0 0
        %520 = vperm.xlu0 %519, %v442
        %v521 = vpop.permute.xlu0 %520
        %524 = vset.pattern.permute.xlu0 0
        %525 = vperm.xlu0 %524, %v443
        %v526 = vpop.permute.xlu0 %525
        %529 = vset.pattern.permute.xlu0 0
        %530 = vperm.xlu0 %529, %v444
        %v531 = vpop.permute.xlu0 %530
        %534 = vset.pattern.permute.xlu0 0
        %535 = vperm.xlu0 %534, %v445
        %v536 = vpop.permute.xlu0 %535
        %539 = vset.pattern.permute.xlu0 0
        %540 = vperm.xlu0 %539, %v446
        %v541 = vpop.permute.xlu0 %540
        %544 = vset.pattern.permute.xlu0 0
        %545 = vperm.xlu0 %544, %v447
        %v546 = vpop.permute.xlu0 %545
        %549 = vset.pattern.permute.xlu0 0
        %550 = vperm.xlu0 %549, %v448
        %v551 = vpop.permute.xlu0 %550
        %554 = vset.pattern.permute.xlu0 0
        %555 = vperm.xlu0 %554, %v449
        %v556 = vpop.permute.xlu0 %555
        %559 = vset.pattern.permute.xlu0 0
        %560 = vperm.xlu0 %559, %v450
        %v561 = vpop.permute.xlu0 %560
        %564 = vset.pattern.permute.xlu0 0
        %565 = vperm.xlu0 %564, %v451
        %v566 = vpop.permute.xlu0 %565
        %569 = vset.pattern.permute.xlu0 0
        %570 = vperm.xlu0 %569, %v452
        %v571 = vpop.permute.xlu0 %570
        %574 = vset.pattern.permute.xlu0 0
        %575 = vperm.xlu0 %574, %v453
        %v576 = vpop.permute.xlu0 %575
        %579 = vset.pattern.permute.xlu0 0
        %580 = vperm.xlu0 %579, %v454
        %v581 = vpop.permute.xlu0 %580
        %584 = vset.pattern.permute.xlu0 0
        %585 = vperm.xlu0 %584, %v455
        %v586 = vpop.permute.xlu0 %585
        %589 = vset.pattern.permute.xlu0 0
        %590 = vperm.xlu0 %589, %v456
        %v591 = vpop.permute.xlu0 %590
        %594 = vset.pattern.permute.xlu0 0
        %595 = vperm.xlu0 %594, %v457
        %v596 = vpop.permute.xlu0 %595
        %599 = vset.pattern.permute.xlu0 0
        %600 = vperm.xlu0 %599, %v458
        %v601 = vpop.permute.xlu0 %600
        %604 = vset.pattern.permute.xlu0 0
        %605 = vperm.xlu0 %604, %v459
        %v606 = vpop.permute.xlu0 %605
        %609 = vset.pattern.permute.xlu0 0
        %610 = vperm.xlu0 %609, %v460
        %v611 = vpop.permute.xlu0 %610
        %614 = vset.pattern.permute.xlu0 0
        %615 = vperm.xlu0 %614, %v461
        %v616 = vpop.permute.xlu0 %615
        %619 = vset.pattern.permute.xlu0 0
        %620 = vperm.xlu0 %619, %v462
        %v621 = vpop.permute.xlu0 %620
        %624 = vset.pattern.permute.xlu0 0
        %625 = vperm.xlu0 %624, %v463
        %v626 = vpop.permute.xlu0 %625
        %629 = vset.pattern.permute.xlu0 0
        %630 = vperm.xlu0 %629, %v464
        %v631 = vpop.permute.xlu0 %630
        %634 = vset.pattern.permute.xlu0 0
        %635 = vperm.xlu0 %634, %v465
        %v636 = vpop.permute.xlu0 %635
        %639 = vset.pattern.permute.xlu0 0
        %640 = vperm.xlu0 %639, %v466
        %v641 = vpop.permute.xlu0 %640
        %644 = vset.pattern.permute.xlu0 0
        %645 = vperm.xlu0 %644, %v467
        %v646 = vpop.permute.xlu0 %645
        %v648 = vmul.f32 %v396, %v471
        %v649 = vmul.f32 %v397, %v476
        %v650 = vmul.f32 %v398, %v481
        %v651 = vmul.f32 %v399, %v486
        %v652 = vmul.f32 %v400, %v491
        %v653 = vmul.f32 %v401, %v496
        %v654 = vmul.f32 %v402, %v501
        %v655 = vmul.f32 %v403, %v506
        %v656 = vmul.f32 %v404, %v511
        %v657 = vmul.f32 %v405, %v516
        %v658 = vmul.f32 %v406, %v521
        %v659 = vmul.f32 %v407, %v526
        %v660 = vmul.f32 %v408, %v531
        %v661 = vmul.f32 %v409, %v536
        %v662 = vmul.f32 %v410, %v541
        %v663 = vmul.f32 %v411, %v546
        %v664 = vmul.f32 %v412, %v551
        %v665 = vmul.f32 %v413, %v556
        %v666 = vmul.f32 %v414, %v561
        %v667 = vmul.f32 %v415, %v566
        %v668 = vmul.f32 %v416, %v571
        %v669 = vmul.f32 %v417, %v576
        %v670 = vmul.f32 %v418, %v581
        %v671 = vmul.f32 %v419, %v586
        %v672 = vmul.f32 %v420, %v591
        %v673 = vmul.f32 %v421, %v596
        %v674 = vmul.f32 %v422, %v601
        %v675 = vmul.f32 %v423, %v606
        %v676 = vmul.f32 %v424, %v611
        %v677 = vmul.f32 %v425, %v616
        %v678 = vmul.f32 %v426, %v621
        %v679 = vmul.f32 %v427, %v626
        %v680 = vmul.f32 %v428, %v631
        %v681 = vmul.f32 %v429, %v636
        %v682 = vmul.f32 %v430, %v641
        %v683 = vmul.f32 %v431, %v646
        %684 = vst [vmem:[#allocation2] sm:$0xff] %v648
        %685 = vst [vmem:[#allocation2 + $0x48] sm:$0xff] %v649
        %686 = vst [vmem:[#allocation2 + $0x90] sm:$0xff] %v650
        %687 = vst [vmem:[#allocation2 + $0xd8] sm:$0xff] %v651
        %688 = vst [vmem:[#allocation2 + $0x120] sm:$0xff] %v652
        %689 = vst [vmem:[#allocation2 + $0x168] sm:$0xff] %v653
        %690 = vst [vmem:[#allocation2 + $0x1b0] sm:$0xff] %v654
        %691 = vst [vmem:[#allocation2 + $0x1f8] sm:$0xff] %v655
        %692 = vst [vmem:[#allocation2 + $0x240] sm:$0xff] %v656
        %693 = vst [vmem:[#allocation2 + $0x288] sm:$0xff] %v657
        %694 = vst [vmem:[#allocation2 + $0x2d0] sm:$0xff] %v658
        %695 = vst [vmem:[#allocation2 + $0x318] sm:$0xff] %v659
        %696 = vst [vmem:[#allocation2 + $0x360] sm:$0xff] %v660
        %697 = vst [vmem:[#allocation2 + $0x3a8] sm:$0xff] %v661
        %698 = vst [vmem:[#allocation2 + $0x3f0] sm:$0xff] %v662
        %699 = vst [vmem:[#allocation2 + $0x438] sm:$0xff] %v663
        %700 = vst [vmem:[#allocation2 + $0x480] sm:$0xff] %v664
        %701 = vst [vmem:[#allocation2 + $0x4c8] sm:$0xff] %v665
        %702 = vst [vmem:[#allocation2 + $0x510] sm:$0xff] %v666
        %703 = vst [vmem:[#allocation2 + $0x558] sm:$0xff] %v667
        %704 = vst [vmem:[#allocation2 + $0x5a0] sm:$0xff] %v668
        %705 = vst [vmem:[#allocation2 + $0x5e8] sm:$0xff] %v669
        %706 = vst [vmem:[#allocation2 + $0x630] sm:$0xff] %v670
        %707 = vst [vmem:[#allocation2 + $0x678] sm:$0xff] %v671
        %708 = vst [vmem:[#allocation2 + $0x6c0] sm:$0xff] %v672
        %709 = vst [vmem:[#allocation2 + $0x708] sm:$0xff] %v673
        %710 = vst [vmem:[#allocation2 + $0x750] sm:$0xff] %v674
        %711 = vst [vmem:[#allocation2 + $0x798] sm:$0xff] %v675
        %712 = vst [vmem:[#allocation2 + $0x7e0] sm:$0xff] %v676
        %713 = vst [vmem:[#allocation2 + $0x828] sm:$0xff] %v677
        %714 = vst [vmem:[#allocation2 + $0x870] sm:$0xff] %v678
        %715 = vst [vmem:[#allocation2 + $0x8b8] sm:$0xff] %v679
        %716 = vst [vmem:[#allocation2 + $0x900] sm:$0xff] %v680
        %717 = vst [vmem:[#allocation2 + $0x948] sm:$0xff] %v681
        %718 = vst [vmem:[#allocation2 + $0x990] sm:$0xff] %v682
        %719 = vst [vmem:[#allocation2 + $0x9d8] sm:$0x3f] %v683
        %v720 = vld [vmem:[%s270 + $0x1] sm:$0xff]
        %v721 = vld [vmem:[%s270 + $0x9] sm:$0xff]
        %v722 = vld [vmem:[%s270 + $0x11] sm:$0xff]
        %v723 = vld [vmem:[%s270 + $0x19] sm:$0xff]
        %v724 = vld [vmem:[%s270 + $0x21] sm:$0xff]
        %v725 = vld [vmem:[%s270 + $0x29] sm:$0xff]
        %v726 = vld [vmem:[%s270 + $0x31] sm:$0xff]
        %v727 = vld [vmem:[%s270 + $0x39] sm:$0xff]
        %v728 = vld [vmem:[%s270 + $0x41] sm:$0xff]
        %v729 = vld [vmem:[%s270 + $0x49] sm:$0xff]
        %v730 = vld [vmem:[%s270 + $0x51] sm:$0xff]
        %v731 = vld [vmem:[%s270 + $0x59] sm:$0xff]
        %v732 = vld [vmem:[%s270 + $0x61] sm:$0xff]
        %v733 = vld [vmem:[%s270 + $0x69] sm:$0xff]
        %v734 = vld [vmem:[%s270 + $0x71] sm:$0xff]
        %v735 = vld [vmem:[%s270 + $0x79] sm:$0xff]
        %v736 = vld [vmem:[%s270 + $0x81] sm:$0xff]
        %v737 = vld [vmem:[%s270 + $0x89] sm:$0xff]
        %v738 = vld [vmem:[%s270 + $0x91] sm:$0xff]
        %v739 = vld [vmem:[%s270 + $0x99] sm:$0xff]
        %v740 = vld [vmem:[%s270 + $0xa1] sm:$0xff]
        %v741 = vld [vmem:[%s270 + $0xa9] sm:$0xff]
        %v742 = vld [vmem:[%s270 + $0xb1] sm:$0xff]
        %v743 = vld [vmem:[%s270 + $0xb9] sm:$0xff]
        %v744 = vld [vmem:[%s270 + $0xc1] sm:$0xff]
        %v745 = vld [vmem:[%s270 + $0xc9] sm:$0xff]
        %v746 = vld [vmem:[%s270 + $0xd1] sm:$0xff]
        %v747 = vld [vmem:[%s270 + $0xd9] sm:$0xff]
        %v748 = vld [vmem:[%s270 + $0xe1] sm:$0xff]
        %v749 = vld [vmem:[%s270 + $0xe9] sm:$0xff]
        %v750 = vld [vmem:[%s270 + $0xf1] sm:$0xff]
        %v751 = vld [vmem:[%s270 + $0xf9] sm:$0xff]
        %v752 = vld [vmem:[%s270 + $0x101] sm:$0xff]
        %v753 = vld [vmem:[%s270 + $0x109] sm:$0xff]
        %v754 = vld [vmem:[%s270 + $0x111] sm:$0xff]
        %v755 = vld [vmem:[%s270 + $0x119] sm:$0x3f]
        %v756 = vmul.f32 %v720, %v319
        %v757 = vmul.f32 %v721, %v319
        %v758 = vmul.f32 %v722, %v319
        %v759 = vmul.f32 %v723, %v319
        %v760 = vmul.f32 %v724, %v319
        %v761 = vmul.f32 %v725, %v319
        %v762 = vmul.f32 %v726, %v319
        %v763 = vmul.f32 %v727, %v319
        %v764 = vmul.f32 %v728, %v319
        %v765 = vmul.f32 %v729, %v319
        %v766 = vmul.f32 %v730, %v319
        %v767 = vmul.f32 %v731, %v319
        %v768 = vmul.f32 %v732, %v319
        %v769 = vmul.f32 %v733, %v319
        %v770 = vmul.f32 %v734, %v319
        %v771 = vmul.f32 %v735, %v319
        %v772 = vmul.f32 %v736, %v319
        %v773 = vmul.f32 %v737, %v319
        %v774 = vmul.f32 %v738, %v319
        %v775 = vmul.f32 %v739, %v319
        %v776 = vmul.f32 %v740, %v319
        %v777 = vmul.f32 %v741, %v319
        %v778 = vmul.f32 %v742, %v319
        %v779 = vmul.f32 %v743, %v319
        %v780 = vmul.f32 %v744, %v319
        %v781 = vmul.f32 %v745, %v319
        %v782 = vmul.f32 %v746, %v319
        %v783 = vmul.f32 %v747, %v319
        %v784 = vmul.f32 %v748, %v319
        %v785 = vmul.f32 %v749, %v319
        %v786 = vmul.f32 %v750, %v319
        %v787 = vmul.f32 %v751, %v319
        %v788 = vmul.f32 %v752, %v319
        %v789 = vmul.f32 %v753, %v319
        %v790 = vmul.f32 %v754, %v319
        %v791 = vmul.f32 %v755, %v319
        %v792 = vadd.f32 %v756, %v358
        %v793 = vadd.f32 %v757, %v358
        %v794 = vadd.f32 %v758, %v358
        %v795 = vadd.f32 %v759, %v358
        %v796 = vadd.f32 %v760, %v358
        %v797 = vadd.f32 %v761, %v358
        %v798 = vadd.f32 %v762, %v358
        %v799 = vadd.f32 %v763, %v358
        %v800 = vadd.f32 %v764, %v358
        %v801 = vadd.f32 %v765, %v358
        %v802 = vadd.f32 %v766, %v358
        %v803 = vadd.f32 %v767, %v358
        %v804 = vadd.f32 %v768, %v358
        %v805 = vadd.f32 %v769, %v358
        %v806 = vadd.f32 %v770, %v358
        %v807 = vadd.f32 %v771, %v358
        %v808 = vadd.f32 %v772, %v358
        %v809 = vadd.f32 %v773, %v358
        %v810 = vadd.f32 %v774, %v358
        %v811 = vadd.f32 %v775, %v358
        %v812 = vadd.f32 %v776, %v358
        %v813 = vadd.f32 %v777, %v358
        %v814 = vadd.f32 %v778, %v358
        %v815 = vadd.f32 %v779, %v358
        %v816 = vadd.f32 %v780, %v358
        %v817 = vadd.f32 %v781, %v358
        %v818 = vadd.f32 %v782, %v358
        %v819 = vadd.f32 %v783, %v358
        %v820 = vadd.f32 %v784, %v358
        %v821 = vadd.f32 %v785, %v358
        %v822 = vadd.f32 %v786, %v358
        %v823 = vadd.f32 %v787, %v358
        %v824 = vadd.f32 %v788, %v358
        %v825 = vadd.f32 %v789, %v358
        %v826 = vadd.f32 %v790, %v358
        %v827 = vadd.f32 %v791, %v358
        %v828 = vmax.f32 %v792, 0.0
        %v829 = vmax.f32 %v793, 0.0
        %v830 = vmax.f32 %v794, 0.0
        %v831 = vmax.f32 %v795, 0.0
        %v832 = vmax.f32 %v796, 0.0
        %v833 = vmax.f32 %v797, 0.0
        %v834 = vmax.f32 %v798, 0.0
        %v835 = vmax.f32 %v799, 0.0
        %v836 = vmax.f32 %v800, 0.0
        %v837 = vmax.f32 %v801, 0.0
        %v838 = vmax.f32 %v802, 0.0
        %v839 = vmax.f32 %v803, 0.0
        %v840 = vmax.f32 %v804, 0.0
        %v841 = vmax.f32 %v805, 0.0
        %v842 = vmax.f32 %v806, 0.0
        %v843 = vmax.f32 %v807, 0.0
        %v844 = vmax.f32 %v808, 0.0
        %v845 = vmax.f32 %v809, 0.0
        %v846 = vmax.f32 %v810, 0.0
        %v847 = vmax.f32 %v811, 0.0
        %v848 = vmax.f32 %v812, 0.0
        %v849 = vmax.f32 %v813, 0.0
        %v850 = vmax.f32 %v814, 0.0
        %v851 = vmax.f32 %v815, 0.0
        %v852 = vmax.f32 %v816, 0.0
        %v853 = vmax.f32 %v817, 0.0
        %v854 = vmax.f32 %v818, 0.0
        %v855 = vmax.f32 %v819, 0.0
        %v856 = vmax.f32 %v820, 0.0
        %v857 = vmax.f32 %v821, 0.0
        %v858 = vmax.f32 %v822, 0.0
        %v859 = vmax.f32 %v823, 0.0
        %v860 = vmax.f32 %v824, 0.0
        %v861 = vmax.f32 %v825, 0.0
        %v862 = vmax.f32 %v826, 0.0
        %v863 = vmax.f32 %v827, 0.0
        %v864 = vld [vmem:[%s4 + $0x1] sm:$0xff]
        %v865 = vld [vmem:[%s4 + $0x9] sm:$0xff]
        %v866 = vld [vmem:[%s4 + $0x11] sm:$0xff]
        %v867 = vld [vmem:[%s4 + $0x19] sm:$0xff]
        %v868 = vld [vmem:[%s4 + $0x21] sm:$0xff]
        %v869 = vld [vmem:[%s4 + $0x29] sm:$0xff]
        %v870 = vld [vmem:[%s4 + $0x31] sm:$0xff]
        %v871 = vld [vmem:[%s4 + $0x39] sm:$0xff]
        %v872 = vld [vmem:[%s4 + $0x41] sm:$0xff]
        %v873 = vld [vmem:[%s4 + $0x49] sm:$0xff]
        %v874 = vld [vmem:[%s4 + $0x51] sm:$0xff]
        %v875 = vld [vmem:[%s4 + $0x59] sm:$0xff]
        %v876 = vld [vmem:[%s4 + $0x61] sm:$0xff]
        %v877 = vld [vmem:[%s4 + $0x69] sm:$0xff]
        %v878 = vld [vmem:[%s4 + $0x71] sm:$0xff]
        %v879 = vld [vmem:[%s4 + $0x79] sm:$0xff]
        %v880 = vld [vmem:[%s4 + $0x81] sm:$0xff]
        %v881 = vld [vmem:[%s4 + $0x89] sm:$0xff]
        %v882 = vld [vmem:[%s4 + $0x91] sm:$0xff]
        %v883 = vld [vmem:[%s4 + $0x99] sm:$0xff]
        %v884 = vld [vmem:[%s4 + $0xa1] sm:$0xff]
        %v885 = vld [vmem:[%s4 + $0xa9] sm:$0xff]
        %v886 = vld [vmem:[%s4 + $0xb1] sm:$0xff]
        %v887 = vld [vmem:[%s4 + $0xb9] sm:$0xff]
        %v888 = vld [vmem:[%s4 + $0xc1] sm:$0xff]
        %v889 = vld [vmem:[%s4 + $0xc9] sm:$0xff]
        %v890 = vld [vmem:[%s4 + $0xd1] sm:$0xff]
        %v891 = vld [vmem:[%s4 + $0xd9] sm:$0xff]
        %v892 = vld [vmem:[%s4 + $0xe1] sm:$0xff]
        %v893 = vld [vmem:[%s4 + $0xe9] sm:$0xff]
        %v894 = vld [vmem:[%s4 + $0xf1] sm:$0xff]
        %v895 = vld [vmem:[%s4 + $0xf9] sm:$0xff]
        %v896 = vld [vmem:[%s4 + $0x101] sm:$0xff]
        %v897 = vld [vmem:[%s4 + $0x109] sm:$0xff]
        %v898 = vld [vmem:[%s4 + $0x111] sm:$0xff]
        %v899 = vld [vmem:[%s4 + $0x119] sm:$0x3f]
        %901 = vset.pattern.permute.xlu0 0
        %902 = vperm.xlu0 %901, %v864
        %v903 = vpop.permute.xlu0 %902
        %906 = vset.pattern.permute.xlu0 0
        %907 = vperm.xlu0 %906, %v865
        %v908 = vpop.permute.xlu0 %907
        %911 = vset.pattern.permute.xlu0 0
        %912 = vperm.xlu0 %911, %v866
        %v913 = vpop.permute.xlu0 %912
        %916 = vset.pattern.permute.xlu0 0
        %917 = vperm.xlu0 %916, %v867
        %v918 = vpop.permute.xlu0 %917
        %921 = vset.pattern.permute.xlu0 0
        %922 = vperm.xlu0 %921, %v868
        %v923 = vpop.permute.xlu0 %922
        %926 = vset.pattern.permute.xlu0 0
        %927 = vperm.xlu0 %926, %v869
        %v928 = vpop.permute.xlu0 %927
        %931 = vset.pattern.permute.xlu0 0
        %932 = vperm.xlu0 %931, %v870
        %v933 = vpop.permute.xlu0 %932
        %936 = vset.pattern.permute.xlu0 0
        %937 = vperm.xlu0 %936, %v871
        %v938 = vpop.permute.xlu0 %937
        %941 = vset.pattern.permute.xlu0 0
        %942 = vperm.xlu0 %941, %v872
        %v943 = vpop.permute.xlu0 %942
        %946 = vset.pattern.permute.xlu0 0
        %947 = vperm.xlu0 %946, %v873
        %v948 = vpop.permute.xlu0 %947
        %951 = vset.pattern.permute.xlu0 0
        %952 = vperm.xlu0 %951, %v874
        %v953 = vpop.permute.xlu0 %952
        %956 = vset.pattern.permute.xlu0 0
        %957 = vperm.xlu0 %956, %v875
        %v958 = vpop.permute.xlu0 %957
        %961 = vset.pattern.permute.xlu0 0
        %962 = vperm.xlu0 %961, %v876
        %v963 = vpop.permute.xlu0 %962
        %966 = vset.pattern.permute.xlu0 0
        %967 = vperm.xlu0 %966, %v877
        %v968 = vpop.permute.xlu0 %967
        %971 = vset.pattern.permute.xlu0 0
        %972 = vperm.xlu0 %971, %v878
        %v973 = vpop.permute.xlu0 %972
        %976 = vset.pattern.permute.xlu0 0
        %977 = vperm.xlu0 %976, %v879
        %v978 = vpop.permute.xlu0 %977
        %981 = vset.pattern.permute.xlu0 0
        %982 = vperm.xlu0 %981, %v880
        %v983 = vpop.permute.xlu0 %982
        %986 = vset.pattern.permute.xlu0 0
        %987 = vperm.xlu0 %986, %v881
        %v988 = vpop.permute.xlu0 %987
        %991 = vset.pattern.permute.xlu0 0
        %992 = vperm.xlu0 %991, %v882
        %v993 = vpop.permute.xlu0 %992
        %996 = vset.pattern.permute.xlu0 0
        %997 = vperm.xlu0 %996, %v883
        %v998 = vpop.permute.xlu0 %997
        %1001 = vset.pattern.permute.xlu0 0
        %1002 = vperm.xlu0 %1001, %v884
        %v1003 = vpop.permute.xlu0 %1002
        %1006 = vset.pattern.permute.xlu0 0
        %1007 = vperm.xlu0 %1006, %v885
        %v1008 = vpop.permute.xlu0 %1007
        %1011 = vset.pattern.permute.xlu0 0
        %1012 = vperm.xlu0 %1011, %v886
        %v1013 = vpop.permute.xlu0 %1012
        %1016 = vset.pattern.permute.xlu0 0
        %1017 = vperm.xlu0 %1016, %v887
        %v1018 = vpop.permute.xlu0 %1017
        %1021 = vset.pattern.permute.xlu0 0
        %1022 = vperm.xlu0 %1021, %v888
        %v1023 = vpop.permute.xlu0 %1022
        %1026 = vset.pattern.permute.xlu0 0
        %1027 = vperm.xlu0 %1026, %v889
        %v1028 = vpop.permute.xlu0 %1027
        %1031 = vset.pattern.permute.xlu0 0
        %1032 = vperm.xlu0 %1031, %v890
        %v1033 = vpop.permute.xlu0 %1032
        %1036 = vset.pattern.permute.xlu0 0
        %1037 = vperm.xlu0 %1036, %v891
        %v1038 = vpop.permute.xlu0 %1037
        %1041 = vset.pattern.permute.xlu0 0
        %1042 = vperm.xlu0 %1041, %v892
        %v1043 = vpop.permute.xlu0 %1042
        %1046 = vset.pattern.permute.xlu0 0
        %1047 = vperm.xlu0 %1046, %v893
        %v1048 = vpop.permute.xlu0 %1047
        %1051 = vset.pattern.permute.xlu0 0
        %1052 = vperm.xlu0 %1051, %v894
        %v1053 = vpop.permute.xlu0 %1052
        %1056 = vset.pattern.permute.xlu0 0
        %1057 = vperm.xlu0 %1056, %v895
        %v1058 = vpop.permute.xlu0 %1057
        %1061 = vset.pattern.permute.xlu0 0
        %1062 = vperm.xlu0 %1061, %v896
        %v1063 = vpop.permute.xlu0 %1062
        %1066 = vset.pattern.permute.xlu0 0
        %1067 = vperm.xlu0 %1066, %v897
        %v1068 = vpop.permute.xlu0 %1067
        %1071 = vset.pattern.permute.xlu0 0
        %1072 = vperm.xlu0 %1071, %v898
        %v1073 = vpop.permute.xlu0 %1072
        %1076 = vset.pattern.permute.xlu0 0
        %1077 = vperm.xlu0 %1076, %v899
        %v1078 = vpop.permute.xlu0 %1077
        %v1080 = vmul.f32 %v828, %v903
        %v1081 = vmul.f32 %v829, %v908
        %v1082 = vmul.f32 %v830, %v913
        %v1083 = vmul.f32 %v831, %v918
        %v1084 = vmul.f32 %v832, %v923
        %v1085 = vmul.f32 %v833, %v928
        %v1086 = vmul.f32 %v834, %v933
        %v1087 = vmul.f32 %v835, %v938
        %v1088 = vmul.f32 %v836, %v943
        %v1089 = vmul.f32 %v837, %v948
        %v1090 = vmul.f32 %v838, %v953
        %v1091 = vmul.f32 %v839, %v958
        %v1092 = vmul.f32 %v840, %v963
        %v1093 = vmul.f32 %v841, %v968
        %v1094 = vmul.f32 %v842, %v973
        %v1095 = vmul.f32 %v843, %v978
        %v1096 = vmul.f32 %v844, %v983
        %v1097 = vmul.f32 %v845, %v988
        %v1098 = vmul.f32 %v846, %v993
        %v1099 = vmul.f32 %v847, %v998
        %v1100 = vmul.f32 %v848, %v1003
        %v1101 = vmul.f32 %v849, %v1008
        %v1102 = vmul.f32 %v850, %v1013
        %v1103 = vmul.f32 %v851, %v1018
        %v1104 = vmul.f32 %v852, %v1023
        %v1105 = vmul.f32 %v853, %v1028
        %v1106 = vmul.f32 %v854, %v1033
        %v1107 = vmul.f32 %v855, %v1038
        %v1108 = vmul.f32 %v856, %v1043
        %v1109 = vmul.f32 %v857, %v1048
        %v1110 = vmul.f32 %v858, %v1053
        %v1111 = vmul.f32 %v859, %v1058
        %v1112 = vmul.f32 %v860, %v1063
        %v1113 = vmul.f32 %v861, %v1068
        %v1114 = vmul.f32 %v862, %v1073
        %v1115 = vmul.f32 %v863, %v1078
        %1116 = vst [vmem:[#allocation2 + $0x8] sm:$0xff] %v1080
        %1117 = vst [vmem:[#allocation2 + $0x50] sm:$0xff] %v1081
        %1118 = vst [vmem:[#allocation2 + $0x98] sm:$0xff] %v1082
        %1119 = vst [vmem:[#allocation2 + $0xe0] sm:$0xff] %v1083
        %1120 = vst [vmem:[#allocation2 + $0x128] sm:$0xff] %v1084
        %1121 = vst [vmem:[#allocation2 + $0x170] sm:$0xff] %v1085
        %1122 = vst [vmem:[#allocation2 + $0x1b8] sm:$0xff] %v1086
        %1123 = vst [vmem:[#allocation2 + $0x200] sm:$0xff] %v1087
        %1124 = vst [vmem:[#allocation2 + $0x248] sm:$0xff] %v1088
        %1125 = vst [vmem:[#allocation2 + $0x290] sm:$0xff] %v1089
        %1126 = vst [vmem:[#allocation2 + $0x2d8] sm:$0xff] %v1090
        %1127 = vst [vmem:[#allocation2 + $0x320] sm:$0xff] %v1091
        %1128 = vst [vmem:[#allocation2 + $0x368] sm:$0xff] %v1092
        %1129 = vst [vmem:[#allocation2 + $0x3b0] sm:$0xff] %v1093
        %1130 = vst [vmem:[#allocation2 + $0x3f8] sm:$0xff] %v1094
        %1131 = vst [vmem:[#allocation2 + $0x440] sm:$0xff] %v1095
        %1132 = vst [vmem:[#allocation2 + $0x488] sm:$0xff] %v1096
        %1133 = vst [vmem:[#allocation2 + $0x4d0] sm:$0xff] %v1097
        %1134 = vst [vmem:[#allocation2 + $0x518] sm:$0xff] %v1098
        %1135 = vst [vmem:[#allocation2 + $0x560] sm:$0xff] %v1099
        %1136 = vst [vmem:[#allocation2 + $0x5a8] sm:$0xff] %v1100
        %1137 = vst [vmem:[#allocation2 + $0x5f0] sm:$0xff] %v1101
        %1138 = vst [vmem:[#allocation2 + $0x638] sm:$0xff] %v1102
        %1139 = vst [vmem:[#allocation2 + $0x680] sm:$0xff] %v1103
        %1140 = vst [vmem:[#allocation2 + $0x6c8] sm:$0xff] %v1104
        %1141 = vst [vmem:[#allocation2 + $0x710] sm:$0xff] %v1105
        %1142 = vst [vmem:[#allocation2 + $0x758] sm:$0xff] %v1106
        %1143 = vst [vmem:[#allocation2 + $0x7a0] sm:$0xff] %v1107
        %1144 = vst [vmem:[#allocation2 + $0x7e8] sm:$0xff] %v1108
        %1145 = vst [vmem:[#allocation2 + $0x830] sm:$0xff] %v1109
        %1146 = vst [vmem:[#allocation2 + $0x878] sm:$0xff] %v1110
        %1147 = vst [vmem:[#allocation2 + $0x8c0] sm:$0xff] %v1111
        %1148 = vst [vmem:[#allocation2 + $0x908] sm:$0xff] %v1112
        %1149 = vst [vmem:[#allocation2 + $0x950] sm:$0xff] %v1113
        %1150 = vst [vmem:[#allocation2 + $0x998] sm:$0xff] %v1114
        %1151 = vst [vmem:[#allocation2 + $0x9e0] sm:$0x3f] %v1115
        %v1152 = vld [vmem:[%s270 + $0x2] sm:$0xff]
        %v1153 = vld [vmem:[%s270 + $0xa] sm:$0xff]
        %v1154 = vld [vmem:[%s270 + $0x12] sm:$0xff]
        %v1155 = vld [vmem:[%s270 + $0x1a] sm:$0xff]
        %v1156 = vld [vmem:[%s270 + $0x22] sm:$0xff]
        %v1157 = vld [vmem:[%s270 + $0x2a] sm:$0xff]
        %v1158 = vld [vmem:[%s270 + $0x32] sm:$0xff]
        %v1159 = vld [vmem:[%s270 + $0x3a] sm:$0xff]
        %v1160 = vld [vmem:[%s270 + $0x42] sm:$0xff]
        %v1161 = vld [vmem:[%s270 + $0x4a] sm:$0xff]
        %v1162 = vld [vmem:[%s270 + $0x52] sm:$0xff]
        %v1163 = vld [vmem:[%s270 + $0x5a] sm:$0xff]
        %v1164 = vld [vmem:[%s270 + $0x62] sm:$0xff]
        %v1165 = vld [vmem:[%s270 + $0x6a] sm:$0xff]
        %v1166 = vld [vmem:[%s270 + $0x72] sm:$0xff]
        %v1167 = vld [vmem:[%s270 + $0x7a] sm:$0xff]
        %v1168 = vld [vmem:[%s270 + $0x82] sm:$0xff]
        %v1169 = vld [vmem:[%s270 + $0x8a] sm:$0xff]
        %v1170 = vld [vmem:[%s270 + $0x92] sm:$0xff]
        %v1171 = vld [vmem:[%s270 + $0x9a] sm:$0xff]
        %v1172 = vld [vmem:[%s270 + $0xa2] sm:$0xff]
        %v1173 = vld [vmem:[%s270 + $0xaa] sm:$0xff]
        %v1174 = vld [vmem:[%s270 + $0xb2] sm:$0xff]
        %v1175 = vld [vmem:[%s270 + $0xba] sm:$0xff]
        %v1176 = vld [vmem:[%s270 + $0xc2] sm:$0xff]
        %v1177 = vld [vmem:[%s270 + $0xca] sm:$0xff]
        %v1178 = vld [vmem:[%s270 + $0xd2] sm:$0xff]
        %v1179 = vld [vmem:[%s270 + $0xda] sm:$0xff]
        %v1180 = vld [vmem:[%s270 + $0xe2] sm:$0xff]
        %v1181 = vld [vmem:[%s270 + $0xea] sm:$0xff]
        %v1182 = vld [vmem:[%s270 + $0xf2] sm:$0xff]
        %v1183 = vld [vmem:[%s270 + $0xfa] sm:$0xff]
        %v1184 = vld [vmem:[%s270 + $0x102] sm:$0xff]
        %v1185 = vld [vmem:[%s270 + $0x10a] sm:$0xff]
        %v1186 = vld [vmem:[%s270 + $0x112] sm:$0xff]
        %v1187 = vld [vmem:[%s270 + $0x11a] sm:$0x3f]
        %v1188 = vmul.f32 %v1152, %v319
        %v1189 = vmul.f32 %v1153, %v319
        %v1190 = vmul.f32 %v1154, %v319
        %v1191 = vmul.f32 %v1155, %v319
        %v1192 = vmul.f32 %v1156, %v319
        %v1193 = vmul.f32 %v1157, %v319
        %v1194 = vmul.f32 %v1158, %v319
        %v1195 = vmul.f32 %v1159, %v319
        %v1196 = vmul.f32 %v1160, %v319
        %v1197 = vmul.f32 %v1161, %v319
        %v1198 = vmul.f32 %v1162, %v319
        %v1199 = vmul.f32 %v1163, %v319
        %v1200 = vmul.f32 %v1164, %v319
        %v1201 = vmul.f32 %v1165, %v319
        %v1202 = vmul.f32 %v1166, %v319
        %v1203 = vmul.f32 %v1167, %v319
        %v1204 = vmul.f32 %v1168, %v319
        %v1205 = vmul.f32 %v1169, %v319
        %v1206 = vmul.f32 %v1170, %v319
        %v1207 = vmul.f32 %v1171, %v319
        %v1208 = vmul.f32 %v1172, %v319
        %v1209 = vmul.f32 %v1173, %v319
        %v1210 = vmul.f32 %v1174, %v319
        %v1211 = vmul.f32 %v1175, %v319
        %v1212 = vmul.f32 %v1176, %v319
        %v1213 = vmul.f32 %v1177, %v319
        %v1214 = vmul.f32 %v1178, %v319
        %v1215 = vmul.f32 %v1179, %v319
        %v1216 = vmul.f32 %v1180, %v319
        %v1217 = vmul.f32 %v1181, %v319
        %v1218 = vmul.f32 %v1182, %v319
        %v1219 = vmul.f32 %v1183, %v319
        %v1220 = vmul.f32 %v1184, %v319
        %v1221 = vmul.f32 %v1185, %v319
        %v1222 = vmul.f32 %v1186, %v319
        %v1223 = vmul.f32 %v1187, %v319
        %v1224 = vadd.f32 %v1188, %v358
        %v1225 = vadd.f32 %v1189, %v358
        %v1226 = vadd.f32 %v1190, %v358
        %v1227 = vadd.f32 %v1191, %v358
        %v1228 = vadd.f32 %v1192, %v358
        %v1229 = vadd.f32 %v1193, %v358
        %v1230 = vadd.f32 %v1194, %v358
        %v1231 = vadd.f32 %v1195, %v358
        %v1232 = vadd.f32 %v1196, %v358
        %v1233 = vadd.f32 %v1197, %v358
        %v1234 = vadd.f32 %v1198, %v358
        %v1235 = vadd.f32 %v1199, %v358
        %v1236 = vadd.f32 %v1200, %v358
        %v1237 = vadd.f32 %v1201, %v358
        %v1238 = vadd.f32 %v1202, %v358
        %v1239 = vadd.f32 %v1203, %v358
        %v1240 = vadd.f32 %v1204, %v358
        %v1241 = vadd.f32 %v1205, %v358
        %v1242 = vadd.f32 %v1206, %v358
        %v1243 = vadd.f32 %v1207, %v358
        %v1244 = vadd.f32 %v1208, %v358
        %v1245 = vadd.f32 %v1209, %v358
        %v1246 = vadd.f32 %v1210, %v358
        %v1247 = vadd.f32 %v1211, %v358
        %v1248 = vadd.f32 %v1212, %v358
        %v1249 = vadd.f32 %v1213, %v358
        %v1250 = vadd.f32 %v1214, %v358
        %v1251 = vadd.f32 %v1215, %v358
        %v1252 = vadd.f32 %v1216, %v358
        %v1253 = vadd.f32 %v1217, %v358
        %v1254 = vadd.f32 %v1218, %v358
        %v1255 = vadd.f32 %v1219, %v358
        %v1256 = vadd.f32 %v1220, %v358
        %v1257 = vadd.f32 %v1221, %v358
        %v1258 = vadd.f32 %v1222, %v358
        %v1259 = vadd.f32 %v1223, %v358
        %v1260 = vmax.f32 %v1224, 0.0
        %v1261 = vmax.f32 %v1225, 0.0
        %v1262 = vmax.f32 %v1226, 0.0
        %v1263 = vmax.f32 %v1227, 0.0
        %v1264 = vmax.f32 %v1228, 0.0
        %v1265 = vmax.f32 %v1229, 0.0
        %v1266 = vmax.f32 %v1230, 0.0
        %v1267 = vmax.f32 %v1231, 0.0
        %v1268 = vmax.f32 %v1232, 0.0
        %v1269 = vmax.f32 %v1233, 0.0
        %v1270 = vmax.f32 %v1234, 0.0
        %v1271 = vmax.f32 %v1235, 0.0
        %v1272 = vmax.f32 %v1236, 0.0
        %v1273 = vmax.f32 %v1237, 0.0
        %v1274 = vmax.f32 %v1238, 0.0
        %v1275 = vmax.f32 %v1239, 0.0
        %v1276 = vmax.f32 %v1240, 0.0
        %v1277 = vmax.f32 %v1241, 0.0
        %v1278 = vmax.f32 %v1242, 0.0
        %v1279 = vmax.f32 %v1243, 0.0
        %v1280 = vmax.f32 %v1244, 0.0
        %v1281 = vmax.f32 %v1245, 0.0
        %v1282 = vmax.f32 %v1246, 0.0
        %v1283 = vmax.f32 %v1247, 0.0
        %v1284 = vmax.f32 %v1248, 0.0
        %v1285 = vmax.f32 %v1249, 0.0
        %v1286 = vmax.f32 %v1250, 0.0
        %v1287 = vmax.f32 %v1251, 0.0
        %v1288 = vmax.f32 %v1252, 0.0
        %v1289 = vmax.f32 %v1253, 0.0
        %v1290 = vmax.f32 %v1254, 0.0
        %v1291 = vmax.f32 %v1255, 0.0
        %v1292 = vmax.f32 %v1256, 0.0
        %v1293 = vmax.f32 %v1257, 0.0
        %v1294 = vmax.f32 %v1258, 0.0
        %v1295 = vmax.f32 %v1259, 0.0
        %v1296 = vld [vmem:[%s4 + $0x2] sm:$0xff]
        %v1297 = vld [vmem:[%s4 + $0xa] sm:$0xff]
        %v1298 = vld [vmem:[%s4 + $0x12] sm:$0xff]
        %v1299 = vld [vmem:[%s4 + $0x1a] sm:$0xff]
        %v1300 = vld [vmem:[%s4 + $0x22] sm:$0xff]
        %v1301 = vld [vmem:[%s4 + $0x2a] sm:$0xff]
        %v1302 = vld [vmem:[%s4 + $0x32] sm:$0xff]
        %v1303 = vld [vmem:[%s4 + $0x3a] sm:$0xff]
        %v1304 = vld [vmem:[%s4 + $0x42] sm:$0xff]
        %v1305 = vld [vmem:[%s4 + $0x4a] sm:$0xff]
        %v1306 = vld [vmem:[%s4 + $0x52] sm:$0xff]
        %v1307 = vld [vmem:[%s4 + $0x5a] sm:$0xff]
        %v1308 = vld [vmem:[%s4 + $0x62] sm:$0xff]
        %v1309 = vld [vmem:[%s4 + $0x6a] sm:$0xff]
        %v1310 = vld [vmem:[%s4 + $0x72] sm:$0xff]
        %v1311 = vld [vmem:[%s4 + $0x7a] sm:$0xff]
        %v1312 = vld [vmem:[%s4 + $0x82] sm:$0xff]
        %v1313 = vld [vmem:[%s4 + $0x8a] sm:$0xff]
        %v1314 = vld [vmem:[%s4 + $0x92] sm:$0xff]
        %v1315 = vld [vmem:[%s4 + $0x9a] sm:$0xff]
        %v1316 = vld [vmem:[%s4 + $0xa2] sm:$0xff]
        %v1317 = vld [vmem:[%s4 + $0xaa] sm:$0xff]
        %v1318 = vld [vmem:[%s4 + $0xb2] sm:$0xff]
        %v1319 = vld [vmem:[%s4 + $0xba] sm:$0xff]
        %v1320 = vld [vmem:[%s4 + $0xc2] sm:$0xff]
        %v1321 = vld [vmem:[%s4 + $0xca] sm:$0xff]
        %v1322 = vld [vmem:[%s4 + $0xd2] sm:$0xff]
        %v1323 = vld [vmem:[%s4 + $0xda] sm:$0xff]
        %v1324 = vld [vmem:[%s4 + $0xe2] sm:$0xff]
        %v1325 = vld [vmem:[%s4 + $0xea] sm:$0xff]
        %v1326 = vld [vmem:[%s4 + $0xf2] sm:$0xff]
        %v1327 = vld [vmem:[%s4 + $0xfa] sm:$0xff]
        %v1328 = vld [vmem:[%s4 + $0x102] sm:$0xff]
        %v1329 = vld [vmem:[%s4 + $0x10a] sm:$0xff]
        %v1330 = vld [vmem:[%s4 + $0x112] sm:$0xff]
        %v1331 = vld [vmem:[%s4 + $0x11a] sm:$0x3f]
        %1333 = vset.pattern.permute.xlu0 0
        %1334 = vperm.xlu0 %1333, %v1296
        %v1335 = vpop.permute.xlu0 %1334
        %1338 = vset.pattern.permute.xlu0 0
        %1339 = vperm.xlu0 %1338, %v1297
        %v1340 = vpop.permute.xlu0 %1339
        %1343 = vset.pattern.permute.xlu0 0
        %1344 = vperm.xlu0 %1343, %v1298
        %v1345 = vpop.permute.xlu0 %1344
        %1348 = vset.pattern.permute.xlu0 0
        %1349 = vperm.xlu0 %1348, %v1299
        %v1350 = vpop.permute.xlu0 %1349
        %1353 = vset.pattern.permute.xlu0 0
        %1354 = vperm.xlu0 %1353, %v1300
        %v1355 = vpop.permute.xlu0 %1354
        %1358 = vset.pattern.permute.xlu0 0
        %1359 = vperm.xlu0 %1358, %v1301
        %v1360 = vpop.permute.xlu0 %1359
        %1363 = vset.pattern.permute.xlu0 0
        %1364 = vperm.xlu0 %1363, %v1302
        %v1365 = vpop.permute.xlu0 %1364
        %1368 = vset.pattern.permute.xlu0 0
        %1369 = vperm.xlu0 %1368, %v1303
        %v1370 = vpop.permute.xlu0 %1369
        %1373 = vset.pattern.permute.xlu0 0
        %1374 = vperm.xlu0 %1373, %v1304
        %v1375 = vpop.permute.xlu0 %1374
        %1378 = vset.pattern.permute.xlu0 0
        %1379 = vperm.xlu0 %1378, %v1305
        %v1380 = vpop.permute.xlu0 %1379
        %1383 = vset.pattern.permute.xlu0 0
        %1384 = vperm.xlu0 %1383, %v1306
        %v1385 = vpop.permute.xlu0 %1384
        %1388 = vset.pattern.permute.xlu0 0
        %1389 = vperm.xlu0 %1388, %v1307
        %v1390 = vpop.permute.xlu0 %1389
        %1393 = vset.pattern.permute.xlu0 0
        %1394 = vperm.xlu0 %1393, %v1308
        %v1395 = vpop.permute.xlu0 %1394
        %1398 = vset.pattern.permute.xlu0 0
        %1399 = vperm.xlu0 %1398, %v1309
        %v1400 = vpop.permute.xlu0 %1399
        %1403 = vset.pattern.permute.xlu0 0
        %1404 = vperm.xlu0 %1403, %v1310
        %v1405 = vpop.permute.xlu0 %1404
        %1408 = vset.pattern.permute.xlu0 0
        %1409 = vperm.xlu0 %1408, %v1311
        %v1410 = vpop.permute.xlu0 %1409
        %1413 = vset.pattern.permute.xlu0 0
        %1414 = vperm.xlu0 %1413, %v1312
        %v1415 = vpop.permute.xlu0 %1414
        %1418 = vset.pattern.permute.xlu0 0
        %1419 = vperm.xlu0 %1418, %v1313
        %v1420 = vpop.permute.xlu0 %1419
        %1423 = vset.pattern.permute.xlu0 0
        %1424 = vperm.xlu0 %1423, %v1314
        %v1425 = vpop.permute.xlu0 %1424
        %1428 = vset.pattern.permute.xlu0 0
        %1429 = vperm.xlu0 %1428, %v1315
        %v1430 = vpop.permute.xlu0 %1429
        %1433 = vset.pattern.permute.xlu0 0
        %1434 = vperm.xlu0 %1433, %v1316
        %v1435 = vpop.permute.xlu0 %1434
        %1438 = vset.pattern.permute.xlu0 0
        %1439 = vperm.xlu0 %1438, %v1317
        %v1440 = vpop.permute.xlu0 %1439
        %1443 = vset.pattern.permute.xlu0 0
        %1444 = vperm.xlu0 %1443, %v1318
        %v1445 = vpop.permute.xlu0 %1444
        %1448 = vset.pattern.permute.xlu0 0
        %1449 = vperm.xlu0 %1448, %v1319
        %v1450 = vpop.permute.xlu0 %1449
        %1453 = vset.pattern.permute.xlu0 0
        %1454 = vperm.xlu0 %1453, %v1320
        %v1455 = vpop.permute.xlu0 %1454
        %1458 = vset.pattern.permute.xlu0 0
        %1459 = vperm.xlu0 %1458, %v1321
        %v1460 = vpop.permute.xlu0 %1459
        %1463 = vset.pattern.permute.xlu0 0
        %1464 = vperm.xlu0 %1463, %v1322
        %v1465 = vpop.permute.xlu0 %1464
        %1468 = vset.pattern.permute.xlu0 0
        %1469 = vperm.xlu0 %1468, %v1323
        %v1470 = vpop.permute.xlu0 %1469
        %1473 = vset.pattern.permute.xlu0 0
        %1474 = vperm.xlu0 %1473, %v1324
        %v1475 = vpop.permute.xlu0 %1474
        %1478 = vset.pattern.permute.xlu0 0
        %1479 = vperm.xlu0 %1478, %v1325
        %v1480 = vpop.permute.xlu0 %1479
        %1483 = vset.pattern.permute.xlu0 0
        %1484 = vperm.xlu0 %1483, %v1326
        %v1485 = vpop.permute.xlu0 %1484
        %1488 = vset.pattern.permute.xlu0 0
        %1489 = vperm.xlu0 %1488, %v1327
        %v1490 = vpop.permute.xlu0 %1489
        %1493 = vset.pattern.permute.xlu0 0
        %1494 = vperm.xlu0 %1493, %v1328
        %v1495 = vpop.permute.xlu0 %1494
        %1498 = vset.pattern.permute.xlu0 0
        %1499 = vperm.xlu0 %1498, %v1329
        %v1500 = vpop.permute.xlu0 %1499
        %1503 = vset.pattern.permute.xlu0 0
        %1504 = vperm.xlu0 %1503, %v1330
        %v1505 = vpop.permute.xlu0 %1504
        %1508 = vset.pattern.permute.xlu0 0
        %1509 = vperm.xlu0 %1508, %v1331
        %v1510 = vpop.permute.xlu0 %1509
        %v1512 = vmul.f32 %v1260, %v1335
        %v1513 = vmul.f32 %v1261, %v1340
        %v1514 = vmul.f32 %v1262, %v1345
        %v1515 = vmul.f32 %v1263, %v1350
        %v1516 = vmul.f32 %v1264, %v1355
        %v1517 = vmul.f32 %v1265, %v1360
        %v1518 = vmul.f32 %v1266, %v1365
        %v1519 = vmul.f32 %v1267, %v1370
        %v1520 = vmul.f32 %v1268, %v1375
        %v1521 = vmul.f32 %v1269, %v1380
        %v1522 = vmul.f32 %v1270, %v1385
        %v1523 = vmul.f32 %v1271, %v1390
        %v1524 = vmul.f32 %v1272, %v1395
        %v1525 = vmul.f32 %v1273, %v1400
        %v1526 = vmul.f32 %v1274, %v1405
        %v1527 = vmul.f32 %v1275, %v1410
        %v1528 = vmul.f32 %v1276, %v1415
        %v1529 = vmul.f32 %v1277, %v1420
        %v1530 = vmul.f32 %v1278, %v1425
        %v1531 = vmul.f32 %v1279, %v1430
        %v1532 = vmul.f32 %v1280, %v1435
        %v1533 = vmul.f32 %v1281, %v1440
        %v1534 = vmul.f32 %v1282, %v1445
        %v1535 = vmul.f32 %v1283, %v1450
        %v1536 = vmul.f32 %v1284, %v1455
        %v1537 = vmul.f32 %v1285, %v1460
        %v1538 = vmul.f32 %v1286, %v1465
        %v1539 = vmul.f32 %v1287, %v1470
        %v1540 = vmul.f32 %v1288, %v1475
        %v1541 = vmul.f32 %v1289, %v1480
        %v1542 = vmul.f32 %v1290, %v1485
        %v1543 = vmul.f32 %v1291, %v1490
        %v1544 = vmul.f32 %v1292, %v1495
        %v1545 = vmul.f32 %v1293, %v1500
        %v1546 = vmul.f32 %v1294, %v1505
        %v1547 = vmul.f32 %v1295, %v1510
        %1548 = vst [vmem:[#allocation2 + $0x10] sm:$0xff] %v1512
        %1549 = vst [vmem:[#allocation2 + $0x58] sm:$0xff] %v1513
        %1550 = vst [vmem:[#allocation2 + $0xa0] sm:$0xff] %v1514
        %1551 = vst [vmem:[#allocation2 + $0xe8] sm:$0xff] %v1515
        %1552 = vst [vmem:[#allocation2 + $0x130] sm:$0xff] %v1516
        %1553 = vst [vmem:[#allocation2 + $0x178] sm:$0xff] %v1517
        %1554 = vst [vmem:[#allocation2 + $0x1c0] sm:$0xff] %v1518
        %1555 = vst [vmem:[#allocation2 + $0x208] sm:$0xff] %v1519
        %1556 = vst [vmem:[#allocation2 + $0x250] sm:$0xff] %v1520
        %1557 = vst [vmem:[#allocation2 + $0x298] sm:$0xff] %v1521
        %1558 = vst [vmem:[#allocation2 + $0x2e0] sm:$0xff] %v1522
        %1559 = vst [vmem:[#allocation2 + $0x328] sm:$0xff] %v1523
        %1560 = vst [vmem:[#allocation2 + $0x370] sm:$0xff] %v1524
        %1561 = vst [vmem:[#allocation2 + $0x3b8] sm:$0xff] %v1525
        %1562 = vst [vmem:[#allocation2 + $0x400] sm:$0xff] %v1526
        %1563 = vst [vmem:[#allocation2 + $0x448] sm:$0xff] %v1527
        %1564 = vst [vmem:[#allocation2 + $0x490] sm:$0xff] %v1528
        %1565 = vst [vmem:[#allocation2 + $0x4d8] sm:$0xff] %v1529
        %1566 = vst [vmem:[#allocation2 + $0x520] sm:$0xff] %v1530
        %1567 = vst [vmem:[#allocation2 + $0x568] sm:$0xff] %v1531
        %1568 = vst [vmem:[#allocation2 + $0x5b0] sm:$0xff] %v1532
        %1569 = vst [vmem:[#allocation2 + $0x5f8] sm:$0xff] %v1533
        %1570 = vst [vmem:[#allocation2 + $0x640] sm:$0xff] %v1534
        %1571 = vst [vmem:[#allocation2 + $0x688] sm:$0xff] %v1535
        %1572 = vst [vmem:[#allocation2 + $0x6d0] sm:$0xff] %v1536
        %1573 = vst [vmem:[#allocation2 + $0x718] sm:$0xff] %v1537
        %1574 = vst [vmem:[#allocation2 + $0x760] sm:$0xff] %v1538
        %1575 = vst [vmem:[#allocation2 + $0x7a8] sm:$0xff] %v1539
        %1576 = vst [vmem:[#allocation2 + $0x7f0] sm:$0xff] %v1540
        %1577 = vst [vmem:[#allocation2 + $0x838] sm:$0xff] %v1541
        %1578 = vst [vmem:[#allocation2 + $0x880] sm:$0xff] %v1542
        %1579 = vst [vmem:[#allocation2 + $0x8c8] sm:$0xff] %v1543
        %1580 = vst [vmem:[#allocation2 + $0x910] sm:$0xff] %v1544
        %1581 = vst [vmem:[#allocation2 + $0x958] sm:$0xff] %v1545
        %1582 = vst [vmem:[#allocation2 + $0x9a0] sm:$0xff] %v1546
        %1583 = vst [vmem:[#allocation2 + $0x9e8] sm:$0x3f] %v1547
        %v1584 = vld [vmem:[%s270 + $0x12] sm:$0xff]
        %v1585 = vld [vmem:[%s270 + $0x1a] sm:$0xff]
        %v1586 = vld [vmem:[%s270 + $0x22] sm:$0xff]
        %v1587 = vld [vmem:[%s270 + $0x2a] sm:$0xff]
        %v1588 = vld [vmem:[%s270 + $0x32] sm:$0xff]
        %v1589 = vld [vmem:[%s270 + $0x3a] sm:$0xff]
        %v1590 = vld [vmem:[%s270 + $0x42] sm:$0xff]
        %v1591 = vld [vmem:[%s270 + $0x4a] sm:$0xff]
        %v1592 = vld [vmem:[%s270 + $0x52] sm:$0xff]
        %v1593 = vld [vmem:[%s270 + $0x5a] sm:$0xff]
        %v1594 = vld [vmem:[%s270 + $0x62] sm:$0xff]
        %v1595 = vld [vmem:[%s270 + $0x6a] sm:$0xff]
        %v1596 = vld [vmem:[%s270 + $0x72] sm:$0xff]
        %v1597 = vld [vmem:[%s270 + $0x7a] sm:$0xff]
        %v1598 = vld [vmem:[%s270 + $0x82] sm:$0xff]
        %v1599 = vld [vmem:[%s270 + $0x8a] sm:$0xff]
        %v1600 = vld [vmem:[%s270 + $0x92] sm:$0xff]
        %v1601 = vld [vmem:[%s270 + $0x9a] sm:$0xff]
        %v1602 = vld [vmem:[%s270 + $0xa2] sm:$0xff]
        %v1603 = vld [vmem:[%s270 + $0xaa] sm:$0xff]
        %v1604 = vld [vmem:[%s270 + $0xb2] sm:$0xff]
        %v1605 = vld [vmem:[%s270 + $0xba] sm:$0xff]
        %v1606 = vld [vmem:[%s270 + $0xc2] sm:$0xff]
        %v1607 = vld [vmem:[%s270 + $0xca] sm:$0xff]
        %v1608 = vld [vmem:[%s270 + $0xd2] sm:$0xff]
        %v1609 = vld [vmem:[%s270 + $0xda] sm:$0xff]
        %v1610 = vld [vmem:[%s270 + $0xe2] sm:$0xff]
        %v1611 = vld [vmem:[%s270 + $0xea] sm:$0xff]
        %v1612 = vld [vmem:[%s270 + $0xf2] sm:$0xff]
        %v1613 = vld [vmem:[%s270 + $0xfa] sm:$0xff]
        %v1614 = vld [vmem:[%s270 + $0x102] sm:$0xff]
        %v1615 = vld [vmem:[%s270 + $0x10a] sm:$0xff]
        %v1616 = vld [vmem:[%s270 + $0x112] sm:$0xff]
        %v1617 = vld [vmem:[%s270 + $0x11a] sm:$0xff]
        %v1618 = vld [vmem:[%s270 + $0x122] sm:$0xff]
        %v1619 = vld [vmem:[%s270 + $0x12a] sm:$0x3f]
        %v1620 = vmul.f32 %v1584, %v319
        %v1621 = vmul.f32 %v1585, %v319
        %v1622 = vmul.f32 %v1586, %v319
        %v1623 = vmul.f32 %v1587, %v319
        %v1624 = vmul.f32 %v1588, %v319
        %v1625 = vmul.f32 %v1589, %v319
        %v1626 = vmul.f32 %v1590, %v319
        %v1627 = vmul.f32 %v1591, %v319
        %v1628 = vmul.f32 %v1592, %v319
        %v1629 = vmul.f32 %v1593, %v319
        %v1630 = vmul.f32 %v1594, %v319
        %v1631 = vmul.f32 %v1595, %v319
        %v1632 = vmul.f32 %v1596, %v319
        %v1633 = vmul.f32 %v1597, %v319
        %v1634 = vmul.f32 %v1598, %v319
        %v1635 = vmul.f32 %v1599, %v319
        %v1636 = vmul.f32 %v1600, %v319
        %v1637 = vmul.f32 %v1601, %v319
        %v1638 = vmul.f32 %v1602, %v319
        %v1639 = vmul.f32 %v1603, %v319
        %v1640 = vmul.f32 %v1604, %v319
        %v1641 = vmul.f32 %v1605, %v319
        %v1642 = vmul.f32 %v1606, %v319
        %v1643 = vmul.f32 %v1607, %v319
        %v1644 = vmul.f32 %v1608, %v319
        %v1645 = vmul.f32 %v1609, %v319
        %v1646 = vmul.f32 %v1610, %v319
        %v1647 = vmul.f32 %v1611, %v319
        %v1648 = vmul.f32 %v1612, %v319
        %v1649 = vmul.f32 %v1613, %v319
        %v1650 = vmul.f32 %v1614, %v319
        %v1651 = vmul.f32 %v1615, %v319
        %v1652 = vmul.f32 %v1616, %v319
        %v1653 = vmul.f32 %v1617, %v319
        %v1654 = vmul.f32 %v1618, %v319
        %v1655 = vmul.f32 %v1619, %v319
        %v1656 = vadd.f32 %v1620, %v358
        %v1657 = vadd.f32 %v1621, %v358
        %v1658 = vadd.f32 %v1622, %v358
        %v1659 = vadd.f32 %v1623, %v358
        %v1660 = vadd.f32 %v1624, %v358
        %v1661 = vadd.f32 %v1625, %v358
        %v1662 = vadd.f32 %v1626, %v358
        %v1663 = vadd.f32 %v1627, %v358
        %v1664 = vadd.f32 %v1628, %v358
        %v1665 = vadd.f32 %v1629, %v358
        %v1666 = vadd.f32 %v1630, %v358
        %v1667 = vadd.f32 %v1631, %v358
        %v1668 = vadd.f32 %v1632, %v358
        %v1669 = vadd.f32 %v1633, %v358
        %v1670 = vadd.f32 %v1634, %v358
        %v1671 = vadd.f32 %v1635, %v358
        %v1672 = vadd.f32 %v1636, %v358
        %v1673 = vadd.f32 %v1637, %v358
        %v1674 = vadd.f32 %v1638, %v358
        %v1675 = vadd.f32 %v1639, %v358
        %v1676 = vadd.f32 %v1640, %v358
        %v1677 = vadd.f32 %v1641, %v358
        %v1678 = vadd.f32 %v1642, %v358
        %v1679 = vadd.f32 %v1643, %v358
        %v1680 = vadd.f32 %v1644, %v358
        %v1681 = vadd.f32 %v1645, %v358
        %v1682 = vadd.f32 %v1646, %v358
        %v1683 = vadd.f32 %v1647, %v358
        %v1684 = vadd.f32 %v1648, %v358
        %v1685 = vadd.f32 %v1649, %v358
        %v1686 = vadd.f32 %v1650, %v358
        %v1687 = vadd.f32 %v1651, %v358
        %v1688 = vadd.f32 %v1652, %v358
        %v1689 = vadd.f32 %v1653, %v358
        %v1690 = vadd.f32 %v1654, %v358
        %v1691 = vadd.f32 %v1655, %v358
        %v1692 = vmax.f32 %v1656, 0.0
        %v1693 = vmax.f32 %v1657, 0.0
        %v1694 = vmax.f32 %v1658, 0.0
        %v1695 = vmax.f32 %v1659, 0.0
        %v1696 = vmax.f32 %v1660, 0.0
        %v1697 = vmax.f32 %v1661, 0.0
        %v1698 = vmax.f32 %v1662, 0.0
        %v1699 = vmax.f32 %v1663, 0.0
        %v1700 = vmax.f32 %v1664, 0.0
        %v1701 = vmax.f32 %v1665, 0.0
        %v1702 = vmax.f32 %v1666, 0.0
        %v1703 = vmax.f32 %v1667, 0.0
        %v1704 = vmax.f32 %v1668, 0.0
        %v1705 = vmax.f32 %v1669, 0.0
        %v1706 = vmax.f32 %v1670, 0.0
        %v1707 = vmax.f32 %v1671, 0.0
        %v1708 = vmax.f32 %v1672, 0.0
        %v1709 = vmax.f32 %v1673, 0.0
        %v1710 = vmax.f32 %v1674, 0.0
        %v1711 = vmax.f32 %v1675, 0.0
        %v1712 = vmax.f32 %v1676, 0.0
        %v1713 = vmax.f32 %v1677, 0.0
        %v1714 = vmax.f32 %v1678, 0.0
        %v1715 = vmax.f32 %v1679, 0.0
        %v1716 = vmax.f32 %v1680, 0.0
        %v1717 = vmax.f32 %v1681, 0.0
        %v1718 = vmax.f32 %v1682, 0.0
        %v1719 = vmax.f32 %v1683, 0.0
        %v1720 = vmax.f32 %v1684, 0.0
        %v1721 = vmax.f32 %v1685, 0.0
        %v1722 = vmax.f32 %v1686, 0.0
        %v1723 = vmax.f32 %v1687, 0.0
        %v1724 = vmax.f32 %v1688, 0.0
        %v1725 = vmax.f32 %v1689, 0.0
        %v1726 = vmax.f32 %v1690, 0.0
        %v1727 = vmax.f32 %v1691, 0.0
        %v1728 = vld [vmem:[%s4 + $0x12] sm:$0xff]
        %v1729 = vld [vmem:[%s4 + $0x1a] sm:$0xff]
        %v1730 = vld [vmem:[%s4 + $0x22] sm:$0xff]
        %v1731 = vld [vmem:[%s4 + $0x2a] sm:$0xff]
        %v1732 = vld [vmem:[%s4 + $0x32] sm:$0xff]
        %v1733 = vld [vmem:[%s4 + $0x3a] sm:$0xff]
        %v1734 = vld [vmem:[%s4 + $0x42] sm:$0xff]
        %v1735 = vld [vmem:[%s4 + $0x4a] sm:$0xff]
        %v1736 = vld [vmem:[%s4 + $0x52] sm:$0xff]
        %v1737 = vld [vmem:[%s4 + $0x5a] sm:$0xff]
        %v1738 = vld [vmem:[%s4 + $0x62] sm:$0xff]
        %v1739 = vld [vmem:[%s4 + $0x6a] sm:$0xff]
        %v1740 = vld [vmem:[%s4 + $0x72] sm:$0xff]
        %v1741 = vld [vmem:[%s4 + $0x7a] sm:$0xff]
        %v1742 = vld [vmem:[%s4 + $0x82] sm:$0xff]
        %v1743 = vld [vmem:[%s4 + $0x8a] sm:$0xff]
        %v1744 = vld [vmem:[%s4 + $0x92] sm:$0xff]
        %v1745 = vld [vmem:[%s4 + $0x9a] sm:$0xff]
        %v1746 = vld [vmem:[%s4 + $0xa2] sm:$0xff]
        %v1747 = vld [vmem:[%s4 + $0xaa] sm:$0xff]
        %v1748 = vld [vmem:[%s4 + $0xb2] sm:$0xff]
        %v1749 = vld [vmem:[%s4 + $0xba] sm:$0xff]
        %v1750 = vld [vmem:[%s4 + $0xc2] sm:$0xff]
        %v1751 = vld [vmem:[%s4 + $0xca] sm:$0xff]
        %v1752 = vld [vmem:[%s4 + $0xd2] sm:$0xff]
        %v1753 = vld [vmem:[%s4 + $0xda] sm:$0xff]
        %v1754 = vld [vmem:[%s4 + $0xe2] sm:$0xff]
        %v1755 = vld [vmem:[%s4 + $0xea] sm:$0xff]
        %v1756 = vld [vmem:[%s4 + $0xf2] sm:$0xff]
        %v1757 = vld [vmem:[%s4 + $0xfa] sm:$0xff]
        %v1758 = vld [vmem:[%s4 + $0x102] sm:$0xff]
        %v1759 = vld [vmem:[%s4 + $0x10a] sm:$0xff]
        %v1760 = vld [vmem:[%s4 + $0x112] sm:$0xff]
        %v1761 = vld [vmem:[%s4 + $0x11a] sm:$0xff]
        %v1762 = vld [vmem:[%s4 + $0x122] sm:$0xff]
        %v1763 = vld [vmem:[%s4 + $0x12a] sm:$0x3f]
        %1765 = vset.pattern.permute.xlu0 0
        %1766 = vperm.xlu0 %1765, %v1728
        %v1767 = vpop.permute.xlu0 %1766
        %1770 = vset.pattern.permute.xlu0 0
        %1771 = vperm.xlu0 %1770, %v1729
        %v1772 = vpop.permute.xlu0 %1771
        %1775 = vset.pattern.permute.xlu0 0
        %1776 = vperm.xlu0 %1775, %v1730
        %v1777 = vpop.permute.xlu0 %1776
        %1780 = vset.pattern.permute.xlu0 0
        %1781 = vperm.xlu0 %1780, %v1731
        %v1782 = vpop.permute.xlu0 %1781
        %1785 = vset.pattern.permute.xlu0 0
        %1786 = vperm.xlu0 %1785, %v1732
        %v1787 = vpop.permute.xlu0 %1786
        %1790 = vset.pattern.permute.xlu0 0
        %1791 = vperm.xlu0 %1790, %v1733
        %v1792 = vpop.permute.xlu0 %1791
        %1795 = vset.pattern.permute.xlu0 0
        %1796 = vperm.xlu0 %1795, %v1734
        %v1797 = vpop.permute.xlu0 %1796
        %1800 = vset.pattern.permute.xlu0 0
        %1801 = vperm.xlu0 %1800, %v1735
        %v1802 = vpop.permute.xlu0 %1801
        %1805 = vset.pattern.permute.xlu0 0
        %1806 = vperm.xlu0 %1805, %v1736
        %v1807 = vpop.permute.xlu0 %1806
        %1810 = vset.pattern.permute.xlu0 0
        %1811 = vperm.xlu0 %1810, %v1737
        %v1812 = vpop.permute.xlu0 %1811
        %1815 = vset.pattern.permute.xlu0 0
        %1816 = vperm.xlu0 %1815, %v1738
        %v1817 = vpop.permute.xlu0 %1816
        %1820 = vset.pattern.permute.xlu0 0
        %1821 = vperm.xlu0 %1820, %v1739
        %v1822 = vpop.permute.xlu0 %1821
        %1825 = vset.pattern.permute.xlu0 0
        %1826 = vperm.xlu0 %1825, %v1740
        %v1827 = vpop.permute.xlu0 %1826
        %1830 = vset.pattern.permute.xlu0 0
        %1831 = vperm.xlu0 %1830, %v1741
        %v1832 = vpop.permute.xlu0 %1831
        %1835 = vset.pattern.permute.xlu0 0
        %1836 = vperm.xlu0 %1835, %v1742
        %v1837 = vpop.permute.xlu0 %1836
        %1840 = vset.pattern.permute.xlu0 0
        %1841 = vperm.xlu0 %1840, %v1743
        %v1842 = vpop.permute.xlu0 %1841
        %1845 = vset.pattern.permute.xlu0 0
        %1846 = vperm.xlu0 %1845, %v1744
        %v1847 = vpop.permute.xlu0 %1846
        %1850 = vset.pattern.permute.xlu0 0
        %1851 = vperm.xlu0 %1850, %v1745
        %v1852 = vpop.permute.xlu0 %1851
        %1855 = vset.pattern.permute.xlu0 0
        %1856 = vperm.xlu0 %1855, %v1746
        %v1857 = vpop.permute.xlu0 %1856
        %1860 = vset.pattern.permute.xlu0 0
        %1861 = vperm.xlu0 %1860, %v1747
        %v1862 = vpop.permute.xlu0 %1861
        %1865 = vset.pattern.permute.xlu0 0
        %1866 = vperm.xlu0 %1865, %v1748
        %v1867 = vpop.permute.xlu0 %1866
        %1870 = vset.pattern.permute.xlu0 0
        %1871 = vperm.xlu0 %1870, %v1749
        %v1872 = vpop.permute.xlu0 %1871
        %1875 = vset.pattern.permute.xlu0 0
        %1876 = vperm.xlu0 %1875, %v1750
        %v1877 = vpop.permute.xlu0 %1876
        %1880 = vset.pattern.permute.xlu0 0
        %1881 = vperm.xlu0 %1880, %v1751
        %v1882 = vpop.permute.xlu0 %1881
        %1885 = vset.pattern.permute.xlu0 0
        %1886 = vperm.xlu0 %1885, %v1752
        %v1887 = vpop.permute.xlu0 %1886
        %1890 = vset.pattern.permute.xlu0 0
        %1891 = vperm.xlu0 %1890, %v1753
        %v1892 = vpop.permute.xlu0 %1891
        %1895 = vset.pattern.permute.xlu0 0
        %1896 = vperm.xlu0 %1895, %v1754
        %v1897 = vpop.permute.xlu0 %1896
        %1900 = vset.pattern.permute.xlu0 0
        %1901 = vperm.xlu0 %1900, %v1755
        %v1902 = vpop.permute.xlu0 %1901
        %1905 = vset.pattern.permute.xlu0 0
        %1906 = vperm.xlu0 %1905, %v1756
        %v1907 = vpop.permute.xlu0 %1906
        %1910 = vset.pattern.permute.xlu0 0
        %1911 = vperm.xlu0 %1910, %v1757
        %v1912 = vpop.permute.xlu0 %1911
        %1915 = vset.pattern.permute.xlu0 0
        %1916 = vperm.xlu0 %1915, %v1758
        %v1917 = vpop.permute.xlu0 %1916
        %1920 = vset.pattern.permute.xlu0 0
        %1921 = vperm.xlu0 %1920, %v1759
        %v1922 = vpop.permute.xlu0 %1921
        %1925 = vset.pattern.permute.xlu0 0
        %1926 = vperm.xlu0 %1925, %v1760
        %v1927 = vpop.permute.xlu0 %1926
        %1930 = vset.pattern.permute.xlu0 0
        %1931 = vperm.xlu0 %1930, %v1761
        %v1932 = vpop.permute.xlu0 %1931
        %1935 = vset.pattern.permute.xlu0 0
        %1936 = vperm.xlu0 %1935, %v1762
        %v1937 = vpop.permute.xlu0 %1936
        %1940 = vset.pattern.permute.xlu0 0
        %1941 = vperm.xlu0 %1940, %v1763
        %v1942 = vpop.permute.xlu0 %1941
        %v1944 = vmul.f32 %v1692, %v1767
        %v1945 = vmul.f32 %v1693, %v1772
        %v1946 = vmul.f32 %v1694, %v1777
        %v1947 = vmul.f32 %v1695, %v1782
        %v1948 = vmul.f32 %v1696, %v1787
        %v1949 = vmul.f32 %v1697, %v1792
        %v1950 = vmul.f32 %v1698, %v1797
        %v1951 = vmul.f32 %v1699, %v1802
        %v1952 = vmul.f32 %v1700, %v1807
        %v1953 = vmul.f32 %v1701, %v1812
        %v1954 = vmul.f32 %v1702, %v1817
        %v1955 = vmul.f32 %v1703, %v1822
        %v1956 = vmul.f32 %v1704, %v1827
        %v1957 = vmul.f32 %v1705, %v1832
        %v1958 = vmul.f32 %v1706, %v1837
        %v1959 = vmul.f32 %v1707, %v1842
        %v1960 = vmul.f32 %v1708, %v1847
        %v1961 = vmul.f32 %v1709, %v1852
        %v1962 = vmul.f32 %v1710, %v1857
        %v1963 = vmul.f32 %v1711, %v1862
        %v1964 = vmul.f32 %v1712, %v1867
        %v1965 = vmul.f32 %v1713, %v1872
        %v1966 = vmul.f32 %v1714, %v1877
        %v1967 = vmul.f32 %v1715, %v1882
        %v1968 = vmul.f32 %v1716, %v1887
        %v1969 = vmul.f32 %v1717, %v1892
        %v1970 = vmul.f32 %v1718, %v1897
        %v1971 = vmul.f32 %v1719, %v1902
        %v1972 = vmul.f32 %v1720, %v1907
        %v1973 = vmul.f32 %v1721, %v1912
        %v1974 = vmul.f32 %v1722, %v1917
        %v1975 = vmul.f32 %v1723, %v1922
        %v1976 = vmul.f32 %v1724, %v1927
        %v1977 = vmul.f32 %v1725, %v1932
        %v1978 = vmul.f32 %v1726, %v1937
        %v1979 = vmul.f32 %v1727, %v1942
        %1980 = vst [vmem:[#allocation2 + $0x18] sm:$0xff] %v1944
        %1981 = vst [vmem:[#allocation2 + $0x60] sm:$0xff] %v1945
        %1982 = vst [vmem:[#allocation2 + $0xa8] sm:$0xff] %v1946
        %1983 = vst [vmem:[#allocation2 + $0xf0] sm:$0xff] %v1947
        %1984 = vst [vmem:[#allocation2 + $0x138] sm:$0xff] %v1948
        %1985 = vst [vmem:[#allocation2 + $0x180] sm:$0xff] %v1949
        %1986 = vst [vmem:[#allocation2 + $0x1c8] sm:$0xff] %v1950
        %1987 = vst [vmem:[#allocation2 + $0x210] sm:$0xff] %v1951
        %1988 = vst [vmem:[#allocation2 + $0x258] sm:$0xff] %v1952
        %1989 = vst [vmem:[#allocation2 + $0x2a0] sm:$0xff] %v1953
        %1990 = vst [vmem:[#allocation2 + $0x2e8] sm:$0xff] %v1954
        %1991 = vst [vmem:[#allocation2 + $0x330] sm:$0xff] %v1955
        %1992 = vst [vmem:[#allocation2 + $0x378] sm:$0xff] %v1956
        %1993 = vst [vmem:[#allocation2 + $0x3c0] sm:$0xff] %v1957
        %1994 = vst [vmem:[#allocation2 + $0x408] sm:$0xff] %v1958
        %1995 = vst [vmem:[#allocation2 + $0x450] sm:$0xff] %v1959
        %1996 = vst [vmem:[#allocation2 + $0x498] sm:$0xff] %v1960
        %1997 = vst [vmem:[#allocation2 + $0x4e0] sm:$0xff] %v1961
        %1998 = vst [vmem:[#allocation2 + $0x528] sm:$0xff] %v1962
        %1999 = vst [vmem:[#allocation2 + $0x570] sm:$0xff] %v1963
        %2000 = vst [vmem:[#allocation2 + $0x5b8] sm:$0xff] %v1964
        %2001 = vst [vmem:[#allocation2 + $0x600] sm:$0xff] %v1965
        %2002 = vst [vmem:[#allocation2 + $0x648] sm:$0xff] %v1966
        %2003 = vst [vmem:[#allocation2 + $0x690] sm:$0xff] %v1967
        %2004 = vst [vmem:[#allocation2 + $0x6d8] sm:$0xff] %v1968
        %2005 = vst [vmem:[#allocation2 + $0x720] sm:$0xff] %v1969
        %2006 = vst [vmem:[#allocation2 + $0x768] sm:$0xff] %v1970
        %2007 = vst [vmem:[#allocation2 + $0x7b0] sm:$0xff] %v1971
        %2008 = vst [vmem:[#allocation2 + $0x7f8] sm:$0xff] %v1972
        %2009 = vst [vmem:[#allocation2 + $0x840] sm:$0xff] %v1973
        %2010 = vst [vmem:[#allocation2 + $0x888] sm:$0xff] %v1974
        %2011 = vst [vmem:[#allocation2 + $0x8d0] sm:$0xff] %v1975
        %2012 = vst [vmem:[#allocation2 + $0x918] sm:$0xff] %v1976
        %2013 = vst [vmem:[#allocation2 + $0x960] sm:$0xff] %v1977
        %2014 = vst [vmem:[#allocation2 + $0x9a8] sm:$0xff] %v1978
        %2015 = vst [vmem:[#allocation2 + $0x9f0] sm:$0x3f] %v1979
        %v2016 = vld [vmem:[%s270 + $0x13] sm:$0xff]
        %v2017 = vld [vmem:[%s270 + $0x1b] sm:$0xff]
        %v2018 = vld [vmem:[%s270 + $0x23] sm:$0xff]
        %v2019 = vld [vmem:[%s270 + $0x2b] sm:$0xff]
        %v2020 = vld [vmem:[%s270 + $0x33] sm:$0xff]
        %v2021 = vld [vmem:[%s270 + $0x3b] sm:$0xff]
        %v2022 = vld [vmem:[%s270 + $0x43] sm:$0xff]
        %v2023 = vld [vmem:[%s270 + $0x4b] sm:$0xff]
        %v2024 = vld [vmem:[%s270 + $0x53] sm:$0xff]
        %v2025 = vld [vmem:[%s270 + $0x5b] sm:$0xff]
        %v2026 = vld [vmem:[%s270 + $0x63] sm:$0xff]
        %v2027 = vld [vmem:[%s270 + $0x6b] sm:$0xff]
        %v2028 = vld [vmem:[%s270 + $0x73] sm:$0xff]
        %v2029 = vld [vmem:[%s270 + $0x7b] sm:$0xff]
        %v2030 = vld [vmem:[%s270 + $0x83] sm:$0xff]
        %v2031 = vld [vmem:[%s270 + $0x8b] sm:$0xff]
        %v2032 = vld [vmem:[%s270 + $0x93] sm:$0xff]
        %v2033 = vld [vmem:[%s270 + $0x9b] sm:$0xff]
        %v2034 = vld [vmem:[%s270 + $0xa3] sm:$0xff]
        %v2035 = vld [vmem:[%s270 + $0xab] sm:$0xff]
        %v2036 = vld [vmem:[%s270 + $0xb3] sm:$0xff]
        %v2037 = vld [vmem:[%s270 + $0xbb] sm:$0xff]
        %v2038 = vld [vmem:[%s270 + $0xc3] sm:$0xff]
        %v2039 = vld [vmem:[%s270 + $0xcb] sm:$0xff]
        %v2040 = vld [vmem:[%s270 + $0xd3] sm:$0xff]
        %v2041 = vld [vmem:[%s270 + $0xdb] sm:$0xff]
        %v2042 = vld [vmem:[%s270 + $0xe3] sm:$0xff]
        %v2043 = vld [vmem:[%s270 + $0xeb] sm:$0xff]
        %v2044 = vld [vmem:[%s270 + $0xf3] sm:$0xff]
        %v2045 = vld [vmem:[%s270 + $0xfb] sm:$0xff]
        %v2046 = vld [vmem:[%s270 + $0x103] sm:$0xff]
        %v2047 = vld [vmem:[%s270 + $0x10b] sm:$0xff]
        %v2048 = vld [vmem:[%s270 + $0x113] sm:$0xff]
        %v2049 = vld [vmem:[%s270 + $0x11b] sm:$0xff]
        %v2050 = vld [vmem:[%s270 + $0x123] sm:$0xff]
        %v2051 = vld [vmem:[%s270 + $0x12b] sm:$0x3f]
        %v2052 = vmul.f32 %v2016, %v319
        %v2053 = vmul.f32 %v2017, %v319
        %v2054 = vmul.f32 %v2018, %v319
        %v2055 = vmul.f32 %v2019, %v319
        %v2056 = vmul.f32 %v2020, %v319
        %v2057 = vmul.f32 %v2021, %v319
        %v2058 = vmul.f32 %v2022, %v319
        %v2059 = vmul.f32 %v2023, %v319
        %v2060 = vmul.f32 %v2024, %v319
        %v2061 = vmul.f32 %v2025, %v319
        %v2062 = vmul.f32 %v2026, %v319
        %v2063 = vmul.f32 %v2027, %v319
        %v2064 = vmul.f32 %v2028, %v319
        %v2065 = vmul.f32 %v2029, %v319
        %v2066 = vmul.f32 %v2030, %v319
        %v2067 = vmul.f32 %v2031, %v319
        %v2068 = vmul.f32 %v2032, %v319
        %v2069 = vmul.f32 %v2033, %v319
        %v2070 = vmul.f32 %v2034, %v319
        %v2071 = vmul.f32 %v2035, %v319
        %v2072 = vmul.f32 %v2036, %v319
        %v2073 = vmul.f32 %v2037, %v319
        %v2074 = vmul.f32 %v2038, %v319
        %v2075 = vmul.f32 %v2039, %v319
        %v2076 = vmul.f32 %v2040, %v319
        %v2077 = vmul.f32 %v2041, %v319
        %v2078 = vmul.f32 %v2042, %v319
        %v2079 = vmul.f32 %v2043, %v319
        %v2080 = vmul.f32 %v2044, %v319
        %v2081 = vmul.f32 %v2045, %v319
        %v2082 = vmul.f32 %v2046, %v319
        %v2083 = vmul.f32 %v2047, %v319
        %v2084 = vmul.f32 %v2048, %v319
        %v2085 = vmul.f32 %v2049, %v319
        %v2086 = vmul.f32 %v2050, %v319
        %v2087 = vmul.f32 %v2051, %v319
        %v2088 = vadd.f32 %v2052, %v358
        %v2089 = vadd.f32 %v2053, %v358
        %v2090 = vadd.f32 %v2054, %v358
        %v2091 = vadd.f32 %v2055, %v358
        %v2092 = vadd.f32 %v2056, %v358
        %v2093 = vadd.f32 %v2057, %v358
        %v2094 = vadd.f32 %v2058, %v358
        %v2095 = vadd.f32 %v2059, %v358
        %v2096 = vadd.f32 %v2060, %v358
        %v2097 = vadd.f32 %v2061, %v358
        %v2098 = vadd.f32 %v2062, %v358
        %v2099 = vadd.f32 %v2063, %v358
        %v2100 = vadd.f32 %v2064, %v358
        %v2101 = vadd.f32 %v2065, %v358
        %v2102 = vadd.f32 %v2066, %v358
        %v2103 = vadd.f32 %v2067, %v358
        %v2104 = vadd.f32 %v2068, %v358
        %v2105 = vadd.f32 %v2069, %v358
        %v2106 = vadd.f32 %v2070, %v358
        %v2107 = vadd.f32 %v2071, %v358
        %v2108 = vadd.f32 %v2072, %v358
        %v2109 = vadd.f32 %v2073, %v358
        %v2110 = vadd.f32 %v2074, %v358
        %v2111 = vadd.f32 %v2075, %v358
        %v2112 = vadd.f32 %v2076, %v358
        %v2113 = vadd.f32 %v2077, %v358
        %v2114 = vadd.f32 %v2078, %v358
        %v2115 = vadd.f32 %v2079, %v358
        %v2116 = vadd.f32 %v2080, %v358
        %v2117 = vadd.f32 %v2081, %v358
        %v2118 = vadd.f32 %v2082, %v358
        %v2119 = vadd.f32 %v2083, %v358
        %v2120 = vadd.f32 %v2084, %v358
        %v2121 = vadd.f32 %v2085, %v358
        %v2122 = vadd.f32 %v2086, %v358
        %v2123 = vadd.f32 %v2087, %v358
        %v2124 = vmax.f32 %v2088, 0.0
        %v2125 = vmax.f32 %v2089, 0.0
        %v2126 = vmax.f32 %v2090, 0.0
        %v2127 = vmax.f32 %v2091, 0.0
        %v2128 = vmax.f32 %v2092, 0.0
        %v2129 = vmax.f32 %v2093, 0.0
        %v2130 = vmax.f32 %v2094, 0.0
        %v2131 = vmax.f32 %v2095, 0.0
        %v2132 = vmax.f32 %v2096, 0.0
        %v2133 = vmax.f32 %v2097, 0.0
        %v2134 = vmax.f32 %v2098, 0.0
        %v2135 = vmax.f32 %v2099, 0.0
        %v2136 = vmax.f32 %v2100, 0.0
        %v2137 = vmax.f32 %v2101, 0.0
        %v2138 = vmax.f32 %v2102, 0.0
        %v2139 = vmax.f32 %v2103, 0.0
        %v2140 = vmax.f32 %v2104, 0.0
        %v2141 = vmax.f32 %v2105, 0.0
        %v2142 = vmax.f32 %v2106, 0.0
        %v2143 = vmax.f32 %v2107, 0.0
        %v2144 = vmax.f32 %v2108, 0.0
        %v2145 = vmax.f32 %v2109, 0.0
        %v2146 = vmax.f32 %v2110, 0.0
        %v2147 = vmax.f32 %v2111, 0.0
        %v2148 = vmax.f32 %v2112, 0.0
        %v2149 = vmax.f32 %v2113, 0.0
        %v2150 = vmax.f32 %v2114, 0.0
        %v2151 = vmax.f32 %v2115, 0.0
        %v2152 = vmax.f32 %v2116, 0.0
        %v2153 = vmax.f32 %v2117, 0.0
        %v2154 = vmax.f32 %v2118, 0.0
        %v2155 = vmax.f32 %v2119, 0.0
        %v2156 = vmax.f32 %v2120, 0.0
        %v2157 = vmax.f32 %v2121, 0.0
        %v2158 = vmax.f32 %v2122, 0.0
        %v2159 = vmax.f32 %v2123, 0.0
        %v2160 = vld [vmem:[%s4 + $0x13] sm:$0xff]
        %v2161 = vld [vmem:[%s4 + $0x1b] sm:$0xff]
        %v2162 = vld [vmem:[%s4 + $0x23] sm:$0xff]
        %v2163 = vld [vmem:[%s4 + $0x2b] sm:$0xff]
        %v2164 = vld [vmem:[%s4 + $0x33] sm:$0xff]
        %v2165 = vld [vmem:[%s4 + $0x3b] sm:$0xff]
        %v2166 = vld [vmem:[%s4 + $0x43] sm:$0xff]
        %v2167 = vld [vmem:[%s4 + $0x4b] sm:$0xff]
        %v2168 = vld [vmem:[%s4 + $0x53] sm:$0xff]
        %v2169 = vld [vmem:[%s4 + $0x5b] sm:$0xff]
        %v2170 = vld [vmem:[%s4 + $0x63] sm:$0xff]
        %v2171 = vld [vmem:[%s4 + $0x6b] sm:$0xff]
        %v2172 = vld [vmem:[%s4 + $0x73] sm:$0xff]
        %v2173 = vld [vmem:[%s4 + $0x7b] sm:$0xff]
        %v2174 = vld [vmem:[%s4 + $0x83] sm:$0xff]
        %v2175 = vld [vmem:[%s4 + $0x8b] sm:$0xff]
        %v2176 = vld [vmem:[%s4 + $0x93] sm:$0xff]
        %v2177 = vld [vmem:[%s4 + $0x9b] sm:$0xff]
        %v2178 = vld [vmem:[%s4 + $0xa3] sm:$0xff]
        %v2179 = vld [vmem:[%s4 + $0xab] sm:$0xff]
        %v2180 = vld [vmem:[%s4 + $0xb3] sm:$0xff]
        %v2181 = vld [vmem:[%s4 + $0xbb] sm:$0xff]
        %v2182 = vld [vmem:[%s4 + $0xc3] sm:$0xff]
        %v2183 = vld [vmem:[%s4 + $0xcb] sm:$0xff]
        %v2184 = vld [vmem:[%s4 + $0xd3] sm:$0xff]
        %v2185 = vld [vmem:[%s4 + $0xdb] sm:$0xff]
        %v2186 = vld [vmem:[%s4 + $0xe3] sm:$0xff]
        %v2187 = vld [vmem:[%s4 + $0xeb] sm:$0xff]
        %v2188 = vld [vmem:[%s4 + $0xf3] sm:$0xff]
        %v2189 = vld [vmem:[%s4 + $0xfb] sm:$0xff]
        %v2190 = vld [vmem:[%s4 + $0x103] sm:$0xff]
        %v2191 = vld [vmem:[%s4 + $0x10b] sm:$0xff]
        %v2192 = vld [vmem:[%s4 + $0x113] sm:$0xff]
        %v2193 = vld [vmem:[%s4 + $0x11b] sm:$0xff]
        %v2194 = vld [vmem:[%s4 + $0x123] sm:$0xff]
        %v2195 = vld [vmem:[%s4 + $0x12b] sm:$0x3f]
        %2197 = vset.pattern.permute.xlu0 0
        %2198 = vperm.xlu0 %2197, %v2160
        %v2199 = vpop.permute.xlu0 %2198
        %2202 = vset.pattern.permute.xlu0 0
        %2203 = vperm.xlu0 %2202, %v2161
        %v2204 = vpop.permute.xlu0 %2203
        %2207 = vset.pattern.permute.xlu0 0
        %2208 = vperm.xlu0 %2207, %v2162
        %v2209 = vpop.permute.xlu0 %2208
        %2212 = vset.pattern.permute.xlu0 0
        %2213 = vperm.xlu0 %2212, %v2163
        %v2214 = vpop.permute.xlu0 %2213
        %2217 = vset.pattern.permute.xlu0 0
        %2218 = vperm.xlu0 %2217, %v2164
        %v2219 = vpop.permute.xlu0 %2218
        %2222 = vset.pattern.permute.xlu0 0
        %2223 = vperm.xlu0 %2222, %v2165
        %v2224 = vpop.permute.xlu0 %2223
        %2227 = vset.pattern.permute.xlu0 0
        %2228 = vperm.xlu0 %2227, %v2166
        %v2229 = vpop.permute.xlu0 %2228
        %2232 = vset.pattern.permute.xlu0 0
        %2233 = vperm.xlu0 %2232, %v2167
        %v2234 = vpop.permute.xlu0 %2233
        %2237 = vset.pattern.permute.xlu0 0
        %2238 = vperm.xlu0 %2237, %v2168
        %v2239 = vpop.permute.xlu0 %2238
        %2242 = vset.pattern.permute.xlu0 0
        %2243 = vperm.xlu0 %2242, %v2169
        %v2244 = vpop.permute.xlu0 %2243
        %2247 = vset.pattern.permute.xlu0 0
        %2248 = vperm.xlu0 %2247, %v2170
        %v2249 = vpop.permute.xlu0 %2248
        %2252 = vset.pattern.permute.xlu0 0
        %2253 = vperm.xlu0 %2252, %v2171
        %v2254 = vpop.permute.xlu0 %2253
        %2257 = vset.pattern.permute.xlu0 0
        %2258 = vperm.xlu0 %2257, %v2172
        %v2259 = vpop.permute.xlu0 %2258
        %2262 = vset.pattern.permute.xlu0 0
        %2263 = vperm.xlu0 %2262, %v2173
        %v2264 = vpop.permute.xlu0 %2263
        %2267 = vset.pattern.permute.xlu0 0
        %2268 = vperm.xlu0 %2267, %v2174
        %v2269 = vpop.permute.xlu0 %2268
        %2272 = vset.pattern.permute.xlu0 0
        %2273 = vperm.xlu0 %2272, %v2175
        %v2274 = vpop.permute.xlu0 %2273
        %2277 = vset.pattern.permute.xlu0 0
        %2278 = vperm.xlu0 %2277, %v2176
        %v2279 = vpop.permute.xlu0 %2278
        %2282 = vset.pattern.permute.xlu0 0
        %2283 = vperm.xlu0 %2282, %v2177
        %v2284 = vpop.permute.xlu0 %2283
        %2287 = vset.pattern.permute.xlu0 0
        %2288 = vperm.xlu0 %2287, %v2178
        %v2289 = vpop.permute.xlu0 %2288
        %2292 = vset.pattern.permute.xlu0 0
        %2293 = vperm.xlu0 %2292, %v2179
        %v2294 = vpop.permute.xlu0 %2293
        %2297 = vset.pattern.permute.xlu0 0
        %2298 = vperm.xlu0 %2297, %v2180
        %v2299 = vpop.permute.xlu0 %2298
        %2302 = vset.pattern.permute.xlu0 0
        %2303 = vperm.xlu0 %2302, %v2181
        %v2304 = vpop.permute.xlu0 %2303
        %2307 = vset.pattern.permute.xlu0 0
        %2308 = vperm.xlu0 %2307, %v2182
        %v2309 = vpop.permute.xlu0 %2308
        %2312 = vset.pattern.permute.xlu0 0
        %2313 = vperm.xlu0 %2312, %v2183
        %v2314 = vpop.permute.xlu0 %2313
        %2317 = vset.pattern.permute.xlu0 0
        %2318 = vperm.xlu0 %2317, %v2184
        %v2319 = vpop.permute.xlu0 %2318
        %2322 = vset.pattern.permute.xlu0 0
        %2323 = vperm.xlu0 %2322, %v2185
        %v2324 = vpop.permute.xlu0 %2323
        %2327 = vset.pattern.permute.xlu0 0
        %2328 = vperm.xlu0 %2327, %v2186
        %v2329 = vpop.permute.xlu0 %2328
        %2332 = vset.pattern.permute.xlu0 0
        %2333 = vperm.xlu0 %2332, %v2187
        %v2334 = vpop.permute.xlu0 %2333
        %2337 = vset.pattern.permute.xlu0 0
        %2338 = vperm.xlu0 %2337, %v2188
        %v2339 = vpop.permute.xlu0 %2338
        %2342 = vset.pattern.permute.xlu0 0
        %2343 = vperm.xlu0 %2342, %v2189
        %v2344 = vpop.permute.xlu0 %2343
        %2347 = vset.pattern.permute.xlu0 0
        %2348 = vperm.xlu0 %2347, %v2190
        %v2349 = vpop.permute.xlu0 %2348
        %2352 = vset.pattern.permute.xlu0 0
        %2353 = vperm.xlu0 %2352, %v2191
        %v2354 = vpop.permute.xlu0 %2353
        %2357 = vset.pattern.permute.xlu0 0
        %2358 = vperm.xlu0 %2357, %v2192
        %v2359 = vpop.permute.xlu0 %2358
        %2362 = vset.pattern.permute.xlu0 0
        %2363 = vperm.xlu0 %2362, %v2193
        %v2364 = vpop.permute.xlu0 %2363
        %2367 = vset.pattern.permute.xlu0 0
        %2368 = vperm.xlu0 %2367, %v2194
        %v2369 = vpop.permute.xlu0 %2368
        %2372 = vset.pattern.permute.xlu0 0
        %2373 = vperm.xlu0 %2372, %v2195
        %v2374 = vpop.permute.xlu0 %2373
        %v2376 = vmul.f32 %v2124, %v2199
        %v2377 = vmul.f32 %v2125, %v2204
        %v2378 = vmul.f32 %v2126, %v2209
        %v2379 = vmul.f32 %v2127, %v2214
        %v2380 = vmul.f32 %v2128, %v2219
        %v2381 = vmul.f32 %v2129, %v2224
        %v2382 = vmul.f32 %v2130, %v2229
        %v2383 = vmul.f32 %v2131, %v2234
        %v2384 = vmul.f32 %v2132, %v2239
        %v2385 = vmul.f32 %v2133, %v2244
        %v2386 = vmul.f32 %v2134, %v2249
        %v2387 = vmul.f32 %v2135, %v2254
        %v2388 = vmul.f32 %v2136, %v2259
        %v2389 = vmul.f32 %v2137, %v2264
        %v2390 = vmul.f32 %v2138, %v2269
        %v2391 = vmul.f32 %v2139, %v2274
        %v2392 = vmul.f32 %v2140, %v2279
        %v2393 = vmul.f32 %v2141, %v2284
        %v2394 = vmul.f32 %v2142, %v2289
        %v2395 = vmul.f32 %v2143, %v2294
        %v2396 = vmul.f32 %v2144, %v2299
        %v2397 = vmul.f32 %v2145, %v2304
        %v2398 = vmul.f32 %v2146, %v2309
        %v2399 = vmul.f32 %v2147, %v2314
        %v2400 = vmul.f32 %v2148, %v2319
        %v2401 = vmul.f32 %v2149, %v2324
        %v2402 = vmul.f32 %v2150, %v2329
        %v2403 = vmul.f32 %v2151, %v2334
        %v2404 = vmul.f32 %v2152, %v2339
        %v2405 = vmul.f32 %v2153, %v2344
        %v2406 = vmul.f32 %v2154, %v2349
        %v2407 = vmul.f32 %v2155, %v2354
        %v2408 = vmul.f32 %v2156, %v2359
        %v2409 = vmul.f32 %v2157, %v2364
        %v2410 = vmul.f32 %v2158, %v2369
        %v2411 = vmul.f32 %v2159, %v2374
        %2412 = vst [vmem:[#allocation2 + $0x20] sm:$0xff] %v2376
        %2413 = vst [vmem:[#allocation2 + $0x68] sm:$0xff] %v2377
        %2414 = vst [vmem:[#allocation2 + $0xb0] sm:$0xff] %v2378
        %2415 = vst [vmem:[#allocation2 + $0xf8] sm:$0xff] %v2379
        %2416 = vst [vmem:[#allocation2 + $0x140] sm:$0xff] %v2380
        %2417 = vst [vmem:[#allocation2 + $0x188] sm:$0xff] %v2381
        %2418 = vst [vmem:[#allocation2 + $0x1d0] sm:$0xff] %v2382
        %2419 = vst [vmem:[#allocation2 + $0x218] sm:$0xff] %v2383
        %2420 = vst [vmem:[#allocation2 + $0x260] sm:$0xff] %v2384
        %2421 = vst [vmem:[#allocation2 + $0x2a8] sm:$0xff] %v2385
        %2422 = vst [vmem:[#allocation2 + $0x2f0] sm:$0xff] %v2386
        %2423 = vst [vmem:[#allocation2 + $0x338] sm:$0xff] %v2387
        %2424 = vst [vmem:[#allocation2 + $0x380] sm:$0xff] %v2388
        %2425 = vst [vmem:[#allocation2 + $0x3c8] sm:$0xff] %v2389
        %2426 = vst [vmem:[#allocation2 + $0x410] sm:$0xff] %v2390
        %2427 = vst [vmem:[#allocation2 + $0x458] sm:$0xff] %v2391
        %2428 = vst [vmem:[#allocation2 + $0x4a0] sm:$0xff] %v2392
        %2429 = vst [vmem:[#allocation2 + $0x4e8] sm:$0xff] %v2393
        %2430 = vst [vmem:[#allocation2 + $0x530] sm:$0xff] %v2394
        %2431 = vst [vmem:[#allocation2 + $0x578] sm:$0xff] %v2395
        %2432 = vst [vmem:[#allocation2 + $0x5c0] sm:$0xff] %v2396
        %2433 = vst [vmem:[#allocation2 + $0x608] sm:$0xff] %v2397
        %2434 = vst [vmem:[#allocation2 + $0x650] sm:$0xff] %v2398
        %2435 = vst [vmem:[#allocation2 + $0x698] sm:$0xff] %v2399
        %2436 = vst [vmem:[#allocation2 + $0x6e0] sm:$0xff] %v2400
        %2437 = vst [vmem:[#allocation2 + $0x728] sm:$0xff] %v2401
        %2438 = vst [vmem:[#allocation2 + $0x770] sm:$0xff] %v2402
        %2439 = vst [vmem:[#allocation2 + $0x7b8] sm:$0xff] %v2403
        %2440 = vst [vmem:[#allocation2 + $0x800] sm:$0xff] %v2404
        %2441 = vst [vmem:[#allocation2 + $0x848] sm:$0xff] %v2405
        %2442 = vst [vmem:[#allocation2 + $0x890] sm:$0xff] %v2406
        %2443 = vst [vmem:[#allocation2 + $0x8d8] sm:$0xff] %v2407
        %2444 = vst [vmem:[#allocation2 + $0x920] sm:$0xff] %v2408
        %2445 = vst [vmem:[#allocation2 + $0x968] sm:$0xff] %v2409
        %2446 = vst [vmem:[#allocation2 + $0x9b0] sm:$0xff] %v2410
        %2447 = vst [vmem:[#allocation2 + $0x9f8] sm:$0x3f] %v2411
        %v2448 = vld [vmem:[%s270 + $0x14] sm:$0xff]
        %v2449 = vld [vmem:[%s270 + $0x1c] sm:$0xff]
        %v2450 = vld [vmem:[%s270 + $0x24] sm:$0xff]
        %v2451 = vld [vmem:[%s270 + $0x2c] sm:$0xff]
        %v2452 = vld [vmem:[%s270 + $0x34] sm:$0xff]
        %v2453 = vld [vmem:[%s270 + $0x3c] sm:$0xff]
        %v2454 = vld [vmem:[%s270 + $0x44] sm:$0xff]
        %v2455 = vld [vmem:[%s270 + $0x4c] sm:$0xff]
        %v2456 = vld [vmem:[%s270 + $0x54] sm:$0xff]
        %v2457 = vld [vmem:[%s270 + $0x5c] sm:$0xff]
        %v2458 = vld [vmem:[%s270 + $0x64] sm:$0xff]
        %v2459 = vld [vmem:[%s270 + $0x6c] sm:$0xff]
        %v2460 = vld [vmem:[%s270 + $0x74] sm:$0xff]
        %v2461 = vld [vmem:[%s270 + $0x7c] sm:$0xff]
        %v2462 = vld [vmem:[%s270 + $0x84] sm:$0xff]
        %v2463 = vld [vmem:[%s270 + $0x8c] sm:$0xff]
        %v2464 = vld [vmem:[%s270 + $0x94] sm:$0xff]
        %v2465 = vld [vmem:[%s270 + $0x9c] sm:$0xff]
        %v2466 = vld [vmem:[%s270 + $0xa4] sm:$0xff]
        %v2467 = vld [vmem:[%s270 + $0xac] sm:$0xff]
        %v2468 = vld [vmem:[%s270 + $0xb4] sm:$0xff]
        %v2469 = vld [vmem:[%s270 + $0xbc] sm:$0xff]
        %v2470 = vld [vmem:[%s270 + $0xc4] sm:$0xff]
        %v2471 = vld [vmem:[%s270 + $0xcc] sm:$0xff]
        %v2472 = vld [vmem:[%s270 + $0xd4] sm:$0xff]
        %v2473 = vld [vmem:[%s270 + $0xdc] sm:$0xff]
        %v2474 = vld [vmem:[%s270 + $0xe4] sm:$0xff]
        %v2475 = vld [vmem:[%s270 + $0xec] sm:$0xff]
        %v2476 = vld [vmem:[%s270 + $0xf4] sm:$0xff]
        %v2477 = vld [vmem:[%s270 + $0xfc] sm:$0xff]
        %v2478 = vld [vmem:[%s270 + $0x104] sm:$0xff]
        %v2479 = vld [vmem:[%s270 + $0x10c] sm:$0xff]
        %v2480 = vld [vmem:[%s270 + $0x114] sm:$0xff]
        %v2481 = vld [vmem:[%s270 + $0x11c] sm:$0xff]
        %v2482 = vld [vmem:[%s270 + $0x124] sm:$0xff]
        %v2483 = vld [vmem:[%s270 + $0x12c] sm:$0x3f]
        %v2484 = vmul.f32 %v2448, %v319
        %v2485 = vmul.f32 %v2449, %v319
        %v2486 = vmul.f32 %v2450, %v319
        %v2487 = vmul.f32 %v2451, %v319
        %v2488 = vmul.f32 %v2452, %v319
        %v2489 = vmul.f32 %v2453, %v319
        %v2490 = vmul.f32 %v2454, %v319
        %v2491 = vmul.f32 %v2455, %v319
        %v2492 = vmul.f32 %v2456, %v319
        %v2493 = vmul.f32 %v2457, %v319
        %v2494 = vmul.f32 %v2458, %v319
        %v2495 = vmul.f32 %v2459, %v319
        %v2496 = vmul.f32 %v2460, %v319
        %v2497 = vmul.f32 %v2461, %v319
        %v2498 = vmul.f32 %v2462, %v319
        %v2499 = vmul.f32 %v2463, %v319
        %v2500 = vmul.f32 %v2464, %v319
        %v2501 = vmul.f32 %v2465, %v319
        %v2502 = vmul.f32 %v2466, %v319
        %v2503 = vmul.f32 %v2467, %v319
        %v2504 = vmul.f32 %v2468, %v319
        %v2505 = vmul.f32 %v2469, %v319
        %v2506 = vmul.f32 %v2470, %v319
        %v2507 = vmul.f32 %v2471, %v319
        %v2508 = vmul.f32 %v2472, %v319
        %v2509 = vmul.f32 %v2473, %v319
        %v2510 = vmul.f32 %v2474, %v319
        %v2511 = vmul.f32 %v2475, %v319
        %v2512 = vmul.f32 %v2476, %v319
        %v2513 = vmul.f32 %v2477, %v319
        %v2514 = vmul.f32 %v2478, %v319
        %v2515 = vmul.f32 %v2479, %v319
        %v2516 = vmul.f32 %v2480, %v319
        %v2517 = vmul.f32 %v2481, %v319
        %v2518 = vmul.f32 %v2482, %v319
        %v2519 = vmul.f32 %v2483, %v319
        %v2520 = vadd.f32 %v2484, %v358
        %v2521 = vadd.f32 %v2485, %v358
        %v2522 = vadd.f32 %v2486, %v358
        %v2523 = vadd.f32 %v2487, %v358
        %v2524 = vadd.f32 %v2488, %v358
        %v2525 = vadd.f32 %v2489, %v358
        %v2526 = vadd.f32 %v2490, %v358
        %v2527 = vadd.f32 %v2491, %v358
        %v2528 = vadd.f32 %v2492, %v358
        %v2529 = vadd.f32 %v2493, %v358
        %v2530 = vadd.f32 %v2494, %v358
        %v2531 = vadd.f32 %v2495, %v358
        %v2532 = vadd.f32 %v2496, %v358
        %v2533 = vadd.f32 %v2497, %v358
        %v2534 = vadd.f32 %v2498, %v358
        %v2535 = vadd.f32 %v2499, %v358
        %v2536 = vadd.f32 %v2500, %v358
        %v2537 = vadd.f32 %v2501, %v358
        %v2538 = vadd.f32 %v2502, %v358
        %v2539 = vadd.f32 %v2503, %v358
        %v2540 = vadd.f32 %v2504, %v358
        %v2541 = vadd.f32 %v2505, %v358
        %v2542 = vadd.f32 %v2506, %v358
        %v2543 = vadd.f32 %v2507, %v358
        %v2544 = vadd.f32 %v2508, %v358
        %v2545 = vadd.f32 %v2509, %v358
        %v2546 = vadd.f32 %v2510, %v358
        %v2547 = vadd.f32 %v2511, %v358
        %v2548 = vadd.f32 %v2512, %v358
        %v2549 = vadd.f32 %v2513, %v358
        %v2550 = vadd.f32 %v2514, %v358
        %v2551 = vadd.f32 %v2515, %v358
        %v2552 = vadd.f32 %v2516, %v358
        %v2553 = vadd.f32 %v2517, %v358
        %v2554 = vadd.f32 %v2518, %v358
        %v2555 = vadd.f32 %v2519, %v358
        %v2556 = vmax.f32 %v2520, 0.0
        %v2557 = vmax.f32 %v2521, 0.0
        %v2558 = vmax.f32 %v2522, 0.0
        %v2559 = vmax.f32 %v2523, 0.0
        %v2560 = vmax.f32 %v2524, 0.0
        %v2561 = vmax.f32 %v2525, 0.0
        %v2562 = vmax.f32 %v2526, 0.0
        %v2563 = vmax.f32 %v2527, 0.0
        %v2564 = vmax.f32 %v2528, 0.0
        %v2565 = vmax.f32 %v2529, 0.0
        %v2566 = vmax.f32 %v2530, 0.0
        %v2567 = vmax.f32 %v2531, 0.0
        %v2568 = vmax.f32 %v2532, 0.0
        %v2569 = vmax.f32 %v2533, 0.0
        %v2570 = vmax.f32 %v2534, 0.0
        %v2571 = vmax.f32 %v2535, 0.0
        %v2572 = vmax.f32 %v2536, 0.0
        %v2573 = vmax.f32 %v2537, 0.0
        %v2574 = vmax.f32 %v2538, 0.0
        %v2575 = vmax.f32 %v2539, 0.0
        %v2576 = vmax.f32 %v2540, 0.0
        %v2577 = vmax.f32 %v2541, 0.0
        %v2578 = vmax.f32 %v2542, 0.0
        %v2579 = vmax.f32 %v2543, 0.0
        %v2580 = vmax.f32 %v2544, 0.0
        %v2581 = vmax.f32 %v2545, 0.0
        %v2582 = vmax.f32 %v2546, 0.0
        %v2583 = vmax.f32 %v2547, 0.0
        %v2584 = vmax.f32 %v2548, 0.0
        %v2585 = vmax.f32 %v2549, 0.0
        %v2586 = vmax.f32 %v2550, 0.0
        %v2587 = vmax.f32 %v2551, 0.0
        %v2588 = vmax.f32 %v2552, 0.0
        %v2589 = vmax.f32 %v2553, 0.0
        %v2590 = vmax.f32 %v2554, 0.0
        %v2591 = vmax.f32 %v2555, 0.0
        %v2592 = vld [vmem:[%s4 + $0x14] sm:$0xff]
        %v2593 = vld [vmem:[%s4 + $0x1c] sm:$0xff]
        %v2594 = vld [vmem:[%s4 + $0x24] sm:$0xff]
        %v2595 = vld [vmem:[%s4 + $0x2c] sm:$0xff]
        %v2596 = vld [vmem:[%s4 + $0x34] sm:$0xff]
        %v2597 = vld [vmem:[%s4 + $0x3c] sm:$0xff]
        %v2598 = vld [vmem:[%s4 + $0x44] sm:$0xff]
        %v2599 = vld [vmem:[%s4 + $0x4c] sm:$0xff]
        %v2600 = vld [vmem:[%s4 + $0x54] sm:$0xff]
        %v2601 = vld [vmem:[%s4 + $0x5c] sm:$0xff]
        %v2602 = vld [vmem:[%s4 + $0x64] sm:$0xff]
        %v2603 = vld [vmem:[%s4 + $0x6c] sm:$0xff]
        %v2604 = vld [vmem:[%s4 + $0x74] sm:$0xff]
        %v2605 = vld [vmem:[%s4 + $0x7c] sm:$0xff]
        %v2606 = vld [vmem:[%s4 + $0x84] sm:$0xff]
        %v2607 = vld [vmem:[%s4 + $0x8c] sm:$0xff]
        %v2608 = vld [vmem:[%s4 + $0x94] sm:$0xff]
        %v2609 = vld [vmem:[%s4 + $0x9c] sm:$0xff]
        %v2610 = vld [vmem:[%s4 + $0xa4] sm:$0xff]
        %v2611 = vld [vmem:[%s4 + $0xac] sm:$0xff]
        %v2612 = vld [vmem:[%s4 + $0xb4] sm:$0xff]
        %v2613 = vld [vmem:[%s4 + $0xbc] sm:$0xff]
        %v2614 = vld [vmem:[%s4 + $0xc4] sm:$0xff]
        %v2615 = vld [vmem:[%s4 + $0xcc] sm:$0xff]
        %v2616 = vld [vmem:[%s4 + $0xd4] sm:$0xff]
        %v2617 = vld [vmem:[%s4 + $0xdc] sm:$0xff]
        %v2618 = vld [vmem:[%s4 + $0xe4] sm:$0xff]
        %v2619 = vld [vmem:[%s4 + $0xec] sm:$0xff]
        %v2620 = vld [vmem:[%s4 + $0xf4] sm:$0xff]
        %v2621 = vld [vmem:[%s4 + $0xfc] sm:$0xff]
        %v2622 = vld [vmem:[%s4 + $0x104] sm:$0xff]
        %v2623 = vld [vmem:[%s4 + $0x10c] sm:$0xff]
        %v2624 = vld [vmem:[%s4 + $0x114] sm:$0xff]
        %v2625 = vld [vmem:[%s4 + $0x11c] sm:$0xff]
        %v2626 = vld [vmem:[%s4 + $0x124] sm:$0xff]
        %v2627 = vld [vmem:[%s4 + $0x12c] sm:$0x3f]
        %2629 = vset.pattern.permute.xlu0 0
        %2630 = vperm.xlu0 %2629, %v2592
        %v2631 = vpop.permute.xlu0 %2630
        %2634 = vset.pattern.permute.xlu0 0
        %2635 = vperm.xlu0 %2634, %v2593
        %v2636 = vpop.permute.xlu0 %2635
        %2639 = vset.pattern.permute.xlu0 0
        %2640 = vperm.xlu0 %2639, %v2594
        %v2641 = vpop.permute.xlu0 %2640
        %2644 = vset.pattern.permute.xlu0 0
        %2645 = vperm.xlu0 %2644, %v2595
        %v2646 = vpop.permute.xlu0 %2645
        %2649 = vset.pattern.permute.xlu0 0
        %2650 = vperm.xlu0 %2649, %v2596
        %v2651 = vpop.permute.xlu0 %2650
        %2654 = vset.pattern.permute.xlu0 0
        %2655 = vperm.xlu0 %2654, %v2597
        %v2656 = vpop.permute.xlu0 %2655
        %2659 = vset.pattern.permute.xlu0 0
        %2660 = vperm.xlu0 %2659, %v2598
        %v2661 = vpop.permute.xlu0 %2660
        %2664 = vset.pattern.permute.xlu0 0
        %2665 = vperm.xlu0 %2664, %v2599
        %v2666 = vpop.permute.xlu0 %2665
        %2669 = vset.pattern.permute.xlu0 0
        %2670 = vperm.xlu0 %2669, %v2600
        %v2671 = vpop.permute.xlu0 %2670
        %2674 = vset.pattern.permute.xlu0 0
        %2675 = vperm.xlu0 %2674, %v2601
        %v2676 = vpop.permute.xlu0 %2675
        %2679 = vset.pattern.permute.xlu0 0
        %2680 = vperm.xlu0 %2679, %v2602
        %v2681 = vpop.permute.xlu0 %2680
        %2684 = vset.pattern.permute.xlu0 0
        %2685 = vperm.xlu0 %2684, %v2603
        %v2686 = vpop.permute.xlu0 %2685
        %2689 = vset.pattern.permute.xlu0 0
        %2690 = vperm.xlu0 %2689, %v2604
        %v2691 = vpop.permute.xlu0 %2690
        %2694 = vset.pattern.permute.xlu0 0
        %2695 = vperm.xlu0 %2694, %v2605
        %v2696 = vpop.permute.xlu0 %2695
        %2699 = vset.pattern.permute.xlu0 0
        %2700 = vperm.xlu0 %2699, %v2606
        %v2701 = vpop.permute.xlu0 %2700
        %2704 = vset.pattern.permute.xlu0 0
        %2705 = vperm.xlu0 %2704, %v2607
        %v2706 = vpop.permute.xlu0 %2705
        %2709 = vset.pattern.permute.xlu0 0
        %2710 = vperm.xlu0 %2709, %v2608
        %v2711 = vpop.permute.xlu0 %2710
        %2714 = vset.pattern.permute.xlu0 0
        %2715 = vperm.xlu0 %2714, %v2609
        %v2716 = vpop.permute.xlu0 %2715
        %2719 = vset.pattern.permute.xlu0 0
        %2720 = vperm.xlu0 %2719, %v2610
        %v2721 = vpop.permute.xlu0 %2720
        %2724 = vset.pattern.permute.xlu0 0
        %2725 = vperm.xlu0 %2724, %v2611
        %v2726 = vpop.permute.xlu0 %2725
        %2729 = vset.pattern.permute.xlu0 0
        %2730 = vperm.xlu0 %2729, %v2612
        %v2731 = vpop.permute.xlu0 %2730
        %2734 = vset.pattern.permute.xlu0 0
        %2735 = vperm.xlu0 %2734, %v2613
        %v2736 = vpop.permute.xlu0 %2735
        %2739 = vset.pattern.permute.xlu0 0
        %2740 = vperm.xlu0 %2739, %v2614
        %v2741 = vpop.permute.xlu0 %2740
        %2744 = vset.pattern.permute.xlu0 0
        %2745 = vperm.xlu0 %2744, %v2615
        %v2746 = vpop.permute.xlu0 %2745
        %2749 = vset.pattern.permute.xlu0 0
        %2750 = vperm.xlu0 %2749, %v2616
        %v2751 = vpop.permute.xlu0 %2750
        %2754 = vset.pattern.permute.xlu0 0
        %2755 = vperm.xlu0 %2754, %v2617
        %v2756 = vpop.permute.xlu0 %2755
        %2759 = vset.pattern.permute.xlu0 0
        %2760 = vperm.xlu0 %2759, %v2618
        %v2761 = vpop.permute.xlu0 %2760
        %2764 = vset.pattern.permute.xlu0 0
        %2765 = vperm.xlu0 %2764, %v2619
        %v2766 = vpop.permute.xlu0 %2765
        %2769 = vset.pattern.permute.xlu0 0
        %2770 = vperm.xlu0 %2769, %v2620
        %v2771 = vpop.permute.xlu0 %2770
        %2774 = vset.pattern.permute.xlu0 0
        %2775 = vperm.xlu0 %2774, %v2621
        %v2776 = vpop.permute.xlu0 %2775
        %2779 = vset.pattern.permute.xlu0 0
        %2780 = vperm.xlu0 %2779, %v2622
        %v2781 = vpop.permute.xlu0 %2780
        %2784 = vset.pattern.permute.xlu0 0
        %2785 = vperm.xlu0 %2784, %v2623
        %v2786 = vpop.permute.xlu0 %2785
        %2789 = vset.pattern.permute.xlu0 0
        %2790 = vperm.xlu0 %2789, %v2624
        %v2791 = vpop.permute.xlu0 %2790
        %2794 = vset.pattern.permute.xlu0 0
        %2795 = vperm.xlu0 %2794, %v2625
        %v2796 = vpop.permute.xlu0 %2795
        %2799 = vset.pattern.permute.xlu0 0
        %2800 = vperm.xlu0 %2799, %v2626
        %v2801 = vpop.permute.xlu0 %2800
        %2804 = vset.pattern.permute.xlu0 0
        %2805 = vperm.xlu0 %2804, %v2627
        %v2806 = vpop.permute.xlu0 %2805
        %v2808 = vmul.f32 %v2556, %v2631
        %v2809 = vmul.f32 %v2557, %v2636
        %v2810 = vmul.f32 %v2558, %v2641
        %v2811 = vmul.f32 %v2559, %v2646
        %v2812 = vmul.f32 %v2560, %v2651
        %v2813 = vmul.f32 %v2561, %v2656
        %v2814 = vmul.f32 %v2562, %v2661
        %v2815 = vmul.f32 %v2563, %v2666
        %v2816 = vmul.f32 %v2564, %v2671
        %v2817 = vmul.f32 %v2565, %v2676
        %v2818 = vmul.f32 %v2566, %v2681
        %v2819 = vmul.f32 %v2567, %v2686
        %v2820 = vmul.f32 %v2568, %v2691
        %v2821 = vmul.f32 %v2569, %v2696
        %v2822 = vmul.f32 %v2570, %v2701
        %v2823 = vmul.f32 %v2571, %v2706
        %v2824 = vmul.f32 %v2572, %v2711
        %v2825 = vmul.f32 %v2573, %v2716
        %v2826 = vmul.f32 %v2574, %v2721
        %v2827 = vmul.f32 %v2575, %v2726
        %v2828 = vmul.f32 %v2576, %v2731
        %v2829 = vmul.f32 %v2577, %v2736
        %v2830 = vmul.f32 %v2578, %v2741
        %v2831 = vmul.f32 %v2579, %v2746
        %v2832 = vmul.f32 %v2580, %v2751
        %v2833 = vmul.f32 %v2581, %v2756
        %v2834 = vmul.f32 %v2582, %v2761
        %v2835 = vmul.f32 %v2583, %v2766
        %v2836 = vmul.f32 %v2584, %v2771
        %v2837 = vmul.f32 %v2585, %v2776
        %v2838 = vmul.f32 %v2586, %v2781
        %v2839 = vmul.f32 %v2587, %v2786
        %v2840 = vmul.f32 %v2588, %v2791
        %v2841 = vmul.f32 %v2589, %v2796
        %v2842 = vmul.f32 %v2590, %v2801
        %v2843 = vmul.f32 %v2591, %v2806
        %2844 = vst [vmem:[#allocation2 + $0x28] sm:$0xff] %v2808
        %2845 = vst [vmem:[#allocation2 + $0x70] sm:$0xff] %v2809
        %2846 = vst [vmem:[#allocation2 + $0xb8] sm:$0xff] %v2810
        %2847 = vst [vmem:[#allocation2 + $0x100] sm:$0xff] %v2811
        %2848 = vst [vmem:[#allocation2 + $0x148] sm:$0xff] %v2812
        %2849 = vst [vmem:[#allocation2 + $0x190] sm:$0xff] %v2813
        %2850 = vst [vmem:[#allocation2 + $0x1d8] sm:$0xff] %v2814
        %2851 = vst [vmem:[#allocation2 + $0x220] sm:$0xff] %v2815
        %2852 = vst [vmem:[#allocation2 + $0x268] sm:$0xff] %v2816
        %2853 = vst [vmem:[#allocation2 + $0x2b0] sm:$0xff] %v2817
        %2854 = vst [vmem:[#allocation2 + $0x2f8] sm:$0xff] %v2818
        %2855 = vst [vmem:[#allocation2 + $0x340] sm:$0xff] %v2819
        %2856 = vst [vmem:[#allocation2 + $0x388] sm:$0xff] %v2820
        %2857 = vst [vmem:[#allocation2 + $0x3d0] sm:$0xff] %v2821
        %2858 = vst [vmem:[#allocation2 + $0x418] sm:$0xff] %v2822
        %2859 = vst [vmem:[#allocation2 + $0x460] sm:$0xff] %v2823
        %2860 = vst [vmem:[#allocation2 + $0x4a8] sm:$0xff] %v2824
        %2861 = vst [vmem:[#allocation2 + $0x4f0] sm:$0xff] %v2825
        %2862 = vst [vmem:[#allocation2 + $0x538] sm:$0xff] %v2826
        %2863 = vst [vmem:[#allocation2 + $0x580] sm:$0xff] %v2827
        %2864 = vst [vmem:[#allocation2 + $0x5c8] sm:$0xff] %v2828
        %2865 = vst [vmem:[#allocation2 + $0x610] sm:$0xff] %v2829
        %2866 = vst [vmem:[#allocation2 + $0x658] sm:$0xff] %v2830
        %2867 = vst [vmem:[#allocation2 + $0x6a0] sm:$0xff] %v2831
        %2868 = vst [vmem:[#allocation2 + $0x6e8] sm:$0xff] %v2832
        %2869 = vst [vmem:[#allocation2 + $0x730] sm:$0xff] %v2833
        %2870 = vst [vmem:[#allocation2 + $0x778] sm:$0xff] %v2834
        %2871 = vst [vmem:[#allocation2 + $0x7c0] sm:$0xff] %v2835
        %2872 = vst [vmem:[#allocation2 + $0x808] sm:$0xff] %v2836
        %2873 = vst [vmem:[#allocation2 + $0x850] sm:$0xff] %v2837
        %2874 = vst [vmem:[#allocation2 + $0x898] sm:$0xff] %v2838
        %2875 = vst [vmem:[#allocation2 + $0x8e0] sm:$0xff] %v2839
        %2876 = vst [vmem:[#allocation2 + $0x928] sm:$0xff] %v2840
        %2877 = vst [vmem:[#allocation2 + $0x970] sm:$0xff] %v2841
        %2878 = vst [vmem:[#allocation2 + $0x9b8] sm:$0xff] %v2842
        %2879 = vst [vmem:[#allocation2 + $0xa00] sm:$0x3f] %v2843
        %v2880 = vld [vmem:[%s270 + $0x24] sm:$0xff]
        %v2881 = vld [vmem:[%s270 + $0x2c] sm:$0xff]
        %v2882 = vld [vmem:[%s270 + $0x34] sm:$0xff]
        %v2883 = vld [vmem:[%s270 + $0x3c] sm:$0xff]
        %v2884 = vld [vmem:[%s270 + $0x44] sm:$0xff]
        %v2885 = vld [vmem:[%s270 + $0x4c] sm:$0xff]
        %v2886 = vld [vmem:[%s270 + $0x54] sm:$0xff]
        %v2887 = vld [vmem:[%s270 + $0x5c] sm:$0xff]
        %v2888 = vld [vmem:[%s270 + $0x64] sm:$0xff]
        %v2889 = vld [vmem:[%s270 + $0x6c] sm:$0xff]
        %v2890 = vld [vmem:[%s270 + $0x74] sm:$0xff]
        %v2891 = vld [vmem:[%s270 + $0x7c] sm:$0xff]
        %v2892 = vld [vmem:[%s270 + $0x84] sm:$0xff]
        %v2893 = vld [vmem:[%s270 + $0x8c] sm:$0xff]
        %v2894 = vld [vmem:[%s270 + $0x94] sm:$0xff]
        %v2895 = vld [vmem:[%s270 + $0x9c] sm:$0xff]
        %v2896 = vld [vmem:[%s270 + $0xa4] sm:$0xff]
        %v2897 = vld [vmem:[%s270 + $0xac] sm:$0xff]
        %v2898 = vld [vmem:[%s270 + $0xb4] sm:$0xff]
        %v2899 = vld [vmem:[%s270 + $0xbc] sm:$0xff]
        %v2900 = vld [vmem:[%s270 + $0xc4] sm:$0xff]
        %v2901 = vld [vmem:[%s270 + $0xcc] sm:$0xff]
        %v2902 = vld [vmem:[%s270 + $0xd4] sm:$0xff]
        %v2903 = vld [vmem:[%s270 + $0xdc] sm:$0xff]
        %v2904 = vld [vmem:[%s270 + $0xe4] sm:$0xff]
        %v2905 = vld [vmem:[%s270 + $0xec] sm:$0xff]
        %v2906 = vld [vmem:[%s270 + $0xf4] sm:$0xff]
        %v2907 = vld [vmem:[%s270 + $0xfc] sm:$0xff]
        %v2908 = vld [vmem:[%s270 + $0x104] sm:$0xff]
        %v2909 = vld [vmem:[%s270 + $0x10c] sm:$0xff]
        %v2910 = vld [vmem:[%s270 + $0x114] sm:$0xff]
        %v2911 = vld [vmem:[%s270 + $0x11c] sm:$0xff]
        %v2912 = vld [vmem:[%s270 + $0x124] sm:$0xff]
        %v2913 = vld [vmem:[%s270 + $0x12c] sm:$0xff]
        %v2914 = vld [vmem:[%s270 + $0x134] sm:$0xff]
        %v2915 = vld [vmem:[%s270 + $0x13c] sm:$0x3f]
        %v2916 = vmul.f32 %v2880, %v319
        %v2917 = vmul.f32 %v2881, %v319
        %v2918 = vmul.f32 %v2882, %v319
        %v2919 = vmul.f32 %v2883, %v319
        %v2920 = vmul.f32 %v2884, %v319
        %v2921 = vmul.f32 %v2885, %v319
        %v2922 = vmul.f32 %v2886, %v319
        %v2923 = vmul.f32 %v2887, %v319
        %v2924 = vmul.f32 %v2888, %v319
        %v2925 = vmul.f32 %v2889, %v319
        %v2926 = vmul.f32 %v2890, %v319
        %v2927 = vmul.f32 %v2891, %v319
        %v2928 = vmul.f32 %v2892, %v319
        %v2929 = vmul.f32 %v2893, %v319
        %v2930 = vmul.f32 %v2894, %v319
        %v2931 = vmul.f32 %v2895, %v319
        %v2932 = vmul.f32 %v2896, %v319
        %v2933 = vmul.f32 %v2897, %v319
        %v2934 = vmul.f32 %v2898, %v319
        %v2935 = vmul.f32 %v2899, %v319
        %v2936 = vmul.f32 %v2900, %v319
        %v2937 = vmul.f32 %v2901, %v319
        %v2938 = vmul.f32 %v2902, %v319
        %v2939 = vmul.f32 %v2903, %v319
        %v2940 = vmul.f32 %v2904, %v319
        %v2941 = vmul.f32 %v2905, %v319
        %v2942 = vmul.f32 %v2906, %v319
        %v2943 = vmul.f32 %v2907, %v319
        %v2944 = vmul.f32 %v2908, %v319
        %v2945 = vmul.f32 %v2909, %v319
        %v2946 = vmul.f32 %v2910, %v319
        %v2947 = vmul.f32 %v2911, %v319
        %v2948 = vmul.f32 %v2912, %v319
        %v2949 = vmul.f32 %v2913, %v319
        %v2950 = vmul.f32 %v2914, %v319
        %v2951 = vmul.f32 %v2915, %v319
        %v2952 = vadd.f32 %v2916, %v358
        %v2953 = vadd.f32 %v2917, %v358
        %v2954 = vadd.f32 %v2918, %v358
        %v2955 = vadd.f32 %v2919, %v358
        %v2956 = vadd.f32 %v2920, %v358
        %v2957 = vadd.f32 %v2921, %v358
        %v2958 = vadd.f32 %v2922, %v358
        %v2959 = vadd.f32 %v2923, %v358
        %v2960 = vadd.f32 %v2924, %v358
        %v2961 = vadd.f32 %v2925, %v358
        %v2962 = vadd.f32 %v2926, %v358
        %v2963 = vadd.f32 %v2927, %v358
        %v2964 = vadd.f32 %v2928, %v358
        %v2965 = vadd.f32 %v2929, %v358
        %v2966 = vadd.f32 %v2930, %v358
        %v2967 = vadd.f32 %v2931, %v358
        %v2968 = vadd.f32 %v2932, %v358
        %v2969 = vadd.f32 %v2933, %v358
        %v2970 = vadd.f32 %v2934, %v358
        %v2971 = vadd.f32 %v2935, %v358
        %v2972 = vadd.f32 %v2936, %v358
        %v2973 = vadd.f32 %v2937, %v358
        %v2974 = vadd.f32 %v2938, %v358
        %v2975 = vadd.f32 %v2939, %v358
        %v2976 = vadd.f32 %v2940, %v358
        %v2977 = vadd.f32 %v2941, %v358
        %v2978 = vadd.f32 %v2942, %v358
        %v2979 = vadd.f32 %v2943, %v358
        %v2980 = vadd.f32 %v2944, %v358
        %v2981 = vadd.f32 %v2945, %v358
        %v2982 = vadd.f32 %v2946, %v358
        %v2983 = vadd.f32 %v2947, %v358
        %v2984 = vadd.f32 %v2948, %v358
        %v2985 = vadd.f32 %v2949, %v358
        %v2986 = vadd.f32 %v2950, %v358
        %v2987 = vadd.f32 %v2951, %v358
        %v2988 = vmax.f32 %v2952, 0.0
        %v2989 = vmax.f32 %v2953, 0.0
        %v2990 = vmax.f32 %v2954, 0.0
        %v2991 = vmax.f32 %v2955, 0.0
        %v2992 = vmax.f32 %v2956, 0.0
        %v2993 = vmax.f32 %v2957, 0.0
        %v2994 = vmax.f32 %v2958, 0.0
        %v2995 = vmax.f32 %v2959, 0.0
        %v2996 = vmax.f32 %v2960, 0.0
        %v2997 = vmax.f32 %v2961, 0.0
        %v2998 = vmax.f32 %v2962, 0.0
        %v2999 = vmax.f32 %v2963, 0.0
        %v3000 = vmax.f32 %v2964, 0.0
        %v3001 = vmax.f32 %v2965, 0.0
        %v3002 = vmax.f32 %v2966, 0.0
        %v3003 = vmax.f32 %v2967, 0.0
        %v3004 = vmax.f32 %v2968, 0.0
        %v3005 = vmax.f32 %v2969, 0.0
        %v3006 = vmax.f32 %v2970, 0.0
        %v3007 = vmax.f32 %v2971, 0.0
        %v3008 = vmax.f32 %v2972, 0.0
        %v3009 = vmax.f32 %v2973, 0.0
        %v3010 = vmax.f32 %v2974, 0.0
        %v3011 = vmax.f32 %v2975, 0.0
        %v3012 = vmax.f32 %v2976, 0.0
        %v3013 = vmax.f32 %v2977, 0.0
        %v3014 = vmax.f32 %v2978, 0.0
        %v3015 = vmax.f32 %v2979, 0.0
        %v3016 = vmax.f32 %v2980, 0.0
        %v3017 = vmax.f32 %v2981, 0.0
        %v3018 = vmax.f32 %v2982, 0.0
        %v3019 = vmax.f32 %v2983, 0.0
        %v3020 = vmax.f32 %v2984, 0.0
        %v3021 = vmax.f32 %v2985, 0.0
        %v3022 = vmax.f32 %v2986, 0.0
        %v3023 = vmax.f32 %v2987, 0.0
        %v3024 = vld [vmem:[%s4 + $0x24] sm:$0xff]
        %v3025 = vld [vmem:[%s4 + $0x2c] sm:$0xff]
        %v3026 = vld [vmem:[%s4 + $0x34] sm:$0xff]
        %v3027 = vld [vmem:[%s4 + $0x3c] sm:$0xff]
        %v3028 = vld [vmem:[%s4 + $0x44] sm:$0xff]
        %v3029 = vld [vmem:[%s4 + $0x4c] sm:$0xff]
        %v3030 = vld [vmem:[%s4 + $0x54] sm:$0xff]
        %v3031 = vld [vmem:[%s4 + $0x5c] sm:$0xff]
        %v3032 = vld [vmem:[%s4 + $0x64] sm:$0xff]
        %v3033 = vld [vmem:[%s4 + $0x6c] sm:$0xff]
        %v3034 = vld [vmem:[%s4 + $0x74] sm:$0xff]
        %v3035 = vld [vmem:[%s4 + $0x7c] sm:$0xff]
        %v3036 = vld [vmem:[%s4 + $0x84] sm:$0xff]
        %v3037 = vld [vmem:[%s4 + $0x8c] sm:$0xff]
        %v3038 = vld [vmem:[%s4 + $0x94] sm:$0xff]
        %v3039 = vld [vmem:[%s4 + $0x9c] sm:$0xff]
        %v3040 = vld [vmem:[%s4 + $0xa4] sm:$0xff]
        %v3041 = vld [vmem:[%s4 + $0xac] sm:$0xff]
        %v3042 = vld [vmem:[%s4 + $0xb4] sm:$0xff]
        %v3043 = vld [vmem:[%s4 + $0xbc] sm:$0xff]
        %v3044 = vld [vmem:[%s4 + $0xc4] sm:$0xff]
        %v3045 = vld [vmem:[%s4 + $0xcc] sm:$0xff]
        %v3046 = vld [vmem:[%s4 + $0xd4] sm:$0xff]
        %v3047 = vld [vmem:[%s4 + $0xdc] sm:$0xff]
        %v3048 = vld [vmem:[%s4 + $0xe4] sm:$0xff]
        %v3049 = vld [vmem:[%s4 + $0xec] sm:$0xff]
        %v3050 = vld [vmem:[%s4 + $0xf4] sm:$0xff]
        %v3051 = vld [vmem:[%s4 + $0xfc] sm:$0xff]
        %v3052 = vld [vmem:[%s4 + $0x104] sm:$0xff]
        %v3053 = vld [vmem:[%s4 + $0x10c] sm:$0xff]
        %v3054 = vld [vmem:[%s4 + $0x114] sm:$0xff]
        %v3055 = vld [vmem:[%s4 + $0x11c] sm:$0xff]
        %v3056 = vld [vmem:[%s4 + $0x124] sm:$0xff]
        %v3057 = vld [vmem:[%s4 + $0x12c] sm:$0xff]
        %v3058 = vld [vmem:[%s4 + $0x134] sm:$0xff]
        %v3059 = vld [vmem:[%s4 + $0x13c] sm:$0x3f]
        %3061 = vset.pattern.permute.xlu0 0
        %3062 = vperm.xlu0 %3061, %v3024
        %v3063 = vpop.permute.xlu0 %3062
        %3066 = vset.pattern.permute.xlu0 0
        %3067 = vperm.xlu0 %3066, %v3025
        %v3068 = vpop.permute.xlu0 %3067
        %3071 = vset.pattern.permute.xlu0 0
        %3072 = vperm.xlu0 %3071, %v3026
        %v3073 = vpop.permute.xlu0 %3072
        %3076 = vset.pattern.permute.xlu0 0
        %3077 = vperm.xlu0 %3076, %v3027
        %v3078 = vpop.permute.xlu0 %3077
        %3081 = vset.pattern.permute.xlu0 0
        %3082 = vperm.xlu0 %3081, %v3028
        %v3083 = vpop.permute.xlu0 %3082
        %3086 = vset.pattern.permute.xlu0 0
        %3087 = vperm.xlu0 %3086, %v3029
        %v3088 = vpop.permute.xlu0 %3087
        %3091 = vset.pattern.permute.xlu0 0
        %3092 = vperm.xlu0 %3091, %v3030
        %v3093 = vpop.permute.xlu0 %3092
        %3096 = vset.pattern.permute.xlu0 0
        %3097 = vperm.xlu0 %3096, %v3031
        %v3098 = vpop.permute.xlu0 %3097
        %3101 = vset.pattern.permute.xlu0 0
        %3102 = vperm.xlu0 %3101, %v3032
        %v3103 = vpop.permute.xlu0 %3102
        %3106 = vset.pattern.permute.xlu0 0
        %3107 = vperm.xlu0 %3106, %v3033
        %v3108 = vpop.permute.xlu0 %3107
        %3111 = vset.pattern.permute.xlu0 0
        %3112 = vperm.xlu0 %3111, %v3034
        %v3113 = vpop.permute.xlu0 %3112
        %3116 = vset.pattern.permute.xlu0 0
        %3117 = vperm.xlu0 %3116, %v3035
        %v3118 = vpop.permute.xlu0 %3117
        %3121 = vset.pattern.permute.xlu0 0
        %3122 = vperm.xlu0 %3121, %v3036
        %v3123 = vpop.permute.xlu0 %3122
        %3126 = vset.pattern.permute.xlu0 0
        %3127 = vperm.xlu0 %3126, %v3037
        %v3128 = vpop.permute.xlu0 %3127
        %3131 = vset.pattern.permute.xlu0 0
        %3132 = vperm.xlu0 %3131, %v3038
        %v3133 = vpop.permute.xlu0 %3132
        %3136 = vset.pattern.permute.xlu0 0
        %3137 = vperm.xlu0 %3136, %v3039
        %v3138 = vpop.permute.xlu0 %3137
        %3141 = vset.pattern.permute.xlu0 0
        %3142 = vperm.xlu0 %3141, %v3040
        %v3143 = vpop.permute.xlu0 %3142
        %3146 = vset.pattern.permute.xlu0 0
        %3147 = vperm.xlu0 %3146, %v3041
        %v3148 = vpop.permute.xlu0 %3147
        %3151 = vset.pattern.permute.xlu0 0
        %3152 = vperm.xlu0 %3151, %v3042
        %v3153 = vpop.permute.xlu0 %3152
        %3156 = vset.pattern.permute.xlu0 0
        %3157 = vperm.xlu0 %3156, %v3043
        %v3158 = vpop.permute.xlu0 %3157
        %3161 = vset.pattern.permute.xlu0 0
        %3162 = vperm.xlu0 %3161, %v3044
        %v3163 = vpop.permute.xlu0 %3162
        %3166 = vset.pattern.permute.xlu0 0
        %3167 = vperm.xlu0 %3166, %v3045
        %v3168 = vpop.permute.xlu0 %3167
        %3171 = vset.pattern.permute.xlu0 0
        %3172 = vperm.xlu0 %3171, %v3046
        %v3173 = vpop.permute.xlu0 %3172
        %3176 = vset.pattern.permute.xlu0 0
        %3177 = vperm.xlu0 %3176, %v3047
        %v3178 = vpop.permute.xlu0 %3177
        %3181 = vset.pattern.permute.xlu0 0
        %3182 = vperm.xlu0 %3181, %v3048
        %v3183 = vpop.permute.xlu0 %3182
        %3186 = vset.pattern.permute.xlu0 0
        %3187 = vperm.xlu0 %3186, %v3049
        %v3188 = vpop.permute.xlu0 %3187
        %3191 = vset.pattern.permute.xlu0 0
        %3192 = vperm.xlu0 %3191, %v3050
        %v3193 = vpop.permute.xlu0 %3192
        %3196 = vset.pattern.permute.xlu0 0
        %3197 = vperm.xlu0 %3196, %v3051
        %v3198 = vpop.permute.xlu0 %3197
        %3201 = vset.pattern.permute.xlu0 0
        %3202 = vperm.xlu0 %3201, %v3052
        %v3203 = vpop.permute.xlu0 %3202
        %3206 = vset.pattern.permute.xlu0 0
        %3207 = vperm.xlu0 %3206, %v3053
        %v3208 = vpop.permute.xlu0 %3207
        %3211 = vset.pattern.permute.xlu0 0
        %3212 = vperm.xlu0 %3211, %v3054
        %v3213 = vpop.permute.xlu0 %3212
        %3216 = vset.pattern.permute.xlu0 0
        %3217 = vperm.xlu0 %3216, %v3055
        %v3218 = vpop.permute.xlu0 %3217
        %3221 = vset.pattern.permute.xlu0 0
        %3222 = vperm.xlu0 %3221, %v3056
        %v3223 = vpop.permute.xlu0 %3222
        %3226 = vset.pattern.permute.xlu0 0
        %3227 = vperm.xlu0 %3226, %v3057
        %v3228 = vpop.permute.xlu0 %3227
        %3231 = vset.pattern.permute.xlu0 0
        %3232 = vperm.xlu0 %3231, %v3058
        %v3233 = vpop.permute.xlu0 %3232
        %3236 = vset.pattern.permute.xlu0 0
        %3237 = vperm.xlu0 %3236, %v3059
        %v3238 = vpop.permute.xlu0 %3237
        %v3240 = vmul.f32 %v2988, %v3063
        %v3241 = vmul.f32 %v2989, %v3068
        %v3242 = vmul.f32 %v2990, %v3073
        %v3243 = vmul.f32 %v2991, %v3078
        %v3244 = vmul.f32 %v2992, %v3083
        %v3245 = vmul.f32 %v2993, %v3088
        %v3246 = vmul.f32 %v2994, %v3093
        %v3247 = vmul.f32 %v2995, %v3098
        %v3248 = vmul.f32 %v2996, %v3103
        %v3249 = vmul.f32 %v2997, %v3108
        %v3250 = vmul.f32 %v2998, %v3113
        %v3251 = vmul.f32 %v2999, %v3118
        %v3252 = vmul.f32 %v3000, %v3123
        %v3253 = vmul.f32 %v3001, %v3128
        %v3254 = vmul.f32 %v3002, %v3133
        %v3255 = vmul.f32 %v3003, %v3138
        %v3256 = vmul.f32 %v3004, %v3143
        %v3257 = vmul.f32 %v3005, %v3148
        %v3258 = vmul.f32 %v3006, %v3153
        %v3259 = vmul.f32 %v3007, %v3158
        %v3260 = vmul.f32 %v3008, %v3163
        %v3261 = vmul.f32 %v3009, %v3168
        %v3262 = vmul.f32 %v3010, %v3173
        %v3263 = vmul.f32 %v3011, %v3178
        %v3264 = vmul.f32 %v3012, %v3183
        %v3265 = vmul.f32 %v3013, %v3188
        %v3266 = vmul.f32 %v3014, %v3193
        %v3267 = vmul.f32 %v3015, %v3198
        %v3268 = vmul.f32 %v3016, %v3203
        %v3269 = vmul.f32 %v3017, %v3208
        %v3270 = vmul.f32 %v3018, %v3213
        %v3271 = vmul.f32 %v3019, %v3218
        %v3272 = vmul.f32 %v3020, %v3223
        %v3273 = vmul.f32 %v3021, %v3228
        %v3274 = vmul.f32 %v3022, %v3233
        %v3275 = vmul.f32 %v3023, %v3238
        %3276 = vst [vmem:[#allocation2 + $0x30] sm:$0xff] %v3240
        %3277 = vst [vmem:[#allocation2 + $0x78] sm:$0xff] %v3241
        %3278 = vst [vmem:[#allocation2 + $0xc0] sm:$0xff] %v3242
        %3279 = vst [vmem:[#allocation2 + $0x108] sm:$0xff] %v3243
        %3280 = vst [vmem:[#allocation2 + $0x150] sm:$0xff] %v3244
        %3281 = vst [vmem:[#allocation2 + $0x198] sm:$0xff] %v3245
        %3282 = vst [vmem:[#allocation2 + $0x1e0] sm:$0xff] %v3246
        %3283 = vst [vmem:[#allocation2 + $0x228] sm:$0xff] %v3247
        %3284 = vst [vmem:[#allocation2 + $0x270] sm:$0xff] %v3248
        %3285 = vst [vmem:[#allocation2 + $0x2b8] sm:$0xff] %v3249
        %3286 = vst [vmem:[#allocation2 + $0x300] sm:$0xff] %v3250
        %3287 = vst [vmem:[#allocation2 + $0x348] sm:$0xff] %v3251
        %3288 = vst [vmem:[#allocation2 + $0x390] sm:$0xff] %v3252
        %3289 = vst [vmem:[#allocation2 + $0x3d8] sm:$0xff] %v3253
        %3290 = vst [vmem:[#allocation2 + $0x420] sm:$0xff] %v3254
        %3291 = vst [vmem:[#allocation2 + $0x468] sm:$0xff] %v3255
        %3292 = vst [vmem:[#allocation2 + $0x4b0] sm:$0xff] %v3256
        %3293 = vst [vmem:[#allocation2 + $0x4f8] sm:$0xff] %v3257
        %3294 = vst [vmem:[#allocation2 + $0x540] sm:$0xff] %v3258
        %3295 = vst [vmem:[#allocation2 + $0x588] sm:$0xff] %v3259
        %3296 = vst [vmem:[#allocation2 + $0x5d0] sm:$0xff] %v3260
        %3297 = vst [vmem:[#allocation2 + $0x618] sm:$0xff] %v3261
        %3298 = vst [vmem:[#allocation2 + $0x660] sm:$0xff] %v3262
        %3299 = vst [vmem:[#allocation2 + $0x6a8] sm:$0xff] %v3263
        %3300 = vst [vmem:[#allocation2 + $0x6f0] sm:$0xff] %v3264
        %3301 = vst [vmem:[#allocation2 + $0x738] sm:$0xff] %v3265
        %3302 = vst [vmem:[#allocation2 + $0x780] sm:$0xff] %v3266
        %3303 = vst [vmem:[#allocation2 + $0x7c8] sm:$0xff] %v3267
        %3304 = vst [vmem:[#allocation2 + $0x810] sm:$0xff] %v3268
        %3305 = vst [vmem:[#allocation2 + $0x858] sm:$0xff] %v3269
        %3306 = vst [vmem:[#allocation2 + $0x8a0] sm:$0xff] %v3270
        %3307 = vst [vmem:[#allocation2 + $0x8e8] sm:$0xff] %v3271
        %3308 = vst [vmem:[#allocation2 + $0x930] sm:$0xff] %v3272
        %3309 = vst [vmem:[#allocation2 + $0x978] sm:$0xff] %v3273
        %3310 = vst [vmem:[#allocation2 + $0x9c0] sm:$0xff] %v3274
        %3311 = vst [vmem:[#allocation2 + $0xa08] sm:$0x3f] %v3275
        %v3312 = vld [vmem:[%s270 + $0x25] sm:$0xff]
        %v3313 = vld [vmem:[%s270 + $0x2d] sm:$0xff]
        %v3314 = vld [vmem:[%s270 + $0x35] sm:$0xff]
        %v3315 = vld [vmem:[%s270 + $0x3d] sm:$0xff]
        %v3316 = vld [vmem:[%s270 + $0x45] sm:$0xff]
        %v3317 = vld [vmem:[%s270 + $0x4d] sm:$0xff]
        %v3318 = vld [vmem:[%s270 + $0x55] sm:$0xff]
        %v3319 = vld [vmem:[%s270 + $0x5d] sm:$0xff]
        %v3320 = vld [vmem:[%s270 + $0x65] sm:$0xff]
        %v3321 = vld [vmem:[%s270 + $0x6d] sm:$0xff]
        %v3322 = vld [vmem:[%s270 + $0x75] sm:$0xff]
        %v3323 = vld [vmem:[%s270 + $0x7d] sm:$0xff]
        %v3324 = vld [vmem:[%s270 + $0x85] sm:$0xff]
        %v3325 = vld [vmem:[%s270 + $0x8d] sm:$0xff]
        %v3326 = vld [vmem:[%s270 + $0x95] sm:$0xff]
        %v3327 = vld [vmem:[%s270 + $0x9d] sm:$0xff]
        %v3328 = vld [vmem:[%s270 + $0xa5] sm:$0xff]
        %v3329 = vld [vmem:[%s270 + $0xad] sm:$0xff]
        %v3330 = vld [vmem:[%s270 + $0xb5] sm:$0xff]
        %v3331 = vld [vmem:[%s270 + $0xbd] sm:$0xff]
        %v3332 = vld [vmem:[%s270 + $0xc5] sm:$0xff]
        %v3333 = vld [vmem:[%s270 + $0xcd] sm:$0xff]
        %v3334 = vld [vmem:[%s270 + $0xd5] sm:$0xff]
        %v3335 = vld [vmem:[%s270 + $0xdd] sm:$0xff]
        %v3336 = vld [vmem:[%s270 + $0xe5] sm:$0xff]
        %v3337 = vld [vmem:[%s270 + $0xed] sm:$0xff]
        %v3338 = vld [vmem:[%s270 + $0xf5] sm:$0xff]
        %v3339 = vld [vmem:[%s270 + $0xfd] sm:$0xff]
        %v3340 = vld [vmem:[%s270 + $0x105] sm:$0xff]
        %v3341 = vld [vmem:[%s270 + $0x10d] sm:$0xff]
        %v3342 = vld [vmem:[%s270 + $0x115] sm:$0xff]
        %v3343 = vld [vmem:[%s270 + $0x11d] sm:$0xff]
        %v3344 = vld [vmem:[%s270 + $0x125] sm:$0xff]
        %v3345 = vld [vmem:[%s270 + $0x12d] sm:$0xff]
        %v3346 = vld [vmem:[%s270 + $0x135] sm:$0xff]
        %v3347 = vld [vmem:[%s270 + $0x13d] sm:$0x3f]
        %v3348 = vmul.f32 %v3312, %v319
        %v3349 = vmul.f32 %v3313, %v319
        %v3350 = vmul.f32 %v3314, %v319
        %v3351 = vmul.f32 %v3315, %v319
        %v3352 = vmul.f32 %v3316, %v319
        %v3353 = vmul.f32 %v3317, %v319
        %v3354 = vmul.f32 %v3318, %v319
        %v3355 = vmul.f32 %v3319, %v319
        %v3356 = vmul.f32 %v3320, %v319
        %v3357 = vmul.f32 %v3321, %v319
        %v3358 = vmul.f32 %v3322, %v319
        %v3359 = vmul.f32 %v3323, %v319
        %v3360 = vmul.f32 %v3324, %v319
        %v3361 = vmul.f32 %v3325, %v319
        %v3362 = vmul.f32 %v3326, %v319
        %v3363 = vmul.f32 %v3327, %v319
        %v3364 = vmul.f32 %v3328, %v319
        %v3365 = vmul.f32 %v3329, %v319
        %v3366 = vmul.f32 %v3330, %v319
        %v3367 = vmul.f32 %v3331, %v319
        %v3368 = vmul.f32 %v3332, %v319
        %v3369 = vmul.f32 %v3333, %v319
        %v3370 = vmul.f32 %v3334, %v319
        %v3371 = vmul.f32 %v3335, %v319
        %v3372 = vmul.f32 %v3336, %v319
        %v3373 = vmul.f32 %v3337, %v319
        %v3374 = vmul.f32 %v3338, %v319
        %v3375 = vmul.f32 %v3339, %v319
        %v3376 = vmul.f32 %v3340, %v319
        %v3377 = vmul.f32 %v3341, %v319
        %v3378 = vmul.f32 %v3342, %v319
        %v3379 = vmul.f32 %v3343, %v319
        %v3380 = vmul.f32 %v3344, %v319
        %v3381 = vmul.f32 %v3345, %v319
        %v3382 = vmul.f32 %v3346, %v319
        %v3383 = vmul.f32 %v3347, %v319
        %v3384 = vadd.f32 %v3348, %v358
        %v3385 = vadd.f32 %v3349, %v358
        %v3386 = vadd.f32 %v3350, %v358
        %v3387 = vadd.f32 %v3351, %v358
        %v3388 = vadd.f32 %v3352, %v358
        %v3389 = vadd.f32 %v3353, %v358
        %v3390 = vadd.f32 %v3354, %v358
        %v3391 = vadd.f32 %v3355, %v358
        %v3392 = vadd.f32 %v3356, %v358
        %v3393 = vadd.f32 %v3357, %v358
        %v3394 = vadd.f32 %v3358, %v358
        %v3395 = vadd.f32 %v3359, %v358
        %v3396 = vadd.f32 %v3360, %v358
        %v3397 = vadd.f32 %v3361, %v358
        %v3398 = vadd.f32 %v3362, %v358
        %v3399 = vadd.f32 %v3363, %v358
        %v3400 = vadd.f32 %v3364, %v358
        %v3401 = vadd.f32 %v3365, %v358
        %v3402 = vadd.f32 %v3366, %v358
        %v3403 = vadd.f32 %v3367, %v358
        %v3404 = vadd.f32 %v3368, %v358
        %v3405 = vadd.f32 %v3369, %v358
        %v3406 = vadd.f32 %v3370, %v358
        %v3407 = vadd.f32 %v3371, %v358
        %v3408 = vadd.f32 %v3372, %v358
        %v3409 = vadd.f32 %v3373, %v358
        %v3410 = vadd.f32 %v3374, %v358
        %v3411 = vadd.f32 %v3375, %v358
        %v3412 = vadd.f32 %v3376, %v358
        %v3413 = vadd.f32 %v3377, %v358
        %v3414 = vadd.f32 %v3378, %v358
        %v3415 = vadd.f32 %v3379, %v358
        %v3416 = vadd.f32 %v3380, %v358
        %v3417 = vadd.f32 %v3381, %v358
        %v3418 = vadd.f32 %v3382, %v358
        %v3419 = vadd.f32 %v3383, %v358
        %v3420 = vmax.f32 %v3384, 0.0
        %v3421 = vmax.f32 %v3385, 0.0
        %v3422 = vmax.f32 %v3386, 0.0
        %v3423 = vmax.f32 %v3387, 0.0
        %v3424 = vmax.f32 %v3388, 0.0
        %v3425 = vmax.f32 %v3389, 0.0
        %v3426 = vmax.f32 %v3390, 0.0
        %v3427 = vmax.f32 %v3391, 0.0
        %v3428 = vmax.f32 %v3392, 0.0
        %v3429 = vmax.f32 %v3393, 0.0
        %v3430 = vmax.f32 %v3394, 0.0
        %v3431 = vmax.f32 %v3395, 0.0
        %v3432 = vmax.f32 %v3396, 0.0
        %v3433 = vmax.f32 %v3397, 0.0
        %v3434 = vmax.f32 %v3398, 0.0
        %v3435 = vmax.f32 %v3399, 0.0
        %v3436 = vmax.f32 %v3400, 0.0
        %v3437 = vmax.f32 %v3401, 0.0
        %v3438 = vmax.f32 %v3402, 0.0
        %v3439 = vmax.f32 %v3403, 0.0
        %v3440 = vmax.f32 %v3404, 0.0
        %v3441 = vmax.f32 %v3405, 0.0
        %v3442 = vmax.f32 %v3406, 0.0
        %v3443 = vmax.f32 %v3407, 0.0
        %v3444 = vmax.f32 %v3408, 0.0
        %v3445 = vmax.f32 %v3409, 0.0
        %v3446 = vmax.f32 %v3410, 0.0
        %v3447 = vmax.f32 %v3411, 0.0
        %v3448 = vmax.f32 %v3412, 0.0
        %v3449 = vmax.f32 %v3413, 0.0
        %v3450 = vmax.f32 %v3414, 0.0
        %v3451 = vmax.f32 %v3415, 0.0
        %v3452 = vmax.f32 %v3416, 0.0
        %v3453 = vmax.f32 %v3417, 0.0
        %v3454 = vmax.f32 %v3418, 0.0
        %v3455 = vmax.f32 %v3419, 0.0
        %v3456 = vld [vmem:[%s4 + $0x25] sm:$0xff]
        %v3457 = vld [vmem:[%s4 + $0x2d] sm:$0xff]
        %v3458 = vld [vmem:[%s4 + $0x35] sm:$0xff]
        %v3459 = vld [vmem:[%s4 + $0x3d] sm:$0xff]
        %v3460 = vld [vmem:[%s4 + $0x45] sm:$0xff]
        %v3461 = vld [vmem:[%s4 + $0x4d] sm:$0xff]
        %v3462 = vld [vmem:[%s4 + $0x55] sm:$0xff]
        %v3463 = vld [vmem:[%s4 + $0x5d] sm:$0xff]
        %v3464 = vld [vmem:[%s4 + $0x65] sm:$0xff]
        %v3465 = vld [vmem:[%s4 + $0x6d] sm:$0xff]
        %v3466 = vld [vmem:[%s4 + $0x75] sm:$0xff]
        %v3467 = vld [vmem:[%s4 + $0x7d] sm:$0xff]
        %v3468 = vld [vmem:[%s4 + $0x85] sm:$0xff]
        %v3469 = vld [vmem:[%s4 + $0x8d] sm:$0xff]
        %v3470 = vld [vmem:[%s4 + $0x95] sm:$0xff]
        %v3471 = vld [vmem:[%s4 + $0x9d] sm:$0xff]
        %v3472 = vld [vmem:[%s4 + $0xa5] sm:$0xff]
        %v3473 = vld [vmem:[%s4 + $0xad] sm:$0xff]
        %v3474 = vld [vmem:[%s4 + $0xb5] sm:$0xff]
        %v3475 = vld [vmem:[%s4 + $0xbd] sm:$0xff]
        %v3476 = vld [vmem:[%s4 + $0xc5] sm:$0xff]
        %v3477 = vld [vmem:[%s4 + $0xcd] sm:$0xff]
        %v3478 = vld [vmem:[%s4 + $0xd5] sm:$0xff]
        %v3479 = vld [vmem:[%s4 + $0xdd] sm:$0xff]
        %v3480 = vld [vmem:[%s4 + $0xe5] sm:$0xff]
        %v3481 = vld [vmem:[%s4 + $0xed] sm:$0xff]
        %v3482 = vld [vmem:[%s4 + $0xf5] sm:$0xff]
        %v3483 = vld [vmem:[%s4 + $0xfd] sm:$0xff]
        %v3484 = vld [vmem:[%s4 + $0x105] sm:$0xff]
        %v3485 = vld [vmem:[%s4 + $0x10d] sm:$0xff]
        %v3486 = vld [vmem:[%s4 + $0x115] sm:$0xff]
        %v3487 = vld [vmem:[%s4 + $0x11d] sm:$0xff]
        %v3488 = vld [vmem:[%s4 + $0x125] sm:$0xff]
        %v3489 = vld [vmem:[%s4 + $0x12d] sm:$0xff]
        %v3490 = vld [vmem:[%s4 + $0x135] sm:$0xff]
        %v3491 = vld [vmem:[%s4 + $0x13d] sm:$0x3f]
        %3493 = vset.pattern.permute.xlu0 0
        %3494 = vperm.xlu0 %3493, %v3456
        %v3495 = vpop.permute.xlu0 %3494
        %3498 = vset.pattern.permute.xlu0 0
        %3499 = vperm.xlu0 %3498, %v3457
        %v3500 = vpop.permute.xlu0 %3499
        %3503 = vset.pattern.permute.xlu0 0
        %3504 = vperm.xlu0 %3503, %v3458
        %v3505 = vpop.permute.xlu0 %3504
        %3508 = vset.pattern.permute.xlu0 0
        %3509 = vperm.xlu0 %3508, %v3459
        %v3510 = vpop.permute.xlu0 %3509
        %3513 = vset.pattern.permute.xlu0 0
        %3514 = vperm.xlu0 %3513, %v3460
        %v3515 = vpop.permute.xlu0 %3514
        %3518 = vset.pattern.permute.xlu0 0
        %3519 = vperm.xlu0 %3518, %v3461
        %v3520 = vpop.permute.xlu0 %3519
        %3523 = vset.pattern.permute.xlu0 0
        %3524 = vperm.xlu0 %3523, %v3462
        %v3525 = vpop.permute.xlu0 %3524
        %3528 = vset.pattern.permute.xlu0 0
        %3529 = vperm.xlu0 %3528, %v3463
        %v3530 = vpop.permute.xlu0 %3529
        %3533 = vset.pattern.permute.xlu0 0
        %3534 = vperm.xlu0 %3533, %v3464
        %v3535 = vpop.permute.xlu0 %3534
        %3538 = vset.pattern.permute.xlu0 0
        %3539 = vperm.xlu0 %3538, %v3465
        %v3540 = vpop.permute.xlu0 %3539
        %3543 = vset.pattern.permute.xlu0 0
        %3544 = vperm.xlu0 %3543, %v3466
        %v3545 = vpop.permute.xlu0 %3544
        %3548 = vset.pattern.permute.xlu0 0
        %3549 = vperm.xlu0 %3548, %v3467
        %v3550 = vpop.permute.xlu0 %3549
        %3553 = vset.pattern.permute.xlu0 0
        %3554 = vperm.xlu0 %3553, %v3468
        %v3555 = vpop.permute.xlu0 %3554
        %3558 = vset.pattern.permute.xlu0 0
        %3559 = vperm.xlu0 %3558, %v3469
        %v3560 = vpop.permute.xlu0 %3559
        %3563 = vset.pattern.permute.xlu0 0
        %3564 = vperm.xlu0 %3563, %v3470
        %v3565 = vpop.permute.xlu0 %3564
        %3568 = vset.pattern.permute.xlu0 0
        %3569 = vperm.xlu0 %3568, %v3471
        %v3570 = vpop.permute.xlu0 %3569
        %3573 = vset.pattern.permute.xlu0 0
        %3574 = vperm.xlu0 %3573, %v3472
        %v3575 = vpop.permute.xlu0 %3574
        %3578 = vset.pattern.permute.xlu0 0
        %3579 = vperm.xlu0 %3578, %v3473
        %v3580 = vpop.permute.xlu0 %3579
        %3583 = vset.pattern.permute.xlu0 0
        %3584 = vperm.xlu0 %3583, %v3474
        %v3585 = vpop.permute.xlu0 %3584
        %3588 = vset.pattern.permute.xlu0 0
        %3589 = vperm.xlu0 %3588, %v3475
        %v3590 = vpop.permute.xlu0 %3589
        %3593 = vset.pattern.permute.xlu0 0
        %3594 = vperm.xlu0 %3593, %v3476
        %v3595 = vpop.permute.xlu0 %3594
        %3598 = vset.pattern.permute.xlu0 0
        %3599 = vperm.xlu0 %3598, %v3477
        %v3600 = vpop.permute.xlu0 %3599
        %3603 = vset.pattern.permute.xlu0 0
        %3604 = vperm.xlu0 %3603, %v3478
        %v3605 = vpop.permute.xlu0 %3604
        %3608 = vset.pattern.permute.xlu0 0
        %3609 = vperm.xlu0 %3608, %v3479
        %v3610 = vpop.permute.xlu0 %3609
        %3613 = vset.pattern.permute.xlu0 0
        %3614 = vperm.xlu0 %3613, %v3480
        %v3615 = vpop.permute.xlu0 %3614
        %3618 = vset.pattern.permute.xlu0 0
        %3619 = vperm.xlu0 %3618, %v3481
        %v3620 = vpop.permute.xlu0 %3619
        %3623 = vset.pattern.permute.xlu0 0
        %3624 = vperm.xlu0 %3623, %v3482
        %v3625 = vpop.permute.xlu0 %3624
        %3628 = vset.pattern.permute.xlu0 0
        %3629 = vperm.xlu0 %3628, %v3483
        %v3630 = vpop.permute.xlu0 %3629
        %3633 = vset.pattern.permute.xlu0 0
        %3634 = vperm.xlu0 %3633, %v3484
        %v3635 = vpop.permute.xlu0 %3634
        %3638 = vset.pattern.permute.xlu0 0
        %3639 = vperm.xlu0 %3638, %v3485
        %v3640 = vpop.permute.xlu0 %3639
        %3643 = vset.pattern.permute.xlu0 0
        %3644 = vperm.xlu0 %3643, %v3486
        %v3645 = vpop.permute.xlu0 %3644
        %3648 = vset.pattern.permute.xlu0 0
        %3649 = vperm.xlu0 %3648, %v3487
        %v3650 = vpop.permute.xlu0 %3649
        %3653 = vset.pattern.permute.xlu0 0
        %3654 = vperm.xlu0 %3653, %v3488
        %v3655 = vpop.permute.xlu0 %3654
        %3658 = vset.pattern.permute.xlu0 0
        %3659 = vperm.xlu0 %3658, %v3489
        %v3660 = vpop.permute.xlu0 %3659
        %3663 = vset.pattern.permute.xlu0 0
        %3664 = vperm.xlu0 %3663, %v3490
        %v3665 = vpop.permute.xlu0 %3664
        %3668 = vset.pattern.permute.xlu0 0
        %3669 = vperm.xlu0 %3668, %v3491
        %v3670 = vpop.permute.xlu0 %3669
        %v3672 = vmul.f32 %v3420, %v3495
        %v3673 = vmul.f32 %v3421, %v3500
        %v3674 = vmul.f32 %v3422, %v3505
        %v3675 = vmul.f32 %v3423, %v3510
        %v3676 = vmul.f32 %v3424, %v3515
        %v3677 = vmul.f32 %v3425, %v3520
        %v3678 = vmul.f32 %v3426, %v3525
        %v3679 = vmul.f32 %v3427, %v3530
        %v3680 = vmul.f32 %v3428, %v3535
        %v3681 = vmul.f32 %v3429, %v3540
        %v3682 = vmul.f32 %v3430, %v3545
        %v3683 = vmul.f32 %v3431, %v3550
        %v3684 = vmul.f32 %v3432, %v3555
        %v3685 = vmul.f32 %v3433, %v3560
        %v3686 = vmul.f32 %v3434, %v3565
        %v3687 = vmul.f32 %v3435, %v3570
        %v3688 = vmul.f32 %v3436, %v3575
        %v3689 = vmul.f32 %v3437, %v3580
        %v3690 = vmul.f32 %v3438, %v3585
        %v3691 = vmul.f32 %v3439, %v3590
        %v3692 = vmul.f32 %v3440, %v3595
        %v3693 = vmul.f32 %v3441, %v3600
        %v3694 = vmul.f32 %v3442, %v3605
        %v3695 = vmul.f32 %v3443, %v3610
        %v3696 = vmul.f32 %v3444, %v3615
        %v3697 = vmul.f32 %v3445, %v3620
        %v3698 = vmul.f32 %v3446, %v3625
        %v3699 = vmul.f32 %v3447, %v3630
        %v3700 = vmul.f32 %v3448, %v3635
        %v3701 = vmul.f32 %v3449, %v3640
        %v3702 = vmul.f32 %v3450, %v3645
        %v3703 = vmul.f32 %v3451, %v3650
        %v3704 = vmul.f32 %v3452, %v3655
        %v3705 = vmul.f32 %v3453, %v3660
        %v3706 = vmul.f32 %v3454, %v3665
        %v3707 = vmul.f32 %v3455, %v3670
        %3708 = vst [vmem:[#allocation2 + $0x38] sm:$0xff] %v3672
        %3709 = vst [vmem:[#allocation2 + $0x80] sm:$0xff] %v3673
        %3710 = vst [vmem:[#allocation2 + $0xc8] sm:$0xff] %v3674
        %3711 = vst [vmem:[#allocation2 + $0x110] sm:$0xff] %v3675
        %3712 = vst [vmem:[#allocation2 + $0x158] sm:$0xff] %v3676
        %3713 = vst [vmem:[#allocation2 + $0x1a0] sm:$0xff] %v3677
        %3714 = vst [vmem:[#allocation2 + $0x1e8] sm:$0xff] %v3678
        %3715 = vst [vmem:[#allocation2 + $0x230] sm:$0xff] %v3679
        %3716 = vst [vmem:[#allocation2 + $0x278] sm:$0xff] %v3680
        %3717 = vst [vmem:[#allocation2 + $0x2c0] sm:$0xff] %v3681
        %3718 = vst [vmem:[#allocation2 + $0x308] sm:$0xff] %v3682
        %3719 = vst [vmem:[#allocation2 + $0x350] sm:$0xff] %v3683
        %3720 = vst [vmem:[#allocation2 + $0x398] sm:$0xff] %v3684
        %3721 = vst [vmem:[#allocation2 + $0x3e0] sm:$0xff] %v3685
        %3722 = vst [vmem:[#allocation2 + $0x428] sm:$0xff] %v3686
        %3723 = vst [vmem:[#allocation2 + $0x470] sm:$0xff] %v3687
        %3724 = vst [vmem:[#allocation2 + $0x4b8] sm:$0xff] %v3688
        %3725 = vst [vmem:[#allocation2 + $0x500] sm:$0xff] %v3689
        %3726 = vst [vmem:[#allocation2 + $0x548] sm:$0xff] %v3690
        %3727 = vst [vmem:[#allocation2 + $0x590] sm:$0xff] %v3691
        %3728 = vst [vmem:[#allocation2 + $0x5d8] sm:$0xff] %v3692
        %3729 = vst [vmem:[#allocation2 + $0x620] sm:$0xff] %v3693
        %3730 = vst [vmem:[#allocation2 + $0x668] sm:$0xff] %v3694
        %3731 = vst [vmem:[#allocation2 + $0x6b0] sm:$0xff] %v3695
        %3732 = vst [vmem:[#allocation2 + $0x6f8] sm:$0xff] %v3696
        %3733 = vst [vmem:[#allocation2 + $0x740] sm:$0xff] %v3697
        %3734 = vst [vmem:[#allocation2 + $0x788] sm:$0xff] %v3698
        %3735 = vst [vmem:[#allocation2 + $0x7d0] sm:$0xff] %v3699
        %3736 = vst [vmem:[#allocation2 + $0x818] sm:$0xff] %v3700
        %3737 = vst [vmem:[#allocation2 + $0x860] sm:$0xff] %v3701
        %3738 = vst [vmem:[#allocation2 + $0x8a8] sm:$0xff] %v3702
        %3739 = vst [vmem:[#allocation2 + $0x8f0] sm:$0xff] %v3703
        %3740 = vst [vmem:[#allocation2 + $0x938] sm:$0xff] %v3704
        %3741 = vst [vmem:[#allocation2 + $0x980] sm:$0xff] %v3705
        %3742 = vst [vmem:[#allocation2 + $0x9c8] sm:$0xff] %v3706
        %3743 = vst [vmem:[#allocation2 + $0xa10] sm:$0x3f] %v3707
        %v3744 = vld [vmem:[%s270 + $0x26] sm:$0xff]
        %v3745 = vld [vmem:[%s270 + $0x2e] sm:$0xff]
        %v3746 = vld [vmem:[%s270 + $0x36] sm:$0xff]
        %v3747 = vld [vmem:[%s270 + $0x3e] sm:$0xff]
        %v3748 = vld [vmem:[%s270 + $0x46] sm:$0xff]
        %v3749 = vld [vmem:[%s270 + $0x4e] sm:$0xff]
        %v3750 = vld [vmem:[%s270 + $0x56] sm:$0xff]
        %v3751 = vld [vmem:[%s270 + $0x5e] sm:$0xff]
        %v3752 = vld [vmem:[%s270 + $0x66] sm:$0xff]
        %v3753 = vld [vmem:[%s270 + $0x6e] sm:$0xff]
        %v3754 = vld [vmem:[%s270 + $0x76] sm:$0xff]
        %v3755 = vld [vmem:[%s270 + $0x7e] sm:$0xff]
        %v3756 = vld [vmem:[%s270 + $0x86] sm:$0xff]
        %v3757 = vld [vmem:[%s270 + $0x8e] sm:$0xff]
        %v3758 = vld [vmem:[%s270 + $0x96] sm:$0xff]
        %v3759 = vld [vmem:[%s270 + $0x9e] sm:$0xff]
        %v3760 = vld [vmem:[%s270 + $0xa6] sm:$0xff]
        %v3761 = vld [vmem:[%s270 + $0xae] sm:$0xff]
        %v3762 = vld [vmem:[%s270 + $0xb6] sm:$0xff]
        %v3763 = vld [vmem:[%s270 + $0xbe] sm:$0xff]
        %v3764 = vld [vmem:[%s270 + $0xc6] sm:$0xff]
        %v3765 = vld [vmem:[%s270 + $0xce] sm:$0xff]
        %v3766 = vld [vmem:[%s270 + $0xd6] sm:$0xff]
        %v3767 = vld [vmem:[%s270 + $0xde] sm:$0xff]
        %v3768 = vld [vmem:[%s270 + $0xe6] sm:$0xff]
        %v3769 = vld [vmem:[%s270 + $0xee] sm:$0xff]
        %v3770 = vld [vmem:[%s270 + $0xf6] sm:$0xff]
        %v3771 = vld [vmem:[%s270 + $0xfe] sm:$0xff]
        %v3772 = vld [vmem:[%s270 + $0x106] sm:$0xff]
        %v3773 = vld [vmem:[%s270 + $0x10e] sm:$0xff]
        %v3774 = vld [vmem:[%s270 + $0x116] sm:$0xff]
        %v3775 = vld [vmem:[%s270 + $0x11e] sm:$0xff]
        %v3776 = vld [vmem:[%s270 + $0x126] sm:$0xff]
        %v3777 = vld [vmem:[%s270 + $0x12e] sm:$0xff]
        %v3778 = vld [vmem:[%s270 + $0x136] sm:$0xff]
        %v3779 = vld [vmem:[%s270 + $0x13e] sm:$0x3f]
        %v3780 = vmul.f32 %v3744, %v319
        %v3781 = vmul.f32 %v3745, %v319
        %v3782 = vmul.f32 %v3746, %v319
        %v3783 = vmul.f32 %v3747, %v319
        %v3784 = vmul.f32 %v3748, %v319
        %v3785 = vmul.f32 %v3749, %v319
        %v3786 = vmul.f32 %v3750, %v319
        %v3787 = vmul.f32 %v3751, %v319
        %v3788 = vmul.f32 %v3752, %v319
        %v3789 = vmul.f32 %v3753, %v319
        %v3790 = vmul.f32 %v3754, %v319
        %v3791 = vmul.f32 %v3755, %v319
        %v3792 = vmul.f32 %v3756, %v319
        %v3793 = vmul.f32 %v3757, %v319
        %v3794 = vmul.f32 %v3758, %v319
        %v3795 = vmul.f32 %v3759, %v319
        %v3796 = vmul.f32 %v3760, %v319
        %v3797 = vmul.f32 %v3761, %v319
        %v3798 = vmul.f32 %v3762, %v319
        %v3799 = vmul.f32 %v3763, %v319
        %v3800 = vmul.f32 %v3764, %v319
        %v3801 = vmul.f32 %v3765, %v319
        %v3802 = vmul.f32 %v3766, %v319
        %v3803 = vmul.f32 %v3767, %v319
        %v3804 = vmul.f32 %v3768, %v319
        %v3805 = vmul.f32 %v3769, %v319
        %v3806 = vmul.f32 %v3770, %v319
        %v3807 = vmul.f32 %v3771, %v319
        %v3808 = vmul.f32 %v3772, %v319
        %v3809 = vmul.f32 %v3773, %v319
        %v3810 = vmul.f32 %v3774, %v319
        %v3811 = vmul.f32 %v3775, %v319
        %v3812 = vmul.f32 %v3776, %v319
        %v3813 = vmul.f32 %v3777, %v319
        %v3814 = vmul.f32 %v3778, %v319
        %v3815 = vmul.f32 %v3779, %v319
        %v3816 = vadd.f32 %v3780, %v358
        %v3817 = vadd.f32 %v3781, %v358
        %v3818 = vadd.f32 %v3782, %v358
        %v3819 = vadd.f32 %v3783, %v358
        %v3820 = vadd.f32 %v3784, %v358
        %v3821 = vadd.f32 %v3785, %v358
        %v3822 = vadd.f32 %v3786, %v358
        %v3823 = vadd.f32 %v3787, %v358
        %v3824 = vadd.f32 %v3788, %v358
        %v3825 = vadd.f32 %v3789, %v358
        %v3826 = vadd.f32 %v3790, %v358
        %v3827 = vadd.f32 %v3791, %v358
        %v3828 = vadd.f32 %v3792, %v358
        %v3829 = vadd.f32 %v3793, %v358
        %v3830 = vadd.f32 %v3794, %v358
        %v3831 = vadd.f32 %v3795, %v358
        %v3832 = vadd.f32 %v3796, %v358
        %v3833 = vadd.f32 %v3797, %v358
        %v3834 = vadd.f32 %v3798, %v358
        %v3835 = vadd.f32 %v3799, %v358
        %v3836 = vadd.f32 %v3800, %v358
        %v3837 = vadd.f32 %v3801, %v358
        %v3838 = vadd.f32 %v3802, %v358
        %v3839 = vadd.f32 %v3803, %v358
        %v3840 = vadd.f32 %v3804, %v358
        %v3841 = vadd.f32 %v3805, %v358
        %v3842 = vadd.f32 %v3806, %v358
        %v3843 = vadd.f32 %v3807, %v358
        %v3844 = vadd.f32 %v3808, %v358
        %v3845 = vadd.f32 %v3809, %v358
        %v3846 = vadd.f32 %v3810, %v358
        %v3847 = vadd.f32 %v3811, %v358
        %v3848 = vadd.f32 %v3812, %v358
        %v3849 = vadd.f32 %v3813, %v358
        %v3850 = vadd.f32 %v3814, %v358
        %v3851 = vadd.f32 %v3815, %v358
        %v3852 = vmax.f32 %v3816, 0.0
        %v3853 = vmax.f32 %v3817, 0.0
        %v3854 = vmax.f32 %v3818, 0.0
        %v3855 = vmax.f32 %v3819, 0.0
        %v3856 = vmax.f32 %v3820, 0.0
        %v3857 = vmax.f32 %v3821, 0.0
        %v3858 = vmax.f32 %v3822, 0.0
        %v3859 = vmax.f32 %v3823, 0.0
        %v3860 = vmax.f32 %v3824, 0.0
        %v3861 = vmax.f32 %v3825, 0.0
        %v3862 = vmax.f32 %v3826, 0.0
        %v3863 = vmax.f32 %v3827, 0.0
        %v3864 = vmax.f32 %v3828, 0.0
        %v3865 = vmax.f32 %v3829, 0.0
        %v3866 = vmax.f32 %v3830, 0.0
        %v3867 = vmax.f32 %v3831, 0.0
        %v3868 = vmax.f32 %v3832, 0.0
        %v3869 = vmax.f32 %v3833, 0.0
        %v3870 = vmax.f32 %v3834, 0.0
        %v3871 = vmax.f32 %v3835, 0.0
        %v3872 = vmax.f32 %v3836, 0.0
        %v3873 = vmax.f32 %v3837, 0.0
        %v3874 = vmax.f32 %v3838, 0.0
        %v3875 = vmax.f32 %v3839, 0.0
        %v3876 = vmax.f32 %v3840, 0.0
        %v3877 = vmax.f32 %v3841, 0.0
        %v3878 = vmax.f32 %v3842, 0.0
        %v3879 = vmax.f32 %v3843, 0.0
        %v3880 = vmax.f32 %v3844, 0.0
        %v3881 = vmax.f32 %v3845, 0.0
        %v3882 = vmax.f32 %v3846, 0.0
        %v3883 = vmax.f32 %v3847, 0.0
        %v3884 = vmax.f32 %v3848, 0.0
        %v3885 = vmax.f32 %v3849, 0.0
        %v3886 = vmax.f32 %v3850, 0.0
        %v3887 = vmax.f32 %v3851, 0.0
        %v3888 = vld [vmem:[%s4 + $0x26] sm:$0xff]
        %v3889 = vld [vmem:[%s4 + $0x2e] sm:$0xff]
        %v3890 = vld [vmem:[%s4 + $0x36] sm:$0xff]
        %v3891 = vld [vmem:[%s4 + $0x3e] sm:$0xff]
        %v3892 = vld [vmem:[%s4 + $0x46] sm:$0xff]
        %v3893 = vld [vmem:[%s4 + $0x4e] sm:$0xff]
        %v3894 = vld [vmem:[%s4 + $0x56] sm:$0xff]
        %v3895 = vld [vmem:[%s4 + $0x5e] sm:$0xff]
        %v3896 = vld [vmem:[%s4 + $0x66] sm:$0xff]
        %v3897 = vld [vmem:[%s4 + $0x6e] sm:$0xff]
        %v3898 = vld [vmem:[%s4 + $0x76] sm:$0xff]
        %v3899 = vld [vmem:[%s4 + $0x7e] sm:$0xff]
        %v3900 = vld [vmem:[%s4 + $0x86] sm:$0xff]
        %v3901 = vld [vmem:[%s4 + $0x8e] sm:$0xff]
        %v3902 = vld [vmem:[%s4 + $0x96] sm:$0xff]
        %v3903 = vld [vmem:[%s4 + $0x9e] sm:$0xff]
        %v3904 = vld [vmem:[%s4 + $0xa6] sm:$0xff]
        %v3905 = vld [vmem:[%s4 + $0xae] sm:$0xff]
        %v3906 = vld [vmem:[%s4 + $0xb6] sm:$0xff]
        %v3907 = vld [vmem:[%s4 + $0xbe] sm:$0xff]
        %v3908 = vld [vmem:[%s4 + $0xc6] sm:$0xff]
        %v3909 = vld [vmem:[%s4 + $0xce] sm:$0xff]
        %v3910 = vld [vmem:[%s4 + $0xd6] sm:$0xff]
        %v3911 = vld [vmem:[%s4 + $0xde] sm:$0xff]
        %v3912 = vld [vmem:[%s4 + $0xe6] sm:$0xff]
        %v3913 = vld [vmem:[%s4 + $0xee] sm:$0xff]
        %v3914 = vld [vmem:[%s4 + $0xf6] sm:$0xff]
        %v3915 = vld [vmem:[%s4 + $0xfe] sm:$0xff]
        %v3916 = vld [vmem:[%s4 + $0x106] sm:$0xff]
        %v3917 = vld [vmem:[%s4 + $0x10e] sm:$0xff]
        %v3918 = vld [vmem:[%s4 + $0x116] sm:$0xff]
        %v3919 = vld [vmem:[%s4 + $0x11e] sm:$0xff]
        %v3920 = vld [vmem:[%s4 + $0x126] sm:$0xff]
        %v3921 = vld [vmem:[%s4 + $0x12e] sm:$0xff]
        %v3922 = vld [vmem:[%s4 + $0x136] sm:$0xff]
        %v3923 = vld [vmem:[%s4 + $0x13e] sm:$0x3f]
        %3925 = vset.pattern.permute.xlu0 0
        %3926 = vperm.xlu0 %3925, %v3888
        %v3927 = vpop.permute.xlu0 %3926
        %3930 = vset.pattern.permute.xlu0 0
        %3931 = vperm.xlu0 %3930, %v3889
        %v3932 = vpop.permute.xlu0 %3931
        %3935 = vset.pattern.permute.xlu0 0
        %3936 = vperm.xlu0 %3935, %v3890
        %v3937 = vpop.permute.xlu0 %3936
        %3940 = vset.pattern.permute.xlu0 0
        %3941 = vperm.xlu0 %3940, %v3891
        %v3942 = vpop.permute.xlu0 %3941
        %3945 = vset.pattern.permute.xlu0 0
        %3946 = vperm.xlu0 %3945, %v3892
        %v3947 = vpop.permute.xlu0 %3946
        %3950 = vset.pattern.permute.xlu0 0
        %3951 = vperm.xlu0 %3950, %v3893
        %v3952 = vpop.permute.xlu0 %3951
        %3955 = vset.pattern.permute.xlu0 0
        %3956 = vperm.xlu0 %3955, %v3894
        %v3957 = vpop.permute.xlu0 %3956
        %3960 = vset.pattern.permute.xlu0 0
        %3961 = vperm.xlu0 %3960, %v3895
        %v3962 = vpop.permute.xlu0 %3961
        %3965 = vset.pattern.permute.xlu0 0
        %3966 = vperm.xlu0 %3965, %v3896
        %v3967 = vpop.permute.xlu0 %3966
        %3970 = vset.pattern.permute.xlu0 0
        %3971 = vperm.xlu0 %3970, %v3897
        %v3972 = vpop.permute.xlu0 %3971
        %3975 = vset.pattern.permute.xlu0 0
        %3976 = vperm.xlu0 %3975, %v3898
        %v3977 = vpop.permute.xlu0 %3976
        %3980 = vset.pattern.permute.xlu0 0
        %3981 = vperm.xlu0 %3980, %v3899
        %v3982 = vpop.permute.xlu0 %3981
        %3985 = vset.pattern.permute.xlu0 0
        %3986 = vperm.xlu0 %3985, %v3900
        %v3987 = vpop.permute.xlu0 %3986
        %3990 = vset.pattern.permute.xlu0 0
        %3991 = vperm.xlu0 %3990, %v3901
        %v3992 = vpop.permute.xlu0 %3991
        %3995 = vset.pattern.permute.xlu0 0
        %3996 = vperm.xlu0 %3995, %v3902
        %v3997 = vpop.permute.xlu0 %3996
        %4000 = vset.pattern.permute.xlu0 0
        %4001 = vperm.xlu0 %4000, %v3903
        %v4002 = vpop.permute.xlu0 %4001
        %4005 = vset.pattern.permute.xlu0 0
        %4006 = vperm.xlu0 %4005, %v3904
        %v4007 = vpop.permute.xlu0 %4006
        %4010 = vset.pattern.permute.xlu0 0
        %4011 = vperm.xlu0 %4010, %v3905
        %v4012 = vpop.permute.xlu0 %4011
        %4015 = vset.pattern.permute.xlu0 0
        %4016 = vperm.xlu0 %4015, %v3906
        %v4017 = vpop.permute.xlu0 %4016
        %4020 = vset.pattern.permute.xlu0 0
        %4021 = vperm.xlu0 %4020, %v3907
        %v4022 = vpop.permute.xlu0 %4021
        %4025 = vset.pattern.permute.xlu0 0
        %4026 = vperm.xlu0 %4025, %v3908
        %v4027 = vpop.permute.xlu0 %4026
        %4030 = vset.pattern.permute.xlu0 0
        %4031 = vperm.xlu0 %4030, %v3909
        %v4032 = vpop.permute.xlu0 %4031
        %4035 = vset.pattern.permute.xlu0 0
        %4036 = vperm.xlu0 %4035, %v3910
        %v4037 = vpop.permute.xlu0 %4036
        %4040 = vset.pattern.permute.xlu0 0
        %4041 = vperm.xlu0 %4040, %v3911
        %v4042 = vpop.permute.xlu0 %4041
        %4045 = vset.pattern.permute.xlu0 0
        %4046 = vperm.xlu0 %4045, %v3912
        %v4047 = vpop.permute.xlu0 %4046
        %4050 = vset.pattern.permute.xlu0 0
        %4051 = vperm.xlu0 %4050, %v3913
        %v4052 = vpop.permute.xlu0 %4051
        %4055 = vset.pattern.permute.xlu0 0
        %4056 = vperm.xlu0 %4055, %v3914
        %v4057 = vpop.permute.xlu0 %4056
        %4060 = vset.pattern.permute.xlu0 0
        %4061 = vperm.xlu0 %4060, %v3915
        %v4062 = vpop.permute.xlu0 %4061
        %4065 = vset.pattern.permute.xlu0 0
        %4066 = vperm.xlu0 %4065, %v3916
        %v4067 = vpop.permute.xlu0 %4066
        %4070 = vset.pattern.permute.xlu0 0
        %4071 = vperm.xlu0 %4070, %v3917
        %v4072 = vpop.permute.xlu0 %4071
        %4075 = vset.pattern.permute.xlu0 0
        %4076 = vperm.xlu0 %4075, %v3918
        %v4077 = vpop.permute.xlu0 %4076
        %4080 = vset.pattern.permute.xlu0 0
        %4081 = vperm.xlu0 %4080, %v3919
        %v4082 = vpop.permute.xlu0 %4081
        %4085 = vset.pattern.permute.xlu0 0
        %4086 = vperm.xlu0 %4085, %v3920
        %v4087 = vpop.permute.xlu0 %4086
        %4090 = vset.pattern.permute.xlu0 0
        %4091 = vperm.xlu0 %4090, %v3921
        %v4092 = vpop.permute.xlu0 %4091
        %4095 = vset.pattern.permute.xlu0 0
        %4096 = vperm.xlu0 %4095, %v3922
        %v4097 = vpop.permute.xlu0 %4096
        %4100 = vset.pattern.permute.xlu0 0
        %4101 = vperm.xlu0 %4100, %v3923
        %v4102 = vpop.permute.xlu0 %4101
        %v4104 = vmul.f32 %v3852, %v3927
        %v4105 = vmul.f32 %v3853, %v3932
        %v4106 = vmul.f32 %v3854, %v3937
        %v4107 = vmul.f32 %v3855, %v3942
        %v4108 = vmul.f32 %v3856, %v3947
        %v4109 = vmul.f32 %v3857, %v3952
        %v4110 = vmul.f32 %v3858, %v3957
        %v4111 = vmul.f32 %v3859, %v3962
        %v4112 = vmul.f32 %v3860, %v3967
        %v4113 = vmul.f32 %v3861, %v3972
        %v4114 = vmul.f32 %v3862, %v3977
        %v4115 = vmul.f32 %v3863, %v3982
        %v4116 = vmul.f32 %v3864, %v3987
        %v4117 = vmul.f32 %v3865, %v3992
        %v4118 = vmul.f32 %v3866, %v3997
        %v4119 = vmul.f32 %v3867, %v4002
        %v4120 = vmul.f32 %v3868, %v4007
        %v4121 = vmul.f32 %v3869, %v4012
        %v4122 = vmul.f32 %v3870, %v4017
        %v4123 = vmul.f32 %v3871, %v4022
        %v4124 = vmul.f32 %v3872, %v4027
        %v4125 = vmul.f32 %v3873, %v4032
        %v4126 = vmul.f32 %v3874, %v4037
        %v4127 = vmul.f32 %v3875, %v4042
        %v4128 = vmul.f32 %v3876, %v4047
        %v4129 = vmul.f32 %v3877, %v4052
        %v4130 = vmul.f32 %v3878, %v4057
        %v4131 = vmul.f32 %v3879, %v4062
        %v4132 = vmul.f32 %v3880, %v4067
        %v4133 = vmul.f32 %v3881, %v4072
        %v4134 = vmul.f32 %v3882, %v4077
        %v4135 = vmul.f32 %v3883, %v4082
        %v4136 = vmul.f32 %v3884, %v4087
        %v4137 = vmul.f32 %v3885, %v4092
        %v4138 = vmul.f32 %v3886, %v4097
        %v4139 = vmul.f32 %v3887, %v4102
        %4140 = vst [vmem:[#allocation2 + $0x40] sm:$0xff] %v4104
        %4141 = vst [vmem:[#allocation2 + $0x88] sm:$0xff] %v4105
        %4142 = vst [vmem:[#allocation2 + $0xd0] sm:$0xff] %v4106
        %4143 = vst [vmem:[#allocation2 + $0x118] sm:$0xff] %v4107
        %4144 = vst [vmem:[#allocation2 + $0x160] sm:$0xff] %v4108
        %4145 = vst [vmem:[#allocation2 + $0x1a8] sm:$0xff] %v4109
        %4146 = vst [vmem:[#allocation2 + $0x1f0] sm:$0xff] %v4110
        %4147 = vst [vmem:[#allocation2 + $0x238] sm:$0xff] %v4111
        %4148 = vst [vmem:[#allocation2 + $0x280] sm:$0xff] %v4112
        %4149 = vst [vmem:[#allocation2 + $0x2c8] sm:$0xff] %v4113
        %4150 = vst [vmem:[#allocation2 + $0x310] sm:$0xff] %v4114
        %4151 = vst [vmem:[#allocation2 + $0x358] sm:$0xff] %v4115
        %4152 = vst [vmem:[#allocation2 + $0x3a0] sm:$0xff] %v4116
        %4153 = vst [vmem:[#allocation2 + $0x3e8] sm:$0xff] %v4117
        %4154 = vst [vmem:[#allocation2 + $0x430] sm:$0xff] %v4118
        %4155 = vst [vmem:[#allocation2 + $0x478] sm:$0xff] %v4119
        %4156 = vst [vmem:[#allocation2 + $0x4c0] sm:$0xff] %v4120
        %4157 = vst [vmem:[#allocation2 + $0x508] sm:$0xff] %v4121
        %4158 = vst [vmem:[#allocation2 + $0x550] sm:$0xff] %v4122
        %4159 = vst [vmem:[#allocation2 + $0x598] sm:$0xff] %v4123
        %4160 = vst [vmem:[#allocation2 + $0x5e0] sm:$0xff] %v4124
        %4161 = vst [vmem:[#allocation2 + $0x628] sm:$0xff] %v4125
        %4162 = vst [vmem:[#allocation2 + $0x670] sm:$0xff] %v4126
        %4163 = vst [vmem:[#allocation2 + $0x6b8] sm:$0xff] %v4127
        %4164 = vst [vmem:[#allocation2 + $0x700] sm:$0xff] %v4128
        %4165 = vst [vmem:[#allocation2 + $0x748] sm:$0xff] %v4129
        %4166 = vst [vmem:[#allocation2 + $0x790] sm:$0xff] %v4130
        %4167 = vst [vmem:[#allocation2 + $0x7d8] sm:$0xff] %v4131
        %4168 = vst [vmem:[#allocation2 + $0x820] sm:$0xff] %v4132
        %4169 = vst [vmem:[#allocation2 + $0x868] sm:$0xff] %v4133
        %4170 = vst [vmem:[#allocation2 + $0x8b0] sm:$0xff] %v4134
        %4171 = vst [vmem:[#allocation2 + $0x8f8] sm:$0xff] %v4135
        %4172 = vst [vmem:[#allocation2 + $0x940] sm:$0xff] %v4136
        %4173 = vst [vmem:[#allocation2 + $0x988] sm:$0xff] %v4137
        %4174 = vst [vmem:[#allocation2 + $0x9d0] sm:$0xff] %v4138
        %4175 = vst [vmem:[#allocation2 + $0xa18] sm:$0x3f] %v4139
        %v4176 = vld [vmem:[#allocation2] sm:$0xff]
        %v4177 = vld [vmem:[#allocation2 + $0x8] sm:$0xff]
        %v4178 = vld [vmem:[#allocation2 + $0x10] sm:$0xff]
        %v4179 = vld [vmem:[#allocation2 + $0x18] sm:$0xff]
        %v4180 = vld [vmem:[#allocation2 + $0x20] sm:$0xff]
        %v4181 = vld [vmem:[#allocation2 + $0x28] sm:$0xff]
        %v4182 = vld [vmem:[#allocation2 + $0x30] sm:$0xff]
        %v4183 = vld [vmem:[#allocation2 + $0x38] sm:$0xff]
        %v4184 = vld [vmem:[#allocation2 + $0x40] sm:$0xff]
        %v4185 = vld [vmem:[#allocation2 + $0x48] sm:$0xff]
        %v4186 = vld [vmem:[#allocation2 + $0x50] sm:$0xff]
        %v4187 = vld [vmem:[#allocation2 + $0x58] sm:$0xff]
        %v4188 = vld [vmem:[#allocation2 + $0x60] sm:$0xff]
        %v4189 = vld [vmem:[#allocation2 + $0x68] sm:$0xff]
        %v4190 = vld [vmem:[#allocation2 + $0x70] sm:$0xff]
        %v4191 = vld [vmem:[#allocation2 + $0x78] sm:$0xff]
        %v4192 = vld [vmem:[#allocation2 + $0x80] sm:$0xff]
        %v4193 = vld [vmem:[#allocation2 + $0x88] sm:$0xff]
        %v4194 = vld [vmem:[#allocation2 + $0x90] sm:$0xff]
        %v4195 = vld [vmem:[#allocation2 + $0x98] sm:$0xff]
        %v4196 = vld [vmem:[#allocation2 + $0xa0] sm:$0xff]
        %v4197 = vld [vmem:[#allocation2 + $0xa8] sm:$0xff]
        %v4198 = vld [vmem:[#allocation2 + $0xb0] sm:$0xff]
        %v4199 = vld [vmem:[#allocation2 + $0xb8] sm:$0xff]
        %v4200 = vld [vmem:[#allocation2 + $0xc0] sm:$0xff]
        %v4201 = vld [vmem:[#allocation2 + $0xc8] sm:$0xff]
        %v4202 = vld [vmem:[#allocation2 + $0xd0] sm:$0xff]
        %v4203 = vld [vmem:[#allocation2 + $0xd8] sm:$0xff]
        %v4204 = vld [vmem:[#allocation2 + $0xe0] sm:$0xff]
        %v4205 = vld [vmem:[#allocation2 + $0xe8] sm:$0xff]
        %v4206 = vld [vmem:[#allocation2 + $0xf0] sm:$0xff]
        %v4207 = vld [vmem:[#allocation2 + $0xf8] sm:$0xff]
        %v4208 = vld [vmem:[#allocation2 + $0x100] sm:$0xff]
        %v4209 = vld [vmem:[#allocation2 + $0x108] sm:$0xff]
        %v4210 = vld [vmem:[#allocation2 + $0x110] sm:$0xff]
        %v4211 = vld [vmem:[#allocation2 + $0x118] sm:$0xff]
        %v4212 = vld [vmem:[#allocation2 + $0x120] sm:$0xff]
        %v4213 = vld [vmem:[#allocation2 + $0x128] sm:$0xff]
        %v4214 = vld [vmem:[#allocation2 + $0x130] sm:$0xff]
        %v4215 = vld [vmem:[#allocation2 + $0x138] sm:$0xff]
        %v4216 = vld [vmem:[#allocation2 + $0x140] sm:$0xff]
        %v4217 = vld [vmem:[#allocation2 + $0x148] sm:$0xff]
        %v4218 = vld [vmem:[#allocation2 + $0x150] sm:$0xff]
        %v4219 = vld [vmem:[#allocation2 + $0x158] sm:$0xff]
        %v4220 = vld [vmem:[#allocation2 + $0x160] sm:$0xff]
        %v4221 = vld [vmem:[#allocation2 + $0x168] sm:$0xff]
        %v4222 = vld [vmem:[#allocation2 + $0x170] sm:$0xff]
        %v4223 = vld [vmem:[#allocation2 + $0x178] sm:$0xff]
        %v4224 = vld [vmem:[#allocation2 + $0x180] sm:$0xff]
        %v4225 = vld [vmem:[#allocation2 + $0x188] sm:$0xff]
        %v4226 = vld [vmem:[#allocation2 + $0x190] sm:$0xff]
        %v4227 = vld [vmem:[#allocation2 + $0x198] sm:$0xff]
        %v4228 = vld [vmem:[#allocation2 + $0x1a0] sm:$0xff]
        %v4229 = vld [vmem:[#allocation2 + $0x1a8] sm:$0xff]
        %v4230 = vld [vmem:[#allocation2 + $0x1b0] sm:$0xff]
        %v4231 = vld [vmem:[#allocation2 + $0x1b8] sm:$0xff]
        %v4232 = vld [vmem:[#allocation2 + $0x1c0] sm:$0xff]
        %v4233 = vld [vmem:[#allocation2 + $0x1c8] sm:$0xff]
        %v4234 = vld [vmem:[#allocation2 + $0x1d0] sm:$0xff]
        %v4235 = vld [vmem:[#allocation2 + $0x1d8] sm:$0xff]
        %v4236 = vld [vmem:[#allocation2 + $0x1e0] sm:$0xff]
        %v4237 = vld [vmem:[#allocation2 + $0x1e8] sm:$0xff]
        %v4238 = vld [vmem:[#allocation2 + $0x1f0] sm:$0xff]
        %v4239 = vld [vmem:[#allocation2 + $0x1f8] sm:$0xff]
        %v4240 = vld [vmem:[#allocation2 + $0x200] sm:$0xff]
        %v4241 = vld [vmem:[#allocation2 + $0x208] sm:$0xff]
        %v4242 = vld [vmem:[#allocation2 + $0x210] sm:$0xff]
        %v4243 = vld [vmem:[#allocation2 + $0x218] sm:$0xff]
        %v4244 = vld [vmem:[#allocation2 + $0x220] sm:$0xff]
        %v4245 = vld [vmem:[#allocation2 + $0x228] sm:$0xff]
        %v4246 = vld [vmem:[#allocation2 + $0x230] sm:$0xff]
        %v4247 = vld [vmem:[#allocation2 + $0x238] sm:$0xff]
        %v4248 = vld [vmem:[#allocation2 + $0x240] sm:$0xff]
        %v4249 = vld [vmem:[#allocation2 + $0x248] sm:$0xff]
        %v4250 = vld [vmem:[#allocation2 + $0x250] sm:$0xff]
        %v4251 = vld [vmem:[#allocation2 + $0x258] sm:$0xff]
        %v4252 = vld [vmem:[#allocation2 + $0x260] sm:$0xff]
        %v4253 = vld [vmem:[#allocation2 + $0x268] sm:$0xff]
        %v4254 = vld [vmem:[#allocation2 + $0x270] sm:$0xff]
        %v4255 = vld [vmem:[#allocation2 + $0x278] sm:$0xff]
        %v4256 = vld [vmem:[#allocation2 + $0x280] sm:$0xff]
        %v4257 = vld [vmem:[#allocation2 + $0x288] sm:$0xff]
        %v4258 = vld [vmem:[#allocation2 + $0x290] sm:$0xff]
        %v4259 = vld [vmem:[#allocation2 + $0x298] sm:$0xff]
        %v4260 = vld [vmem:[#allocation2 + $0x2a0] sm:$0xff]
        %v4261 = vld [vmem:[#allocation2 + $0x2a8] sm:$0xff]
        %v4262 = vld [vmem:[#allocation2 + $0x2b0] sm:$0xff]
        %v4263 = vld [vmem:[#allocation2 + $0x2b8] sm:$0xff]
        %v4264 = vld [vmem:[#allocation2 + $0x2c0] sm:$0xff]
        %v4265 = vld [vmem:[#allocation2 + $0x2c8] sm:$0xff]
        %v4266 = vld [vmem:[#allocation2 + $0x2d0] sm:$0xff]
        %v4267 = vld [vmem:[#allocation2 + $0x2d8] sm:$0xff]
        %v4268 = vld [vmem:[#allocation2 + $0x2e0] sm:$0xff]
        %v4269 = vld [vmem:[#allocation2 + $0x2e8] sm:$0xff]
        %v4270 = vld [vmem:[#allocation2 + $0x2f0] sm:$0xff]
        %v4271 = vld [vmem:[#allocation2 + $0x2f8] sm:$0xff]
        %v4272 = vld [vmem:[#allocation2 + $0x300] sm:$0xff]
        %v4273 = vld [vmem:[#allocation2 + $0x308] sm:$0xff]
        %v4274 = vld [vmem:[#allocation2 + $0x310] sm:$0xff]
        %v4275 = vld [vmem:[#allocation2 + $0x318] sm:$0xff]
        %v4276 = vld [vmem:[#allocation2 + $0x320] sm:$0xff]
        %v4277 = vld [vmem:[#allocation2 + $0x328] sm:$0xff]
        %v4278 = vld [vmem:[#allocation2 + $0x330] sm:$0xff]
        %v4279 = vld [vmem:[#allocation2 + $0x338] sm:$0xff]
        %v4280 = vld [vmem:[#allocation2 + $0x340] sm:$0xff]
        %v4281 = vld [vmem:[#allocation2 + $0x348] sm:$0xff]
        %v4282 = vld [vmem:[#allocation2 + $0x350] sm:$0xff]
        %v4283 = vld [vmem:[#allocation2 + $0x358] sm:$0xff]
        %v4284 = vld [vmem:[#allocation2 + $0x360] sm:$0xff]
        %v4285 = vld [vmem:[#allocation2 + $0x368] sm:$0xff]
        %v4286 = vld [vmem:[#allocation2 + $0x370] sm:$0xff]
        %v4287 = vld [vmem:[#allocation2 + $0x378] sm:$0xff]
        %v4288 = vld [vmem:[#allocation2 + $0x380] sm:$0xff]
        %v4289 = vld [vmem:[#allocation2 + $0x388] sm:$0xff]
        %v4290 = vld [vmem:[#allocation2 + $0x390] sm:$0xff]
        %v4291 = vld [vmem:[#allocation2 + $0x398] sm:$0xff]
        %v4292 = vld [vmem:[#allocation2 + $0x3a0] sm:$0xff]
        %v4293 = vld [vmem:[#allocation2 + $0x3a8] sm:$0xff]
        %v4294 = vld [vmem:[#allocation2 + $0x3b0] sm:$0xff]
        %v4295 = vld [vmem:[#allocation2 + $0x3b8] sm:$0xff]
        %v4296 = vld [vmem:[#allocation2 + $0x3c0] sm:$0xff]
        %v4297 = vld [vmem:[#allocation2 + $0x3c8] sm:$0xff]
        %v4298 = vld [vmem:[#allocation2 + $0x3d0] sm:$0xff]
        %v4299 = vld [vmem:[#allocation2 + $0x3d8] sm:$0xff]
        %v4300 = vld [vmem:[#allocation2 + $0x3e0] sm:$0xff]
        %v4301 = vld [vmem:[#allocation2 + $0x3e8] sm:$0xff]
        %v4302 = vld [vmem:[#allocation2 + $0x3f0] sm:$0xff]
        %v4303 = vld [vmem:[#allocation2 + $0x3f8] sm:$0xff]
        %v4304 = vld [vmem:[#allocation2 + $0x400] sm:$0xff]
        %v4305 = vld [vmem:[#allocation2 + $0x408] sm:$0xff]
        %v4306 = vld [vmem:[#allocation2 + $0x410] sm:$0xff]
        %v4307 = vld [vmem:[#allocation2 + $0x418] sm:$0xff]
        %v4308 = vld [vmem:[#allocation2 + $0x420] sm:$0xff]
        %v4309 = vld [vmem:[#allocation2 + $0x428] sm:$0xff]
        %v4310 = vld [vmem:[#allocation2 + $0x430] sm:$0xff]
        %v4311 = vld [vmem:[#allocation2 + $0x438] sm:$0xff]
        %v4312 = vld [vmem:[#allocation2 + $0x440] sm:$0xff]
        %v4313 = vld [vmem:[#allocation2 + $0x448] sm:$0xff]
        %v4314 = vld [vmem:[#allocation2 + $0x450] sm:$0xff]
        %v4315 = vld [vmem:[#allocation2 + $0x458] sm:$0xff]
        %v4316 = vld [vmem:[#allocation2 + $0x460] sm:$0xff]
        %v4317 = vld [vmem:[#allocation2 + $0x468] sm:$0xff]
        %v4318 = vld [vmem:[#allocation2 + $0x470] sm:$0xff]
        %v4319 = vld [vmem:[#allocation2 + $0x478] sm:$0xff]
        %v4320 = vld [vmem:[#allocation2 + $0x480] sm:$0xff]
        %v4321 = vld [vmem:[#allocation2 + $0x488] sm:$0xff]
        %v4322 = vld [vmem:[#allocation2 + $0x490] sm:$0xff]
        %v4323 = vld [vmem:[#allocation2 + $0x498] sm:$0xff]
        %v4324 = vld [vmem:[#allocation2 + $0x4a0] sm:$0xff]
        %v4325 = vld [vmem:[#allocation2 + $0x4a8] sm:$0xff]
        %v4326 = vld [vmem:[#allocation2 + $0x4b0] sm:$0xff]
        %v4327 = vld [vmem:[#allocation2 + $0x4b8] sm:$0xff]
        %v4328 = vld [vmem:[#allocation2 + $0x4c0] sm:$0xff]
        %v4329 = vld [vmem:[#allocation2 + $0x4c8] sm:$0xff]
        %v4330 = vld [vmem:[#allocation2 + $0x4d0] sm:$0xff]
        %v4331 = vld [vmem:[#allocation2 + $0x4d8] sm:$0xff]
        %v4332 = vld [vmem:[#allocation2 + $0x4e0] sm:$0xff]
        %v4333 = vld [vmem:[#allocation2 + $0x4e8] sm:$0xff]
        %v4334 = vld [vmem:[#allocation2 + $0x4f0] sm:$0xff]
        %v4335 = vld [vmem:[#allocation2 + $0x4f8] sm:$0xff]
        %v4336 = vld [vmem:[#allocation2 + $0x500] sm:$0xff]
        %v4337 = vld [vmem:[#allocation2 + $0x508] sm:$0xff]
        %v4338 = vld [vmem:[#allocation2 + $0x510] sm:$0xff]
        %v4339 = vld [vmem:[#allocation2 + $0x518] sm:$0xff]
        %v4340 = vld [vmem:[#allocation2 + $0x520] sm:$0xff]
        %v4341 = vld [vmem:[#allocation2 + $0x528] sm:$0xff]
        %v4342 = vld [vmem:[#allocation2 + $0x530] sm:$0xff]
        %v4343 = vld [vmem:[#allocation2 + $0x538] sm:$0xff]
        %v4344 = vld [vmem:[#allocation2 + $0x540] sm:$0xff]
        %v4345 = vld [vmem:[#allocation2 + $0x548] sm:$0xff]
        %v4346 = vld [vmem:[#allocation2 + $0x550] sm:$0xff]
        %v4347 = vld [vmem:[#allocation2 + $0x558] sm:$0xff]
        %v4348 = vld [vmem:[#allocation2 + $0x560] sm:$0xff]
        %v4349 = vld [vmem:[#allocation2 + $0x568] sm:$0xff]
        %v4350 = vld [vmem:[#allocation2 + $0x570] sm:$0xff]
        %v4351 = vld [vmem:[#allocation2 + $0x578] sm:$0xff]
        %v4352 = vld [vmem:[#allocation2 + $0x580] sm:$0xff]
        %v4353 = vld [vmem:[#allocation2 + $0x588] sm:$0xff]
        %v4354 = vld [vmem:[#allocation2 + $0x590] sm:$0xff]
        %v4355 = vld [vmem:[#allocation2 + $0x598] sm:$0xff]
        %v4356 = vld [vmem:[#allocation2 + $0x5a0] sm:$0xff]
        %v4357 = vld [vmem:[#allocation2 + $0x5a8] sm:$0xff]
        %v4358 = vld [vmem:[#allocation2 + $0x5b0] sm:$0xff]
        %v4359 = vld [vmem:[#allocation2 + $0x5b8] sm:$0xff]
        %v4360 = vld [vmem:[#allocation2 + $0x5c0] sm:$0xff]
        %v4361 = vld [vmem:[#allocation2 + $0x5c8] sm:$0xff]
        %v4362 = vld [vmem:[#allocation2 + $0x5d0] sm:$0xff]
        %v4363 = vld [vmem:[#allocation2 + $0x5d8] sm:$0xff]
        %v4364 = vld [vmem:[#allocation2 + $0x5e0] sm:$0xff]
        %v4365 = vld [vmem:[#allocation2 + $0x5e8] sm:$0xff]
        %v4366 = vld [vmem:[#allocation2 + $0x5f0] sm:$0xff]
        %v4367 = vld [vmem:[#allocation2 + $0x5f8] sm:$0xff]
        %v4368 = vld [vmem:[#allocation2 + $0x600] sm:$0xff]
        %v4369 = vld [vmem:[#allocation2 + $0x608] sm:$0xff]
        %v4370 = vld [vmem:[#allocation2 + $0x610] sm:$0xff]
        %v4371 = vld [vmem:[#allocation2 + $0x618] sm:$0xff]
        %v4372 = vld [vmem:[#allocation2 + $0x620] sm:$0xff]
        %v4373 = vld [vmem:[#allocation2 + $0x628] sm:$0xff]
        %v4374 = vld [vmem:[#allocation2 + $0x630] sm:$0xff]
        %v4375 = vld [vmem:[#allocation2 + $0x638] sm:$0xff]
        %v4376 = vld [vmem:[#allocation2 + $0x640] sm:$0xff]
        %v4377 = vld [vmem:[#allocation2 + $0x648] sm:$0xff]
        %v4378 = vld [vmem:[#allocation2 + $0x650] sm:$0xff]
        %v4379 = vld [vmem:[#allocation2 + $0x658] sm:$0xff]
        %v4380 = vld [vmem:[#allocation2 + $0x660] sm:$0xff]
        %v4381 = vld [vmem:[#allocation2 + $0x668] sm:$0xff]
        %v4382 = vld [vmem:[#allocation2 + $0x670] sm:$0xff]
        %v4383 = vld [vmem:[#allocation2 + $0x678] sm:$0xff]
        %v4384 = vld [vmem:[#allocation2 + $0x680] sm:$0xff]
        %v4385 = vld [vmem:[#allocation2 + $0x688] sm:$0xff]
        %v4386 = vld [vmem:[#allocation2 + $0x690] sm:$0xff]
        %v4387 = vld [vmem:[#allocation2 + $0x698] sm:$0xff]
        %v4388 = vld [vmem:[#allocation2 + $0x6a0] sm:$0xff]
        %v4389 = vld [vmem:[#allocation2 + $0x6a8] sm:$0xff]
        %v4390 = vld [vmem:[#allocation2 + $0x6b0] sm:$0xff]
        %v4391 = vld [vmem:[#allocation2 + $0x6b8] sm:$0xff]
        %v4392 = vld [vmem:[#allocation2 + $0x6c0] sm:$0xff]
        %v4393 = vld [vmem:[#allocation2 + $0x6c8] sm:$0xff]
        %v4394 = vld [vmem:[#allocation2 + $0x6d0] sm:$0xff]
        %v4395 = vld [vmem:[#allocation2 + $0x6d8] sm:$0xff]
        %v4396 = vld [vmem:[#allocation2 + $0x6e0] sm:$0xff]
        %v4397 = vld [vmem:[#allocation2 + $0x6e8] sm:$0xff]
        %v4398 = vld [vmem:[#allocation2 + $0x6f0] sm:$0xff]
        %v4399 = vld [vmem:[#allocation2 + $0x6f8] sm:$0xff]
        %v4400 = vld [vmem:[#allocation2 + $0x700] sm:$0xff]
        %v4401 = vld [vmem:[#allocation2 + $0x708] sm:$0xff]
        %v4402 = vld [vmem:[#allocation2 + $0x710] sm:$0xff]
        %v4403 = vld [vmem:[#allocation2 + $0x718] sm:$0xff]
        %v4404 = vld [vmem:[#allocation2 + $0x720] sm:$0xff]
        %v4405 = vld [vmem:[#allocation2 + $0x728] sm:$0xff]
        %v4406 = vld [vmem:[#allocation2 + $0x730] sm:$0xff]
        %v4407 = vld [vmem:[#allocation2 + $0x738] sm:$0xff]
        %v4408 = vld [vmem:[#allocation2 + $0x740] sm:$0xff]
        %v4409 = vld [vmem:[#allocation2 + $0x748] sm:$0xff]
        %v4410 = vld [vmem:[#allocation2 + $0x750] sm:$0xff]
        %v4411 = vld [vmem:[#allocation2 + $0x758] sm:$0xff]
        %v4412 = vld [vmem:[#allocation2 + $0x760] sm:$0xff]
        %v4413 = vld [vmem:[#allocation2 + $0x768] sm:$0xff]
        %v4414 = vld [vmem:[#allocation2 + $0x770] sm:$0xff]
        %v4415 = vld [vmem:[#allocation2 + $0x778] sm:$0xff]
        %v4416 = vld [vmem:[#allocation2 + $0x780] sm:$0xff]
        %v4417 = vld [vmem:[#allocation2 + $0x788] sm:$0xff]
        %v4418 = vld [vmem:[#allocation2 + $0x790] sm:$0xff]
        %v4419 = vld [vmem:[#allocation2 + $0x798] sm:$0xff]
        %v4420 = vld [vmem:[#allocation2 + $0x7a0] sm:$0xff]
        %v4421 = vld [vmem:[#allocation2 + $0x7a8] sm:$0xff]
        %v4422 = vld [vmem:[#allocation2 + $0x7b0] sm:$0xff]
        %v4423 = vld [vmem:[#allocation2 + $0x7b8] sm:$0xff]
        %v4424 = vld [vmem:[#allocation2 + $0x7c0] sm:$0xff]
        %v4425 = vld [vmem:[#allocation2 + $0x7c8] sm:$0xff]
        %v4426 = vld [vmem:[#allocation2 + $0x7d0] sm:$0xff]
        %v4427 = vld [vmem:[#allocation2 + $0x7d8] sm:$0xff]
        %v4428 = vld [vmem:[#allocation2 + $0x7e0] sm:$0xff]
        %v4429 = vld [vmem:[#allocation2 + $0x7e8] sm:$0xff]
        %v4430 = vld [vmem:[#allocation2 + $0x7f0] sm:$0xff]
        %v4431 = vld [vmem:[#allocation2 + $0x7f8] sm:$0xff]
        %v4432 = vld [vmem:[#allocation2 + $0x800] sm:$0xff]
        %v4433 = vld [vmem:[#allocation2 + $0x808] sm:$0xff]
        %v4434 = vld [vmem:[#allocation2 + $0x810] sm:$0xff]
        %v4435 = vld [vmem:[#allocation2 + $0x818] sm:$0xff]
        %v4436 = vld [vmem:[#allocation2 + $0x820] sm:$0xff]
        %v4437 = vld [vmem:[#allocation2 + $0x828] sm:$0xff]
        %v4438 = vld [vmem:[#allocation2 + $0x830] sm:$0xff]
        %v4439 = vld [vmem:[#allocation2 + $0x838] sm:$0xff]
        %v4440 = vld [vmem:[#allocation2 + $0x840] sm:$0xff]
        %v4441 = vld [vmem:[#allocation2 + $0x848] sm:$0xff]
        %v4442 = vld [vmem:[#allocation2 + $0x850] sm:$0xff]
        %v4443 = vld [vmem:[#allocation2 + $0x858] sm:$0xff]
        %v4444 = vld [vmem:[#allocation2 + $0x860] sm:$0xff]
        %v4445 = vld [vmem:[#allocation2 + $0x868] sm:$0xff]
        %v4446 = vld [vmem:[#allocation2 + $0x870] sm:$0xff]
        %v4447 = vld [vmem:[#allocation2 + $0x878] sm:$0xff]
        %v4448 = vld [vmem:[#allocation2 + $0x880] sm:$0xff]
        %v4449 = vld [vmem:[#allocation2 + $0x888] sm:$0xff]
        %v4450 = vld [vmem:[#allocation2 + $0x890] sm:$0xff]
        %v4451 = vld [vmem:[#allocation2 + $0x898] sm:$0xff]
        %v4452 = vld [vmem:[#allocation2 + $0x8a0] sm:$0xff]
        %v4453 = vld [vmem:[#allocation2 + $0x8a8] sm:$0xff]
        %v4454 = vld [vmem:[#allocation2 + $0x8b0] sm:$0xff]
        %v4455 = vld [vmem:[#allocation2 + $0x8b8] sm:$0xff]
        %v4456 = vld [vmem:[#allocation2 + $0x8c0] sm:$0xff]
        %v4457 = vld [vmem:[#allocation2 + $0x8c8] sm:$0xff]
        %v4458 = vld [vmem:[#allocation2 + $0x8d0] sm:$0xff]
        %v4459 = vld [vmem:[#allocation2 + $0x8d8] sm:$0xff]
        %v4460 = vld [vmem:[#allocation2 + $0x8e0] sm:$0xff]
        %v4461 = vld [vmem:[#allocation2 + $0x8e8] sm:$0xff]
        %v4462 = vld [vmem:[#allocation2 + $0x8f0] sm:$0xff]
        %v4463 = vld [vmem:[#allocation2 + $0x8f8] sm:$0xff]
        %v4464 = vld [vmem:[#allocation2 + $0x900] sm:$0xff]
        %v4465 = vld [vmem:[#allocation2 + $0x908] sm:$0xff]
        %v4466 = vld [vmem:[#allocation2 + $0x910] sm:$0xff]
        %v4467 = vld [vmem:[#allocation2 + $0x918] sm:$0xff]
        %v4468 = vld [vmem:[#allocation2 + $0x920] sm:$0xff]
        %v4469 = vld [vmem:[#allocation2 + $0x928] sm:$0xff]
        %v4470 = vld [vmem:[#allocation2 + $0x930] sm:$0xff]
        %v4471 = vld [vmem:[#allocation2 + $0x938] sm:$0xff]
        %v4472 = vld [vmem:[#allocation2 + $0x940] sm:$0xff]
        %v4473 = vld [vmem:[#allocation2 + $0x948] sm:$0xff]
        %v4474 = vld [vmem:[#allocation2 + $0x950] sm:$0xff]
        %v4475 = vld [vmem:[#allocation2 + $0x958] sm:$0xff]
        %v4476 = vld [vmem:[#allocation2 + $0x960] sm:$0xff]
        %v4477 = vld [vmem:[#allocation2 + $0x968] sm:$0xff]
        %v4478 = vld [vmem:[#allocation2 + $0x970] sm:$0xff]
        %v4479 = vld [vmem:[#allocation2 + $0x978] sm:$0xff]
        %v4480 = vld [vmem:[#allocation2 + $0x980] sm:$0xff]
        %v4481 = vld [vmem:[#allocation2 + $0x988] sm:$0xff]
        %v4482 = vld [vmem:[#allocation2 + $0x990] sm:$0xff]
        %v4483 = vld [vmem:[#allocation2 + $0x998] sm:$0xff]
        %v4484 = vld [vmem:[#allocation2 + $0x9a0] sm:$0xff]
        %v4485 = vld [vmem:[#allocation2 + $0x9a8] sm:$0xff]
        %v4486 = vld [vmem:[#allocation2 + $0x9b0] sm:$0xff]
        %v4487 = vld [vmem:[#allocation2 + $0x9b8] sm:$0xff]
        %v4488 = vld [vmem:[#allocation2 + $0x9c0] sm:$0xff]
        %v4489 = vld [vmem:[#allocation2 + $0x9c8] sm:$0xff]
        %v4490 = vld [vmem:[#allocation2 + $0x9d0] sm:$0xff]
        %v4491 = vld [vmem:[#allocation2 + $0x9d8] sm:$0x3f]
        %v4492 = vld [vmem:[#allocation2 + $0x9e0] sm:$0x3f]
        %v4493 = vld [vmem:[#allocation2 + $0x9e8] sm:$0x3f]
        %v4494 = vld [vmem:[#allocation2 + $0x9f0] sm:$0x3f]
        %v4495 = vld [vmem:[#allocation2 + $0x9f8] sm:$0x3f]
        %v4496 = vld [vmem:[#allocation2 + $0xa00] sm:$0x3f]
        %v4497 = vld [vmem:[#allocation2 + $0xa08] sm:$0x3f]
        %v4498 = vld [vmem:[#allocation2 + $0xa10] sm:$0x3f]
        %v4499 = vld [vmem:[#allocation2 + $0xa18] sm:$0x3f]
        %v4500 = vld [vmem:[#allocation3] sm:$0xff]
        %v4501 = vld [vmem:[#allocation3 + $0x8] sm:$0xff]
        %v4502 = vld [vmem:[#allocation3 + $0x10] sm:$0xff]
        %v4503 = vld [vmem:[#allocation3 + $0x18] sm:$0xff]
        %v4504 = vld [vmem:[#allocation3 + $0x20] sm:$0xff]
        %v4505 = vld [vmem:[#allocation3 + $0x28] sm:$0xff]
        %v4506 = vld [vmem:[#allocation3 + $0x30] sm:$0xff]
        %v4507 = vld [vmem:[#allocation3 + $0x38] sm:$0xff]
        %v4508 = vld [vmem:[#allocation3 + $0x40] sm:$0xff]
        %v4509 = vld [vmem:[#allocation3 + $0x48] sm:$0xff]
        %v4510 = vld [vmem:[#allocation3 + $0x50] sm:$0xff]
        %v4511 = vld [vmem:[#allocation3 + $0x58] sm:$0xff]
        %v4512 = vld [vmem:[#allocation3 + $0x60] sm:$0xff]
        %v4513 = vld [vmem:[#allocation3 + $0x68] sm:$0xff]
        %v4514 = vld [vmem:[#allocation3 + $0x70] sm:$0xff]
        %v4515 = vld [vmem:[#allocation3 + $0x78] sm:$0xff]
        %v4516 = vld [vmem:[#allocation3 + $0x80] sm:$0xff]
        %v4517 = vld [vmem:[#allocation3 + $0x88] sm:$0xff]
        %v4518 = vld [vmem:[#allocation3 + $0x90] sm:$0xff]
        %v4519 = vld [vmem:[#allocation3 + $0x98] sm:$0xff]
        %v4520 = vld [vmem:[#allocation3 + $0xa0] sm:$0xff]
        %v4521 = vld [vmem:[#allocation3 + $0xa8] sm:$0xff]
        %v4522 = vld [vmem:[#allocation3 + $0xb0] sm:$0xff]
        %v4523 = vld [vmem:[#allocation3 + $0xb8] sm:$0xff]
        %v4524 = vld [vmem:[#allocation3 + $0xc0] sm:$0xff]
        %v4525 = vld [vmem:[#allocation3 + $0xc8] sm:$0xff]
        %v4526 = vld [vmem:[#allocation3 + $0xd0] sm:$0xff]
        %v4527 = vld [vmem:[#allocation3 + $0xd8] sm:$0xff]
        %v4528 = vld [vmem:[#allocation3 + $0xe0] sm:$0xff]
        %v4529 = vld [vmem:[#allocation3 + $0xe8] sm:$0xff]
        %v4530 = vld [vmem:[#allocation3 + $0xf0] sm:$0xff]
        %v4531 = vld [vmem:[#allocation3 + $0xf8] sm:$0xff]
        %v4532 = vld [vmem:[#allocation3 + $0x100] sm:$0xff]
        %v4533 = vld [vmem:[#allocation3 + $0x108] sm:$0xff]
        %v4534 = vld [vmem:[#allocation3 + $0x110] sm:$0xff]
        %v4535 = vld [vmem:[#allocation3 + $0x118] sm:$0xff]
        %v4536 = vld [vmem:[#allocation3 + $0x120] sm:$0xff]
        %v4537 = vld [vmem:[#allocation3 + $0x128] sm:$0xff]
        %v4538 = vld [vmem:[#allocation3 + $0x130] sm:$0xff]
        %v4539 = vld [vmem:[#allocation3 + $0x138] sm:$0xff]
        %v4540 = vld [vmem:[#allocation3 + $0x140] sm:$0xff]
        %v4541 = vld [vmem:[#allocation3 + $0x148] sm:$0xff]
        %v4542 = vld [vmem:[#allocation3 + $0x150] sm:$0xff]
        %v4543 = vld [vmem:[#allocation3 + $0x158] sm:$0xff]
        %v4544 = vld [vmem:[#allocation3 + $0x160] sm:$0xff]
        %v4545 = vld [vmem:[#allocation3 + $0x168] sm:$0xff]
        %v4546 = vld [vmem:[#allocation3 + $0x170] sm:$0xff]
        %v4547 = vld [vmem:[#allocation3 + $0x178] sm:$0xff]
        %v4548 = vld [vmem:[#allocation3 + $0x180] sm:$0xff]
        %v4549 = vld [vmem:[#allocation3 + $0x188] sm:$0xff]
        %v4550 = vld [vmem:[#allocation3 + $0x190] sm:$0xff]
        %v4551 = vld [vmem:[#allocation3 + $0x198] sm:$0xff]
        %v4552 = vld [vmem:[#allocation3 + $0x1a0] sm:$0xff]
        %v4553 = vld [vmem:[#allocation3 + $0x1a8] sm:$0xff]
        %v4554 = vld [vmem:[#allocation3 + $0x1b0] sm:$0xff]
        %v4555 = vld [vmem:[#allocation3 + $0x1b8] sm:$0xff]
        %v4556 = vld [vmem:[#allocation3 + $0x1c0] sm:$0xff]
        %v4557 = vld [vmem:[#allocation3 + $0x1c8] sm:$0xff]
        %v4558 = vld [vmem:[#allocation3 + $0x1d0] sm:$0xff]
        %v4559 = vld [vmem:[#allocation3 + $0x1d8] sm:$0xff]
        %v4560 = vld [vmem:[#allocation3 + $0x1e0] sm:$0xff]
        %v4561 = vld [vmem:[#allocation3 + $0x1e8] sm:$0xff]
        %v4562 = vld [vmem:[#allocation3 + $0x1f0] sm:$0xff]
        %v4563 = vld [vmem:[#allocation3 + $0x1f8] sm:$0xff]
        %v4564 = vld [vmem:[#allocation3 + $0x200] sm:$0xff]
        %v4565 = vld [vmem:[#allocation3 + $0x208] sm:$0xff]
        %v4566 = vld [vmem:[#allocation3 + $0x210] sm:$0xff]
        %v4567 = vld [vmem:[#allocation3 + $0x218] sm:$0xff]
        %v4568 = vld [vmem:[#allocation3 + $0x220] sm:$0xff]
        %v4569 = vld [vmem:[#allocation3 + $0x228] sm:$0xff]
        %v4570 = vld [vmem:[#allocation3 + $0x230] sm:$0xff]
        %v4571 = vld [vmem:[#allocation3 + $0x238] sm:$0xff]
        %v4572 = vld [vmem:[#allocation3 + $0x240] sm:$0xff]
        %v4573 = vld [vmem:[#allocation3 + $0x248] sm:$0xff]
        %v4574 = vld [vmem:[#allocation3 + $0x250] sm:$0xff]
        %v4575 = vld [vmem:[#allocation3 + $0x258] sm:$0xff]
        %v4576 = vld [vmem:[#allocation3 + $0x260] sm:$0xff]
        %v4577 = vld [vmem:[#allocation3 + $0x268] sm:$0xff]
        %v4578 = vld [vmem:[#allocation3 + $0x270] sm:$0xff]
        %v4579 = vld [vmem:[#allocation3 + $0x278] sm:$0xff]
        %v4580 = vld [vmem:[#allocation3 + $0x280] sm:$0xff]
        %v4581 = vld [vmem:[#allocation3 + $0x288] sm:$0xff]
        %v4582 = vld [vmem:[#allocation3 + $0x290] sm:$0xff]
        %v4583 = vld [vmem:[#allocation3 + $0x298] sm:$0xff]
        %v4584 = vld [vmem:[#allocation3 + $0x2a0] sm:$0xff]
        %v4585 = vld [vmem:[#allocation3 + $0x2a8] sm:$0xff]
        %v4586 = vld [vmem:[#allocation3 + $0x2b0] sm:$0xff]
        %v4587 = vld [vmem:[#allocation3 + $0x2b8] sm:$0xff]
        %v4588 = vld [vmem:[#allocation3 + $0x2c0] sm:$0xff]
        %v4589 = vld [vmem:[#allocation3 + $0x2c8] sm:$0xff]
        %v4590 = vld [vmem:[#allocation3 + $0x2d0] sm:$0xff]
        %v4591 = vld [vmem:[#allocation3 + $0x2d8] sm:$0xff]
        %v4592 = vld [vmem:[#allocation3 + $0x2e0] sm:$0xff]
        %v4593 = vld [vmem:[#allocation3 + $0x2e8] sm:$0xff]
        %v4594 = vld [vmem:[#allocation3 + $0x2f0] sm:$0xff]
        %v4595 = vld [vmem:[#allocation3 + $0x2f8] sm:$0xff]
        %v4596 = vld [vmem:[#allocation3 + $0x300] sm:$0xff]
        %v4597 = vld [vmem:[#allocation3 + $0x308] sm:$0xff]
        %v4598 = vld [vmem:[#allocation3 + $0x310] sm:$0xff]
        %v4599 = vld [vmem:[#allocation3 + $0x318] sm:$0xff]
        %v4600 = vld [vmem:[#allocation3 + $0x320] sm:$0xff]
        %v4601 = vld [vmem:[#allocation3 + $0x328] sm:$0xff]
        %v4602 = vld [vmem:[#allocation3 + $0x330] sm:$0xff]
        %v4603 = vld [vmem:[#allocation3 + $0x338] sm:$0xff]
        %v4604 = vld [vmem:[#allocation3 + $0x340] sm:$0xff]
        %v4605 = vld [vmem:[#allocation3 + $0x348] sm:$0xff]
        %v4606 = vld [vmem:[#allocation3 + $0x350] sm:$0xff]
        %v4607 = vld [vmem:[#allocation3 + $0x358] sm:$0xff]
        %v4608 = vld [vmem:[#allocation3 + $0x360] sm:$0xff]
        %v4609 = vld [vmem:[#allocation3 + $0x368] sm:$0xff]
        %v4610 = vld [vmem:[#allocation3 + $0x370] sm:$0xff]
        %v4611 = vld [vmem:[#allocation3 + $0x378] sm:$0xff]
        %v4612 = vld [vmem:[#allocation3 + $0x380] sm:$0xff]
        %v4613 = vld [vmem:[#allocation3 + $0x388] sm:$0xff]
        %v4614 = vld [vmem:[#allocation3 + $0x390] sm:$0xff]
        %v4615 = vld [vmem:[#allocation3 + $0x398] sm:$0xff]
        %v4616 = vld [vmem:[#allocation3 + $0x3a0] sm:$0xff]
        %v4617 = vld [vmem:[#allocation3 + $0x3a8] sm:$0xff]
        %v4618 = vld [vmem:[#allocation3 + $0x3b0] sm:$0xff]
        %v4619 = vld [vmem:[#allocation3 + $0x3b8] sm:$0xff]
        %v4620 = vld [vmem:[#allocation3 + $0x3c0] sm:$0xff]
        %v4621 = vld [vmem:[#allocation3 + $0x3c8] sm:$0xff]
        %v4622 = vld [vmem:[#allocation3 + $0x3d0] sm:$0xff]
        %v4623 = vld [vmem:[#allocation3 + $0x3d8] sm:$0xff]
        %v4624 = vld [vmem:[#allocation3 + $0x3e0] sm:$0xff]
        %v4625 = vld [vmem:[#allocation3 + $0x3e8] sm:$0xff]
        %v4626 = vld [vmem:[#allocation3 + $0x3f0] sm:$0xff]
        %v4627 = vld [vmem:[#allocation3 + $0x3f8] sm:$0xff]
        %v4628 = vld [vmem:[#allocation3 + $0x400] sm:$0xff]
        %v4629 = vld [vmem:[#allocation3 + $0x408] sm:$0xff]
        %v4630 = vld [vmem:[#allocation3 + $0x410] sm:$0xff]
        %v4631 = vld [vmem:[#allocation3 + $0x418] sm:$0xff]
        %v4632 = vld [vmem:[#allocation3 + $0x420] sm:$0xff]
        %v4633 = vld [vmem:[#allocation3 + $0x428] sm:$0xff]
        %v4634 = vld [vmem:[#allocation3 + $0x430] sm:$0xff]
        %v4635 = vld [vmem:[#allocation3 + $0x438] sm:$0xff]
        %v4636 = vld [vmem:[#allocation3 + $0x440] sm:$0xff]
        %v4637 = vld [vmem:[#allocation3 + $0x448] sm:$0xff]
        %v4638 = vld [vmem:[#allocation3 + $0x450] sm:$0xff]
        %v4639 = vld [vmem:[#allocation3 + $0x458] sm:$0xff]
        %v4640 = vld [vmem:[#allocation3 + $0x460] sm:$0xff]
        %v4641 = vld [vmem:[#allocation3 + $0x468] sm:$0xff]
        %v4642 = vld [vmem:[#allocation3 + $0x470] sm:$0xff]
        %v4643 = vld [vmem:[#allocation3 + $0x478] sm:$0xff]
        %4644 = vmatpush.msra.mxu0 %v4515
        %4645 = vmatpush.msra.mxu0 %v4514
        %4646 = vmatpush.msra.mxu0 %v4513
        %4647 = vmatpush.msra.mxu0 %v4512
        %4648 = vmatpush.msra.mxu0 %v4511
        %4649 = vmatpush.msra.mxu0 %v4510
        %4650 = vmatpush.msra.mxu0 %v4509
        %4651 = vmatpush.msra.mxu0 %v4508
        %4652 = vmatpush.msra.mxu0 %v4507
        %4653 = vmatpush.msra.mxu0 %v4506
        %4654 = vmatpush.msra.mxu0 %v4505
        %4655 = vmatpush.msra.mxu0 %v4504
        %4656 = vmatpush.msra.mxu0 %v4503
        %4657 = vmatpush.msra.mxu0 %v4502
        %4658 = vmatpush.msra.mxu0 %v4501
        %4659 = vmatpush.msra.mxu0 %v4500
        %4660 = vmatmul.f32.gmra.mxu0 %v4176
        %v4661 = vpop.f32.mrf.mxu0
        %v4662 = vadd.f32 0.0, %v4661
        %4663 = vmatmul.f32.gmra.mxu0 %v4185
        %v4664 = vpop.f32.mrf.mxu0
        %v4665 = vadd.f32 0.0, %v4664
        %4666 = vmatmul.f32.gmra.mxu0 %v4194
        %v4667 = vpop.f32.mrf.mxu0
        %v4668 = vadd.f32 0.0, %v4667
        %4669 = vmatmul.f32.gmra.mxu0 %v4203
        %v4670 = vpop.f32.mrf.mxu0
        %v4671 = vadd.f32 0.0, %v4670
        %4672 = vmatmul.f32.gmra.mxu0 %v4212
        %v4673 = vpop.f32.mrf.mxu0
        %v4674 = vadd.f32 0.0, %v4673
        %4675 = vmatmul.f32.gmra.mxu0 %v4221
        %v4676 = vpop.f32.mrf.mxu0
        %v4677 = vadd.f32 0.0, %v4676
        %4678 = vmatmul.f32.gmra.mxu0 %v4230
        %v4679 = vpop.f32.mrf.mxu0
        %v4680 = vadd.f32 0.0, %v4679
        %4681 = vmatmul.f32.gmra.mxu0 %v4239
        %v4682 = vpop.f32.mrf.mxu0
        %v4683 = vadd.f32 0.0, %v4682
        %4684 = vmatmul.f32.gmra.mxu0 %v4248
        %v4685 = vpop.f32.mrf.mxu0
        %v4686 = vadd.f32 0.0, %v4685
        %4687 = vmatmul.f32.gmra.mxu0 %v4257
        %v4688 = vpop.f32.mrf.mxu0
        %v4689 = vadd.f32 0.0, %v4688
        %4690 = vmatmul.f32.gmra.mxu0 %v4266
        %v4691 = vpop.f32.mrf.mxu0
        %v4692 = vadd.f32 0.0, %v4691
        %4693 = vmatmul.f32.gmra.mxu0 %v4275
        %v4694 = vpop.f32.mrf.mxu0
        %v4695 = vadd.f32 0.0, %v4694
        %4696 = vmatmul.f32.gmra.mxu0 %v4284
        %v4697 = vpop.f32.mrf.mxu0
        %v4698 = vadd.f32 0.0, %v4697
        %4699 = vmatmul.f32.gmra.mxu0 %v4293
        %v4700 = vpop.f32.mrf.mxu0
        %v4701 = vadd.f32 0.0, %v4700
        %4702 = vmatmul.f32.gmra.mxu0 %v4302
        %v4703 = vpop.f32.mrf.mxu0
        %v4704 = vadd.f32 0.0, %v4703
        %4705 = vmatmul.f32.gmra.mxu0 %v4311
        %v4706 = vpop.f32.mrf.mxu0
        %v4707 = vadd.f32 0.0, %v4706
        %4708 = vmatmul.f32.gmra.mxu0 %v4320
        %v4709 = vpop.f32.mrf.mxu0
        %v4710 = vadd.f32 0.0, %v4709
        %4711 = vmatmul.f32.gmra.mxu0 %v4329
        %v4712 = vpop.f32.mrf.mxu0
        %v4713 = vadd.f32 0.0, %v4712
        %4714 = vmatmul.f32.gmra.mxu0 %v4338
        %v4715 = vpop.f32.mrf.mxu0
        %v4716 = vadd.f32 0.0, %v4715
        %4717 = vmatmul.f32.gmra.mxu0 %v4347
        %v4718 = vpop.f32.mrf.mxu0
        %v4719 = vadd.f32 0.0, %v4718
        %4720 = vmatmul.f32.gmra.mxu0 %v4356
        %v4721 = vpop.f32.mrf.mxu0
        %v4722 = vadd.f32 0.0, %v4721
        %4723 = vmatmul.f32.gmra.mxu0 %v4365
        %v4724 = vpop.f32.mrf.mxu0
        %v4725 = vadd.f32 0.0, %v4724
        %4726 = vmatmul.f32.gmra.mxu0 %v4374
        %v4727 = vpop.f32.mrf.mxu0
        %v4728 = vadd.f32 0.0, %v4727
        %4729 = vmatmul.f32.gmra.mxu0 %v4383
        %v4730 = vpop.f32.mrf.mxu0
        %v4731 = vadd.f32 0.0, %v4730
        %4732 = vmatmul.f32.gmra.mxu0 %v4392
        %v4733 = vpop.f32.mrf.mxu0
        %v4734 = vadd.f32 0.0, %v4733
        %4735 = vmatmul.f32.gmra.mxu0 %v4401
        %v4736 = vpop.f32.mrf.mxu0
        %v4737 = vadd.f32 0.0, %v4736
        %4738 = vmatmul.f32.gmra.mxu0 %v4410
        %v4739 = vpop.f32.mrf.mxu0
        %v4740 = vadd.f32 0.0, %v4739
        %4741 = vmatmul.f32.gmra.mxu0 %v4419
        %v4742 = vpop.f32.mrf.mxu0
        %v4743 = vadd.f32 0.0, %v4742
        %4744 = vmatmul.f32.gmra.mxu0 %v4428
        %v4745 = vpop.f32.mrf.mxu0
        %v4746 = vadd.f32 0.0, %v4745
        %4747 = vmatmul.f32.gmra.mxu0 %v4437
        %v4748 = vpop.f32.mrf.mxu0
        %v4749 = vadd.f32 0.0, %v4748
        %4750 = vmatmul.f32.gmra.mxu0 %v4446
        %v4751 = vpop.f32.mrf.mxu0
        %v4752 = vadd.f32 0.0, %v4751
        %4753 = vmatmul.f32.gmra.mxu0 %v4455
        %v4754 = vpop.f32.mrf.mxu0
        %v4755 = vadd.f32 0.0, %v4754
        %4756 = vmatmul.f32.gmra.mxu0 %v4464
        %v4757 = vpop.f32.mrf.mxu0
        %v4758 = vadd.f32 0.0, %v4757
        %4759 = vmatmul.f32.gmra.mxu0 %v4473
        %v4760 = vpop.f32.mrf.mxu0
        %v4761 = vadd.f32 0.0, %v4760
        %4762 = vmatmul.f32.gmra.mxu0 %v4482
        %v4763 = vpop.f32.mrf.mxu0
        %v4764 = vadd.f32 0.0, %v4763
        %4765 = vmatmul.f32.gmra.mxu0 %v4491
        %v4766 = vpop.f32.mrf.mxu0
        %v4767 = vadd.f32 0.0, %v4766
        %4768 = vdwg.mxu0
        %4769 = vmatpush.msra.mxu0 %v4531
        %4770 = vmatpush.msra.mxu0 %v4530
        %4771 = vmatpush.msra.mxu0 %v4529
        %4772 = vmatpush.msra.mxu0 %v4528
        %4773 = vmatpush.msra.mxu0 %v4527
        %4774 = vmatpush.msra.mxu0 %v4526
        %4775 = vmatpush.msra.mxu0 %v4525
        %4776 = vmatpush.msra.mxu0 %v4524
        %4777 = vmatpush.msra.mxu0 %v4523
        %4778 = vmatpush.msra.mxu0 %v4522
        %4779 = vmatpush.msra.mxu0 %v4521
        %4780 = vmatpush.msra.mxu0 %v4520
        %4781 = vmatpush.msra.mxu0 %v4519
        %4782 = vmatpush.msra.mxu0 %v4518
        %4783 = vmatpush.msra.mxu0 %v4517
        %4784 = vmatpush.msra.mxu0 %v4516
        %4785 = vmatmul.f32.gmra.mxu0 %v4177
        %v4786 = vpop.f32.mrf.mxu0
        %v4787 = vadd.f32 %v4662, %v4786
        %4788 = vmatmul.f32.gmra.mxu0 %v4186
        %v4789 = vpop.f32.mrf.mxu0
        %v4790 = vadd.f32 %v4665, %v4789
        %4791 = vmatmul.f32.gmra.mxu0 %v4195
        %v4792 = vpop.f32.mrf.mxu0
        %v4793 = vadd.f32 %v4668, %v4792
        %4794 = vmatmul.f32.gmra.mxu0 %v4204
        %v4795 = vpop.f32.mrf.mxu0
        %v4796 = vadd.f32 %v4671, %v4795
        %4797 = vmatmul.f32.gmra.mxu0 %v4213
        %v4798 = vpop.f32.mrf.mxu0
        %v4799 = vadd.f32 %v4674, %v4798
        %4800 = vmatmul.f32.gmra.mxu0 %v4222
        %v4801 = vpop.f32.mrf.mxu0
        %v4802 = vadd.f32 %v4677, %v4801
        %4803 = vmatmul.f32.gmra.mxu0 %v4231
        %v4804 = vpop.f32.mrf.mxu0
        %v4805 = vadd.f32 %v4680, %v4804
        %4806 = vmatmul.f32.gmra.mxu0 %v4240
        %v4807 = vpop.f32.mrf.mxu0
        %v4808 = vadd.f32 %v4683, %v4807
        %4809 = vmatmul.f32.gmra.mxu0 %v4249
        %v4810 = vpop.f32.mrf.mxu0
        %v4811 = vadd.f32 %v4686, %v4810
        %4812 = vmatmul.f32.gmra.mxu0 %v4258
        %v4813 = vpop.f32.mrf.mxu0
        %v4814 = vadd.f32 %v4689, %v4813
        %4815 = vmatmul.f32.gmra.mxu0 %v4267
        %v4816 = vpop.f32.mrf.mxu0
        %v4817 = vadd.f32 %v4692, %v4816
        %4818 = vmatmul.f32.gmra.mxu0 %v4276
        %v4819 = vpop.f32.mrf.mxu0
        %v4820 = vadd.f32 %v4695, %v4819
        %4821 = vmatmul.f32.gmra.mxu0 %v4285
        %v4822 = vpop.f32.mrf.mxu0
        %v4823 = vadd.f32 %v4698, %v4822
        %4824 = vmatmul.f32.gmra.mxu0 %v4294
        %v4825 = vpop.f32.mrf.mxu0
        %v4826 = vadd.f32 %v4701, %v4825
        %4827 = vmatmul.f32.gmra.mxu0 %v4303
        %v4828 = vpop.f32.mrf.mxu0
        %v4829 = vadd.f32 %v4704, %v4828
        %4830 = vmatmul.f32.gmra.mxu0 %v4312
        %v4831 = vpop.f32.mrf.mxu0
        %v4832 = vadd.f32 %v4707, %v4831
        %4833 = vmatmul.f32.gmra.mxu0 %v4321
        %v4834 = vpop.f32.mrf.mxu0
        %v4835 = vadd.f32 %v4710, %v4834
        %4836 = vmatmul.f32.gmra.mxu0 %v4330
        %v4837 = vpop.f32.mrf.mxu0
        %v4838 = vadd.f32 %v4713, %v4837
        %4839 = vmatmul.f32.gmra.mxu0 %v4339
        %v4840 = vpop.f32.mrf.mxu0
        %v4841 = vadd.f32 %v4716, %v4840
        %4842 = vmatmul.f32.gmra.mxu0 %v4348
        %v4843 = vpop.f32.mrf.mxu0
        %v4844 = vadd.f32 %v4719, %v4843
        %4845 = vmatmul.f32.gmra.mxu0 %v4357
        %v4846 = vpop.f32.mrf.mxu0
        %v4847 = vadd.f32 %v4722, %v4846
        %4848 = vmatmul.f32.gmra.mxu0 %v4366
        %v4849 = vpop.f32.mrf.mxu0
        %v4850 = vadd.f32 %v4725, %v4849
        %4851 = vmatmul.f32.gmra.mxu0 %v4375
        %v4852 = vpop.f32.mrf.mxu0
        %v4853 = vadd.f32 %v4728, %v4852
        %4854 = vmatmul.f32.gmra.mxu0 %v4384
        %v4855 = vpop.f32.mrf.mxu0
        %v4856 = vadd.f32 %v4731, %v4855
        %4857 = vmatmul.f32.gmra.mxu0 %v4393
        %v4858 = vpop.f32.mrf.mxu0
        %v4859 = vadd.f32 %v4734, %v4858
        %4860 = vmatmul.f32.gmra.mxu0 %v4402
        %v4861 = vpop.f32.mrf.mxu0
        %v4862 = vadd.f32 %v4737, %v4861
        %4863 = vmatmul.f32.gmra.mxu0 %v4411
        %v4864 = vpop.f32.mrf.mxu0
        %v4865 = vadd.f32 %v4740, %v4864
        %4866 = vmatmul.f32.gmra.mxu0 %v4420
        %v4867 = vpop.f32.mrf.mxu0
        %v4868 = vadd.f32 %v4743, %v4867
        %4869 = vmatmul.f32.gmra.mxu0 %v4429
        %v4870 = vpop.f32.mrf.mxu0
        %v4871 = vadd.f32 %v4746, %v4870
        %4872 = vmatmul.f32.gmra.mxu0 %v4438
        %v4873 = vpop.f32.mrf.mxu0
        %v4874 = vadd.f32 %v4749, %v4873
        %4875 = vmatmul.f32.gmra.mxu0 %v4447
        %v4876 = vpop.f32.mrf.mxu0
        %v4877 = vadd.f32 %v4752, %v4876
        %4878 = vmatmul.f32.gmra.mxu0 %v4456
        %v4879 = vpop.f32.mrf.mxu0
        %v4880 = vadd.f32 %v4755, %v4879
        %4881 = vmatmul.f32.gmra.mxu0 %v4465
        %v4882 = vpop.f32.mrf.mxu0
        %v4883 = vadd.f32 %v4758, %v4882
        %4884 = vmatmul.f32.gmra.mxu0 %v4474
        %v4885 = vpop.f32.mrf.mxu0
        %v4886 = vadd.f32 %v4761, %v4885
        %4887 = vmatmul.f32.gmra.mxu0 %v4483
        %v4888 = vpop.f32.mrf.mxu0
        %v4889 = vadd.f32 %v4764, %v4888
        %4890 = vmatmul.f32.gmra.mxu0 %v4492
        %v4891 = vpop.f32.mrf.mxu0
        %v4892 = vadd.f32 %v4767, %v4891
        %4893 = vdwg.mxu0
        %4894 = vmatpush.msra.mxu0 %v4547
        %4895 = vmatpush.msra.mxu0 %v4546
        %4896 = vmatpush.msra.mxu0 %v4545
        %4897 = vmatpush.msra.mxu0 %v4544
        %4898 = vmatpush.msra.mxu0 %v4543
        %4899 = vmatpush.msra.mxu0 %v4542
        %4900 = vmatpush.msra.mxu0 %v4541
        %4901 = vmatpush.msra.mxu0 %v4540
        %4902 = vmatpush.msra.mxu0 %v4539
        %4903 = vmatpush.msra.mxu0 %v4538
        %4904 = vmatpush.msra.mxu0 %v4537
        %4905 = vmatpush.msra.mxu0 %v4536
        %4906 = vmatpush.msra.mxu0 %v4535
        %4907 = vmatpush.msra.mxu0 %v4534
        %4908 = vmatpush.msra.mxu0 %v4533
        %4909 = vmatpush.msra.mxu0 %v4532
        %4910 = vmatmul.f32.gmra.mxu0 %v4178
        %v4911 = vpop.f32.mrf.mxu0
        %v4912 = vadd.f32 %v4787, %v4911
        %4913 = vmatmul.f32.gmra.mxu0 %v4187
        %v4914 = vpop.f32.mrf.mxu0
        %v4915 = vadd.f32 %v4790, %v4914
        %4916 = vmatmul.f32.gmra.mxu0 %v4196
        %v4917 = vpop.f32.mrf.mxu0
        %v4918 = vadd.f32 %v4793, %v4917
        %4919 = vmatmul.f32.gmra.mxu0 %v4205
        %v4920 = vpop.f32.mrf.mxu0
        %v4921 = vadd.f32 %v4796, %v4920
        %4922 = vmatmul.f32.gmra.mxu0 %v4214
        %v4923 = vpop.f32.mrf.mxu0
        %v4924 = vadd.f32 %v4799, %v4923
        %4925 = vmatmul.f32.gmra.mxu0 %v4223
        %v4926 = vpop.f32.mrf.mxu0
        %v4927 = vadd.f32 %v4802, %v4926
        %4928 = vmatmul.f32.gmra.mxu0 %v4232
        %v4929 = vpop.f32.mrf.mxu0
        %v4930 = vadd.f32 %v4805, %v4929
        %4931 = vmatmul.f32.gmra.mxu0 %v4241
        %v4932 = vpop.f32.mrf.mxu0
        %v4933 = vadd.f32 %v4808, %v4932
        %4934 = vmatmul.f32.gmra.mxu0 %v4250
        %v4935 = vpop.f32.mrf.mxu0
        %v4936 = vadd.f32 %v4811, %v4935
        %4937 = vmatmul.f32.gmra.mxu0 %v4259
        %v4938 = vpop.f32.mrf.mxu0
        %v4939 = vadd.f32 %v4814, %v4938
        %4940 = vmatmul.f32.gmra.mxu0 %v4268
        %v4941 = vpop.f32.mrf.mxu0
        %v4942 = vadd.f32 %v4817, %v4941
        %4943 = vmatmul.f32.gmra.mxu0 %v4277
        %v4944 = vpop.f32.mrf.mxu0
        %v4945 = vadd.f32 %v4820, %v4944
        %4946 = vmatmul.f32.gmra.mxu0 %v4286
        %v4947 = vpop.f32.mrf.mxu0
        %v4948 = vadd.f32 %v4823, %v4947
        %4949 = vmatmul.f32.gmra.mxu0 %v4295
        %v4950 = vpop.f32.mrf.mxu0
        %v4951 = vadd.f32 %v4826, %v4950
        %4952 = vmatmul.f32.gmra.mxu0 %v4304
        %v4953 = vpop.f32.mrf.mxu0
        %v4954 = vadd.f32 %v4829, %v4953
        %4955 = vmatmul.f32.gmra.mxu0 %v4313
        %v4956 = vpop.f32.mrf.mxu0
        %v4957 = vadd.f32 %v4832, %v4956
        %4958 = vmatmul.f32.gmra.mxu0 %v4322
        %v4959 = vpop.f32.mrf.mxu0
        %v4960 = vadd.f32 %v4835, %v4959
        %4961 = vmatmul.f32.gmra.mxu0 %v4331
        %v4962 = vpop.f32.mrf.mxu0
        %v4963 = vadd.f32 %v4838, %v4962
        %4964 = vmatmul.f32.gmra.mxu0 %v4340
        %v4965 = vpop.f32.mrf.mxu0
        %v4966 = vadd.f32 %v4841, %v4965
        %4967 = vmatmul.f32.gmra.mxu0 %v4349
        %v4968 = vpop.f32.mrf.mxu0
        %v4969 = vadd.f32 %v4844, %v4968
        %4970 = vmatmul.f32.gmra.mxu0 %v4358
        %v4971 = vpop.f32.mrf.mxu0
        %v4972 = vadd.f32 %v4847, %v4971
        %4973 = vmatmul.f32.gmra.mxu0 %v4367
        %v4974 = vpop.f32.mrf.mxu0
        %v4975 = vadd.f32 %v4850, %v4974
        %4976 = vmatmul.f32.gmra.mxu0 %v4376
        %v4977 = vpop.f32.mrf.mxu0
        %v4978 = vadd.f32 %v4853, %v4977
        %4979 = vmatmul.f32.gmra.mxu0 %v4385
        %v4980 = vpop.f32.mrf.mxu0
        %v4981 = vadd.f32 %v4856, %v4980
        %4982 = vmatmul.f32.gmra.mxu0 %v4394
        %v4983 = vpop.f32.mrf.mxu0
        %v4984 = vadd.f32 %v4859, %v4983
        %4985 = vmatmul.f32.gmra.mxu0 %v4403
        %v4986 = vpop.f32.mrf.mxu0
        %v4987 = vadd.f32 %v4862, %v4986
        %4988 = vmatmul.f32.gmra.mxu0 %v4412
        %v4989 = vpop.f32.mrf.mxu0
        %v4990 = vadd.f32 %v4865, %v4989
        %4991 = vmatmul.f32.gmra.mxu0 %v4421
        %v4992 = vpop.f32.mrf.mxu0
        %v4993 = vadd.f32 %v4868, %v4992
        %4994 = vmatmul.f32.gmra.mxu0 %v4430
        %v4995 = vpop.f32.mrf.mxu0
        %v4996 = vadd.f32 %v4871, %v4995
        %4997 = vmatmul.f32.gmra.mxu0 %v4439
        %v4998 = vpop.f32.mrf.mxu0
        %v4999 = vadd.f32 %v4874, %v4998
        %5000 = vmatmul.f32.gmra.mxu0 %v4448
        %v5001 = vpop.f32.mrf.mxu0
        %v5002 = vadd.f32 %v4877, %v5001
        %5003 = vmatmul.f32.gmra.mxu0 %v4457
        %v5004 = vpop.f32.mrf.mxu0
        %v5005 = vadd.f32 %v4880, %v5004
        %5006 = vmatmul.f32.gmra.mxu0 %v4466
        %v5007 = vpop.f32.mrf.mxu0
        %v5008 = vadd.f32 %v4883, %v5007
        %5009 = vmatmul.f32.gmra.mxu0 %v4475
        %v5010 = vpop.f32.mrf.mxu0
        %v5011 = vadd.f32 %v4886, %v5010
        %5012 = vmatmul.f32.gmra.mxu0 %v4484
        %v5013 = vpop.f32.mrf.mxu0
        %v5014 = vadd.f32 %v4889, %v5013
        %5015 = vmatmul.f32.gmra.mxu0 %v4493
        %v5016 = vpop.f32.mrf.mxu0
        %v5017 = vadd.f32 %v4892, %v5016
        %5018 = vdwg.mxu0
        %5019 = vmatpush.msra.mxu0 %v4563
        %5020 = vmatpush.msra.mxu0 %v4562
        %5021 = vmatpush.msra.mxu0 %v4561
        %5022 = vmatpush.msra.mxu0 %v4560
        %5023 = vmatpush.msra.mxu0 %v4559
        %5024 = vmatpush.msra.mxu0 %v4558
        %5025 = vmatpush.msra.mxu0 %v4557
        %5026 = vmatpush.msra.mxu0 %v4556
        %5027 = vmatpush.msra.mxu0 %v4555
        %5028 = vmatpush.msra.mxu0 %v4554
        %5029 = vmatpush.msra.mxu0 %v4553
        %5030 = vmatpush.msra.mxu0 %v4552
        %5031 = vmatpush.msra.mxu0 %v4551
        %5032 = vmatpush.msra.mxu0 %v4550
        %5033 = vmatpush.msra.mxu0 %v4549
        %5034 = vmatpush.msra.mxu0 %v4548
        %5035 = vmatmul.f32.gmra.mxu0 %v4179
        %v5036 = vpop.f32.mrf.mxu0
        %v5037 = vadd.f32 %v4912, %v5036
        %5038 = vmatmul.f32.gmra.mxu0 %v4188
        %v5039 = vpop.f32.mrf.mxu0
        %v5040 = vadd.f32 %v4915, %v5039
        %5041 = vmatmul.f32.gmra.mxu0 %v4197
        %v5042 = vpop.f32.mrf.mxu0
        %v5043 = vadd.f32 %v4918, %v5042
        %5044 = vmatmul.f32.gmra.mxu0 %v4206
        %v5045 = vpop.f32.mrf.mxu0
        %v5046 = vadd.f32 %v4921, %v5045
        %5047 = vmatmul.f32.gmra.mxu0 %v4215
        %v5048 = vpop.f32.mrf.mxu0
        %v5049 = vadd.f32 %v4924, %v5048
        %5050 = vmatmul.f32.gmra.mxu0 %v4224
        %v5051 = vpop.f32.mrf.mxu0
        %v5052 = vadd.f32 %v4927, %v5051
        %5053 = vmatmul.f32.gmra.mxu0 %v4233
        %v5054 = vpop.f32.mrf.mxu0
        %v5055 = vadd.f32 %v4930, %v5054
        %5056 = vmatmul.f32.gmra.mxu0 %v4242
        %v5057 = vpop.f32.mrf.mxu0
        %v5058 = vadd.f32 %v4933, %v5057
        %5059 = vmatmul.f32.gmra.mxu0 %v4251
        %v5060 = vpop.f32.mrf.mxu0
        %v5061 = vadd.f32 %v4936, %v5060
        %5062 = vmatmul.f32.gmra.mxu0 %v4260
        %v5063 = vpop.f32.mrf.mxu0
        %v5064 = vadd.f32 %v4939, %v5063
        %5065 = vmatmul.f32.gmra.mxu0 %v4269
        %v5066 = vpop.f32.mrf.mxu0
        %v5067 = vadd.f32 %v4942, %v5066
        %5068 = vmatmul.f32.gmra.mxu0 %v4278
        %v5069 = vpop.f32.mrf.mxu0
        %v5070 = vadd.f32 %v4945, %v5069
        %5071 = vmatmul.f32.gmra.mxu0 %v4287
        %v5072 = vpop.f32.mrf.mxu0
        %v5073 = vadd.f32 %v4948, %v5072
        %5074 = vmatmul.f32.gmra.mxu0 %v4296
        %v5075 = vpop.f32.mrf.mxu0
        %v5076 = vadd.f32 %v4951, %v5075
        %5077 = vmatmul.f32.gmra.mxu0 %v4305
        %v5078 = vpop.f32.mrf.mxu0
        %v5079 = vadd.f32 %v4954, %v5078
        %5080 = vmatmul.f32.gmra.mxu0 %v4314
        %v5081 = vpop.f32.mrf.mxu0
        %v5082 = vadd.f32 %v4957, %v5081
        %5083 = vmatmul.f32.gmra.mxu0 %v4323
        %v5084 = vpop.f32.mrf.mxu0
        %v5085 = vadd.f32 %v4960, %v5084
        %5086 = vmatmul.f32.gmra.mxu0 %v4332
        %v5087 = vpop.f32.mrf.mxu0
        %v5088 = vadd.f32 %v4963, %v5087
        %5089 = vmatmul.f32.gmra.mxu0 %v4341
        %v5090 = vpop.f32.mrf.mxu0
        %v5091 = vadd.f32 %v4966, %v5090
        %5092 = vmatmul.f32.gmra.mxu0 %v4350
        %v5093 = vpop.f32.mrf.mxu0
        %v5094 = vadd.f32 %v4969, %v5093
        %5095 = vmatmul.f32.gmra.mxu0 %v4359
        %v5096 = vpop.f32.mrf.mxu0
        %v5097 = vadd.f32 %v4972, %v5096
        %5098 = vmatmul.f32.gmra.mxu0 %v4368
        %v5099 = vpop.f32.mrf.mxu0
        %v5100 = vadd.f32 %v4975, %v5099
        %5101 = vmatmul.f32.gmra.mxu0 %v4377
        %v5102 = vpop.f32.mrf.mxu0
        %v5103 = vadd.f32 %v4978, %v5102
        %5104 = vmatmul.f32.gmra.mxu0 %v4386
        %v5105 = vpop.f32.mrf.mxu0
        %v5106 = vadd.f32 %v4981, %v5105
        %5107 = vmatmul.f32.gmra.mxu0 %v4395
        %v5108 = vpop.f32.mrf.mxu0
        %v5109 = vadd.f32 %v4984, %v5108
        %5110 = vmatmul.f32.gmra.mxu0 %v4404
        %v5111 = vpop.f32.mrf.mxu0
        %v5112 = vadd.f32 %v4987, %v5111
        %5113 = vmatmul.f32.gmra.mxu0 %v4413
        %v5114 = vpop.f32.mrf.mxu0
        %v5115 = vadd.f32 %v4990, %v5114
        %5116 = vmatmul.f32.gmra.mxu0 %v4422
        %v5117 = vpop.f32.mrf.mxu0
        %v5118 = vadd.f32 %v4993, %v5117
        %5119 = vmatmul.f32.gmra.mxu0 %v4431
        %v5120 = vpop.f32.mrf.mxu0
        %v5121 = vadd.f32 %v4996, %v5120
        %5122 = vmatmul.f32.gmra.mxu0 %v4440
        %v5123 = vpop.f32.mrf.mxu0
        %v5124 = vadd.f32 %v4999, %v5123
        %5125 = vmatmul.f32.gmra.mxu0 %v4449
        %v5126 = vpop.f32.mrf.mxu0
        %v5127 = vadd.f32 %v5002, %v5126
        %5128 = vmatmul.f32.gmra.mxu0 %v4458
        %v5129 = vpop.f32.mrf.mxu0
        %v5130 = vadd.f32 %v5005, %v5129
        %5131 = vmatmul.f32.gmra.mxu0 %v4467
        %v5132 = vpop.f32.mrf.mxu0
        %v5133 = vadd.f32 %v5008, %v5132
        %5134 = vmatmul.f32.gmra.mxu0 %v4476
        %v5135 = vpop.f32.mrf.mxu0
        %v5136 = vadd.f32 %v5011, %v5135
        %5137 = vmatmul.f32.gmra.mxu0 %v4485
        %v5138 = vpop.f32.mrf.mxu0
        %v5139 = vadd.f32 %v5014, %v5138
        %5140 = vmatmul.f32.gmra.mxu0 %v4494
        %v5141 = vpop.f32.mrf.mxu0
        %v5142 = vadd.f32 %v5017, %v5141
        %5143 = vdwg.mxu0
        %5144 = vmatpush.msra.mxu0 %v4579
        %5145 = vmatpush.msra.mxu0 %v4578
        %5146 = vmatpush.msra.mxu0 %v4577
        %5147 = vmatpush.msra.mxu0 %v4576
        %5148 = vmatpush.msra.mxu0 %v4575
        %5149 = vmatpush.msra.mxu0 %v4574
        %5150 = vmatpush.msra.mxu0 %v4573
        %5151 = vmatpush.msra.mxu0 %v4572
        %5152 = vmatpush.msra.mxu0 %v4571
        %5153 = vmatpush.msra.mxu0 %v4570
        %5154 = vmatpush.msra.mxu0 %v4569
        %5155 = vmatpush.msra.mxu0 %v4568
        %5156 = vmatpush.msra.mxu0 %v4567
        %5157 = vmatpush.msra.mxu0 %v4566
        %5158 = vmatpush.msra.mxu0 %v4565
        %5159 = vmatpush.msra.mxu0 %v4564
        %5160 = vmatmul.f32.gmra.mxu0 %v4180
        %v5161 = vpop.f32.mrf.mxu0
        %v5162 = vadd.f32 %v5037, %v5161
        %5163 = vmatmul.f32.gmra.mxu0 %v4189
        %v5164 = vpop.f32.mrf.mxu0
        %v5165 = vadd.f32 %v5040, %v5164
        %5166 = vmatmul.f32.gmra.mxu0 %v4198
        %v5167 = vpop.f32.mrf.mxu0
        %v5168 = vadd.f32 %v5043, %v5167
        %5169 = vmatmul.f32.gmra.mxu0 %v4207
        %v5170 = vpop.f32.mrf.mxu0
        %v5171 = vadd.f32 %v5046, %v5170
        %5172 = vmatmul.f32.gmra.mxu0 %v4216
        %v5173 = vpop.f32.mrf.mxu0
        %v5174 = vadd.f32 %v5049, %v5173
        %5175 = vmatmul.f32.gmra.mxu0 %v4225
        %v5176 = vpop.f32.mrf.mxu0
        %v5177 = vadd.f32 %v5052, %v5176
        %5178 = vmatmul.f32.gmra.mxu0 %v4234
        %v5179 = vpop.f32.mrf.mxu0
        %v5180 = vadd.f32 %v5055, %v5179
        %5181 = vmatmul.f32.gmra.mxu0 %v4243
        %v5182 = vpop.f32.mrf.mxu0
        %v5183 = vadd.f32 %v5058, %v5182
        %5184 = vmatmul.f32.gmra.mxu0 %v4252
        %v5185 = vpop.f32.mrf.mxu0
        %v5186 = vadd.f32 %v5061, %v5185
        %5187 = vmatmul.f32.gmra.mxu0 %v4261
        %v5188 = vpop.f32.mrf.mxu0
        %v5189 = vadd.f32 %v5064, %v5188
        %5190 = vmatmul.f32.gmra.mxu0 %v4270
        %v5191 = vpop.f32.mrf.mxu0
        %v5192 = vadd.f32 %v5067, %v5191
        %5193 = vmatmul.f32.gmra.mxu0 %v4279
        %v5194 = vpop.f32.mrf.mxu0
        %v5195 = vadd.f32 %v5070, %v5194
        %5196 = vmatmul.f32.gmra.mxu0 %v4288
        %v5197 = vpop.f32.mrf.mxu0
        %v5198 = vadd.f32 %v5073, %v5197
        %5199 = vmatmul.f32.gmra.mxu0 %v4297
        %v5200 = vpop.f32.mrf.mxu0
        %v5201 = vadd.f32 %v5076, %v5200
        %5202 = vmatmul.f32.gmra.mxu0 %v4306
        %v5203 = vpop.f32.mrf.mxu0
        %v5204 = vadd.f32 %v5079, %v5203
        %5205 = vmatmul.f32.gmra.mxu0 %v4315
        %v5206 = vpop.f32.mrf.mxu0
        %v5207 = vadd.f32 %v5082, %v5206
        %5208 = vmatmul.f32.gmra.mxu0 %v4324
        %v5209 = vpop.f32.mrf.mxu0
        %v5210 = vadd.f32 %v5085, %v5209
        %5211 = vmatmul.f32.gmra.mxu0 %v4333
        %v5212 = vpop.f32.mrf.mxu0
        %v5213 = vadd.f32 %v5088, %v5212
        %5214 = vmatmul.f32.gmra.mxu0 %v4342
        %v5215 = vpop.f32.mrf.mxu0
        %v5216 = vadd.f32 %v5091, %v5215
        %5217 = vmatmul.f32.gmra.mxu0 %v4351
        %v5218 = vpop.f32.mrf.mxu0
        %v5219 = vadd.f32 %v5094, %v5218
        %5220 = vmatmul.f32.gmra.mxu0 %v4360
        %v5221 = vpop.f32.mrf.mxu0
        %v5222 = vadd.f32 %v5097, %v5221
        %5223 = vmatmul.f32.gmra.mxu0 %v4369
        %v5224 = vpop.f32.mrf.mxu0
        %v5225 = vadd.f32 %v5100, %v5224
        %5226 = vmatmul.f32.gmra.mxu0 %v4378
        %v5227 = vpop.f32.mrf.mxu0
        %v5228 = vadd.f32 %v5103, %v5227
        %5229 = vmatmul.f32.gmra.mxu0 %v4387
        %v5230 = vpop.f32.mrf.mxu0
        %v5231 = vadd.f32 %v5106, %v5230
        %5232 = vmatmul.f32.gmra.mxu0 %v4396
        %v5233 = vpop.f32.mrf.mxu0
        %v5234 = vadd.f32 %v5109, %v5233
        %5235 = vmatmul.f32.gmra.mxu0 %v4405
        %v5236 = vpop.f32.mrf.mxu0
        %v5237 = vadd.f32 %v5112, %v5236
        %5238 = vmatmul.f32.gmra.mxu0 %v4414
        %v5239 = vpop.f32.mrf.mxu0
        %v5240 = vadd.f32 %v5115, %v5239
        %5241 = vmatmul.f32.gmra.mxu0 %v4423
        %v5242 = vpop.f32.mrf.mxu0
        %v5243 = vadd.f32 %v5118, %v5242
        %5244 = vmatmul.f32.gmra.mxu0 %v4432
        %v5245 = vpop.f32.mrf.mxu0
        %v5246 = vadd.f32 %v5121, %v5245
        %5247 = vmatmul.f32.gmra.mxu0 %v4441
        %v5248 = vpop.f32.mrf.mxu0
        %v5249 = vadd.f32 %v5124, %v5248
        %5250 = vmatmul.f32.gmra.mxu0 %v4450
        %v5251 = vpop.f32.mrf.mxu0
        %v5252 = vadd.f32 %v5127, %v5251
        %5253 = vmatmul.f32.gmra.mxu0 %v4459
        %v5254 = vpop.f32.mrf.mxu0
        %v5255 = vadd.f32 %v5130, %v5254
        %5256 = vmatmul.f32.gmra.mxu0 %v4468
        %v5257 = vpop.f32.mrf.mxu0
        %v5258 = vadd.f32 %v5133, %v5257
        %5259 = vmatmul.f32.gmra.mxu0 %v4477
        %v5260 = vpop.f32.mrf.mxu0
        %v5261 = vadd.f32 %v5136, %v5260
        %5262 = vmatmul.f32.gmra.mxu0 %v4486
        %v5263 = vpop.f32.mrf.mxu0
        %v5264 = vadd.f32 %v5139, %v5263
        %5265 = vmatmul.f32.gmra.mxu0 %v4495
        %v5266 = vpop.f32.mrf.mxu0
        %v5267 = vadd.f32 %v5142, %v5266
        %5268 = vdwg.mxu0
        %5269 = vmatpush.msra.mxu0 %v4595
        %5270 = vmatpush.msra.mxu0 %v4594
        %5271 = vmatpush.msra.mxu0 %v4593
        %5272 = vmatpush.msra.mxu0 %v4592
        %5273 = vmatpush.msra.mxu0 %v4591
        %5274 = vmatpush.msra.mxu0 %v4590
        %5275 = vmatpush.msra.mxu0 %v4589
        %5276 = vmatpush.msra.mxu0 %v4588
        %5277 = vmatpush.msra.mxu0 %v4587
        %5278 = vmatpush.msra.mxu0 %v4586
        %5279 = vmatpush.msra.mxu0 %v4585
        %5280 = vmatpush.msra.mxu0 %v4584
        %5281 = vmatpush.msra.mxu0 %v4583
        %5282 = vmatpush.msra.mxu0 %v4582
        %5283 = vmatpush.msra.mxu0 %v4581
        %5284 = vmatpush.msra.mxu0 %v4580
        %5285 = vmatmul.f32.gmra.mxu0 %v4181
        %v5286 = vpop.f32.mrf.mxu0
        %v5287 = vadd.f32 %v5162, %v5286
        %5288 = vmatmul.f32.gmra.mxu0 %v4190
        %v5289 = vpop.f32.mrf.mxu0
        %v5290 = vadd.f32 %v5165, %v5289
        %5291 = vmatmul.f32.gmra.mxu0 %v4199
        %v5292 = vpop.f32.mrf.mxu0
        %v5293 = vadd.f32 %v5168, %v5292
        %5294 = vmatmul.f32.gmra.mxu0 %v4208
        %v5295 = vpop.f32.mrf.mxu0
        %v5296 = vadd.f32 %v5171, %v5295
        %5297 = vmatmul.f32.gmra.mxu0 %v4217
        %v5298 = vpop.f32.mrf.mxu0
        %v5299 = vadd.f32 %v5174, %v5298
        %5300 = vmatmul.f32.gmra.mxu0 %v4226
        %v5301 = vpop.f32.mrf.mxu0
        %v5302 = vadd.f32 %v5177, %v5301
        %5303 = vmatmul.f32.gmra.mxu0 %v4235
        %v5304 = vpop.f32.mrf.mxu0
        %v5305 = vadd.f32 %v5180, %v5304
        %5306 = vmatmul.f32.gmra.mxu0 %v4244
        %v5307 = vpop.f32.mrf.mxu0
        %v5308 = vadd.f32 %v5183, %v5307
        %5309 = vmatmul.f32.gmra.mxu0 %v4253
        %v5310 = vpop.f32.mrf.mxu0
        %v5311 = vadd.f32 %v5186, %v5310
        %5312 = vmatmul.f32.gmra.mxu0 %v4262
        %v5313 = vpop.f32.mrf.mxu0
        %v5314 = vadd.f32 %v5189, %v5313
        %5315 = vmatmul.f32.gmra.mxu0 %v4271
        %v5316 = vpop.f32.mrf.mxu0
        %v5317 = vadd.f32 %v5192, %v5316
        %5318 = vmatmul.f32.gmra.mxu0 %v4280
        %v5319 = vpop.f32.mrf.mxu0
        %v5320 = vadd.f32 %v5195, %v5319
        %5321 = vmatmul.f32.gmra.mxu0 %v4289
        %v5322 = vpop.f32.mrf.mxu0
        %v5323 = vadd.f32 %v5198, %v5322
        %5324 = vmatmul.f32.gmra.mxu0 %v4298
        %v5325 = vpop.f32.mrf.mxu0
        %v5326 = vadd.f32 %v5201, %v5325
        %5327 = vmatmul.f32.gmra.mxu0 %v4307
        %v5328 = vpop.f32.mrf.mxu0
        %v5329 = vadd.f32 %v5204, %v5328
        %5330 = vmatmul.f32.gmra.mxu0 %v4316
        %v5331 = vpop.f32.mrf.mxu0
        %v5332 = vadd.f32 %v5207, %v5331
        %5333 = vmatmul.f32.gmra.mxu0 %v4325
        %v5334 = vpop.f32.mrf.mxu0
        %v5335 = vadd.f32 %v5210, %v5334
        %5336 = vmatmul.f32.gmra.mxu0 %v4334
        %v5337 = vpop.f32.mrf.mxu0
        %v5338 = vadd.f32 %v5213, %v5337
        %5339 = vmatmul.f32.gmra.mxu0 %v4343
        %v5340 = vpop.f32.mrf.mxu0
        %v5341 = vadd.f32 %v5216, %v5340
        %5342 = vmatmul.f32.gmra.mxu0 %v4352
        %v5343 = vpop.f32.mrf.mxu0
        %v5344 = vadd.f32 %v5219, %v5343
        %5345 = vmatmul.f32.gmra.mxu0 %v4361
        %v5346 = vpop.f32.mrf.mxu0
        %v5347 = vadd.f32 %v5222, %v5346
        %5348 = vmatmul.f32.gmra.mxu0 %v4370
        %v5349 = vpop.f32.mrf.mxu0
        %v5350 = vadd.f32 %v5225, %v5349
        %5351 = vmatmul.f32.gmra.mxu0 %v4379
        %v5352 = vpop.f32.mrf.mxu0
        %v5353 = vadd.f32 %v5228, %v5352
        %5354 = vmatmul.f32.gmra.mxu0 %v4388
        %v5355 = vpop.f32.mrf.mxu0
        %v5356 = vadd.f32 %v5231, %v5355
        %5357 = vmatmul.f32.gmra.mxu0 %v4397
        %v5358 = vpop.f32.mrf.mxu0
        %v5359 = vadd.f32 %v5234, %v5358
        %5360 = vmatmul.f32.gmra.mxu0 %v4406
        %v5361 = vpop.f32.mrf.mxu0
        %v5362 = vadd.f32 %v5237, %v5361
        %5363 = vmatmul.f32.gmra.mxu0 %v4415
        %v5364 = vpop.f32.mrf.mxu0
        %v5365 = vadd.f32 %v5240, %v5364
        %5366 = vmatmul.f32.gmra.mxu0 %v4424
        %v5367 = vpop.f32.mrf.mxu0
        %v5368 = vadd.f32 %v5243, %v5367
        %5369 = vmatmul.f32.gmra.mxu0 %v4433
        %v5370 = vpop.f32.mrf.mxu0
        %v5371 = vadd.f32 %v5246, %v5370
        %5372 = vmatmul.f32.gmra.mxu0 %v4442
        %v5373 = vpop.f32.mrf.mxu0
        %v5374 = vadd.f32 %v5249, %v5373
        %5375 = vmatmul.f32.gmra.mxu0 %v4451
        %v5376 = vpop.f32.mrf.mxu0
        %v5377 = vadd.f32 %v5252, %v5376
        %5378 = vmatmul.f32.gmra.mxu0 %v4460
        %v5379 = vpop.f32.mrf.mxu0
        %v5380 = vadd.f32 %v5255, %v5379
        %5381 = vmatmul.f32.gmra.mxu0 %v4469
        %v5382 = vpop.f32.mrf.mxu0
        %v5383 = vadd.f32 %v5258, %v5382
        %5384 = vmatmul.f32.gmra.mxu0 %v4478
        %v5385 = vpop.f32.mrf.mxu0
        %v5386 = vadd.f32 %v5261, %v5385
        %5387 = vmatmul.f32.gmra.mxu0 %v4487
        %v5388 = vpop.f32.mrf.mxu0
        %v5389 = vadd.f32 %v5264, %v5388
        %5390 = vmatmul.f32.gmra.mxu0 %v4496
        %v5391 = vpop.f32.mrf.mxu0
        %v5392 = vadd.f32 %v5267, %v5391
        %5393 = vdwg.mxu0
        %5394 = vmatpush.msra.mxu0 %v4611
        %5395 = vmatpush.msra.mxu0 %v4610
        %5396 = vmatpush.msra.mxu0 %v4609
        %5397 = vmatpush.msra.mxu0 %v4608
        %5398 = vmatpush.msra.mxu0 %v4607
        %5399 = vmatpush.msra.mxu0 %v4606
        %5400 = vmatpush.msra.mxu0 %v4605
        %5401 = vmatpush.msra.mxu0 %v4604
        %5402 = vmatpush.msra.mxu0 %v4603
        %5403 = vmatpush.msra.mxu0 %v4602
        %5404 = vmatpush.msra.mxu0 %v4601
        %5405 = vmatpush.msra.mxu0 %v4600
        %5406 = vmatpush.msra.mxu0 %v4599
        %5407 = vmatpush.msra.mxu0 %v4598
        %5408 = vmatpush.msra.mxu0 %v4597
        %5409 = vmatpush.msra.mxu0 %v4596
        %5410 = vmatmul.f32.gmra.mxu0 %v4182
        %v5411 = vpop.f32.mrf.mxu0
        %v5412 = vadd.f32 %v5287, %v5411
        %5413 = vmatmul.f32.gmra.mxu0 %v4191
        %v5414 = vpop.f32.mrf.mxu0
        %v5415 = vadd.f32 %v5290, %v5414
        %5416 = vmatmul.f32.gmra.mxu0 %v4200
        %v5417 = vpop.f32.mrf.mxu0
        %v5418 = vadd.f32 %v5293, %v5417
        %5419 = vmatmul.f32.gmra.mxu0 %v4209
        %v5420 = vpop.f32.mrf.mxu0
        %v5421 = vadd.f32 %v5296, %v5420
        %5422 = vmatmul.f32.gmra.mxu0 %v4218
        %v5423 = vpop.f32.mrf.mxu0
        %v5424 = vadd.f32 %v5299, %v5423
        %5425 = vmatmul.f32.gmra.mxu0 %v4227
        %v5426 = vpop.f32.mrf.mxu0
        %v5427 = vadd.f32 %v5302, %v5426
        %5428 = vmatmul.f32.gmra.mxu0 %v4236
        %v5429 = vpop.f32.mrf.mxu0
        %v5430 = vadd.f32 %v5305, %v5429
        %5431 = vmatmul.f32.gmra.mxu0 %v4245
        %v5432 = vpop.f32.mrf.mxu0
        %v5433 = vadd.f32 %v5308, %v5432
        %5434 = vmatmul.f32.gmra.mxu0 %v4254
        %v5435 = vpop.f32.mrf.mxu0
        %v5436 = vadd.f32 %v5311, %v5435
        %5437 = vmatmul.f32.gmra.mxu0 %v4263
        %v5438 = vpop.f32.mrf.mxu0
        %v5439 = vadd.f32 %v5314, %v5438
        %5440 = vmatmul.f32.gmra.mxu0 %v4272
        %v5441 = vpop.f32.mrf.mxu0
        %v5442 = vadd.f32 %v5317, %v5441
        %5443 = vmatmul.f32.gmra.mxu0 %v4281
        %v5444 = vpop.f32.mrf.mxu0
        %v5445 = vadd.f32 %v5320, %v5444
        %5446 = vmatmul.f32.gmra.mxu0 %v4290
        %v5447 = vpop.f32.mrf.mxu0
        %v5448 = vadd.f32 %v5323, %v5447
        %5449 = vmatmul.f32.gmra.mxu0 %v4299
        %v5450 = vpop.f32.mrf.mxu0
        %v5451 = vadd.f32 %v5326, %v5450
        %5452 = vmatmul.f32.gmra.mxu0 %v4308
        %v5453 = vpop.f32.mrf.mxu0
        %v5454 = vadd.f32 %v5329, %v5453
        %5455 = vmatmul.f32.gmra.mxu0 %v4317
        %v5456 = vpop.f32.mrf.mxu0
        %v5457 = vadd.f32 %v5332, %v5456
        %5458 = vmatmul.f32.gmra.mxu0 %v4326
        %v5459 = vpop.f32.mrf.mxu0
        %v5460 = vadd.f32 %v5335, %v5459
        %5461 = vmatmul.f32.gmra.mxu0 %v4335
        %v5462 = vpop.f32.mrf.mxu0
        %v5463 = vadd.f32 %v5338, %v5462
        %5464 = vmatmul.f32.gmra.mxu0 %v4344
        %v5465 = vpop.f32.mrf.mxu0
        %v5466 = vadd.f32 %v5341, %v5465
        %5467 = vmatmul.f32.gmra.mxu0 %v4353
        %v5468 = vpop.f32.mrf.mxu0
        %v5469 = vadd.f32 %v5344, %v5468
        %5470 = vmatmul.f32.gmra.mxu0 %v4362
        %v5471 = vpop.f32.mrf.mxu0
        %v5472 = vadd.f32 %v5347, %v5471
        %5473 = vmatmul.f32.gmra.mxu0 %v4371
        %v5474 = vpop.f32.mrf.mxu0
        %v5475 = vadd.f32 %v5350, %v5474
        %5476 = vmatmul.f32.gmra.mxu0 %v4380
        %v5477 = vpop.f32.mrf.mxu0
        %v5478 = vadd.f32 %v5353, %v5477
        %5479 = vmatmul.f32.gmra.mxu0 %v4389
        %v5480 = vpop.f32.mrf.mxu0
        %v5481 = vadd.f32 %v5356, %v5480
        %5482 = vmatmul.f32.gmra.mxu0 %v4398
        %v5483 = vpop.f32.mrf.mxu0
        %v5484 = vadd.f32 %v5359, %v5483
        %5485 = vmatmul.f32.gmra.mxu0 %v4407
        %v5486 = vpop.f32.mrf.mxu0
        %v5487 = vadd.f32 %v5362, %v5486
        %5488 = vmatmul.f32.gmra.mxu0 %v4416
        %v5489 = vpop.f32.mrf.mxu0
        %v5490 = vadd.f32 %v5365, %v5489
        %5491 = vmatmul.f32.gmra.mxu0 %v4425
        %v5492 = vpop.f32.mrf.mxu0
        %v5493 = vadd.f32 %v5368, %v5492
        %5494 = vmatmul.f32.gmra.mxu0 %v4434
        %v5495 = vpop.f32.mrf.mxu0
        %v5496 = vadd.f32 %v5371, %v5495
        %5497 = vmatmul.f32.gmra.mxu0 %v4443
        %v5498 = vpop.f32.mrf.mxu0
        %v5499 = vadd.f32 %v5374, %v5498
        %5500 = vmatmul.f32.gmra.mxu0 %v4452
        %v5501 = vpop.f32.mrf.mxu0
        %v5502 = vadd.f32 %v5377, %v5501
        %5503 = vmatmul.f32.gmra.mxu0 %v4461
        %v5504 = vpop.f32.mrf.mxu0
        %v5505 = vadd.f32 %v5380, %v5504
        %5506 = vmatmul.f32.gmra.mxu0 %v4470
        %v5507 = vpop.f32.mrf.mxu0
        %v5508 = vadd.f32 %v5383, %v5507
        %5509 = vmatmul.f32.gmra.mxu0 %v4479
        %v5510 = vpop.f32.mrf.mxu0
        %v5511 = vadd.f32 %v5386, %v5510
        %5512 = vmatmul.f32.gmra.mxu0 %v4488
        %v5513 = vpop.f32.mrf.mxu0
        %v5514 = vadd.f32 %v5389, %v5513
        %5515 = vmatmul.f32.gmra.mxu0 %v4497
        %v5516 = vpop.f32.mrf.mxu0
        %v5517 = vadd.f32 %v5392, %v5516
        %5518 = vdwg.mxu0
        %5519 = vmatpush.msra.mxu0 %v4627
        %5520 = vmatpush.msra.mxu0 %v4626
        %5521 = vmatpush.msra.mxu0 %v4625
        %5522 = vmatpush.msra.mxu0 %v4624
        %5523 = vmatpush.msra.mxu0 %v4623
        %5524 = vmatpush.msra.mxu0 %v4622
        %5525 = vmatpush.msra.mxu0 %v4621
        %5526 = vmatpush.msra.mxu0 %v4620
        %5527 = vmatpush.msra.mxu0 %v4619
        %5528 = vmatpush.msra.mxu0 %v4618
        %5529 = vmatpush.msra.mxu0 %v4617
        %5530 = vmatpush.msra.mxu0 %v4616
        %5531 = vmatpush.msra.mxu0 %v4615
        %5532 = vmatpush.msra.mxu0 %v4614
        %5533 = vmatpush.msra.mxu0 %v4613
        %5534 = vmatpush.msra.mxu0 %v4612
        %5535 = vmatmul.f32.gmra.mxu0 %v4183
        %v5536 = vpop.f32.mrf.mxu0
        %v5537 = vadd.f32 %v5412, %v5536
        %5538 = vmatmul.f32.gmra.mxu0 %v4192
        %v5539 = vpop.f32.mrf.mxu0
        %v5540 = vadd.f32 %v5415, %v5539
        %5541 = vmatmul.f32.gmra.mxu0 %v4201
        %v5542 = vpop.f32.mrf.mxu0
        %v5543 = vadd.f32 %v5418, %v5542
        %5544 = vmatmul.f32.gmra.mxu0 %v4210
        %v5545 = vpop.f32.mrf.mxu0
        %v5546 = vadd.f32 %v5421, %v5545
        %5547 = vmatmul.f32.gmra.mxu0 %v4219
        %v5548 = vpop.f32.mrf.mxu0
        %v5549 = vadd.f32 %v5424, %v5548
        %5550 = vmatmul.f32.gmra.mxu0 %v4228
        %v5551 = vpop.f32.mrf.mxu0
        %v5552 = vadd.f32 %v5427, %v5551
        %5553 = vmatmul.f32.gmra.mxu0 %v4237
        %v5554 = vpop.f32.mrf.mxu0
        %v5555 = vadd.f32 %v5430, %v5554
        %5556 = vmatmul.f32.gmra.mxu0 %v4246
        %v5557 = vpop.f32.mrf.mxu0
        %v5558 = vadd.f32 %v5433, %v5557
        %5559 = vmatmul.f32.gmra.mxu0 %v4255
        %v5560 = vpop.f32.mrf.mxu0
        %v5561 = vadd.f32 %v5436, %v5560
        %5562 = vmatmul.f32.gmra.mxu0 %v4264
        %v5563 = vpop.f32.mrf.mxu0
        %v5564 = vadd.f32 %v5439, %v5563
        %5565 = vmatmul.f32.gmra.mxu0 %v4273
        %v5566 = vpop.f32.mrf.mxu0
        %v5567 = vadd.f32 %v5442, %v5566
        %5568 = vmatmul.f32.gmra.mxu0 %v4282
        %v5569 = vpop.f32.mrf.mxu0
        %v5570 = vadd.f32 %v5445, %v5569
        %5571 = vmatmul.f32.gmra.mxu0 %v4291
        %v5572 = vpop.f32.mrf.mxu0
        %v5573 = vadd.f32 %v5448, %v5572
        %5574 = vmatmul.f32.gmra.mxu0 %v4300
        %v5575 = vpop.f32.mrf.mxu0
        %v5576 = vadd.f32 %v5451, %v5575
        %5577 = vmatmul.f32.gmra.mxu0 %v4309
        %v5578 = vpop.f32.mrf.mxu0
        %v5579 = vadd.f32 %v5454, %v5578
        %5580 = vmatmul.f32.gmra.mxu0 %v4318
        %v5581 = vpop.f32.mrf.mxu0
        %v5582 = vadd.f32 %v5457, %v5581
        %5583 = vmatmul.f32.gmra.mxu0 %v4327
        %v5584 = vpop.f32.mrf.mxu0
        %v5585 = vadd.f32 %v5460, %v5584
        %5586 = vmatmul.f32.gmra.mxu0 %v4336
        %v5587 = vpop.f32.mrf.mxu0
        %v5588 = vadd.f32 %v5463, %v5587
        %5589 = vmatmul.f32.gmra.mxu0 %v4345
        %v5590 = vpop.f32.mrf.mxu0
        %v5591 = vadd.f32 %v5466, %v5590
        %5592 = vmatmul.f32.gmra.mxu0 %v4354
        %v5593 = vpop.f32.mrf.mxu0
        %v5594 = vadd.f32 %v5469, %v5593
        %5595 = vmatmul.f32.gmra.mxu0 %v4363
        %v5596 = vpop.f32.mrf.mxu0
        %v5597 = vadd.f32 %v5472, %v5596
        %5598 = vmatmul.f32.gmra.mxu0 %v4372
        %v5599 = vpop.f32.mrf.mxu0
        %v5600 = vadd.f32 %v5475, %v5599
        %5601 = vmatmul.f32.gmra.mxu0 %v4381
        %v5602 = vpop.f32.mrf.mxu0
        %v5603 = vadd.f32 %v5478, %v5602
        %5604 = vmatmul.f32.gmra.mxu0 %v4390
        %v5605 = vpop.f32.mrf.mxu0
        %v5606 = vadd.f32 %v5481, %v5605
        %5607 = vmatmul.f32.gmra.mxu0 %v4399
        %v5608 = vpop.f32.mrf.mxu0
        %v5609 = vadd.f32 %v5484, %v5608
        %5610 = vmatmul.f32.gmra.mxu0 %v4408
        %v5611 = vpop.f32.mrf.mxu0
        %v5612 = vadd.f32 %v5487, %v5611
        %5613 = vmatmul.f32.gmra.mxu0 %v4417
        %v5614 = vpop.f32.mrf.mxu0
        %v5615 = vadd.f32 %v5490, %v5614
        %5616 = vmatmul.f32.gmra.mxu0 %v4426
        %v5617 = vpop.f32.mrf.mxu0
        %v5618 = vadd.f32 %v5493, %v5617
        %5619 = vmatmul.f32.gmra.mxu0 %v4435
        %v5620 = vpop.f32.mrf.mxu0
        %v5621 = vadd.f32 %v5496, %v5620
        %5622 = vmatmul.f32.gmra.mxu0 %v4444
        %v5623 = vpop.f32.mrf.mxu0
        %v5624 = vadd.f32 %v5499, %v5623
        %5625 = vmatmul.f32.gmra.mxu0 %v4453
        %v5626 = vpop.f32.mrf.mxu0
        %v5627 = vadd.f32 %v5502, %v5626
        %5628 = vmatmul.f32.gmra.mxu0 %v4462
        %v5629 = vpop.f32.mrf.mxu0
        %v5630 = vadd.f32 %v5505, %v5629
        %5631 = vmatmul.f32.gmra.mxu0 %v4471
        %v5632 = vpop.f32.mrf.mxu0
        %v5633 = vadd.f32 %v5508, %v5632
        %5634 = vmatmul.f32.gmra.mxu0 %v4480
        %v5635 = vpop.f32.mrf.mxu0
        %v5636 = vadd.f32 %v5511, %v5635
        %5637 = vmatmul.f32.gmra.mxu0 %v4489
        %v5638 = vpop.f32.mrf.mxu0
        %v5639 = vadd.f32 %v5514, %v5638
        %5640 = vmatmul.f32.gmra.mxu0 %v4498
        %v5641 = vpop.f32.mrf.mxu0
        %v5642 = vadd.f32 %v5517, %v5641
        %5643 = vdwg.mxu0
        %5644 = vmatpush.msra.mxu0 %v4643
        %5645 = vmatpush.msra.mxu0 %v4642
        %5646 = vmatpush.msra.mxu0 %v4641
        %5647 = vmatpush.msra.mxu0 %v4640
        %5648 = vmatpush.msra.mxu0 %v4639
        %5649 = vmatpush.msra.mxu0 %v4638
        %5650 = vmatpush.msra.mxu0 %v4637
        %5651 = vmatpush.msra.mxu0 %v4636
        %5652 = vmatpush.msra.mxu0 %v4635
        %5653 = vmatpush.msra.mxu0 %v4634
        %5654 = vmatpush.msra.mxu0 %v4633
        %5655 = vmatpush.msra.mxu0 %v4632
        %5656 = vmatpush.msra.mxu0 %v4631
        %5657 = vmatpush.msra.mxu0 %v4630
        %5658 = vmatpush.msra.mxu0 %v4629
        %5659 = vmatpush.msra.mxu0 %v4628
        %5660 = vmatmul.f32.gmra.mxu0 %v4184
        %v5661 = vpop.f32.mrf.mxu0
        %v5662 = vadd.f32 %v5537, %v5661
        %5663 = vmatmul.f32.gmra.mxu0 %v4193
        %v5664 = vpop.f32.mrf.mxu0
        %v5665 = vadd.f32 %v5540, %v5664
        %5666 = vmatmul.f32.gmra.mxu0 %v4202
        %v5667 = vpop.f32.mrf.mxu0
        %v5668 = vadd.f32 %v5543, %v5667
        %5669 = vmatmul.f32.gmra.mxu0 %v4211
        %v5670 = vpop.f32.mrf.mxu0
        %v5671 = vadd.f32 %v5546, %v5670
        %5672 = vmatmul.f32.gmra.mxu0 %v4220
        %v5673 = vpop.f32.mrf.mxu0
        %v5674 = vadd.f32 %v5549, %v5673
        %5675 = vmatmul.f32.gmra.mxu0 %v4229
        %v5676 = vpop.f32.mrf.mxu0
        %v5677 = vadd.f32 %v5552, %v5676
        %5678 = vmatmul.f32.gmra.mxu0 %v4238
        %v5679 = vpop.f32.mrf.mxu0
        %v5680 = vadd.f32 %v5555, %v5679
        %5681 = vmatmul.f32.gmra.mxu0 %v4247
        %v5682 = vpop.f32.mrf.mxu0
        %v5683 = vadd.f32 %v5558, %v5682
        %5684 = vmatmul.f32.gmra.mxu0 %v4256
        %v5685 = vpop.f32.mrf.mxu0
        %v5686 = vadd.f32 %v5561, %v5685
        %5687 = vmatmul.f32.gmra.mxu0 %v4265
        %v5688 = vpop.f32.mrf.mxu0
        %v5689 = vadd.f32 %v5564, %v5688
        %5690 = vmatmul.f32.gmra.mxu0 %v4274
        %v5691 = vpop.f32.mrf.mxu0
        %v5692 = vadd.f32 %v5567, %v5691
        %5693 = vmatmul.f32.gmra.mxu0 %v4283
        %v5694 = vpop.f32.mrf.mxu0
        %v5695 = vadd.f32 %v5570, %v5694
        %5696 = vmatmul.f32.gmra.mxu0 %v4292
        %v5697 = vpop.f32.mrf.mxu0
        %v5698 = vadd.f32 %v5573, %v5697
        %5699 = vmatmul.f32.gmra.mxu0 %v4301
        %v5700 = vpop.f32.mrf.mxu0
        %v5701 = vadd.f32 %v5576, %v5700
        %5702 = vmatmul.f32.gmra.mxu0 %v4310
        %v5703 = vpop.f32.mrf.mxu0
        %v5704 = vadd.f32 %v5579, %v5703
        %5705 = vmatmul.f32.gmra.mxu0 %v4319
        %v5706 = vpop.f32.mrf.mxu0
        %v5707 = vadd.f32 %v5582, %v5706
        %5708 = vmatmul.f32.gmra.mxu0 %v4328
        %v5709 = vpop.f32.mrf.mxu0
        %v5710 = vadd.f32 %v5585, %v5709
        %5711 = vmatmul.f32.gmra.mxu0 %v4337
        %v5712 = vpop.f32.mrf.mxu0
        %v5713 = vadd.f32 %v5588, %v5712
        %5714 = vmatmul.f32.gmra.mxu0 %v4346
        %v5715 = vpop.f32.mrf.mxu0
        %v5716 = vadd.f32 %v5591, %v5715
        %5717 = vmatmul.f32.gmra.mxu0 %v4355
        %v5718 = vpop.f32.mrf.mxu0
        %v5719 = vadd.f32 %v5594, %v5718
        %5720 = vmatmul.f32.gmra.mxu0 %v4364
        %v5721 = vpop.f32.mrf.mxu0
        %v5722 = vadd.f32 %v5597, %v5721
        %5723 = vmatmul.f32.gmra.mxu0 %v4373
        %v5724 = vpop.f32.mrf.mxu0
        %v5725 = vadd.f32 %v5600, %v5724
        %5726 = vmatmul.f32.gmra.mxu0 %v4382
        %v5727 = vpop.f32.mrf.mxu0
        %v5728 = vadd.f32 %v5603, %v5727
        %5729 = vmatmul.f32.gmra.mxu0 %v4391
        %v5730 = vpop.f32.mrf.mxu0
        %v5731 = vadd.f32 %v5606, %v5730
        %5732 = vmatmul.f32.gmra.mxu0 %v4400
        %v5733 = vpop.f32.mrf.mxu0
        %v5734 = vadd.f32 %v5609, %v5733
        %5735 = vmatmul.f32.gmra.mxu0 %v4409
        %v5736 = vpop.f32.mrf.mxu0
        %v5737 = vadd.f32 %v5612, %v5736
        %5738 = vmatmul.f32.gmra.mxu0 %v4418
        %v5739 = vpop.f32.mrf.mxu0
        %v5740 = vadd.f32 %v5615, %v5739
        %5741 = vmatmul.f32.gmra.mxu0 %v4427
        %v5742 = vpop.f32.mrf.mxu0
        %v5743 = vadd.f32 %v5618, %v5742
        %5744 = vmatmul.f32.gmra.mxu0 %v4436
        %v5745 = vpop.f32.mrf.mxu0
        %v5746 = vadd.f32 %v5621, %v5745
        %5747 = vmatmul.f32.gmra.mxu0 %v4445
        %v5748 = vpop.f32.mrf.mxu0
        %v5749 = vadd.f32 %v5624, %v5748
        %5750 = vmatmul.f32.gmra.mxu0 %v4454
        %v5751 = vpop.f32.mrf.mxu0
        %v5752 = vadd.f32 %v5627, %v5751
        %5753 = vmatmul.f32.gmra.mxu0 %v4463
        %v5754 = vpop.f32.mrf.mxu0
        %v5755 = vadd.f32 %v5630, %v5754
        %5756 = vmatmul.f32.gmra.mxu0 %v4472
        %v5757 = vpop.f32.mrf.mxu0
        %v5758 = vadd.f32 %v5633, %v5757
        %5759 = vmatmul.f32.gmra.mxu0 %v4481
        %v5760 = vpop.f32.mrf.mxu0
        %v5761 = vadd.f32 %v5636, %v5760
        %5762 = vmatmul.f32.gmra.mxu0 %v4490
        %v5763 = vpop.f32.mrf.mxu0
        %v5764 = vadd.f32 %v5639, %v5763
        %5765 = vmatmul.f32.gmra.mxu0 %v4499
        %v5766 = vpop.f32.mrf.mxu0
        %v5767 = vadd.f32 %v5642, %v5766
        %5768 = vdwg.mxu0
        %v5769 = vld [vmem:[%s4 + $0x13] sm:$0xff]
        %v5770 = vld [vmem:[%s4 + $0x1b] sm:$0xff]
        %v5771 = vld [vmem:[%s4 + $0x23] sm:$0xff]
        %v5772 = vld [vmem:[%s4 + $0x2b] sm:$0xff]
        %v5773 = vld [vmem:[%s4 + $0x33] sm:$0xff]
        %v5774 = vld [vmem:[%s4 + $0x3b] sm:$0xff]
        %v5775 = vld [vmem:[%s4 + $0x43] sm:$0xff]
        %v5776 = vld [vmem:[%s4 + $0x4b] sm:$0xff]
        %v5777 = vld [vmem:[%s4 + $0x53] sm:$0xff]
        %v5778 = vld [vmem:[%s4 + $0x5b] sm:$0xff]
        %v5779 = vld [vmem:[%s4 + $0x63] sm:$0xff]
        %v5780 = vld [vmem:[%s4 + $0x6b] sm:$0xff]
        %v5781 = vld [vmem:[%s4 + $0x73] sm:$0xff]
        %v5782 = vld [vmem:[%s4 + $0x7b] sm:$0xff]
        %v5783 = vld [vmem:[%s4 + $0x83] sm:$0xff]
        %v5784 = vld [vmem:[%s4 + $0x8b] sm:$0xff]
        %v5785 = vld [vmem:[%s4 + $0x93] sm:$0xff]
        %v5786 = vld [vmem:[%s4 + $0x9b] sm:$0xff]
        %v5787 = vld [vmem:[%s4 + $0xa3] sm:$0xff]
        %v5788 = vld [vmem:[%s4 + $0xab] sm:$0xff]
        %v5789 = vld [vmem:[%s4 + $0xb3] sm:$0xff]
        %v5790 = vld [vmem:[%s4 + $0xbb] sm:$0xff]
        %v5791 = vld [vmem:[%s4 + $0xc3] sm:$0xff]
        %v5792 = vld [vmem:[%s4 + $0xcb] sm:$0xff]
        %v5793 = vld [vmem:[%s4 + $0xd3] sm:$0xff]
        %v5794 = vld [vmem:[%s4 + $0xdb] sm:$0xff]
        %v5795 = vld [vmem:[%s4 + $0xe3] sm:$0xff]
        %v5796 = vld [vmem:[%s4 + $0xeb] sm:$0xff]
        %v5797 = vld [vmem:[%s4 + $0xf3] sm:$0xff]
        %v5798 = vld [vmem:[%s4 + $0xfb] sm:$0xff]
        %v5799 = vld [vmem:[%s4 + $0x103] sm:$0xff]
        %v5800 = vld [vmem:[%s4 + $0x10b] sm:$0xff]
        %v5801 = vld [vmem:[%s4 + $0x113] sm:$0xff]
        %v5802 = vld [vmem:[%s4 + $0x11b] sm:$0xff]
        %v5803 = vld [vmem:[%s4 + $0x123] sm:$0xff]
        %v5804 = vld [vmem:[%s4 + $0x12b] sm:$0x3f]
        %5806 = vset.pattern.permute.xlu0 0
        %5807 = vperm.xlu0 %5806, %v5769
        %v5808 = vpop.permute.xlu0 %5807
        %5811 = vset.pattern.permute.xlu0 0
        %5812 = vperm.xlu0 %5811, %v5770
        %v5813 = vpop.permute.xlu0 %5812
        %5816 = vset.pattern.permute.xlu0 0
        %5817 = vperm.xlu0 %5816, %v5771
        %v5818 = vpop.permute.xlu0 %5817
        %5821 = vset.pattern.permute.xlu0 0
        %5822 = vperm.xlu0 %5821, %v5772
        %v5823 = vpop.permute.xlu0 %5822
        %5826 = vset.pattern.permute.xlu0 0
        %5827 = vperm.xlu0 %5826, %v5773
        %v5828 = vpop.permute.xlu0 %5827
        %5831 = vset.pattern.permute.xlu0 0
        %5832 = vperm.xlu0 %5831, %v5774
        %v5833 = vpop.permute.xlu0 %5832
        %5836 = vset.pattern.permute.xlu0 0
        %5837 = vperm.xlu0 %5836, %v5775
        %v5838 = vpop.permute.xlu0 %5837
        %5841 = vset.pattern.permute.xlu0 0
        %5842 = vperm.xlu0 %5841, %v5776
        %v5843 = vpop.permute.xlu0 %5842
        %5846 = vset.pattern.permute.xlu0 0
        %5847 = vperm.xlu0 %5846, %v5777
        %v5848 = vpop.permute.xlu0 %5847
        %5851 = vset.pattern.permute.xlu0 0
        %5852 = vperm.xlu0 %5851, %v5778
        %v5853 = vpop.permute.xlu0 %5852
        %5856 = vset.pattern.permute.xlu0 0
        %5857 = vperm.xlu0 %5856, %v5779
        %v5858 = vpop.permute.xlu0 %5857
        %5861 = vset.pattern.permute.xlu0 0
        %5862 = vperm.xlu0 %5861, %v5780
        %v5863 = vpop.permute.xlu0 %5862
        %5866 = vset.pattern.permute.xlu0 0
        %5867 = vperm.xlu0 %5866, %v5781
        %v5868 = vpop.permute.xlu0 %5867
        %5871 = vset.pattern.permute.xlu0 0
        %5872 = vperm.xlu0 %5871, %v5782
        %v5873 = vpop.permute.xlu0 %5872
        %5876 = vset.pattern.permute.xlu0 0
        %5877 = vperm.xlu0 %5876, %v5783
        %v5878 = vpop.permute.xlu0 %5877
        %5881 = vset.pattern.permute.xlu0 0
        %5882 = vperm.xlu0 %5881, %v5784
        %v5883 = vpop.permute.xlu0 %5882
        %5886 = vset.pattern.permute.xlu0 0
        %5887 = vperm.xlu0 %5886, %v5785
        %v5888 = vpop.permute.xlu0 %5887
        %5891 = vset.pattern.permute.xlu0 0
        %5892 = vperm.xlu0 %5891, %v5786
        %v5893 = vpop.permute.xlu0 %5892
        %5896 = vset.pattern.permute.xlu0 0
        %5897 = vperm.xlu0 %5896, %v5787
        %v5898 = vpop.permute.xlu0 %5897
        %5901 = vset.pattern.permute.xlu0 0
        %5902 = vperm.xlu0 %5901, %v5788
        %v5903 = vpop.permute.xlu0 %5902
        %5906 = vset.pattern.permute.xlu0 0
        %5907 = vperm.xlu0 %5906, %v5789
        %v5908 = vpop.permute.xlu0 %5907
        %5911 = vset.pattern.permute.xlu0 0
        %5912 = vperm.xlu0 %5911, %v5790
        %v5913 = vpop.permute.xlu0 %5912
        %5916 = vset.pattern.permute.xlu0 0
        %5917 = vperm.xlu0 %5916, %v5791
        %v5918 = vpop.permute.xlu0 %5917
        %5921 = vset.pattern.permute.xlu0 0
        %5922 = vperm.xlu0 %5921, %v5792
        %v5923 = vpop.permute.xlu0 %5922
        %5926 = vset.pattern.permute.xlu0 0
        %5927 = vperm.xlu0 %5926, %v5793
        %v5928 = vpop.permute.xlu0 %5927
        %5931 = vset.pattern.permute.xlu0 0
        %5932 = vperm.xlu0 %5931, %v5794
        %v5933 = vpop.permute.xlu0 %5932
        %5936 = vset.pattern.permute.xlu0 0
        %5937 = vperm.xlu0 %5936, %v5795
        %v5938 = vpop.permute.xlu0 %5937
        %5941 = vset.pattern.permute.xlu0 0
        %5942 = vperm.xlu0 %5941, %v5796
        %v5943 = vpop.permute.xlu0 %5942
        %5946 = vset.pattern.permute.xlu0 0
        %5947 = vperm.xlu0 %5946, %v5797
        %v5948 = vpop.permute.xlu0 %5947
        %5951 = vset.pattern.permute.xlu0 0
        %5952 = vperm.xlu0 %5951, %v5798
        %v5953 = vpop.permute.xlu0 %5952
        %5956 = vset.pattern.permute.xlu0 0
        %5957 = vperm.xlu0 %5956, %v5799
        %v5958 = vpop.permute.xlu0 %5957
        %5961 = vset.pattern.permute.xlu0 0
        %5962 = vperm.xlu0 %5961, %v5800
        %v5963 = vpop.permute.xlu0 %5962
        %5966 = vset.pattern.permute.xlu0 0
        %5967 = vperm.xlu0 %5966, %v5801
        %v5968 = vpop.permute.xlu0 %5967
        %5971 = vset.pattern.permute.xlu0 0
        %5972 = vperm.xlu0 %5971, %v5802
        %v5973 = vpop.permute.xlu0 %5972
        %5976 = vset.pattern.permute.xlu0 0
        %5977 = vperm.xlu0 %5976, %v5803
        %v5978 = vpop.permute.xlu0 %5977
        %5981 = vset.pattern.permute.xlu0 0
        %5982 = vperm.xlu0 %5981, %v5804
        %v5983 = vpop.permute.xlu0 %5982
        %v5985 = vmul.f32 %v5662, %v5808
        %v5986 = vmul.f32 %v5665, %v5813
        %v5987 = vmul.f32 %v5668, %v5818
        %v5988 = vmul.f32 %v5671, %v5823
        %v5989 = vmul.f32 %v5674, %v5828
        %v5990 = vmul.f32 %v5677, %v5833
        %v5991 = vmul.f32 %v5680, %v5838
        %v5992 = vmul.f32 %v5683, %v5843
        %v5993 = vmul.f32 %v5686, %v5848
        %v5994 = vmul.f32 %v5689, %v5853
        %v5995 = vmul.f32 %v5692, %v5858
        %v5996 = vmul.f32 %v5695, %v5863
        %v5997 = vmul.f32 %v5698, %v5868
        %v5998 = vmul.f32 %v5701, %v5873
        %v5999 = vmul.f32 %v5704, %v5878
        %v6000 = vmul.f32 %v5707, %v5883
        %v6001 = vmul.f32 %v5710, %v5888
        %v6002 = vmul.f32 %v5713, %v5893
        %v6003 = vmul.f32 %v5716, %v5898
        %v6004 = vmul.f32 %v5719, %v5903
        %v6005 = vmul.f32 %v5722, %v5908
        %v6006 = vmul.f32 %v5725, %v5913
        %v6007 = vmul.f32 %v5728, %v5918
        %v6008 = vmul.f32 %v5731, %v5923
        %v6009 = vmul.f32 %v5734, %v5928
        %v6010 = vmul.f32 %v5737, %v5933
        %v6011 = vmul.f32 %v5740, %v5938
        %v6012 = vmul.f32 %v5743, %v5943
        %v6013 = vmul.f32 %v5746, %v5948
        %v6014 = vmul.f32 %v5749, %v5953
        %v6015 = vmul.f32 %v5752, %v5958
        %v6016 = vmul.f32 %v5755, %v5963
        %v6017 = vmul.f32 %v5758, %v5968
        %v6018 = vmul.f32 %v5761, %v5973
        %v6019 = vmul.f32 %v5764, %v5978
        %v6020 = vmul.f32 %v5767, %v5983
        %v6021 = vadd.f32 %v5985, %v5986
        %v6022 = vadd.f32 %v6021, %v5987
        %v6023 = vadd.f32 %v6022, %v5988
        %v6024 = vadd.f32 %v6023, %v5989
        %v6025 = vadd.f32 %v6024, %v5990
        %v6026 = vadd.f32 %v6025, %v5991
        %v6027 = vadd.f32 %v6026, %v5992
        %v6028 = vadd.f32 %v6027, %v5993
        %v6029 = vadd.f32 %v6028, %v5994
        %v6030 = vadd.f32 %v6029, %v5995
        %v6031 = vadd.f32 %v6030, %v5996
        %v6032 = vadd.f32 %v6031, %v5997
        %v6033 = vadd.f32 %v6032, %v5998
        %v6034 = vadd.f32 %v6033, %v5999
        %v6035 = vadd.f32 %v6034, %v6000
        %v6036 = vadd.f32 %v6035, %v6001
        %v6037 = vadd.f32 %v6036, %v6002
        %v6038 = vadd.f32 %v6037, %v6003
        %v6039 = vadd.f32 %v6038, %v6004
        %v6040 = vadd.f32 %v6039, %v6005
        %v6041 = vadd.f32 %v6040, %v6006
        %v6042 = vadd.f32 %v6041, %v6007
        %v6043 = vadd.f32 %v6042, %v6008
        %v6044 = vadd.f32 %v6043, %v6009
        %v6045 = vadd.f32 %v6044, %v6010
        %v6046 = vadd.f32 %v6045, %v6011
        %v6047 = vadd.f32 %v6046, %v6012
        %v6048 = vadd.f32 %v6047, %v6013
        %v6049 = vadd.f32 %v6048, %v6014
        %v6050 = vadd.f32 %v6049, %v6015
        %v6051 = vadd.f32 %v6050, %v6016
        %v6052 = vadd.f32 %v6051, %v6017
        %v6053 = vadd.f32 %v6052, %v6018
        %v6054 = vadd.f32 %v6053, %v6019
        %vm6055 = vcmask 1045504
        %v6056 = vsel %vm6055, %v6020, 0.0
        %v6057 = vadd.f32 %v6054, %v6056
        %v6058 = vrot.slane %v6057, 4
        %v6059 = vadd.f32 %v6057, %v6058
        %v6060 = vrot.slane %v6059, 2
        %v6061 = vadd.f32 %v6059, %v6060
        %v6062 = vrot.slane %v6061, 1
        %v6063 = vadd.f32 %v6061, %v6062
        %6064 = vst [vmem:[%s279] sm:$0x1] %v6063
        %v6065 = vmul.f32 %v5985, %v5985
        %v6066 = vmul.f32 %v5986, %v5986
        %v6067 = vmul.f32 %v5987, %v5987
        %v6068 = vmul.f32 %v5988, %v5988
        %v6069 = vmul.f32 %v5989, %v5989
        %v6070 = vmul.f32 %v5990, %v5990
        %v6071 = vmul.f32 %v5991, %v5991
        %v6072 = vmul.f32 %v5992, %v5992
        %v6073 = vmul.f32 %v5993, %v5993
        %v6074 = vmul.f32 %v5994, %v5994
        %v6075 = vmul.f32 %v5995, %v5995
        %v6076 = vmul.f32 %v5996, %v5996
        %v6077 = vmul.f32 %v5997, %v5997
        %v6078 = vmul.f32 %v5998, %v5998
        %v6079 = vmul.f32 %v5999, %v5999
        %v6080 = vmul.f32 %v6000, %v6000
        %v6081 = vmul.f32 %v6001, %v6001
        %v6082 = vmul.f32 %v6002, %v6002
        %v6083 = vmul.f32 %v6003, %v6003
        %v6084 = vmul.f32 %v6004, %v6004
        %v6085 = vmul.f32 %v6005, %v6005
        %v6086 = vmul.f32 %v6006, %v6006
        %v6087 = vmul.f32 %v6007, %v6007
        %v6088 = vmul.f32 %v6008, %v6008
        %v6089 = vmul.f32 %v6009, %v6009
        %v6090 = vmul.f32 %v6010, %v6010
        %v6091 = vmul.f32 %v6011, %v6011
        %v6092 = vmul.f32 %v6012, %v6012
        %v6093 = vmul.f32 %v6013, %v6013
        %v6094 = vmul.f32 %v6014, %v6014
        %v6095 = vmul.f32 %v6015, %v6015
        %v6096 = vmul.f32 %v6016, %v6016
        %v6097 = vmul.f32 %v6017, %v6017
        %v6098 = vmul.f32 %v6018, %v6018
        %v6099 = vmul.f32 %v6019, %v6019
        %v6100 = vmul.f32 %v6020, %v6020
        %v6101 = vadd.f32 %v6065, %v6066
        %v6102 = vadd.f32 %v6101, %v6067
        %v6103 = vadd.f32 %v6102, %v6068
        %v6104 = vadd.f32 %v6103, %v6069
        %v6105 = vadd.f32 %v6104, %v6070
        %v6106 = vadd.f32 %v6105, %v6071
        %v6107 = vadd.f32 %v6106, %v6072
        %v6108 = vadd.f32 %v6107, %v6073
        %v6109 = vadd.f32 %v6108, %v6074
        %v6110 = vadd.f32 %v6109, %v6075
        %v6111 = vadd.f32 %v6110, %v6076
        %v6112 = vadd.f32 %v6111, %v6077
        %v6113 = vadd.f32 %v6112, %v6078
        %v6114 = vadd.f32 %v6113, %v6079
        %v6115 = vadd.f32 %v6114, %v6080
        %v6116 = vadd.f32 %v6115, %v6081
        %v6117 = vadd.f32 %v6116, %v6082
        %v6118 = vadd.f32 %v6117, %v6083
        %v6119 = vadd.f32 %v6118, %v6084
        %v6120 = vadd.f32 %v6119, %v6085
        %v6121 = vadd.f32 %v6120, %v6086
        %v6122 = vadd.f32 %v6121, %v6087
        %v6123 = vadd.f32 %v6122, %v6088
        %v6124 = vadd.f32 %v6123, %v6089
        %v6125 = vadd.f32 %v6124, %v6090
        %v6126 = vadd.f32 %v6125, %v6091
        %v6127 = vadd.f32 %v6126, %v6092
        %v6128 = vadd.f32 %v6127, %v6093
        %v6129 = vadd.f32 %v6128, %v6094
        %v6130 = vadd.f32 %v6129, %v6095
        %v6131 = vadd.f32 %v6130, %v6096
        %v6132 = vadd.f32 %v6131, %v6097
        %v6133 = vadd.f32 %v6132, %v6098
        %v6134 = vadd.f32 %v6133, %v6099
        %v6135 = vsel %vm6055, %v6100, 0.0
        %v6136 = vadd.f32 %v6134, %v6135
        %v6137 = vrot.slane %v6136, 4
        %v6138 = vadd.f32 %v6136, %v6137
        %v6139 = vrot.slane %v6138, 2
        %v6140 = vadd.f32 %v6138, %v6139
        %v6141 = vrot.slane %v6140, 1
        %v6142 = vadd.f32 %v6140, %v6141
        %6143 = vst [vmem:[%s279 + $0x1] sm:$0x1] %v6142
        %6144 = vst [vmem:[%s275 + $0x13] sm:$0xff] %v5985
        %6145 = vst [vmem:[%s275 + $0x1b] sm:$0xff] %v5986
        %6146 = vst [vmem:[%s275 + $0x23] sm:$0xff] %v5987
        %6147 = vst [vmem:[%s275 + $0x2b] sm:$0xff] %v5988
        %6148 = vst [vmem:[%s275 + $0x33] sm:$0xff] %v5989
        %6149 = vst [vmem:[%s275 + $0x3b] sm:$0xff] %v5990
        %6150 = vst [vmem:[%s275 + $0x43] sm:$0xff] %v5991
        %6151 = vst [vmem:[%s275 + $0x4b] sm:$0xff] %v5992
        %6152 = vst [vmem:[%s275 + $0x53] sm:$0xff] %v5993
        %6153 = vst [vmem:[%s275 + $0x5b] sm:$0xff] %v5994
        %6154 = vst [vmem:[%s275 + $0x63] sm:$0xff] %v5995
        %6155 = vst [vmem:[%s275 + $0x6b] sm:$0xff] %v5996
        %6156 = vst [vmem:[%s275 + $0x73] sm:$0xff] %v5997
        %6157 = vst [vmem:[%s275 + $0x7b] sm:$0xff] %v5998
        %6158 = vst [vmem:[%s275 + $0x83] sm:$0xff] %v5999
        %6159 = vst [vmem:[%s275 + $0x8b] sm:$0xff] %v6000
        %6160 = vst [vmem:[%s275 + $0x93] sm:$0xff] %v6001
        %6161 = vst [vmem:[%s275 + $0x9b] sm:$0xff] %v6002
        %6162 = vst [vmem:[%s275 + $0xa3] sm:$0xff] %v6003
        %6163 = vst [vmem:[%s275 + $0xab] sm:$0xff] %v6004
        %6164 = vst [vmem:[%s275 + $0xb3] sm:$0xff] %v6005
        %6165 = vst [vmem:[%s275 + $0xbb] sm:$0xff] %v6006
        %6166 = vst [vmem:[%s275 + $0xc3] sm:$0xff] %v6007
        %6167 = vst [vmem:[%s275 + $0xcb] sm:$0xff] %v6008
        %6168 = vst [vmem:[%s275 + $0xd3] sm:$0xff] %v6009
        %6169 = vst [vmem:[%s275 + $0xdb] sm:$0xff] %v6010
        %6170 = vst [vmem:[%s275 + $0xe3] sm:$0xff] %v6011
        %6171 = vst [vmem:[%s275 + $0xeb] sm:$0xff] %v6012
        %6172 = vst [vmem:[%s275 + $0xf3] sm:$0xff] %v6013
        %6173 = vst [vmem:[%s275 + $0xfb] sm:$0xff] %v6014
        %6174 = vst [vmem:[%s275 + $0x103] sm:$0xff] %v6015
        %6175 = vst [vmem:[%s275 + $0x10b] sm:$0xff] %v6016
        %6176 = vst [vmem:[%s275 + $0x113] sm:$0xff] %v6017
        %6177 = vst [vmem:[%s275 + $0x11b] sm:$0xff] %v6018
        %6178 = vst [vmem:[%s275 + $0x123] sm:$0xff] %v6019
        %6179 = vst [vmem:[%s275 + $0x12b] sm:$0x3f] %v6020
        %6180 = vst [vmem:[%s275] sm:$0xff] 0.0
        %6181 = vst [vmem:[%s275 + $0x8] sm:$0xff] 0.0
        %6182 = vst [vmem:[%s275 + $0x10] sm:$0x7] 0.0
        %6183 = vst [vmem:[%s275 + $0x131] sm:$0xff] 0.0
        %6184 = vst [vmem:[%s275 + $0x139] sm:$0xff] 0.0
        %6185 = vst [vmem:[%s275 + $0x141] sm:$0x7] 0.0
        %p6186 = scmp.lt.s32.totalorder %s19, 1
        %s6187 = scalar_select %p6186, %s19, 1
        %s6188 = smul.addr %s6187, 41
        %s6189 = smul.addr %s6188, 8
        %s6190 = scalar_lea.vmem %s5, %s6189
        %p6191 = scmp.lt.s32.totalorder %s19, 1
        %s6192 = scalar_select %p6191, %s19, 1
        %s6193 = smul.addr %s6192, 2
        %s6194 = scalar_lea.vmem %s6, %s6193
        // Predicated region
        $region45: #{basic_block_padded.4} parent=39 // pred_check
          %p6195 = pneg %p147
        $region46: #{basic_block_padded.4} parent=39 // pred_check_branch
          %6197 = sbr.rel (%p6195) target = $region48
        $region47: #{basic_block_padded.4} parent=39 // pred_region
          _
        $region48: #{basic_block_padded.4} parent=39 // pred_fallthru
          _
        // Predicated region
        $region49: #{basic_block_padded.4} parent=39 // pred_check
          %p6198 = pneg %p173
        $region50: #{basic_block_padded.4} parent=39 // pred_check_branch
          %6200 = sbr.rel (%p6198) target = $region52
        $region51: #{basic_block_padded.4} parent=39 // pred_region
          _
        $region52: #{basic_block_padded.4} parent=39 // pred_fallthru
          _
      $region40: #{basic_block_padded.4} parent=5 // pred_fallthru
        _
      %p6201 = scmp.le.s32.totalorder 2, %s14
      // Predicated region
      $region53: #{basic_block_padded.4} parent=5 // pred_check
        %p6202 = pneg %p6201
      $region54: #{basic_block_padded.4} parent=5 // pred_check_branch
        %6204 = sbr.rel (%p6202) target = $region56
      $region55: #{basic_block_padded.4} parent=5 // pred_region
        %s6205 = ssub.s32 %s14, 2
        // Predicated region
        $region57: #{basic_block_padded.4} parent=55 // pred_check
          %p6206 = pneg %p153
        $region58: #{basic_block_padded.4} parent=55 // pred_check_branch
          %6208 = sbr.rel (%p6206) target = $region60
        $region59: #{basic_block_padded.4} parent=55 // pred_region
          %p6209 = scmp.lt.s32.totalorder %s20, 1
          %s6210 = scalar_select %p6209, %s20, 1
          %s6211 = smul.addr %s6210, 41
          %s6212 = smul.addr %s6211, 8
          %s6213 = scalar_lea.vmem %s5, %s6212
        $region60: #{basic_block_padded.4} parent=55 // pred_fallthru
          _
        // Predicated region
        $region61: #{basic_block_padded.4} parent=55 // pred_check
          %p6214 = pneg %p179
        $region62: #{basic_block_padded.4} parent=55 // pred_check_branch
          %6216 = sbr.rel (%p6214) target = $region64
        $region63: #{basic_block_padded.4} parent=55 // pred_region
          %p6217 = scmp.lt.s32.totalorder %s20, 1
          %s6218 = scalar_select %p6217, %s20, 1
          %s6219 = smul.addr %s6218, 2
          %s6220 = scalar_lea.vmem %s6, %s6219
        $region64: #{basic_block_padded.4} parent=55 // pred_fallthru
          _
      $region56: #{basic_block_padded.4} parent=5 // pred_fallthru
        _
    $region6: #{basic_block_padded.4} parent=1 // loop_footer
      %s18 = sadd.s32 1, %s14
    $region7: #{basic_block_padded.4} parent=1 // loop_footer_branch
      %13 = sbr.rel target = $region3
    $region8: #{basic_block_padded.4} parent=1 // loop_exit
      _
    %6221 = vsyncpa [#allocation4], 1
    %s6222 = scalar_lea.sflag [#allocation4], 1
    %6223 = vsyncpa %s6222, 1

</llo_original>
